<compile_context>
chip_gen: v7x
topology: tpu7x:2x2x1
jax: 0.10.0
libtpu: 0.0.40
codegen_flags: <defaults>
</compile_context>

<pallas_src>
import jax
import jax.numpy as jnp
from jax.experimental import pallas as pl
from jax.experimental.pallas import tpu as pltpu


def mlp_kernel(x_ref, w1_ref, b1_ref, w2_ref, b2_ref,
               w3_ref, b3_ref, w4_ref, b4_ref, o_ref):
    # fc1..fc3: bf16 x bf16 MXU matmuls, f32 accumulation; bias + ReLU in f32 (VPU).
    h = jnp.dot(x_ref[...], w1_ref[...], preferred_element_type=jnp.float32)
    h = jnp.maximum(h + b1_ref[...], 0.0)          # dropout = identity (eval mode)
    h = jnp.dot(h.astype(jnp.bfloat16), w2_ref[...], preferred_element_type=jnp.float32)
    h = jnp.maximum(h + b2_ref[...], 0.0)
    h = jnp.dot(h.astype(jnp.bfloat16), w3_ref[...], preferred_element_type=jnp.float32)
    h = jnp.maximum(h + b3_ref[...], 0.0)
    # fc4 (hidden -> 1): VPU multiply + cross-lane (XLU) reduction instead of a 1-wide
    # MXU matmul; result becomes a lane-dense (1, batch_tile) row of the output slab.
    w4f = w4_ref[...].astype(jnp.float32)                    # (1, hidden)
    out_row = jnp.sum(h * w4f, axis=-1)                      # (batch_tile,)
    o_ref[...] = (out_row[None, :] + b4_ref[...]).astype(o_ref.dtype)


def mlp_forward(x, params, *, batch_tile=256):
    """x: (B, input_size) f32.
    params: w1..w4 stored (in_features, out_features) f32, b1..b4 stored (1, out_features) f32.
    Returns (B, 1) f32."""
    B, input_size = x.shape
    hidden = params["w1"].shape[1]
    assert batch_tile % 128 == 0, "batch_tile must be a multiple of 128 (lane width)"

    num_tiles = pl.cdiv(B, batch_tile)
    b_pad = num_tiles * batch_tile

    # Cast streamed input + weights to bf16 once (halves DMA / VMEM, 2x MXU rate).
    x_bf16 = x.astype(jnp.bfloat16)
    if b_pad != B:
        x_bf16 = jnp.pad(x_bf16, ((0, b_pad - B), (0, 0)))
    w1 = params["w1"].astype(jnp.bfloat16)
    w2 = params["w2"].astype(jnp.bfloat16)
    w3 = params["w3"].astype(jnp.bfloat16)
    w4 = params["w4"].reshape(1, hidden).astype(jnp.bfloat16)   # (hidden,1) -> (1,hidden)
    b1, b2, b3 = params["b1"], params["b2"], params["b3"]        # (1, hidden) f32
    b4 = params["b4"]                                            # (1, 1) f32

    def const_spec(shape):
        # Whole array resident; constant index_map => fetched once, not re-DMA'd per step.
        return pl.BlockSpec(shape, lambda i: (0, 0))

    out_row = pl.pallas_call(
        mlp_kernel,
        out_shape=jax.ShapeDtypeStruct((1, b_pad), jnp.float32),
        grid_spec=pltpu.PrefetchScalarGridSpec(
            num_scalar_prefetch=0,
            grid=(num_tiles,),
            in_specs=[
                pl.BlockSpec((batch_tile, input_size), lambda i: (i, 0)),   # x tile
                const_spec(w1.shape), const_spec(b1.shape),
                const_spec(w2.shape), const_spec(b2.shape),
                const_spec(w3.shape), const_spec(b3.shape),
                const_spec(w4.shape), const_spec(b4.shape),
            ],
            # Lane-dense output: each grid step writes a (1, batch_tile) block of (1, B_pad).
            out_specs=pl.BlockSpec((1, batch_tile), lambda i: (0, i)),
        ),
        compiler_params=pltpu.CompilerParams(
            dimension_semantics=("parallel",),
            vmem_limit_bytes=32 * 1024 * 1024,
        ),
    )(x_bf16, w1, b1, w2, b2, w3, b3, w4, b4)

    return out_row.reshape(b_pad, 1)[:B]


def init_params(key, input_size, hidden_size, output_size):
    """PyTorch nn.Linear-style init (U[-1/sqrt(fan_in), 1/sqrt(fan_in)]).
    Weights stored as (in_features, out_features); biases as (1, out_features)."""
    dims = [(input_size, hidden_size),
            (hidden_size, hidden_size),
            (hidden_size, hidden_size),
            (hidden_size, output_size)]
    params = {}
    for idx, (fan_in, fan_out) in enumerate(dims, start=1):
        key, kw, kb = jax.random.split(key, 3)
        bound = 1.0 / jnp.sqrt(fan_in)
        params[f"w{idx}"] = jax.random.uniform(
            kw, (fan_in, fan_out), jnp.float32, minval=-bound, maxval=bound)
        params[f"b{idx}"] = jax.random.uniform(
            kb, (1, fan_out), jnp.float32, minval=-bound, maxval=bound)
    return params


def mlp_reference(x, params):
    """Pure-JAX reference with the same bf16 quantization points as the kernel."""
    q = lambda a: a.astype(jnp.bfloat16).astype(jnp.float32)
    h = jnp.maximum(q(x) @ q(params["w1"]) + params["b1"], 0.0)
    h = jnp.maximum(q(h) @ q(params["w2"]) + params["b2"], 0.0)
    h = jnp.maximum(q(h) @ q(params["w3"]) + params["b3"], 0.0)
    return h @ q(params["w4"]) + params["b4"]


if __name__ == "__main__":
    INPUT_SIZE = 32      # X_train.shape[1] stand-in
    HIDDEN = 512         # module default hidden_size
    OUTPUT = 1
    BATCH = 512          # 2 grid steps of 256 rows -> both v7x TensorCores busy

    key = jax.random.PRNGKey(0)
    key, kx = jax.random.split(key)
    x = jax.random.normal(kx, (BATCH, INPUT_SIZE), dtype=jnp.float32)
    params = init_params(key, INPUT_SIZE, HIDDEN, OUTPUT)

    out = mlp_forward(x, params, batch_tile=256)
    out = jax.block_until_ready(out)

    ref = mlp_reference(x, params)
    assert out.shape == (BATCH, OUTPUT)
    assert jnp.allclose(out, ref, atol=2e-2, rtol=2e-2), "mismatch vs reference"

    print("KERNEL_OK")
</pallas_src>

<mosaic_0001>
module attributes {stable_mosaic.version = 11 : i64} {
  func.func @mlp_kernel(%arg0: i32, %arg1: memref<256x32xbf16, #tpu.memory_space<vmem>>, %arg2: memref<32x512xbf16, #tpu.memory_space<vmem>>, %arg3: memref<1x512xf32, #tpu.memory_space<vmem>>, %arg4: memref<512x512xbf16, #tpu.memory_space<vmem>>, %arg5: memref<1x512xf32, #tpu.memory_space<vmem>>, %arg6: memref<512x512xbf16, #tpu.memory_space<vmem>>, %arg7: memref<1x512xf32, #tpu.memory_space<vmem>>, %arg8: memref<1x512xbf16, #tpu.memory_space<vmem>>, %arg9: memref<1x1xf32, #tpu.memory_space<vmem>>, %arg10: memref<1x256xf32, #tpu.memory_space<vmem>>) attributes {dimension_semantics = [#tpu.dimension_semantics<parallel>], iteration_bounds = array<i64: 2>, scalar_prefetch = 0 : i64, scratch_operands = 0 : i64, tpu.core_type = #tpu.core_type<tc>, window_params = [{transform_indices = @transform_0, window_bounds = array<i64: 256, 32>}, {pipeline_mode = #tpu.pipeline_mode<synchronous>, transform_indices = @transform_1, window_bounds = array<i64: 32, 512>}, {pipeline_mode = #tpu.pipeline_mode<synchronous>, transform_indices = @transform_2, window_bounds = array<i64: 1, 512>}, {pipeline_mode = #tpu.pipeline_mode<synchronous>, transform_indices = @transform_3, window_bounds = array<i64: 512, 512>}, {pipeline_mode = #tpu.pipeline_mode<synchronous>, transform_indices = @transform_4, window_bounds = array<i64: 1, 512>}, {pipeline_mode = #tpu.pipeline_mode<synchronous>, transform_indices = @transform_5, window_bounds = array<i64: 512, 512>}, {pipeline_mode = #tpu.pipeline_mode<synchronous>, transform_indices = @transform_6, window_bounds = array<i64: 1, 512>}, {pipeline_mode = #tpu.pipeline_mode<synchronous>, transform_indices = @transform_7, window_bounds = array<i64: 1, 512>}, {pipeline_mode = #tpu.pipeline_mode<synchronous>, transform_indices = @transform_8, window_bounds = array<i64: 1, 1>}, {transform_indices = @transform_9, window_bounds = array<i64: 1, 256>}]} {
    %c0 = arith.constant 0 : index
    %c0_0 = arith.constant 0 : index
    %0 = vector.load %arg1[%c0, %c0_0] : memref<256x32xbf16, #tpu.memory_space<vmem>>, vector<256x32xbf16>
    %c0_1 = arith.constant 0 : index
    %c0_2 = arith.constant 0 : index
    %1 = vector.load %arg2[%c0_1, %c0_2] : memref<32x512xbf16, #tpu.memory_space<vmem>>, vector<32x512xbf16>
    %cst = arith.constant dense<0.000000e+00> : vector<256x512xf32>
    %2 = tpu.matmul %0, %1, %cst {dimension_numbers = #tpu.dot_dimension_numbers<[1], [0], [0], [1], [0, 0, 1, 1], [], []>} : vector<256x32xbf16>, vector<32x512xbf16>, vector<256x512xf32> -> vector<256x512xf32>
    %c0_3 = arith.constant 0 : index
    %c0_4 = arith.constant 0 : index
    %3 = vector.load %arg3[%c0_3, %c0_4] : memref<1x512xf32, #tpu.memory_space<vmem>>, vector<1x512xf32>
    %4 = vector.broadcast %3 : vector<1x512xf32> to vector<256x512xf32>
    %5 = arith.addf %2, %4 : vector<256x512xf32>
    %cst_5 = arith.constant 0.000000e+00 : f32
    %6 = vector.broadcast %cst_5 : f32 to vector<256x512xf32>
    %7 = arith.maximumf %5, %6 : vector<256x512xf32>
    %8 = arith.truncf %7 : vector<256x512xf32> to vector<256x512xbf16>
    %c0_6 = arith.constant 0 : index
    %c0_7 = arith.constant 0 : index
    %9 = vector.load %arg4[%c0_6, %c0_7] : memref<512x512xbf16, #tpu.memory_space<vmem>>, vector<512x512xbf16>
    %cst_8 = arith.constant dense<0.000000e+00> : vector<256x512xf32>
    %10 = tpu.matmul %8, %9, %cst_8 {dimension_numbers = #tpu.dot_dimension_numbers<[1], [0], [0], [1], [0, 0, 1, 1], [], []>} : vector<256x512xbf16>, vector<512x512xbf16>, vector<256x512xf32> -> vector<256x512xf32>
    %c0_9 = arith.constant 0 : index
    %c0_10 = arith.constant 0 : index
    %11 = vector.load %arg5[%c0_9, %c0_10] : memref<1x512xf32, #tpu.memory_space<vmem>>, vector<1x512xf32>
    %12 = vector.broadcast %11 : vector<1x512xf32> to vector<256x512xf32>
    %13 = arith.addf %10, %12 : vector<256x512xf32>
    %cst_11 = arith.constant 0.000000e+00 : f32
    %14 = vector.broadcast %cst_11 : f32 to vector<256x512xf32>
    %15 = arith.maximumf %13, %14 : vector<256x512xf32>
    %16 = arith.truncf %15 : vector<256x512xf32> to vector<256x512xbf16>
    %c0_12 = arith.constant 0 : index
    %c0_13 = arith.constant 0 : index
    %17 = vector.load %arg6[%c0_12, %c0_13] : memref<512x512xbf16, #tpu.memory_space<vmem>>, vector<512x512xbf16>
    %cst_14 = arith.constant dense<0.000000e+00> : vector<256x512xf32>
    %18 = tpu.matmul %16, %17, %cst_14 {dimension_numbers = #tpu.dot_dimension_numbers<[1], [0], [0], [1], [0, 0, 1, 1], [], []>} : vector<256x512xbf16>, vector<512x512xbf16>, vector<256x512xf32> -> vector<256x512xf32>
    %c0_15 = arith.constant 0 : index
    %c0_16 = arith.constant 0 : index
    %19 = vector.load %arg7[%c0_15, %c0_16] : memref<1x512xf32, #tpu.memory_space<vmem>>, vector<1x512xf32>
    %20 = vector.broadcast %19 : vector<1x512xf32> to vector<256x512xf32>
    %21 = arith.addf %18, %20 : vector<256x512xf32>
    %cst_17 = arith.constant 0.000000e+00 : f32
    %22 = vector.broadcast %cst_17 : f32 to vector<256x512xf32>
    %23 = arith.maximumf %21, %22 : vector<256x512xf32>
    %c0_18 = arith.constant 0 : index
    %c0_19 = arith.constant 0 : index
    %24 = vector.load %arg8[%c0_18, %c0_19] : memref<1x512xbf16, #tpu.memory_space<vmem>>, vector<1x512xbf16>
    %25 = arith.extf %24 : vector<1x512xbf16> to vector<1x512xf32>
    %26 = vector.broadcast %25 : vector<1x512xf32> to vector<256x512xf32>
    %27 = arith.mulf %23, %26 : vector<256x512xf32>
    %cst_20 = arith.constant dense<0.000000e+00> : vector<256xf32>
    %28 = vector.multi_reduction <add>, %27, %cst_20 [1] : vector<256x512xf32> to vector<256xf32>
    %29 = vector.shape_cast %28 : vector<256xf32> to vector<1x256xf32>
    %c0_21 = arith.constant 0 : index
    %c0_22 = arith.constant 0 : index
    %30 = vector.load %arg9[%c0_21, %c0_22] : memref<1x1xf32, #tpu.memory_space<vmem>>, vector<1x1xf32>
    %31 = vector.broadcast %30 : vector<1x1xf32> to vector<1x256xf32>
    %32 = arith.addf %29, %31 : vector<1x256xf32>
    %c0_23 = arith.constant 0 : index
    %c0_24 = arith.constant 0 : index
    %33 = vector.load %arg10[%c0_23, %c0_24] : memref<1x256xf32, #tpu.memory_space<vmem>>, vector<1x256xf32>
    tpu.vector_store %arg10[%c0_23, %c0_24], %32 {strides = array<i32>} : memref<1x256xf32, #tpu.memory_space<vmem>>, vector<1x256xf32>,
    return
  }
  func.func @transform_0(%arg0: i32) -> (i32, i32) {
    %c0_i32 = arith.constant 0 : i32
    %c0_i32_0 = arith.constant 0 : i32
    return %arg0, %c0_i32 : i32, i32
  }
  func.func @transform_1(%arg0: i32) -> (i32, i32) {
    %c0_i32 = arith.constant 0 : i32
    %c0_i32_0 = arith.constant 0 : i32
    %c0_i32_1 = arith.constant 0 : i32
    return %c0_i32, %c0_i32_0 : i32, i32
  }
  func.func @transform_2(%arg0: i32) -> (i32, i32) {
    %c0_i32 = arith.constant 0 : i32
    %c0_i32_0 = arith.constant 0 : i32
    %c0_i32_1 = arith.constant 0 : i32
    return %c0_i32, %c0_i32_0 : i32, i32
  }
  func.func @transform_3(%arg0: i32) -> (i32, i32) {
    %c0_i32 = arith.constant 0 : i32
    %c0_i32_0 = arith.constant 0 : i32
    %c0_i32_1 = arith.constant 0 : i32
    return %c0_i32, %c0_i32_0 : i32, i32
  }
  func.func @transform_4(%arg0: i32) -> (i32, i32) {
    %c0_i32 = arith.constant 0 : i32
    %c0_i32_0 = arith.constant 0 : i32
    %c0_i32_1 = arith.constant 0 : i32
    return %c0_i32, %c0_i32_0 : i32, i32
  }
  func.func @transform_5(%arg0: i32) -> (i32, i32) {
    %c0_i32 = arith.constant 0 : i32
    %c0_i32_0 = arith.constant 0 : i32
    %c0_i32_1 = arith.constant 0 : i32
    return %c0_i32, %c0_i32_0 : i32, i32
  }
  func.func @transform_6(%arg0: i32) -> (i32, i32) {
    %c0_i32 = arith.constant 0 : i32
    %c0_i32_0 = arith.constant 0 : i32
    %c0_i32_1 = arith.constant 0 : i32
    return %c0_i32, %c0_i32_0 : i32, i32
  }
  func.func @transform_7(%arg0: i32) -> (i32, i32) {
    %c0_i32 = arith.constant 0 : i32
    %c0_i32_0 = arith.constant 0 : i32
    %c0_i32_1 = arith.constant 0 : i32
    return %c0_i32, %c0_i32_0 : i32, i32
  }
  func.func @transform_8(%arg0: i32) -> (i32, i32) {
    %c0_i32 = arith.constant 0 : i32
    %c0_i32_0 = arith.constant 0 : i32
    %c0_i32_1 = arith.constant 0 : i32
    return %c0_i32, %c0_i32_0 : i32, i32
  }
  func.func @transform_9(%arg0: i32) -> (i32, i32) {
    %c0_i32 = arith.constant 0 : i32
    %c0_i32_0 = arith.constant 0 : i32
    return %c0_i32, %arg0 : i32, i32
  }
}

</mosaic_0001>

<llo_original>
// kernel: tpu_custom_call.1
$region0: #{tpu_custom_call.1}
  #allocation0 [shape = 'u32[]', space=smem, size = 0x4, offset = 0x4, fixed_abs, tag = 'smem constant byte address 0x4 - core index']
  #allocation1 [shape = 'u32[144,128]{1,0:T(1,128)}', space=vmem, size = 0x12000, scoped, tag = 'internal scratch']
  #allocation2 [shape = 'f32[1,1]{1,0:T(1,128)S(1)}', space=vmem, size = 0x200, scoped, tag = 'scoped memory for tpu_custom_call.1']
  %s0 = inlined_call_operand.vmem [shape: bf16[512,32], index: 0, kind: input, shape index: {}]
  %s1 = inlined_call_operand.vmem [shape: bf16[32,512], index: 1, kind: input, shape index: {}]
  %s2 = inlined_call_operand.vmem [shape: f32[1,512], index: 2, kind: input, shape index: {}]
  %s3 = inlined_call_operand.hbm [shape: bf16[512,512], index: 3, kind: input, shape index: {}]
  %s4 = inlined_call_operand.vmem [shape: f32[1,512], index: 4, kind: input, shape index: {}]
  %s5 = inlined_call_operand.hbm [shape: bf16[512,512], index: 5, kind: input, shape index: {}]
  %s6 = inlined_call_operand.vmem [shape: f32[1,512], index: 6, kind: input, shape index: {}]
  %s7 = inlined_call_operand.vmem [shape: bf16[1,512], index: 7, kind: input, shape index: {}]
  %s8 = inlined_call_operand.<no memory space> [shape: f32[1,1], index: 8, kind: input, shape index: {}]
  %s9 = inlined_call_operand.hbm [shape: f32[1,512], index: 9, kind: output, shape index: {}]
  %s10 = sld [smem:[#allocation0]]
  $region77: #{tpu_custom_call.1} parent=0
    _
  %s12 = ssub.s32 1, %s10
  %s13 = scalar_select 0, %s12, %s10
  %v14 = vstv %s8
  %15 = vst [vmem:[#allocation2] sm:$0x1] %v14
  $region1: #{tpu_custom_call.1} parent=0
    #allocation3 [shape = 'u8[524288]{0}', space=vmem, size = 0x80000, scoped, tag = 'input window, operand 3, single buffered']
    #allocation4 [shape = 's32[2]{0}', space=sflag, size = 0x8, scoped, tag = 'scoped memory for tpu_custom_call.1']
    #allocation5 [shape = 's32[2]{0}', space=sflag, size = 0x8, scoped, tag = 'scoped memory for tpu_custom_call.1']
    #allocation6 [shape = 'u8[524288]{0}', space=vmem, size = 0x80000, scoped, tag = 'input window, operand 5, single buffered']
    #allocation7 [shape = 's32[1]{0}', space=sflag, size = 0x4, scoped, tag = 'scoped memory for tpu_custom_call.1']
    #allocation8 [shape = 'u8[2048]{0}', space=vmem, size = 0x800, scoped, tag = 'output window, operand 0']
    %16 = vsyncpa [#allocation4], 0
    %17 = vsyncpa [#allocation7], 0
    %18 = vsyncpa [#allocation5], 0
    %s19 = scalar_lea.sflag [#allocation5], 1
    %20 = vsyncpa %s19, 0
    loop: start=0, step=1, limit=4
    $region2: #{tpu_custom_call.1} parent=1 // loop_pre_header
      _
    $region3: #{tpu_custom_call.1} parent=1 // loop_header
      %s22 = sphi 0, %s26
      %p23 = scmp.ge.s32.totalorder %s22, 4
      %s32 = sphi 0, %s34
      %s35 = sphi 0, %s32
      %s36 = sphi 0, %s35
      %s52 = sphi 0, %s36
      %s56 = sphi 0, %s56
      %s58 = sphi 0, %s56
      %s59 = sphi 0, %s58
      %s73 = sphi 0, %s59
      %s77 = sphi 0, %s77
      %s79 = sphi 0, %s77
      %s80 = sphi 0, %s79
      %s94 = sphi 0, %s80
      %s98 = sphi 0, %s98
      %s100 = sphi 0, %s98
      %s101 = sphi 0, %s100
      %s115 = sphi 0, %s101
      %s119 = sphi 0, %s119
      %s121 = sphi 0, %s119
      %s122 = sphi 0, %s121
      %s136 = sphi 0, %s122
      %s140 = sphi 0, %s140
      %s142 = sphi 0, %s140
      %s143 = sphi 0, %s142
      %s157 = sphi 0, %s143
      %s161 = sphi 0, %s161
      %s163 = sphi 0, %s161
      %s164 = sphi 0, %s163
      %s178 = sphi 0, %s164
      %s182 = sphi 0, %s182
      %s184 = sphi 0, %s182
      %s185 = sphi 0, %s184
      %s199 = sphi 0, %s185
      %s203 = sphi 0, %s203
      %s205 = sphi 0, %s203
      %s206 = sphi 0, %s205
      %s220 = sphi 0, %s206
      %s226 = sphi 0, %s228
      %s229 = sphi 0, %s226
      %s230 = sphi 0, %s229
      %s246 = sphi 0, %s230
    $region4: #{tpu_custom_call.1} parent=1 // loop_header_branch
      %25 = sbr.rel (%p23) target = $region8
    $region5: #{tpu_custom_call.1} parent=1 // loop_body
      %s27 = ssub.s32 %s22, 1
      %s28 = ssub.s32 %s22, 2
      %s29 = sadd.s32 %s22, 1
      %s30 = ssub.s32 %s22, %s29
      %p31 = scmp.eq.s32.totalorder %s30, 0
      %s33 = sadd.s32 %s32, 1
      %s34 = scalar_select %p31, %s32, %s33
      %p37 = pneg %p31
      %p38 = scmp.eq.s32.totalorder %s22, 1
      %p39 = por %p37, %p38
      %p40 = scmp.ne.s32.totalorder %s32, %s35
      %p41 = scmp.eq.s32.totalorder %s22, 0
      %p42 = por %p40, %p41
      %p43 = scmp.ne.s32.totalorder %s32, %s35
      %p44 = scmp.eq.s32.totalorder %s27, 1
      %p45 = por %p43, %p44
      %p46 = scmp.ne.s32.totalorder %s35, %s36
      %p47 = scmp.eq.s32.totalorder %s27, 0
      %p48 = por %p46, %p47
      %p49 = scmp.ne.s32.totalorder %s35, %s36
      %p50 = scmp.eq.s32.totalorder %s28, 1
      %p51 = por %p49, %p50
      %p53 = scmp.ne.s32.totalorder %s36, %s52
      %p54 = scmp.eq.s32.totalorder %s28, 0
      %p55 = por %p53, %p54
      %s57 = sadd.s32 %s56, 1
      %p60 = scmp.eq.s32.totalorder %s22, 1
      %p61 = scmp.ne.s32.totalorder %s56, %s58
      %p62 = scmp.eq.s32.totalorder %s22, 0
      %p63 = por %p61, %p62
      %p64 = scmp.ne.s32.totalorder %s56, %s58
      %p65 = scmp.eq.s32.totalorder %s27, 1
      %p66 = por %p64, %p65
      %p67 = scmp.ne.s32.totalorder %s58, %s59
      %p68 = scmp.eq.s32.totalorder %s27, 0
      %p69 = por %p67, %p68
      %p70 = scmp.ne.s32.totalorder %s58, %s59
      %p71 = scmp.eq.s32.totalorder %s28, 1
      %p72 = por %p70, %p71
      %p74 = scmp.ne.s32.totalorder %s59, %s73
      %p75 = scmp.eq.s32.totalorder %s28, 0
      %p76 = por %p74, %p75
      %s78 = sadd.s32 %s77, 1
      %p81 = scmp.eq.s32.totalorder %s22, 1
      %p82 = scmp.ne.s32.totalorder %s77, %s79
      %p83 = scmp.eq.s32.totalorder %s22, 0
      %p84 = por %p82, %p83
      %p85 = scmp.ne.s32.totalorder %s77, %s79
      %p86 = scmp.eq.s32.totalorder %s27, 1
      %p87 = por %p85, %p86
      %p88 = scmp.ne.s32.totalorder %s79, %s80
      %p89 = scmp.eq.s32.totalorder %s27, 0
      %p90 = por %p88, %p89
      %p91 = scmp.ne.s32.totalorder %s79, %s80
      %p92 = scmp.eq.s32.totalorder %s28, 1
      %p93 = por %p91, %p92
      %p95 = scmp.ne.s32.totalorder %s80, %s94
      %p96 = scmp.eq.s32.totalorder %s28, 0
      %p97 = por %p95, %p96
      %s99 = sadd.s32 %s98, 1
      %p102 = scmp.eq.s32.totalorder %s22, 1
      %p103 = scmp.ne.s32.totalorder %s98, %s100
      %p104 = scmp.eq.s32.totalorder %s22, 0
      %p105 = por %p103, %p104
      %p106 = scmp.ne.s32.totalorder %s98, %s100
      %p107 = scmp.eq.s32.totalorder %s27, 1
      %p108 = por %p106, %p107
      %p109 = scmp.ne.s32.totalorder %s100, %s101
      %p110 = scmp.eq.s32.totalorder %s27, 0
      %p111 = por %p109, %p110
      %p112 = scmp.ne.s32.totalorder %s100, %s101
      %p113 = scmp.eq.s32.totalorder %s28, 1
      %p114 = por %p112, %p113
      %p116 = scmp.ne.s32.totalorder %s101, %s115
      %p117 = scmp.eq.s32.totalorder %s28, 0
      %p118 = por %p116, %p117
      %s120 = sadd.s32 %s119, 1
      %p123 = scmp.eq.s32.totalorder %s22, 1
      %p124 = scmp.ne.s32.totalorder %s119, %s121
      %p125 = scmp.eq.s32.totalorder %s22, 0
      %p126 = por %p124, %p125
      %p127 = scmp.ne.s32.totalorder %s119, %s121
      %p128 = scmp.eq.s32.totalorder %s27, 1
      %p129 = por %p127, %p128
      %p130 = scmp.ne.s32.totalorder %s121, %s122
      %p131 = scmp.eq.s32.totalorder %s27, 0
      %p132 = por %p130, %p131
      %p133 = scmp.ne.s32.totalorder %s121, %s122
      %p134 = scmp.eq.s32.totalorder %s28, 1
      %p135 = por %p133, %p134
      %p137 = scmp.ne.s32.totalorder %s122, %s136
      %p138 = scmp.eq.s32.totalorder %s28, 0
      %p139 = por %p137, %p138
      %s141 = sadd.s32 %s140, 1
      %p144 = scmp.eq.s32.totalorder %s22, 1
      %p145 = scmp.ne.s32.totalorder %s140, %s142
      %p146 = scmp.eq.s32.totalorder %s22, 0
      %p147 = por %p145, %p146
      %p148 = scmp.ne.s32.totalorder %s140, %s142
      %p149 = scmp.eq.s32.totalorder %s27, 1
      %p150 = por %p148, %p149
      %p151 = scmp.ne.s32.totalorder %s142, %s143
      %p152 = scmp.eq.s32.totalorder %s27, 0
      %p153 = por %p151, %p152
      %p154 = scmp.ne.s32.totalorder %s142, %s143
      %p155 = scmp.eq.s32.totalorder %s28, 1
      %p156 = por %p154, %p155
      %p158 = scmp.ne.s32.totalorder %s143, %s157
      %p159 = scmp.eq.s32.totalorder %s28, 0
      %p160 = por %p158, %p159
      %s162 = sadd.s32 %s161, 1
      %p165 = scmp.eq.s32.totalorder %s22, 1
      %p166 = scmp.ne.s32.totalorder %s161, %s163
      %p167 = scmp.eq.s32.totalorder %s22, 0
      %p168 = por %p166, %p167
      %p169 = scmp.ne.s32.totalorder %s161, %s163
      %p170 = scmp.eq.s32.totalorder %s27, 1
      %p171 = por %p169, %p170
      %p172 = scmp.ne.s32.totalorder %s163, %s164
      %p173 = scmp.eq.s32.totalorder %s27, 0
      %p174 = por %p172, %p173
      %p175 = scmp.ne.s32.totalorder %s163, %s164
      %p176 = scmp.eq.s32.totalorder %s28, 1
      %p177 = por %p175, %p176
      %p179 = scmp.ne.s32.totalorder %s164, %s178
      %p180 = scmp.eq.s32.totalorder %s28, 0
      %p181 = por %p179, %p180
      %s183 = sadd.s32 %s182, 1
      %p186 = scmp.eq.s32.totalorder %s22, 1
      %p187 = scmp.ne.s32.totalorder %s182, %s184
      %p188 = scmp.eq.s32.totalorder %s22, 0
      %p189 = por %p187, %p188
      %p190 = scmp.ne.s32.totalorder %s182, %s184
      %p191 = scmp.eq.s32.totalorder %s27, 1
      %p192 = por %p190, %p191
      %p193 = scmp.ne.s32.totalorder %s184, %s185
      %p194 = scmp.eq.s32.totalorder %s27, 0
      %p195 = por %p193, %p194
      %p196 = scmp.ne.s32.totalorder %s184, %s185
      %p197 = scmp.eq.s32.totalorder %s28, 1
      %p198 = por %p196, %p197
      %p200 = scmp.ne.s32.totalorder %s185, %s199
      %p201 = scmp.eq.s32.totalorder %s28, 0
      %p202 = por %p200, %p201
      %s204 = sadd.s32 %s203, 1
      %p207 = scmp.eq.s32.totalorder %s22, 1
      %p208 = scmp.ne.s32.totalorder %s203, %s205
      %p209 = scmp.eq.s32.totalorder %s22, 0
      %p210 = por %p208, %p209
      %p211 = scmp.ne.s32.totalorder %s203, %s205
      %p212 = scmp.eq.s32.totalorder %s27, 1
      %p213 = por %p211, %p212
      %p214 = scmp.ne.s32.totalorder %s205, %s206
      %p215 = scmp.eq.s32.totalorder %s27, 0
      %p216 = por %p214, %p215
      %p217 = scmp.ne.s32.totalorder %s205, %s206
      %p218 = scmp.eq.s32.totalorder %s28, 1
      %p219 = por %p217, %p218
      %p221 = scmp.ne.s32.totalorder %s206, %s220
      %p222 = scmp.eq.s32.totalorder %s28, 0
      %p223 = por %p221, %p222
      %s224 = ssub.s32 %s22, %s29
      %p225 = scmp.eq.s32.totalorder %s224, 0
      %s227 = sadd.s32 %s226, 1
      %s228 = scalar_select %p225, %s226, %s227
      %p231 = pneg %p225
      %p232 = scmp.eq.s32.totalorder %s22, 1
      %p233 = por %p231, %p232
      %p234 = scmp.ne.s32.totalorder %s226, %s229
      %p235 = scmp.eq.s32.totalorder %s22, 0
      %p236 = por %p234, %p235
      %p237 = scmp.ne.s32.totalorder %s226, %s229
      %p238 = scmp.eq.s32.totalorder %s27, 1
      %p239 = por %p237, %p238
      %p240 = scmp.ne.s32.totalorder %s229, %s230
      %p241 = scmp.eq.s32.totalorder %s27, 0
      %p242 = por %p240, %p241
      %p243 = scmp.ne.s32.totalorder %s229, %s230
      %p244 = scmp.eq.s32.totalorder %s28, 1
      %p245 = por %p243, %p244
      %p247 = scmp.ne.s32.totalorder %s230, %s246
      %p248 = scmp.eq.s32.totalorder %s28, 0
      %p249 = por %p247, %p248
      %p250 = scmp.le.s32.totalorder 1, %s22
      %p251 = scmp.lt.s32.totalorder %s22, 3
      %p252 = pnand %p250, %p251
      %p253 = pneg %p252
      // Predicated region
      $region9: #{tpu_custom_call.1} parent=5 // pred_check
        _
      $region10: #{tpu_custom_call.1} parent=5 // pred_check_branch
        %255 = sbr.rel (%p252) target = $region12
      $region11: #{tpu_custom_call.1} parent=5 // pred_region
        %s256 = ssub.s32 %s22, 1
        // Predicated region
        $region13: #{tpu_custom_call.1} parent=11 // pred_check
          %p257 = pneg %p69
        $region14: #{tpu_custom_call.1} parent=11 // pred_check_branch
          %259 = sbr.rel (%p257) target = $region16
        $region15: #{tpu_custom_call.1} parent=11 // pred_region
          _
        $region16: #{tpu_custom_call.1} parent=11 // pred_fallthru
          _
        // Predicated region
        $region17: #{tpu_custom_call.1} parent=11 // pred_check
          %p260 = pneg %p90
        $region18: #{tpu_custom_call.1} parent=11 // pred_check_branch
          %262 = sbr.rel (%p260) target = $region20
        $region19: #{tpu_custom_call.1} parent=11 // pred_region
          _
        $region20: #{tpu_custom_call.1} parent=11 // pred_fallthru
          _
        // Predicated region
        $region21: #{tpu_custom_call.1} parent=11 // pred_check
          %p263 = pneg %p111
        $region22: #{tpu_custom_call.1} parent=11 // pred_check_branch
          %265 = sbr.rel (%p263) target = $region24
        $region23: #{tpu_custom_call.1} parent=11 // pred_region
          %s267 = ssub.s32 16384, 16384
          %268 = vsyncadd [#allocation4], %s267
          %s269 = sshll.u32 [#allocation3], 4
          %s270 = int_to_ptr.vmem [resolvable:$true] %s269
          %275 = dma.hbm_to_vmem [thread:$0]  %s3, 16384, %s270, [#allocation4], 256, 256, 16
        $region24: #{tpu_custom_call.1} parent=11 // pred_fallthru
          _
        // Predicated region
        $region25: #{tpu_custom_call.1} parent=11 // pred_check
          %p276 = pneg %p132
        $region26: #{tpu_custom_call.1} parent=11 // pred_check_branch
          %278 = sbr.rel (%p276) target = $region28
        $region27: #{tpu_custom_call.1} parent=11 // pred_region
          _
        $region28: #{tpu_custom_call.1} parent=11 // pred_fallthru
          _
        // Predicated region
        $region29: #{tpu_custom_call.1} parent=11 // pred_check
          %p279 = pneg %p153
        $region30: #{tpu_custom_call.1} parent=11 // pred_check_branch
          %281 = sbr.rel (%p279) target = $region32
        $region31: #{tpu_custom_call.1} parent=11 // pred_region
          %s283 = ssub.s32 16384, 16384
          %284 = vsyncadd [#allocation7], %s283
          %s285 = sshll.u32 [#allocation6], 4
          %s286 = int_to_ptr.vmem [resolvable:$true] %s285
          %291 = dma.hbm_to_vmem [thread:$0]  %s5, 16384, %s286, [#allocation7], 256, 256, 16
        $region32: #{tpu_custom_call.1} parent=11 // pred_fallthru
          _
        // Predicated region
        $region33: #{tpu_custom_call.1} parent=11 // pred_check
          %p292 = pneg %p174
        $region34: #{tpu_custom_call.1} parent=11 // pred_check_branch
          %294 = sbr.rel (%p292) target = $region36
        $region35: #{tpu_custom_call.1} parent=11 // pred_region
          _
        $region36: #{tpu_custom_call.1} parent=11 // pred_fallthru
          _
        // Predicated region
        $region37: #{tpu_custom_call.1} parent=11 // pred_check
          %p295 = pneg %p195
        $region38: #{tpu_custom_call.1} parent=11 // pred_check_branch
          %297 = sbr.rel (%p295) target = $region40
        $region39: #{tpu_custom_call.1} parent=11 // pred_region
          _
        $region40: #{tpu_custom_call.1} parent=11 // pred_fallthru
          _
        // Predicated region
        $region41: #{tpu_custom_call.1} parent=11 // pred_check
          %p298 = pneg %p216
        $region42: #{tpu_custom_call.1} parent=11 // pred_check_branch
          %300 = sbr.rel (%p298) target = $region44
        $region43: #{tpu_custom_call.1} parent=11 // pred_region
          _
        $region44: #{tpu_custom_call.1} parent=11 // pred_fallthru
          _
      $region12: #{tpu_custom_call.1} parent=5 // pred_fallthru
        _
      %p301 = scmp.lt.s32.totalorder %s22, 2
      // Predicated region
      $region45: #{tpu_custom_call.1} parent=5 // pred_check
        %p302 = pneg %p301
      $region46: #{tpu_custom_call.1} parent=5 // pred_check_branch
        %304 = sbr.rel (%p302) target = $region48
      $region47: #{tpu_custom_call.1} parent=5 // pred_region
        // Predicated region
        $region49: #{tpu_custom_call.1} parent=47 // pred_check
          %p305 = pneg %p42
        $region50: #{tpu_custom_call.1} parent=47 // pred_check_branch
          %307 = sbr.rel (%p305) target = $region52
        $region51: #{tpu_custom_call.1} parent=47 // pred_region
          %s308 = smul.u32 32, %s22
          %p309 = scmp.lt.s32.totalorder %s308, 63
          %s310 = scalar_select %p309, %s308, 63
          %s311 = smul.addr %s310, 4
          %s312 = scalar_lea.vmem %s0, %s311
          %s313 = smul.u32 32, %s22
        $region52: #{tpu_custom_call.1} parent=47 // pred_fallthru
          _
      $region48: #{tpu_custom_call.1} parent=5 // pred_fallthru
        _
      %p314 = scmp.le.s32.totalorder 1, %s22
      %p315 = scmp.lt.s32.totalorder %s22, 3
      %p316 = pnand %p314, %p315
      %p317 = pneg %p316
      // Predicated region
      $region53: #{tpu_custom_call.1} parent=5 // pred_check
        _
      $region54: #{tpu_custom_call.1} parent=5 // pred_check_branch
        %319 = sbr.rel (%p316) target = $region56
      $region55: #{tpu_custom_call.1} parent=5 // pred_region
        %s320 = ssub.s32 %s22, 1
        // Predicated region
        $region57: #{tpu_custom_call.1} parent=55 // pred_check
          %p321 = pneg %p111
        $region58: #{tpu_custom_call.1} parent=55 // pred_check_branch
          %323 = sbr.rel (%p321) target = $region60
        $region59: #{tpu_custom_call.1} parent=55 // pred_region
          %324 = dma.done [#allocation4], 16384
        $region60: #{tpu_custom_call.1} parent=55 // pred_fallthru
          _
        // Predicated region
        $region61: #{tpu_custom_call.1} parent=55 // pred_check
          %p325 = pneg %p153
        $region62: #{tpu_custom_call.1} parent=55 // pred_check_branch
          %327 = sbr.rel (%p325) target = $region64
        $region63: #{tpu_custom_call.1} parent=55 // pred_region
          %328 = dma.done [#allocation7], 16384
        $region64: #{tpu_custom_call.1} parent=55 // pred_fallthru
          _
        %s329 = smul.u32 32, %s27
        %p330 = scmp.lt.s32.totalorder %s329, 63
        %s331 = scalar_select %p330, %s329, 63
        %s332 = smul.addr %s331, 4
        %s333 = scalar_lea.vmem %s0, %s332
        %p334 = pneg %p48
        %p335 = pneg %p45
        %p336 = pneg %p69
        %p337 = pneg %p66
        %p338 = pneg %p90
        %p339 = pneg %p87
        %p340 = pneg %p111
        %p341 = pneg %p108
        %p342 = pneg %p132
        %p343 = pneg %p129
        %p344 = pneg %p153
        %p345 = pneg %p150
        %p346 = pneg %p174
        %p347 = pneg %p171
        %p348 = pneg %p195
        %p349 = pneg %p192
        %p350 = pneg %p216
        %p351 = pneg %p213
        %p352 = pneg %p242
        %p353 = pneg %p239
        %s354 = sand.u32 %s229, 1
        %s355 = scalar_lea.sflag [#allocation5], %s354
        %s356 = sand.u32 %s229, 1
        %s357 = smul.addr %s356, 2
        %s358 = scalar_lea.vmem [#allocation8], %s357
        %s359 = smul.u32 32, %s27
        %p360 = scmp.lt.s32.totalorder %s359, 63
        %s361 = scalar_select %p360, %s359, 63
        %s362 = smul.addr %s361, 4
        %s363 = scalar_lea.vmem %s0, %s362
        %s364 = smul.u32 32, %s27
        %s365 = smul.u32 2, %s27
        %v367 = vld [vmem:[%s363] sm:$0xf]
        %v368 = vld [vmem:[%s363 + $0x4] sm:$0xf]
        %v369 = vld [vmem:[%s363 + $0x8] sm:$0xf]
        %v370 = vld [vmem:[%s363 + $0xc] sm:$0xf]
        %v371 = vld [vmem:[%s363 + $0x10] sm:$0xf]
        %v372 = vld [vmem:[%s363 + $0x14] sm:$0xf]
        %v373 = vld [vmem:[%s363 + $0x18] sm:$0xf]
        %v374 = vld [vmem:[%s363 + $0x1c] sm:$0xf]
        %v375 = vld [vmem:[%s363 + $0x20] sm:$0xf]
        %v376 = vld [vmem:[%s363 + $0x24] sm:$0xf]
        %v377 = vld [vmem:[%s363 + $0x28] sm:$0xf]
        %v378 = vld [vmem:[%s363 + $0x2c] sm:$0xf]
        %v379 = vld [vmem:[%s363 + $0x30] sm:$0xf]
        %v380 = vld [vmem:[%s363 + $0x34] sm:$0xf]
        %v381 = vld [vmem:[%s363 + $0x38] sm:$0xf]
        %v382 = vld [vmem:[%s363 + $0x3c] sm:$0xf]
        %v383 = vld [vmem:[%s363 + $0x40] sm:$0xf]
        %v384 = vld [vmem:[%s363 + $0x44] sm:$0xf]
        %v385 = vld [vmem:[%s363 + $0x48] sm:$0xf]
        %v386 = vld [vmem:[%s363 + $0x4c] sm:$0xf]
        %v387 = vld [vmem:[%s363 + $0x50] sm:$0xf]
        %v388 = vld [vmem:[%s363 + $0x54] sm:$0xf]
        %v389 = vld [vmem:[%s363 + $0x58] sm:$0xf]
        %v390 = vld [vmem:[%s363 + $0x5c] sm:$0xf]
        %v391 = vld [vmem:[%s363 + $0x60] sm:$0xf]
        %v392 = vld [vmem:[%s363 + $0x64] sm:$0xf]
        %v393 = vld [vmem:[%s363 + $0x68] sm:$0xf]
        %v394 = vld [vmem:[%s363 + $0x6c] sm:$0xf]
        %v395 = vld [vmem:[%s363 + $0x70] sm:$0xf]
        %v396 = vld [vmem:[%s363 + $0x74] sm:$0xf]
        %v397 = vld [vmem:[%s363 + $0x78] sm:$0xf]
        %v398 = vld [vmem:[%s363 + $0x7c] sm:$0xf]
        %v399 = vld [vmem:[%s1] sm:$0xff]
        %v400 = vld [vmem:[%s1 + $0x8] sm:$0xff]
        %v401 = vld [vmem:[%s1 + $0x10] sm:$0xff]
        %v402 = vld [vmem:[%s1 + $0x18] sm:$0xff]
        %v403 = vld [vmem:[%s1 + $0x20] sm:$0xff]
        %v404 = vld [vmem:[%s1 + $0x28] sm:$0xff]
        %v405 = vld [vmem:[%s1 + $0x30] sm:$0xff]
        %v406 = vld [vmem:[%s1 + $0x38] sm:$0xff]
        %v407 = vld [vmem:[%s2] sm:$0xf]
        %v409 = vlaneseq
        %v410 = vshrl.u32 %v409, 7
        %v411 = vsub.s32 0, %v410
        %v412 = vrot.slane %v407, %v411
        %v413 = vlaneseq
        %v414 = vshrl.u32 %v413, 7
        %v415 = vsub.s32 1, %v414
        %v416 = vrot.slane %v407, %v415
        %v417 = vlaneseq
        %v418 = vshrl.u32 %v417, 7
        %v419 = vsub.s32 2, %v418
        %v420 = vrot.slane %v407, %v419
        %v421 = vlaneseq
        %v422 = vshrl.u32 %v421, 7
        %v423 = vsub.s32 3, %v422
        %v424 = vrot.slane %v407, %v423
        %v461 = vunpack.c.l.b16 %v367
        %v462 = vunpack.c.l.b16 %v368
        %v463 = vunpack.c.l.b16 %v369
        %v464 = vunpack.c.l.b16 %v370
        %v465 = vunpack.c.l.b16 %v371
        %v466 = vunpack.c.l.b16 %v372
        %v467 = vunpack.c.l.b16 %v373
        %v468 = vunpack.c.l.b16 %v374
        %v469 = vunpack.c.l.b16 %v375
        %v470 = vunpack.c.l.b16 %v376
        %v471 = vunpack.c.l.b16 %v377
        %v472 = vunpack.c.l.b16 %v378
        %v473 = vunpack.c.l.b16 %v379
        %v474 = vunpack.c.l.b16 %v380
        %v475 = vunpack.c.l.b16 %v381
        %v476 = vunpack.c.l.b16 %v382
        %v477 = vunpack.c.l.b16 %v383
        %v478 = vunpack.c.l.b16 %v384
        %v479 = vunpack.c.l.b16 %v385
        %v480 = vunpack.c.l.b16 %v386
        %v481 = vunpack.c.l.b16 %v387
        %v482 = vunpack.c.l.b16 %v388
        %v483 = vunpack.c.l.b16 %v389
        %v484 = vunpack.c.l.b16 %v390
        %v485 = vunpack.c.l.b16 %v391
        %v486 = vunpack.c.l.b16 %v392
        %v487 = vunpack.c.l.b16 %v393
        %v488 = vunpack.c.l.b16 %v394
        %v489 = vunpack.c.l.b16 %v395
        %v490 = vunpack.c.l.b16 %v396
        %v491 = vunpack.c.l.b16 %v397
        %v492 = vunpack.c.l.b16 %v398
        %v493 = vpack.c.b16 %v462, %v461
        %v494 = vpack.c.b16 %v464, %v463
        %v495 = vpack.c.b16 %v466, %v465
        %v496 = vpack.c.b16 %v468, %v467
        %v497 = vpack.c.b16 %v470, %v469
        %v498 = vpack.c.b16 %v472, %v471
        %v499 = vpack.c.b16 %v474, %v473
        %v500 = vpack.c.b16 %v476, %v475
        %v501 = vpack.c.b16 %v478, %v477
        %v502 = vpack.c.b16 %v480, %v479
        %v503 = vpack.c.b16 %v482, %v481
        %v504 = vpack.c.b16 %v484, %v483
        %v505 = vpack.c.b16 %v486, %v485
        %v506 = vpack.c.b16 %v488, %v487
        %v507 = vpack.c.b16 %v490, %v489
        %v508 = vpack.c.b16 %v492, %v491
        %v517 = vunpack.c.l.b16 %v399
        %v518 = vunpack.c.h.b16 %v399
        %v519 = vunpack.c.l.b16 %v400
        %v520 = vunpack.c.h.b16 %v400
        %v521 = vunpack.c.l.b16 %v401
        %v522 = vunpack.c.h.b16 %v401
        %v523 = vunpack.c.l.b16 %v402
        %v524 = vunpack.c.h.b16 %v402
        %v525 = vunpack.c.l.b16 %v403
        %v526 = vunpack.c.h.b16 %v403
        %v527 = vunpack.c.l.b16 %v404
        %v528 = vunpack.c.h.b16 %v404
        %v529 = vunpack.c.l.b16 %v405
        %v530 = vunpack.c.h.b16 %v405
        %v531 = vunpack.c.l.b16 %v406
        %v532 = vunpack.c.h.b16 %v406
        %v533 = vpack.c.b16 %v521, %v517
        %v534 = vpack.c.b16 %v522, %v518
        %v535 = vpack.c.b16 %v523, %v519
        %v536 = vpack.c.b16 %v524, %v520
        %v537 = vpack.c.b16 %v529, %v525
        %v538 = vpack.c.b16 %v530, %v526
        %v539 = vpack.c.b16 %v531, %v527
        %v540 = vpack.c.b16 %v532, %v528
        %vm549 = vcmask 261120
        %v551 = vsel %vm549, %v493, 0
        %v554 = vsel %vm549, %v494, 0
        %v557 = vsel %vm549, %v495, 0
        %v560 = vsel %vm549, %v496, 0
        %v563 = vsel %vm549, %v497, 0
        %v566 = vsel %vm549, %v498, 0
        %v569 = vsel %vm549, %v499, 0
        %v572 = vsel %vm549, %v500, 0
        %v575 = vsel %vm549, %v501, 0
        %v578 = vsel %vm549, %v502, 0
        %v581 = vsel %vm549, %v503, 0
        %v584 = vsel %vm549, %v504, 0
        %v587 = vsel %vm549, %v505, 0
        %v590 = vsel %vm549, %v506, 0
        %v593 = vsel %vm549, %v507, 0
        %v596 = vsel %vm549, %v508, 0
        %598 = vmatprep.subr.bf16.mxu0 %v534
        %599 = vmatpush1.bf16.msra.mxu0 %v533
        %600 = vmatprep.subr.bf16.mxu0 %v538
        %601 = vmatpush1.bf16.msra.mxu0 %v537
        %602 = vmatprep.subr.bf16.mxu0 0
        %603 = vmatpush1.bf16.msra.mxu0 0
        %604 = vmatprep.subr.bf16.mxu0 0
        %605 = vmatpush1.bf16.msra.mxu0 0
        %606 = vmatprep.subr.bf16.mxu0 0
        %607 = vmatpush1.bf16.msra.mxu0 0
        %608 = vmatprep.subr.bf16.mxu0 0
        %609 = vmatpush1.bf16.msra.mxu0 0
        %610 = vmatprep.subr.bf16.mxu0 0
        %611 = vmatpush1.bf16.msra.mxu0 0
        %612 = vmatprep.subr.bf16.mxu0 0
        %613 = vmatpush1.bf16.msra.mxu0 0
        %614 = vmatprep.subr.bf16.mxu0 0
        %615 = vmatpush1.bf16.msra.mxu0 0
        %616 = vmatprep.subr.bf16.mxu0 0
        %617 = vmatpush1.bf16.msra.mxu0 0
        %618 = vmatprep.subr.bf16.mxu0 0
        %619 = vmatpush1.bf16.msra.mxu0 0
        %620 = vmatprep.subr.bf16.mxu0 0
        %621 = vmatpush1.bf16.msra.mxu0 0
        %622 = vmatprep.subr.bf16.mxu0 0
        %623 = vmatpush1.bf16.msra.mxu0 0
        %624 = vmatprep.subr.bf16.mxu0 0
        %625 = vmatpush1.bf16.msra.mxu0 0
        %626 = vmatprep.subr.bf16.mxu0 0
        %627 = vmatpush1.bf16.msra.mxu0 0
        %628 = vmatprep.subr.bf16.mxu0 0
        %629 = vmatpush1.bf16.msra.mxu0 0
        %630 = vmatprep.mubr.bf16.mxu0 0
        %631 = vmatmul.mubr.bf16.gmra.mrb[0].mxu0 %v551
        %v632 = vpop.f32.mrb[0].mxu0
        %v633 = vadd.f32 %v412, %v632
        %v634 = vpop.f32.mrb[0].mxu0
        %v635 = vadd.f32 %v416, %v634
        %v636 = vpop.f32.mrb[0].mxu0
        %v637 = vadd.f32 %v412, %v636
        %v638 = vpop.f32.mrb[0].mxu0
        %v639 = vadd.f32 %v416, %v638
        %640 = vmatprep.mubr.bf16.mxu0 0
        %641 = vmatmul.mubr.bf16.gmra.mrb[0].mxu0 %v554
        %v642 = vpop.f32.mrb[0].mxu0
        %v643 = vadd.f32 %v412, %v642
        %v644 = vpop.f32.mrb[0].mxu0
        %v645 = vadd.f32 %v416, %v644
        %v646 = vpop.f32.mrb[0].mxu0
        %v647 = vadd.f32 %v412, %v646
        %v648 = vpop.f32.mrb[0].mxu0
        %v649 = vadd.f32 %v416, %v648
        %650 = vmatprep.mubr.bf16.mxu0 0
        %651 = vmatmul.mubr.bf16.gmra.mrb[0].mxu0 %v557
        %v652 = vpop.f32.mrb[0].mxu0
        %v653 = vadd.f32 %v412, %v652
        %v654 = vpop.f32.mrb[0].mxu0
        %v655 = vadd.f32 %v416, %v654
        %v656 = vpop.f32.mrb[0].mxu0
        %v657 = vadd.f32 %v412, %v656
        %v658 = vpop.f32.mrb[0].mxu0
        %v659 = vadd.f32 %v416, %v658
        %660 = vmatprep.mubr.bf16.mxu0 0
        %661 = vmatmul.mubr.bf16.gmra.mrb[0].mxu0 %v560
        %v662 = vpop.f32.mrb[0].mxu0
        %v663 = vadd.f32 %v412, %v662
        %v664 = vpop.f32.mrb[0].mxu0
        %v665 = vadd.f32 %v416, %v664
        %v666 = vpop.f32.mrb[0].mxu0
        %v667 = vadd.f32 %v412, %v666
        %v668 = vpop.f32.mrb[0].mxu0
        %v669 = vadd.f32 %v416, %v668
        %670 = vmatprep.mubr.bf16.mxu0 0
        %671 = vmatmul.mubr.bf16.gmra.mrb[0].mxu0 %v563
        %v672 = vpop.f32.mrb[0].mxu0
        %v673 = vadd.f32 %v412, %v672
        %v674 = vpop.f32.mrb[0].mxu0
        %v675 = vadd.f32 %v416, %v674
        %v676 = vpop.f32.mrb[0].mxu0
        %v677 = vadd.f32 %v412, %v676
        %v678 = vpop.f32.mrb[0].mxu0
        %v679 = vadd.f32 %v416, %v678
        %680 = vmatprep.mubr.bf16.mxu0 0
        %681 = vmatmul.mubr.bf16.gmra.mrb[0].mxu0 %v566
        %v682 = vpop.f32.mrb[0].mxu0
        %v683 = vadd.f32 %v412, %v682
        %v684 = vpop.f32.mrb[0].mxu0
        %v685 = vadd.f32 %v416, %v684
        %v686 = vpop.f32.mrb[0].mxu0
        %v687 = vadd.f32 %v412, %v686
        %v688 = vpop.f32.mrb[0].mxu0
        %v689 = vadd.f32 %v416, %v688
        %690 = vmatprep.mubr.bf16.mxu0 0
        %691 = vmatmul.mubr.bf16.gmra.mrb[0].mxu0 %v569
        %v692 = vpop.f32.mrb[0].mxu0
        %v693 = vadd.f32 %v412, %v692
        %v694 = vpop.f32.mrb[0].mxu0
        %v695 = vadd.f32 %v416, %v694
        %v696 = vpop.f32.mrb[0].mxu0
        %v697 = vadd.f32 %v412, %v696
        %v698 = vpop.f32.mrb[0].mxu0
        %v699 = vadd.f32 %v416, %v698
        %700 = vmatprep.mubr.bf16.mxu0 0
        %701 = vmatmul.mubr.bf16.gmra.mrb[0].mxu0 %v572
        %v702 = vpop.f32.mrb[0].mxu0
        %v703 = vadd.f32 %v412, %v702
        %v704 = vpop.f32.mrb[0].mxu0
        %v705 = vadd.f32 %v416, %v704
        %v706 = vpop.f32.mrb[0].mxu0
        %v707 = vadd.f32 %v412, %v706
        %v708 = vpop.f32.mrb[0].mxu0
        %v709 = vadd.f32 %v416, %v708
        %710 = vmatprep.mubr.bf16.mxu0 0
        %711 = vmatmul.mubr.bf16.gmra.mrb[0].mxu0 %v575
        %v712 = vpop.f32.mrb[0].mxu0
        %v713 = vadd.f32 %v412, %v712
        %v714 = vpop.f32.mrb[0].mxu0
        %v715 = vadd.f32 %v416, %v714
        %v716 = vpop.f32.mrb[0].mxu0
        %v717 = vadd.f32 %v412, %v716
        %v718 = vpop.f32.mrb[0].mxu0
        %v719 = vadd.f32 %v416, %v718
        %720 = vmatprep.mubr.bf16.mxu0 0
        %721 = vmatmul.mubr.bf16.gmra.mrb[0].mxu0 %v578
        %v722 = vpop.f32.mrb[0].mxu0
        %v723 = vadd.f32 %v412, %v722
        %v724 = vpop.f32.mrb[0].mxu0
        %v725 = vadd.f32 %v416, %v724
        %v726 = vpop.f32.mrb[0].mxu0
        %v727 = vadd.f32 %v412, %v726
        %v728 = vpop.f32.mrb[0].mxu0
        %v729 = vadd.f32 %v416, %v728
        %730 = vmatprep.mubr.bf16.mxu0 0
        %731 = vmatmul.mubr.bf16.gmra.mrb[0].mxu0 %v581
        %v732 = vpop.f32.mrb[0].mxu0
        %v733 = vadd.f32 %v412, %v732
        %v734 = vpop.f32.mrb[0].mxu0
        %v735 = vadd.f32 %v416, %v734
        %v736 = vpop.f32.mrb[0].mxu0
        %v737 = vadd.f32 %v412, %v736
        %v738 = vpop.f32.mrb[0].mxu0
        %v739 = vadd.f32 %v416, %v738
        %740 = vmatprep.mubr.bf16.mxu0 0
        %741 = vmatmul.mubr.bf16.gmra.mrb[0].mxu0 %v584
        %v742 = vpop.f32.mrb[0].mxu0
        %v743 = vadd.f32 %v412, %v742
        %v744 = vpop.f32.mrb[0].mxu0
        %v745 = vadd.f32 %v416, %v744
        %v746 = vpop.f32.mrb[0].mxu0
        %v747 = vadd.f32 %v412, %v746
        %v748 = vpop.f32.mrb[0].mxu0
        %v749 = vadd.f32 %v416, %v748
        %750 = vmatprep.mubr.bf16.mxu0 0
        %751 = vmatmul.mubr.bf16.gmra.mrb[0].mxu0 %v587
        %v752 = vpop.f32.mrb[0].mxu0
        %v753 = vadd.f32 %v412, %v752
        %v754 = vpop.f32.mrb[0].mxu0
        %v755 = vadd.f32 %v416, %v754
        %v756 = vpop.f32.mrb[0].mxu0
        %v757 = vadd.f32 %v412, %v756
        %v758 = vpop.f32.mrb[0].mxu0
        %v759 = vadd.f32 %v416, %v758
        %760 = vmatprep.mubr.bf16.mxu0 0
        %761 = vmatmul.mubr.bf16.gmra.mrb[0].mxu0 %v590
        %v762 = vpop.f32.mrb[0].mxu0
        %v763 = vadd.f32 %v412, %v762
        %v764 = vpop.f32.mrb[0].mxu0
        %v765 = vadd.f32 %v416, %v764
        %v766 = vpop.f32.mrb[0].mxu0
        %v767 = vadd.f32 %v412, %v766
        %v768 = vpop.f32.mrb[0].mxu0
        %v769 = vadd.f32 %v416, %v768
        %770 = vmatprep.mubr.bf16.mxu0 0
        %771 = vmatmul.mubr.bf16.gmra.mrb[0].mxu0 %v593
        %v772 = vpop.f32.mrb[0].mxu0
        %v773 = vadd.f32 %v412, %v772
        %v774 = vpop.f32.mrb[0].mxu0
        %v775 = vadd.f32 %v416, %v774
        %v776 = vpop.f32.mrb[0].mxu0
        %v777 = vadd.f32 %v412, %v776
        %v778 = vpop.f32.mrb[0].mxu0
        %v779 = vadd.f32 %v416, %v778
        %780 = vmatprep.mubr.bf16.mxu0 0
        %781 = vmatmul.mubr.bf16.gmra.mrb[0].mxu0 %v596
        %v782 = vpop.f32.mrb[0].mxu0
        %v783 = vadd.f32 %v412, %v782
        %v784 = vpop.f32.mrb[0].mxu0
        %v785 = vadd.f32 %v416, %v784
        %v786 = vpop.f32.mrb[0].mxu0
        %v787 = vadd.f32 %v412, %v786
        %v788 = vpop.f32.mrb[0].mxu0
        %v789 = vadd.f32 %v416, %v788
        %790 = vdwg.mxu0
        %791 = vmatprep.subr.bf16.mxu0 %v536
        %792 = vmatpush1.bf16.msra.mxu0 %v535
        %793 = vmatprep.subr.bf16.mxu0 %v540
        %794 = vmatpush1.bf16.msra.mxu0 %v539
        %795 = vmatprep.subr.bf16.mxu0 0
        %796 = vmatpush1.bf16.msra.mxu0 0
        %797 = vmatprep.subr.bf16.mxu0 0
        %798 = vmatpush1.bf16.msra.mxu0 0
        %799 = vmatprep.subr.bf16.mxu0 0
        %800 = vmatpush1.bf16.msra.mxu0 0
        %801 = vmatprep.subr.bf16.mxu0 0
        %802 = vmatpush1.bf16.msra.mxu0 0
        %803 = vmatprep.subr.bf16.mxu0 0
        %804 = vmatpush1.bf16.msra.mxu0 0
        %805 = vmatprep.subr.bf16.mxu0 0
        %806 = vmatpush1.bf16.msra.mxu0 0
        %807 = vmatprep.subr.bf16.mxu0 0
        %808 = vmatpush1.bf16.msra.mxu0 0
        %809 = vmatprep.subr.bf16.mxu0 0
        %810 = vmatpush1.bf16.msra.mxu0 0
        %811 = vmatprep.subr.bf16.mxu0 0
        %812 = vmatpush1.bf16.msra.mxu0 0
        %813 = vmatprep.subr.bf16.mxu0 0
        %814 = vmatpush1.bf16.msra.mxu0 0
        %815 = vmatprep.subr.bf16.mxu0 0
        %816 = vmatpush1.bf16.msra.mxu0 0
        %817 = vmatprep.subr.bf16.mxu0 0
        %818 = vmatpush1.bf16.msra.mxu0 0
        %819 = vmatprep.subr.bf16.mxu0 0
        %820 = vmatpush1.bf16.msra.mxu0 0
        %821 = vmatprep.subr.bf16.mxu0 0
        %822 = vmatpush1.bf16.msra.mxu0 0
        %823 = vmatprep.mubr.bf16.mxu0 0
        %824 = vmatmul.mubr.bf16.gmra.mrb[0].mxu0 %v551
        %v825 = vpop.f32.mrb[0].mxu0
        %v826 = vadd.f32 %v420, %v825
        %v827 = vpop.f32.mrb[0].mxu0
        %v828 = vadd.f32 %v424, %v827
        %v829 = vpop.f32.mrb[0].mxu0
        %v830 = vadd.f32 %v420, %v829
        %v831 = vpop.f32.mrb[0].mxu0
        %v832 = vadd.f32 %v424, %v831
        %833 = vmatprep.mubr.bf16.mxu0 0
        %834 = vmatmul.mubr.bf16.gmra.mrb[0].mxu0 %v554
        %v835 = vpop.f32.mrb[0].mxu0
        %v836 = vadd.f32 %v420, %v835
        %v837 = vpop.f32.mrb[0].mxu0
        %v838 = vadd.f32 %v424, %v837
        %v839 = vpop.f32.mrb[0].mxu0
        %v840 = vadd.f32 %v420, %v839
        %v841 = vpop.f32.mrb[0].mxu0
        %v842 = vadd.f32 %v424, %v841
        %843 = vmatprep.mubr.bf16.mxu0 0
        %844 = vmatmul.mubr.bf16.gmra.mrb[0].mxu0 %v557
        %v845 = vpop.f32.mrb[0].mxu0
        %v846 = vadd.f32 %v420, %v845
        %v847 = vpop.f32.mrb[0].mxu0
        %v848 = vadd.f32 %v424, %v847
        %v849 = vpop.f32.mrb[0].mxu0
        %v850 = vadd.f32 %v420, %v849
        %v851 = vpop.f32.mrb[0].mxu0
        %v852 = vadd.f32 %v424, %v851
        %853 = vmatprep.mubr.bf16.mxu0 0
        %854 = vmatmul.mubr.bf16.gmra.mrb[0].mxu0 %v560
        %v855 = vpop.f32.mrb[0].mxu0
        %v856 = vadd.f32 %v420, %v855
        %v857 = vpop.f32.mrb[0].mxu0
        %v858 = vadd.f32 %v424, %v857
        %v859 = vpop.f32.mrb[0].mxu0
        %v860 = vadd.f32 %v420, %v859
        %v861 = vpop.f32.mrb[0].mxu0
        %v862 = vadd.f32 %v424, %v861
        %863 = vmatprep.mubr.bf16.mxu0 0
        %864 = vmatmul.mubr.bf16.gmra.mrb[0].mxu0 %v563
        %v865 = vpop.f32.mrb[0].mxu0
        %v866 = vadd.f32 %v420, %v865
        %v867 = vpop.f32.mrb[0].mxu0
        %v868 = vadd.f32 %v424, %v867
        %v869 = vpop.f32.mrb[0].mxu0
        %v870 = vadd.f32 %v420, %v869
        %v871 = vpop.f32.mrb[0].mxu0
        %v872 = vadd.f32 %v424, %v871
        %873 = vmatprep.mubr.bf16.mxu0 0
        %874 = vmatmul.mubr.bf16.gmra.mrb[0].mxu0 %v566
        %v875 = vpop.f32.mrb[0].mxu0
        %v876 = vadd.f32 %v420, %v875
        %v877 = vpop.f32.mrb[0].mxu0
        %v878 = vadd.f32 %v424, %v877
        %v879 = vpop.f32.mrb[0].mxu0
        %v880 = vadd.f32 %v420, %v879
        %v881 = vpop.f32.mrb[0].mxu0
        %v882 = vadd.f32 %v424, %v881
        %883 = vmatprep.mubr.bf16.mxu0 0
        %884 = vmatmul.mubr.bf16.gmra.mrb[0].mxu0 %v569
        %v885 = vpop.f32.mrb[0].mxu0
        %v886 = vadd.f32 %v420, %v885
        %v887 = vpop.f32.mrb[0].mxu0
        %v888 = vadd.f32 %v424, %v887
        %v889 = vpop.f32.mrb[0].mxu0
        %v890 = vadd.f32 %v420, %v889
        %v891 = vpop.f32.mrb[0].mxu0
        %v892 = vadd.f32 %v424, %v891
        %893 = vmatprep.mubr.bf16.mxu0 0
        %894 = vmatmul.mubr.bf16.gmra.mrb[0].mxu0 %v572
        %v895 = vpop.f32.mrb[0].mxu0
        %v896 = vadd.f32 %v420, %v895
        %v897 = vpop.f32.mrb[0].mxu0
        %v898 = vadd.f32 %v424, %v897
        %v899 = vpop.f32.mrb[0].mxu0
        %v900 = vadd.f32 %v420, %v899
        %v901 = vpop.f32.mrb[0].mxu0
        %v902 = vadd.f32 %v424, %v901
        %903 = vmatprep.mubr.bf16.mxu0 0
        %904 = vmatmul.mubr.bf16.gmra.mrb[0].mxu0 %v575
        %v905 = vpop.f32.mrb[0].mxu0
        %v906 = vadd.f32 %v420, %v905
        %v907 = vpop.f32.mrb[0].mxu0
        %v908 = vadd.f32 %v424, %v907
        %v909 = vpop.f32.mrb[0].mxu0
        %v910 = vadd.f32 %v420, %v909
        %v911 = vpop.f32.mrb[0].mxu0
        %v912 = vadd.f32 %v424, %v911
        %913 = vmatprep.mubr.bf16.mxu0 0
        %914 = vmatmul.mubr.bf16.gmra.mrb[0].mxu0 %v578
        %v915 = vpop.f32.mrb[0].mxu0
        %v916 = vadd.f32 %v420, %v915
        %v917 = vpop.f32.mrb[0].mxu0
        %v918 = vadd.f32 %v424, %v917
        %v919 = vpop.f32.mrb[0].mxu0
        %v920 = vadd.f32 %v420, %v919
        %v921 = vpop.f32.mrb[0].mxu0
        %v922 = vadd.f32 %v424, %v921
        %923 = vmatprep.mubr.bf16.mxu0 0
        %924 = vmatmul.mubr.bf16.gmra.mrb[0].mxu0 %v581
        %v925 = vpop.f32.mrb[0].mxu0
        %v926 = vadd.f32 %v420, %v925
        %v927 = vpop.f32.mrb[0].mxu0
        %v928 = vadd.f32 %v424, %v927
        %v929 = vpop.f32.mrb[0].mxu0
        %v930 = vadd.f32 %v420, %v929
        %v931 = vpop.f32.mrb[0].mxu0
        %v932 = vadd.f32 %v424, %v931
        %933 = vmatprep.mubr.bf16.mxu0 0
        %934 = vmatmul.mubr.bf16.gmra.mrb[0].mxu0 %v584
        %v935 = vpop.f32.mrb[0].mxu0
        %v936 = vadd.f32 %v420, %v935
        %v937 = vpop.f32.mrb[0].mxu0
        %v938 = vadd.f32 %v424, %v937
        %v939 = vpop.f32.mrb[0].mxu0
        %v940 = vadd.f32 %v420, %v939
        %v941 = vpop.f32.mrb[0].mxu0
        %v942 = vadd.f32 %v424, %v941
        %943 = vmatprep.mubr.bf16.mxu0 0
        %944 = vmatmul.mubr.bf16.gmra.mrb[0].mxu0 %v587
        %v945 = vpop.f32.mrb[0].mxu0
        %v946 = vadd.f32 %v420, %v945
        %v947 = vpop.f32.mrb[0].mxu0
        %v948 = vadd.f32 %v424, %v947
        %v949 = vpop.f32.mrb[0].mxu0
        %v950 = vadd.f32 %v420, %v949
        %v951 = vpop.f32.mrb[0].mxu0
        %v952 = vadd.f32 %v424, %v951
        %953 = vmatprep.mubr.bf16.mxu0 0
        %954 = vmatmul.mubr.bf16.gmra.mrb[0].mxu0 %v590
        %v955 = vpop.f32.mrb[0].mxu0
        %v956 = vadd.f32 %v420, %v955
        %v957 = vpop.f32.mrb[0].mxu0
        %v958 = vadd.f32 %v424, %v957
        %v959 = vpop.f32.mrb[0].mxu0
        %v960 = vadd.f32 %v420, %v959
        %v961 = vpop.f32.mrb[0].mxu0
        %v962 = vadd.f32 %v424, %v961
        %963 = vmatprep.mubr.bf16.mxu0 0
        %964 = vmatmul.mubr.bf16.gmra.mrb[0].mxu0 %v593
        %v965 = vpop.f32.mrb[0].mxu0
        %v966 = vadd.f32 %v420, %v965
        %v967 = vpop.f32.mrb[0].mxu0
        %v968 = vadd.f32 %v424, %v967
        %v969 = vpop.f32.mrb[0].mxu0
        %v970 = vadd.f32 %v420, %v969
        %v971 = vpop.f32.mrb[0].mxu0
        %v972 = vadd.f32 %v424, %v971
        %973 = vmatprep.mubr.bf16.mxu0 0
        %974 = vmatmul.mubr.bf16.gmra.mrb[0].mxu0 %v596
        %v975 = vpop.f32.mrb[0].mxu0
        %v976 = vadd.f32 %v420, %v975
        %v977 = vpop.f32.mrb[0].mxu0
        %v978 = vadd.f32 %v424, %v977
        %v979 = vpop.f32.mrb[0].mxu0
        %v980 = vadd.f32 %v420, %v979
        %v981 = vpop.f32.mrb[0].mxu0
        %v982 = vadd.f32 %v424, %v981
        %983 = vdwg.mxu0
        %v984 = vmax.f32 %v633, 0.0
        %v985 = vmax.f32 %v635, 0.0
        %v986 = vmax.f32 %v826, 0.0
        %v987 = vmax.f32 %v828, 0.0
        %v988 = vmax.f32 %v637, 0.0
        %v989 = vmax.f32 %v639, 0.0
        %v990 = vmax.f32 %v830, 0.0
        %v991 = vmax.f32 %v832, 0.0
        %v992 = vmax.f32 %v643, 0.0
        %v993 = vmax.f32 %v645, 0.0
        %v994 = vmax.f32 %v836, 0.0
        %v995 = vmax.f32 %v838, 0.0
        %v996 = vmax.f32 %v647, 0.0
        %v997 = vmax.f32 %v649, 0.0
        %v998 = vmax.f32 %v840, 0.0
        %v999 = vmax.f32 %v842, 0.0
        %v1000 = vmax.f32 %v653, 0.0
        %v1001 = vmax.f32 %v655, 0.0
        %v1002 = vmax.f32 %v846, 0.0
        %v1003 = vmax.f32 %v848, 0.0
        %v1004 = vmax.f32 %v657, 0.0
        %v1005 = vmax.f32 %v659, 0.0
        %v1006 = vmax.f32 %v850, 0.0
        %v1007 = vmax.f32 %v852, 0.0
        %v1008 = vmax.f32 %v663, 0.0
        %v1009 = vmax.f32 %v665, 0.0
        %v1010 = vmax.f32 %v856, 0.0
        %v1011 = vmax.f32 %v858, 0.0
        %v1012 = vmax.f32 %v667, 0.0
        %v1013 = vmax.f32 %v669, 0.0
        %v1014 = vmax.f32 %v860, 0.0
        %v1015 = vmax.f32 %v862, 0.0
        %v1016 = vmax.f32 %v673, 0.0
        %v1017 = vmax.f32 %v675, 0.0
        %v1018 = vmax.f32 %v866, 0.0
        %v1019 = vmax.f32 %v868, 0.0
        %v1020 = vmax.f32 %v677, 0.0
        %v1021 = vmax.f32 %v679, 0.0
        %v1022 = vmax.f32 %v870, 0.0
        %v1023 = vmax.f32 %v872, 0.0
        %v1024 = vmax.f32 %v683, 0.0
        %v1025 = vmax.f32 %v685, 0.0
        %v1026 = vmax.f32 %v876, 0.0
        %v1027 = vmax.f32 %v878, 0.0
        %v1028 = vmax.f32 %v687, 0.0
        %v1029 = vmax.f32 %v689, 0.0
        %v1030 = vmax.f32 %v880, 0.0
        %v1031 = vmax.f32 %v882, 0.0
        %v1032 = vmax.f32 %v693, 0.0
        %v1033 = vmax.f32 %v695, 0.0
        %v1034 = vmax.f32 %v886, 0.0
        %v1035 = vmax.f32 %v888, 0.0
        %v1036 = vmax.f32 %v697, 0.0
        %v1037 = vmax.f32 %v699, 0.0
        %v1038 = vmax.f32 %v890, 0.0
        %v1039 = vmax.f32 %v892, 0.0
        %v1040 = vmax.f32 %v703, 0.0
        %v1041 = vmax.f32 %v705, 0.0
        %v1042 = vmax.f32 %v896, 0.0
        %v1043 = vmax.f32 %v898, 0.0
        %v1044 = vmax.f32 %v707, 0.0
        %v1045 = vmax.f32 %v709, 0.0
        %v1046 = vmax.f32 %v900, 0.0
        %v1047 = vmax.f32 %v902, 0.0
        %v1048 = vmax.f32 %v713, 0.0
        %v1049 = vmax.f32 %v715, 0.0
        %v1050 = vmax.f32 %v906, 0.0
        %v1051 = vmax.f32 %v908, 0.0
        %v1052 = vmax.f32 %v717, 0.0
        %v1053 = vmax.f32 %v719, 0.0
        %v1054 = vmax.f32 %v910, 0.0
        %v1055 = vmax.f32 %v912, 0.0
        %v1056 = vmax.f32 %v723, 0.0
        %v1057 = vmax.f32 %v725, 0.0
        %v1058 = vmax.f32 %v916, 0.0
        %v1059 = vmax.f32 %v918, 0.0
        %v1060 = vmax.f32 %v727, 0.0
        %v1061 = vmax.f32 %v729, 0.0
        %v1062 = vmax.f32 %v920, 0.0
        %v1063 = vmax.f32 %v922, 0.0
        %v1064 = vmax.f32 %v733, 0.0
        %v1065 = vmax.f32 %v735, 0.0
        %v1066 = vmax.f32 %v926, 0.0
        %v1067 = vmax.f32 %v928, 0.0
        %v1068 = vmax.f32 %v737, 0.0
        %v1069 = vmax.f32 %v739, 0.0
        %v1070 = vmax.f32 %v930, 0.0
        %v1071 = vmax.f32 %v932, 0.0
        %v1072 = vmax.f32 %v743, 0.0
        %v1073 = vmax.f32 %v745, 0.0
        %v1074 = vmax.f32 %v936, 0.0
        %v1075 = vmax.f32 %v938, 0.0
        %v1076 = vmax.f32 %v747, 0.0
        %v1077 = vmax.f32 %v749, 0.0
        %v1078 = vmax.f32 %v940, 0.0
        %v1079 = vmax.f32 %v942, 0.0
        %v1080 = vmax.f32 %v753, 0.0
        %v1081 = vmax.f32 %v755, 0.0
        %v1082 = vmax.f32 %v946, 0.0
        %v1083 = vmax.f32 %v948, 0.0
        %v1084 = vmax.f32 %v757, 0.0
        %v1085 = vmax.f32 %v759, 0.0
        %v1086 = vmax.f32 %v950, 0.0
        %v1087 = vmax.f32 %v952, 0.0
        %v1088 = vmax.f32 %v763, 0.0
        %v1089 = vmax.f32 %v765, 0.0
        %v1090 = vmax.f32 %v956, 0.0
        %v1091 = vmax.f32 %v958, 0.0
        %v1092 = vmax.f32 %v767, 0.0
        %v1093 = vmax.f32 %v769, 0.0
        %v1094 = vmax.f32 %v960, 0.0
        %v1095 = vmax.f32 %v962, 0.0
        %v1096 = vmax.f32 %v773, 0.0
        %v1097 = vmax.f32 %v775, 0.0
        %v1098 = vmax.f32 %v966, 0.0
        %v1099 = vmax.f32 %v968, 0.0
        %v1100 = vmax.f32 %v777, 0.0
        %v1101 = vmax.f32 %v779, 0.0
        %v1102 = vmax.f32 %v970, 0.0
        %v1103 = vmax.f32 %v972, 0.0
        %v1104 = vmax.f32 %v783, 0.0
        %v1105 = vmax.f32 %v785, 0.0
        %v1106 = vmax.f32 %v976, 0.0
        %v1107 = vmax.f32 %v978, 0.0
        %v1108 = vmax.f32 %v787, 0.0
        %v1109 = vmax.f32 %v789, 0.0
        %v1110 = vmax.f32 %v980, 0.0
        %v1111 = vmax.f32 %v982, 0.0
        %v1112 = vpack.c.bf16 %v988, %v984
        %v1113 = vpack.c.bf16 %v989, %v985
        %v1114 = vpack.c.bf16 %v990, %v986
        %v1115 = vpack.c.bf16 %v991, %v987
        %v1116 = vpack.c.bf16 %v996, %v992
        %v1117 = vpack.c.bf16 %v997, %v993
        %v1118 = vpack.c.bf16 %v998, %v994
        %v1119 = vpack.c.bf16 %v999, %v995
        %v1120 = vpack.c.bf16 %v1004, %v1000
        %v1121 = vpack.c.bf16 %v1005, %v1001
        %v1122 = vpack.c.bf16 %v1006, %v1002
        %v1123 = vpack.c.bf16 %v1007, %v1003
        %v1124 = vpack.c.bf16 %v1012, %v1008
        %v1125 = vpack.c.bf16 %v1013, %v1009
        %v1126 = vpack.c.bf16 %v1014, %v1010
        %v1127 = vpack.c.bf16 %v1015, %v1011
        %v1128 = vpack.c.bf16 %v1020, %v1016
        %v1129 = vpack.c.bf16 %v1021, %v1017
        %v1130 = vpack.c.bf16 %v1022, %v1018
        %v1131 = vpack.c.bf16 %v1023, %v1019
        %v1132 = vpack.c.bf16 %v1028, %v1024
        %v1133 = vpack.c.bf16 %v1029, %v1025
        %v1134 = vpack.c.bf16 %v1030, %v1026
        %v1135 = vpack.c.bf16 %v1031, %v1027
        %v1136 = vpack.c.bf16 %v1036, %v1032
        %v1137 = vpack.c.bf16 %v1037, %v1033
        %v1138 = vpack.c.bf16 %v1038, %v1034
        %v1139 = vpack.c.bf16 %v1039, %v1035
        %v1140 = vpack.c.bf16 %v1044, %v1040
        %v1141 = vpack.c.bf16 %v1045, %v1041
        %v1142 = vpack.c.bf16 %v1046, %v1042
        %v1143 = vpack.c.bf16 %v1047, %v1043
        %v1144 = vpack.c.bf16 %v1052, %v1048
        %v1145 = vpack.c.bf16 %v1053, %v1049
        %v1146 = vpack.c.bf16 %v1054, %v1050
        %v1147 = vpack.c.bf16 %v1055, %v1051
        %v1148 = vpack.c.bf16 %v1060, %v1056
        %v1149 = vpack.c.bf16 %v1061, %v1057
        %v1150 = vpack.c.bf16 %v1062, %v1058
        %v1151 = vpack.c.bf16 %v1063, %v1059
        %v1152 = vpack.c.bf16 %v1068, %v1064
        %v1153 = vpack.c.bf16 %v1069, %v1065
        %v1154 = vpack.c.bf16 %v1070, %v1066
        %v1155 = vpack.c.bf16 %v1071, %v1067
        %v1156 = vpack.c.bf16 %v1076, %v1072
        %v1157 = vpack.c.bf16 %v1077, %v1073
        %v1158 = vpack.c.bf16 %v1078, %v1074
        %v1159 = vpack.c.bf16 %v1079, %v1075
        %v1160 = vpack.c.bf16 %v1084, %v1080
        %v1161 = vpack.c.bf16 %v1085, %v1081
        %v1162 = vpack.c.bf16 %v1086, %v1082
        %v1163 = vpack.c.bf16 %v1087, %v1083
        %v1164 = vpack.c.bf16 %v1092, %v1088
        %v1165 = vpack.c.bf16 %v1093, %v1089
        %v1166 = vpack.c.bf16 %v1094, %v1090
        %v1167 = vpack.c.bf16 %v1095, %v1091
        %v1168 = vpack.c.bf16 %v1100, %v1096
        %v1169 = vpack.c.bf16 %v1101, %v1097
        %v1170 = vpack.c.bf16 %v1102, %v1098
        %v1171 = vpack.c.bf16 %v1103, %v1099
        %v1172 = vpack.c.bf16 %v1108, %v1104
        %v1173 = vpack.c.bf16 %v1109, %v1105
        %v1174 = vpack.c.bf16 %v1110, %v1106
        %v1175 = vpack.c.bf16 %v1111, %v1107
        %v1176 = vld [vmem:[#allocation3] sm:$0xff]
        %v1177 = vld [vmem:[#allocation3 + $0x8] sm:$0xff]
        %v1178 = vld [vmem:[#allocation3 + $0x10] sm:$0xff]
        %v1179 = vld [vmem:[#allocation3 + $0x18] sm:$0xff]
        %v1180 = vld [vmem:[#allocation3 + $0x20] sm:$0xff]
        %v1181 = vld [vmem:[#allocation3 + $0x28] sm:$0xff]
        %v1182 = vld [vmem:[#allocation3 + $0x30] sm:$0xff]
        %v1183 = vld [vmem:[#allocation3 + $0x38] sm:$0xff]
        %v1184 = vld [vmem:[#allocation3 + $0x40] sm:$0xff]
        %v1185 = vld [vmem:[#allocation3 + $0x48] sm:$0xff]
        %v1186 = vld [vmem:[#allocation3 + $0x50] sm:$0xff]
        %v1187 = vld [vmem:[#allocation3 + $0x58] sm:$0xff]
        %v1188 = vld [vmem:[#allocation3 + $0x60] sm:$0xff]
        %v1189 = vld [vmem:[#allocation3 + $0x68] sm:$0xff]
        %v1190 = vld [vmem:[#allocation3 + $0x70] sm:$0xff]
        %v1191 = vld [vmem:[#allocation3 + $0x78] sm:$0xff]
        %v1192 = vld [vmem:[#allocation3 + $0x80] sm:$0xff]
        %v1193 = vld [vmem:[#allocation3 + $0x88] sm:$0xff]
        %v1194 = vld [vmem:[#allocation3 + $0x90] sm:$0xff]
        %v1195 = vld [vmem:[#allocation3 + $0x98] sm:$0xff]
        %v1196 = vld [vmem:[#allocation3 + $0xa0] sm:$0xff]
        %v1197 = vld [vmem:[#allocation3 + $0xa8] sm:$0xff]
        %v1198 = vld [vmem:[#allocation3 + $0xb0] sm:$0xff]
        %v1199 = vld [vmem:[#allocation3 + $0xb8] sm:$0xff]
        %v1200 = vld [vmem:[#allocation3 + $0xc0] sm:$0xff]
        %v1201 = vld [vmem:[#allocation3 + $0xc8] sm:$0xff]
        %v1202 = vld [vmem:[#allocation3 + $0xd0] sm:$0xff]
        %v1203 = vld [vmem:[#allocation3 + $0xd8] sm:$0xff]
        %v1204 = vld [vmem:[#allocation3 + $0xe0] sm:$0xff]
        %v1205 = vld [vmem:[#allocation3 + $0xe8] sm:$0xff]
        %v1206 = vld [vmem:[#allocation3 + $0xf0] sm:$0xff]
        %v1207 = vld [vmem:[#allocation3 + $0xf8] sm:$0xff]
        %v1208 = vld [vmem:[#allocation3 + $0x100] sm:$0xff]
        %v1209 = vld [vmem:[#allocation3 + $0x108] sm:$0xff]
        %v1210 = vld [vmem:[#allocation3 + $0x110] sm:$0xff]
        %v1211 = vld [vmem:[#allocation3 + $0x118] sm:$0xff]
        %v1212 = vld [vmem:[#allocation3 + $0x120] sm:$0xff]
        %v1213 = vld [vmem:[#allocation3 + $0x128] sm:$0xff]
        %v1214 = vld [vmem:[#allocation3 + $0x130] sm:$0xff]
        %v1215 = vld [vmem:[#allocation3 + $0x138] sm:$0xff]
        %v1216 = vld [vmem:[#allocation3 + $0x140] sm:$0xff]
        %v1217 = vld [vmem:[#allocation3 + $0x148] sm:$0xff]
        %v1218 = vld [vmem:[#allocation3 + $0x150] sm:$0xff]
        %v1219 = vld [vmem:[#allocation3 + $0x158] sm:$0xff]
        %v1220 = vld [vmem:[#allocation3 + $0x160] sm:$0xff]
        %v1221 = vld [vmem:[#allocation3 + $0x168] sm:$0xff]
        %v1222 = vld [vmem:[#allocation3 + $0x170] sm:$0xff]
        %v1223 = vld [vmem:[#allocation3 + $0x178] sm:$0xff]
        %v1224 = vld [vmem:[#allocation3 + $0x180] sm:$0xff]
        %v1225 = vld [vmem:[#allocation3 + $0x188] sm:$0xff]
        %v1226 = vld [vmem:[#allocation3 + $0x190] sm:$0xff]
        %v1227 = vld [vmem:[#allocation3 + $0x198] sm:$0xff]
        %v1228 = vld [vmem:[#allocation3 + $0x1a0] sm:$0xff]
        %v1229 = vld [vmem:[#allocation3 + $0x1a8] sm:$0xff]
        %v1230 = vld [vmem:[#allocation3 + $0x1b0] sm:$0xff]
        %v1231 = vld [vmem:[#allocation3 + $0x1b8] sm:$0xff]
        %v1232 = vld [vmem:[#allocation3 + $0x1c0] sm:$0xff]
        %v1233 = vld [vmem:[#allocation3 + $0x1c8] sm:$0xff]
        %v1234 = vld [vmem:[#allocation3 + $0x1d0] sm:$0xff]
        %v1235 = vld [vmem:[#allocation3 + $0x1d8] sm:$0xff]
        %v1236 = vld [vmem:[#allocation3 + $0x1e0] sm:$0xff]
        %v1237 = vld [vmem:[#allocation3 + $0x1e8] sm:$0xff]
        %v1238 = vld [vmem:[#allocation3 + $0x1f0] sm:$0xff]
        %v1239 = vld [vmem:[#allocation3 + $0x1f8] sm:$0xff]
        %v1240 = vld [vmem:[#allocation3 + $0x200] sm:$0xff]
        %v1241 = vld [vmem:[#allocation3 + $0x208] sm:$0xff]
        %v1242 = vld [vmem:[#allocation3 + $0x210] sm:$0xff]
        %v1243 = vld [vmem:[#allocation3 + $0x218] sm:$0xff]
        %v1244 = vld [vmem:[#allocation3 + $0x220] sm:$0xff]
        %v1245 = vld [vmem:[#allocation3 + $0x228] sm:$0xff]
        %v1246 = vld [vmem:[#allocation3 + $0x230] sm:$0xff]
        %v1247 = vld [vmem:[#allocation3 + $0x238] sm:$0xff]
        %v1248 = vld [vmem:[#allocation3 + $0x240] sm:$0xff]
        %v1249 = vld [vmem:[#allocation3 + $0x248] sm:$0xff]
        %v1250 = vld [vmem:[#allocation3 + $0x250] sm:$0xff]
        %v1251 = vld [vmem:[#allocation3 + $0x258] sm:$0xff]
        %v1252 = vld [vmem:[#allocation3 + $0x260] sm:$0xff]
        %v1253 = vld [vmem:[#allocation3 + $0x268] sm:$0xff]
        %v1254 = vld [vmem:[#allocation3 + $0x270] sm:$0xff]
        %v1255 = vld [vmem:[#allocation3 + $0x278] sm:$0xff]
        %v1256 = vld [vmem:[#allocation3 + $0x280] sm:$0xff]
        %v1257 = vld [vmem:[#allocation3 + $0x288] sm:$0xff]
        %v1258 = vld [vmem:[#allocation3 + $0x290] sm:$0xff]
        %v1259 = vld [vmem:[#allocation3 + $0x298] sm:$0xff]
        %v1260 = vld [vmem:[#allocation3 + $0x2a0] sm:$0xff]
        %v1261 = vld [vmem:[#allocation3 + $0x2a8] sm:$0xff]
        %v1262 = vld [vmem:[#allocation3 + $0x2b0] sm:$0xff]
        %v1263 = vld [vmem:[#allocation3 + $0x2b8] sm:$0xff]
        %v1264 = vld [vmem:[#allocation3 + $0x2c0] sm:$0xff]
        %v1265 = vld [vmem:[#allocation3 + $0x2c8] sm:$0xff]
        %v1266 = vld [vmem:[#allocation3 + $0x2d0] sm:$0xff]
        %v1267 = vld [vmem:[#allocation3 + $0x2d8] sm:$0xff]
        %v1268 = vld [vmem:[#allocation3 + $0x2e0] sm:$0xff]
        %v1269 = vld [vmem:[#allocation3 + $0x2e8] sm:$0xff]
        %v1270 = vld [vmem:[#allocation3 + $0x2f0] sm:$0xff]
        %v1271 = vld [vmem:[#allocation3 + $0x2f8] sm:$0xff]
        %v1272 = vld [vmem:[#allocation3 + $0x300] sm:$0xff]
        %v1273 = vld [vmem:[#allocation3 + $0x308] sm:$0xff]
        %v1274 = vld [vmem:[#allocation3 + $0x310] sm:$0xff]
        %v1275 = vld [vmem:[#allocation3 + $0x318] sm:$0xff]
        %v1276 = vld [vmem:[#allocation3 + $0x320] sm:$0xff]
        %v1277 = vld [vmem:[#allocation3 + $0x328] sm:$0xff]
        %v1278 = vld [vmem:[#allocation3 + $0x330] sm:$0xff]
        %v1279 = vld [vmem:[#allocation3 + $0x338] sm:$0xff]
        %v1280 = vld [vmem:[#allocation3 + $0x340] sm:$0xff]
        %v1281 = vld [vmem:[#allocation3 + $0x348] sm:$0xff]
        %v1282 = vld [vmem:[#allocation3 + $0x350] sm:$0xff]
        %v1283 = vld [vmem:[#allocation3 + $0x358] sm:$0xff]
        %v1284 = vld [vmem:[#allocation3 + $0x360] sm:$0xff]
        %v1285 = vld [vmem:[#allocation3 + $0x368] sm:$0xff]
        %v1286 = vld [vmem:[#allocation3 + $0x370] sm:$0xff]
        %v1287 = vld [vmem:[#allocation3 + $0x378] sm:$0xff]
        %v1288 = vld [vmem:[#allocation3 + $0x380] sm:$0xff]
        %v1289 = vld [vmem:[#allocation3 + $0x388] sm:$0xff]
        %v1290 = vld [vmem:[#allocation3 + $0x390] sm:$0xff]
        %v1291 = vld [vmem:[#allocation3 + $0x398] sm:$0xff]
        %v1292 = vld [vmem:[#allocation3 + $0x3a0] sm:$0xff]
        %v1293 = vld [vmem:[#allocation3 + $0x3a8] sm:$0xff]
        %v1294 = vld [vmem:[#allocation3 + $0x3b0] sm:$0xff]
        %v1295 = vld [vmem:[#allocation3 + $0x3b8] sm:$0xff]
        %v1296 = vld [vmem:[#allocation3 + $0x3c0] sm:$0xff]
        %v1297 = vld [vmem:[#allocation3 + $0x3c8] sm:$0xff]
        %v1298 = vld [vmem:[#allocation3 + $0x3d0] sm:$0xff]
        %v1299 = vld [vmem:[#allocation3 + $0x3d8] sm:$0xff]
        %v1300 = vld [vmem:[#allocation3 + $0x3e0] sm:$0xff]
        %v1301 = vld [vmem:[#allocation3 + $0x3e8] sm:$0xff]
        %v1302 = vld [vmem:[#allocation3 + $0x3f0] sm:$0xff]
        %v1303 = vld [vmem:[#allocation3 + $0x3f8] sm:$0xff]
        %v1304 = vld [vmem:[%s4] sm:$0xf]
        %v1306 = vlaneseq
        %v1307 = vshrl.u32 %v1306, 7
        %v1308 = vsub.s32 0, %v1307
        %v1309 = vrot.slane %v1304, %v1308
        %v1310 = vlaneseq
        %v1311 = vshrl.u32 %v1310, 7
        %v1312 = vsub.s32 1, %v1311
        %v1313 = vrot.slane %v1304, %v1312
        %v1314 = vlaneseq
        %v1315 = vshrl.u32 %v1314, 7
        %v1316 = vsub.s32 2, %v1315
        %v1317 = vrot.slane %v1304, %v1316
        %v1318 = vlaneseq
        %v1319 = vshrl.u32 %v1318, 7
        %v1320 = vsub.s32 3, %v1319
        %v1321 = vrot.slane %v1304, %v1320
        %v1454 = vunpack.c.l.b16 %v1176
        %v1455 = vunpack.c.h.b16 %v1176
        %v1456 = vunpack.c.l.b16 %v1177
        %v1457 = vunpack.c.h.b16 %v1177
        %v1458 = vunpack.c.l.b16 %v1178
        %v1459 = vunpack.c.h.b16 %v1178
        %v1460 = vunpack.c.l.b16 %v1179
        %v1461 = vunpack.c.h.b16 %v1179
        %v1462 = vunpack.c.l.b16 %v1180
        %v1463 = vunpack.c.h.b16 %v1180
        %v1464 = vunpack.c.l.b16 %v1181
        %v1465 = vunpack.c.h.b16 %v1181
        %v1466 = vunpack.c.l.b16 %v1182
        %v1467 = vunpack.c.h.b16 %v1182
        %v1468 = vunpack.c.l.b16 %v1183
        %v1469 = vunpack.c.h.b16 %v1183
        %v1470 = vunpack.c.l.b16 %v1184
        %v1471 = vunpack.c.h.b16 %v1184
        %v1472 = vunpack.c.l.b16 %v1185
        %v1473 = vunpack.c.h.b16 %v1185
        %v1474 = vunpack.c.l.b16 %v1186
        %v1475 = vunpack.c.h.b16 %v1186
        %v1476 = vunpack.c.l.b16 %v1187
        %v1477 = vunpack.c.h.b16 %v1187
        %v1478 = vunpack.c.l.b16 %v1188
        %v1479 = vunpack.c.h.b16 %v1188
        %v1480 = vunpack.c.l.b16 %v1189
        %v1481 = vunpack.c.h.b16 %v1189
        %v1482 = vunpack.c.l.b16 %v1190
        %v1483 = vunpack.c.h.b16 %v1190
        %v1484 = vunpack.c.l.b16 %v1191
        %v1485 = vunpack.c.h.b16 %v1191
        %v1486 = vunpack.c.l.b16 %v1192
        %v1487 = vunpack.c.h.b16 %v1192
        %v1488 = vunpack.c.l.b16 %v1193
        %v1489 = vunpack.c.h.b16 %v1193
        %v1490 = vunpack.c.l.b16 %v1194
        %v1491 = vunpack.c.h.b16 %v1194
        %v1492 = vunpack.c.l.b16 %v1195
        %v1493 = vunpack.c.h.b16 %v1195
        %v1494 = vunpack.c.l.b16 %v1196
        %v1495 = vunpack.c.h.b16 %v1196
        %v1496 = vunpack.c.l.b16 %v1197
        %v1497 = vunpack.c.h.b16 %v1197
        %v1498 = vunpack.c.l.b16 %v1198
        %v1499 = vunpack.c.h.b16 %v1198
        %v1500 = vunpack.c.l.b16 %v1199
        %v1501 = vunpack.c.h.b16 %v1199
        %v1502 = vunpack.c.l.b16 %v1200
        %v1503 = vunpack.c.h.b16 %v1200
        %v1504 = vunpack.c.l.b16 %v1201
        %v1505 = vunpack.c.h.b16 %v1201
        %v1506 = vunpack.c.l.b16 %v1202
        %v1507 = vunpack.c.h.b16 %v1202
        %v1508 = vunpack.c.l.b16 %v1203
        %v1509 = vunpack.c.h.b16 %v1203
        %v1510 = vunpack.c.l.b16 %v1204
        %v1511 = vunpack.c.h.b16 %v1204
        %v1512 = vunpack.c.l.b16 %v1205
        %v1513 = vunpack.c.h.b16 %v1205
        %v1514 = vunpack.c.l.b16 %v1206
        %v1515 = vunpack.c.h.b16 %v1206
        %v1516 = vunpack.c.l.b16 %v1207
        %v1517 = vunpack.c.h.b16 %v1207
        %v1518 = vunpack.c.l.b16 %v1208
        %v1519 = vunpack.c.h.b16 %v1208
        %v1520 = vunpack.c.l.b16 %v1209
        %v1521 = vunpack.c.h.b16 %v1209
        %v1522 = vunpack.c.l.b16 %v1210
        %v1523 = vunpack.c.h.b16 %v1210
        %v1524 = vunpack.c.l.b16 %v1211
        %v1525 = vunpack.c.h.b16 %v1211
        %v1526 = vunpack.c.l.b16 %v1212
        %v1527 = vunpack.c.h.b16 %v1212
        %v1528 = vunpack.c.l.b16 %v1213
        %v1529 = vunpack.c.h.b16 %v1213
        %v1530 = vunpack.c.l.b16 %v1214
        %v1531 = vunpack.c.h.b16 %v1214
        %v1532 = vunpack.c.l.b16 %v1215
        %v1533 = vunpack.c.h.b16 %v1215
        %v1534 = vunpack.c.l.b16 %v1216
        %v1535 = vunpack.c.h.b16 %v1216
        %v1536 = vunpack.c.l.b16 %v1217
        %v1537 = vunpack.c.h.b16 %v1217
        %v1538 = vunpack.c.l.b16 %v1218
        %v1539 = vunpack.c.h.b16 %v1218
        %v1540 = vunpack.c.l.b16 %v1219
        %v1541 = vunpack.c.h.b16 %v1219
        %v1542 = vunpack.c.l.b16 %v1220
        %v1543 = vunpack.c.h.b16 %v1220
        %v1544 = vunpack.c.l.b16 %v1221
        %v1545 = vunpack.c.h.b16 %v1221
        %v1546 = vunpack.c.l.b16 %v1222
        %v1547 = vunpack.c.h.b16 %v1222
        %v1548 = vunpack.c.l.b16 %v1223
        %v1549 = vunpack.c.h.b16 %v1223
        %v1550 = vunpack.c.l.b16 %v1224
        %v1551 = vunpack.c.h.b16 %v1224
        %v1552 = vunpack.c.l.b16 %v1225
        %v1553 = vunpack.c.h.b16 %v1225
        %v1554 = vunpack.c.l.b16 %v1226
        %v1555 = vunpack.c.h.b16 %v1226
        %v1556 = vunpack.c.l.b16 %v1227
        %v1557 = vunpack.c.h.b16 %v1227
        %v1558 = vunpack.c.l.b16 %v1228
        %v1559 = vunpack.c.h.b16 %v1228
        %v1560 = vunpack.c.l.b16 %v1229
        %v1561 = vunpack.c.h.b16 %v1229
        %v1562 = vunpack.c.l.b16 %v1230
        %v1563 = vunpack.c.h.b16 %v1230
        %v1564 = vunpack.c.l.b16 %v1231
        %v1565 = vunpack.c.h.b16 %v1231
        %v1566 = vunpack.c.l.b16 %v1232
        %v1567 = vunpack.c.h.b16 %v1232
        %v1568 = vunpack.c.l.b16 %v1233
        %v1569 = vunpack.c.h.b16 %v1233
        %v1570 = vunpack.c.l.b16 %v1234
        %v1571 = vunpack.c.h.b16 %v1234
        %v1572 = vunpack.c.l.b16 %v1235
        %v1573 = vunpack.c.h.b16 %v1235
        %v1574 = vunpack.c.l.b16 %v1236
        %v1575 = vunpack.c.h.b16 %v1236
        %v1576 = vunpack.c.l.b16 %v1237
        %v1577 = vunpack.c.h.b16 %v1237
        %v1578 = vunpack.c.l.b16 %v1238
        %v1579 = vunpack.c.h.b16 %v1238
        %v1580 = vunpack.c.l.b16 %v1239
        %v1581 = vunpack.c.h.b16 %v1239
        %v1582 = vunpack.c.l.b16 %v1240
        %v1583 = vunpack.c.h.b16 %v1240
        %v1584 = vunpack.c.l.b16 %v1241
        %v1585 = vunpack.c.h.b16 %v1241
        %v1586 = vunpack.c.l.b16 %v1242
        %v1587 = vunpack.c.h.b16 %v1242
        %v1588 = vunpack.c.l.b16 %v1243
        %v1589 = vunpack.c.h.b16 %v1243
        %v1590 = vunpack.c.l.b16 %v1244
        %v1591 = vunpack.c.h.b16 %v1244
        %v1592 = vunpack.c.l.b16 %v1245
        %v1593 = vunpack.c.h.b16 %v1245
        %v1594 = vunpack.c.l.b16 %v1246
        %v1595 = vunpack.c.h.b16 %v1246
        %v1596 = vunpack.c.l.b16 %v1247
        %v1597 = vunpack.c.h.b16 %v1247
        %v1598 = vunpack.c.l.b16 %v1248
        %v1599 = vunpack.c.h.b16 %v1248
        %v1600 = vunpack.c.l.b16 %v1249
        %v1601 = vunpack.c.h.b16 %v1249
        %v1602 = vunpack.c.l.b16 %v1250
        %v1603 = vunpack.c.h.b16 %v1250
        %v1604 = vunpack.c.l.b16 %v1251
        %v1605 = vunpack.c.h.b16 %v1251
        %v1606 = vunpack.c.l.b16 %v1252
        %v1607 = vunpack.c.h.b16 %v1252
        %v1608 = vunpack.c.l.b16 %v1253
        %v1609 = vunpack.c.h.b16 %v1253
        %v1610 = vunpack.c.l.b16 %v1254
        %v1611 = vunpack.c.h.b16 %v1254
        %v1612 = vunpack.c.l.b16 %v1255
        %v1613 = vunpack.c.h.b16 %v1255
        %v1614 = vunpack.c.l.b16 %v1256
        %v1615 = vunpack.c.h.b16 %v1256
        %v1616 = vunpack.c.l.b16 %v1257
        %v1617 = vunpack.c.h.b16 %v1257
        %v1618 = vunpack.c.l.b16 %v1258
        %v1619 = vunpack.c.h.b16 %v1258
        %v1620 = vunpack.c.l.b16 %v1259
        %v1621 = vunpack.c.h.b16 %v1259
        %v1622 = vunpack.c.l.b16 %v1260
        %v1623 = vunpack.c.h.b16 %v1260
        %v1624 = vunpack.c.l.b16 %v1261
        %v1625 = vunpack.c.h.b16 %v1261
        %v1626 = vunpack.c.l.b16 %v1262
        %v1627 = vunpack.c.h.b16 %v1262
        %v1628 = vunpack.c.l.b16 %v1263
        %v1629 = vunpack.c.h.b16 %v1263
        %v1630 = vunpack.c.l.b16 %v1264
        %v1631 = vunpack.c.h.b16 %v1264
        %v1632 = vunpack.c.l.b16 %v1265
        %v1633 = vunpack.c.h.b16 %v1265
        %v1634 = vunpack.c.l.b16 %v1266
        %v1635 = vunpack.c.h.b16 %v1266
        %v1636 = vunpack.c.l.b16 %v1267
        %v1637 = vunpack.c.h.b16 %v1267
        %v1638 = vunpack.c.l.b16 %v1268
        %v1639 = vunpack.c.h.b16 %v1268
        %v1640 = vunpack.c.l.b16 %v1269
        %v1641 = vunpack.c.h.b16 %v1269
        %v1642 = vunpack.c.l.b16 %v1270
        %v1643 = vunpack.c.h.b16 %v1270
        %v1644 = vunpack.c.l.b16 %v1271
        %v1645 = vunpack.c.h.b16 %v1271
        %v1646 = vunpack.c.l.b16 %v1272
        %v1647 = vunpack.c.h.b16 %v1272
        %v1648 = vunpack.c.l.b16 %v1273
        %v1649 = vunpack.c.h.b16 %v1273
        %v1650 = vunpack.c.l.b16 %v1274
        %v1651 = vunpack.c.h.b16 %v1274
        %v1652 = vunpack.c.l.b16 %v1275
        %v1653 = vunpack.c.h.b16 %v1275
        %v1654 = vunpack.c.l.b16 %v1276
        %v1655 = vunpack.c.h.b16 %v1276
        %v1656 = vunpack.c.l.b16 %v1277
        %v1657 = vunpack.c.h.b16 %v1277
        %v1658 = vunpack.c.l.b16 %v1278
        %v1659 = vunpack.c.h.b16 %v1278
        %v1660 = vunpack.c.l.b16 %v1279
        %v1661 = vunpack.c.h.b16 %v1279
        %v1662 = vunpack.c.l.b16 %v1280
        %v1663 = vunpack.c.h.b16 %v1280
        %v1664 = vunpack.c.l.b16 %v1281
        %v1665 = vunpack.c.h.b16 %v1281
        %v1666 = vunpack.c.l.b16 %v1282
        %v1667 = vunpack.c.h.b16 %v1282
        %v1668 = vunpack.c.l.b16 %v1283
        %v1669 = vunpack.c.h.b16 %v1283
        %v1670 = vunpack.c.l.b16 %v1284
        %v1671 = vunpack.c.h.b16 %v1284
        %v1672 = vunpack.c.l.b16 %v1285
        %v1673 = vunpack.c.h.b16 %v1285
        %v1674 = vunpack.c.l.b16 %v1286
        %v1675 = vunpack.c.h.b16 %v1286
        %v1676 = vunpack.c.l.b16 %v1287
        %v1677 = vunpack.c.h.b16 %v1287
        %v1678 = vunpack.c.l.b16 %v1288
        %v1679 = vunpack.c.h.b16 %v1288
        %v1680 = vunpack.c.l.b16 %v1289
        %v1681 = vunpack.c.h.b16 %v1289
        %v1682 = vunpack.c.l.b16 %v1290
        %v1683 = vunpack.c.h.b16 %v1290
        %v1684 = vunpack.c.l.b16 %v1291
        %v1685 = vunpack.c.h.b16 %v1291
        %v1686 = vunpack.c.l.b16 %v1292
        %v1687 = vunpack.c.h.b16 %v1292
        %v1688 = vunpack.c.l.b16 %v1293
        %v1689 = vunpack.c.h.b16 %v1293
        %v1690 = vunpack.c.l.b16 %v1294
        %v1691 = vunpack.c.h.b16 %v1294
        %v1692 = vunpack.c.l.b16 %v1295
        %v1693 = vunpack.c.h.b16 %v1295
        %v1694 = vunpack.c.l.b16 %v1296
        %v1695 = vunpack.c.h.b16 %v1296
        %v1696 = vunpack.c.l.b16 %v1297
        %v1697 = vunpack.c.h.b16 %v1297
        %v1698 = vunpack.c.l.b16 %v1298
        %v1699 = vunpack.c.h.b16 %v1298
        %v1700 = vunpack.c.l.b16 %v1299
        %v1701 = vunpack.c.h.b16 %v1299
        %v1702 = vunpack.c.l.b16 %v1300
        %v1703 = vunpack.c.h.b16 %v1300
        %v1704 = vunpack.c.l.b16 %v1301
        %v1705 = vunpack.c.h.b16 %v1301
        %v1706 = vunpack.c.l.b16 %v1302
        %v1707 = vunpack.c.h.b16 %v1302
        %v1708 = vunpack.c.l.b16 %v1303
        %v1709 = vunpack.c.h.b16 %v1303
        %v1710 = vpack.c.b16 %v1458, %v1454
        %v1711 = vpack.c.b16 %v1459, %v1455
        %v1712 = vpack.c.b16 %v1460, %v1456
        %v1713 = vpack.c.b16 %v1461, %v1457
        %v1714 = vpack.c.b16 %v1466, %v1462
        %v1715 = vpack.c.b16 %v1467, %v1463
        %v1716 = vpack.c.b16 %v1468, %v1464
        %v1717 = vpack.c.b16 %v1469, %v1465
        %v1718 = vpack.c.b16 %v1474, %v1470
        %v1719 = vpack.c.b16 %v1475, %v1471
        %v1720 = vpack.c.b16 %v1476, %v1472
        %v1721 = vpack.c.b16 %v1477, %v1473
        %v1722 = vpack.c.b16 %v1482, %v1478
        %v1723 = vpack.c.b16 %v1483, %v1479
        %v1724 = vpack.c.b16 %v1484, %v1480
        %v1725 = vpack.c.b16 %v1485, %v1481
        %v1726 = vpack.c.b16 %v1490, %v1486
        %v1727 = vpack.c.b16 %v1491, %v1487
        %v1728 = vpack.c.b16 %v1492, %v1488
        %v1729 = vpack.c.b16 %v1493, %v1489
        %v1730 = vpack.c.b16 %v1498, %v1494
        %v1731 = vpack.c.b16 %v1499, %v1495
        %v1732 = vpack.c.b16 %v1500, %v1496
        %v1733 = vpack.c.b16 %v1501, %v1497
        %v1734 = vpack.c.b16 %v1506, %v1502
        %v1735 = vpack.c.b16 %v1507, %v1503
        %v1736 = vpack.c.b16 %v1508, %v1504
        %v1737 = vpack.c.b16 %v1509, %v1505
        %v1738 = vpack.c.b16 %v1514, %v1510
        %v1739 = vpack.c.b16 %v1515, %v1511
        %v1740 = vpack.c.b16 %v1516, %v1512
        %v1741 = vpack.c.b16 %v1517, %v1513
        %v1742 = vpack.c.b16 %v1522, %v1518
        %v1743 = vpack.c.b16 %v1523, %v1519
        %v1744 = vpack.c.b16 %v1524, %v1520
        %v1745 = vpack.c.b16 %v1525, %v1521
        %v1746 = vpack.c.b16 %v1530, %v1526
        %v1747 = vpack.c.b16 %v1531, %v1527
        %v1748 = vpack.c.b16 %v1532, %v1528
        %v1749 = vpack.c.b16 %v1533, %v1529
        %v1750 = vpack.c.b16 %v1538, %v1534
        %v1751 = vpack.c.b16 %v1539, %v1535
        %v1752 = vpack.c.b16 %v1540, %v1536
        %v1753 = vpack.c.b16 %v1541, %v1537
        %v1754 = vpack.c.b16 %v1546, %v1542
        %v1755 = vpack.c.b16 %v1547, %v1543
        %v1756 = vpack.c.b16 %v1548, %v1544
        %v1757 = vpack.c.b16 %v1549, %v1545
        %v1758 = vpack.c.b16 %v1554, %v1550
        %v1759 = vpack.c.b16 %v1555, %v1551
        %v1760 = vpack.c.b16 %v1556, %v1552
        %v1761 = vpack.c.b16 %v1557, %v1553
        %v1762 = vpack.c.b16 %v1562, %v1558
        %v1763 = vpack.c.b16 %v1563, %v1559
        %v1764 = vpack.c.b16 %v1564, %v1560
        %v1765 = vpack.c.b16 %v1565, %v1561
        %v1766 = vpack.c.b16 %v1570, %v1566
        %v1767 = vpack.c.b16 %v1571, %v1567
        %v1768 = vpack.c.b16 %v1572, %v1568
        %v1769 = vpack.c.b16 %v1573, %v1569
        %v1770 = vpack.c.b16 %v1578, %v1574
        %v1771 = vpack.c.b16 %v1579, %v1575
        %v1772 = vpack.c.b16 %v1580, %v1576
        %v1773 = vpack.c.b16 %v1581, %v1577
        %v1774 = vpack.c.b16 %v1586, %v1582
        %v1775 = vpack.c.b16 %v1587, %v1583
        %v1776 = vpack.c.b16 %v1588, %v1584
        %v1777 = vpack.c.b16 %v1589, %v1585
        %v1778 = vpack.c.b16 %v1594, %v1590
        %v1779 = vpack.c.b16 %v1595, %v1591
        %v1780 = vpack.c.b16 %v1596, %v1592
        %v1781 = vpack.c.b16 %v1597, %v1593
        %v1782 = vpack.c.b16 %v1602, %v1598
        %v1783 = vpack.c.b16 %v1603, %v1599
        %v1784 = vpack.c.b16 %v1604, %v1600
        %v1785 = vpack.c.b16 %v1605, %v1601
        %v1786 = vpack.c.b16 %v1610, %v1606
        %v1787 = vpack.c.b16 %v1611, %v1607
        %v1788 = vpack.c.b16 %v1612, %v1608
        %v1789 = vpack.c.b16 %v1613, %v1609
        %v1790 = vpack.c.b16 %v1618, %v1614
        %v1791 = vpack.c.b16 %v1619, %v1615
        %v1792 = vpack.c.b16 %v1620, %v1616
        %v1793 = vpack.c.b16 %v1621, %v1617
        %v1794 = vpack.c.b16 %v1626, %v1622
        %v1795 = vpack.c.b16 %v1627, %v1623
        %v1796 = vpack.c.b16 %v1628, %v1624
        %v1797 = vpack.c.b16 %v1629, %v1625
        %v1798 = vpack.c.b16 %v1634, %v1630
        %v1799 = vpack.c.b16 %v1635, %v1631
        %v1800 = vpack.c.b16 %v1636, %v1632
        %v1801 = vpack.c.b16 %v1637, %v1633
        %v1802 = vpack.c.b16 %v1642, %v1638
        %v1803 = vpack.c.b16 %v1643, %v1639
        %v1804 = vpack.c.b16 %v1644, %v1640
        %v1805 = vpack.c.b16 %v1645, %v1641
        %v1806 = vpack.c.b16 %v1650, %v1646
        %v1807 = vpack.c.b16 %v1651, %v1647
        %v1808 = vpack.c.b16 %v1652, %v1648
        %v1809 = vpack.c.b16 %v1653, %v1649
        %v1810 = vpack.c.b16 %v1658, %v1654
        %v1811 = vpack.c.b16 %v1659, %v1655
        %v1812 = vpack.c.b16 %v1660, %v1656
        %v1813 = vpack.c.b16 %v1661, %v1657
        %v1814 = vpack.c.b16 %v1666, %v1662
        %v1815 = vpack.c.b16 %v1667, %v1663
        %v1816 = vpack.c.b16 %v1668, %v1664
        %v1817 = vpack.c.b16 %v1669, %v1665
        %v1818 = vpack.c.b16 %v1674, %v1670
        %v1819 = vpack.c.b16 %v1675, %v1671
        %v1820 = vpack.c.b16 %v1676, %v1672
        %v1821 = vpack.c.b16 %v1677, %v1673
        %v1822 = vpack.c.b16 %v1682, %v1678
        %v1823 = vpack.c.b16 %v1683, %v1679
        %v1824 = vpack.c.b16 %v1684, %v1680
        %v1825 = vpack.c.b16 %v1685, %v1681
        %v1826 = vpack.c.b16 %v1690, %v1686
        %v1827 = vpack.c.b16 %v1691, %v1687
        %v1828 = vpack.c.b16 %v1692, %v1688
        %v1829 = vpack.c.b16 %v1693, %v1689
        %v1830 = vpack.c.b16 %v1698, %v1694
        %v1831 = vpack.c.b16 %v1699, %v1695
        %v1832 = vpack.c.b16 %v1700, %v1696
        %v1833 = vpack.c.b16 %v1701, %v1697
        %v1834 = vpack.c.b16 %v1706, %v1702
        %v1835 = vpack.c.b16 %v1707, %v1703
        %v1836 = vpack.c.b16 %v1708, %v1704
        %v1837 = vpack.c.b16 %v1709, %v1705
        %1966 = vmatprep.subr.bf16.mxu0 %v1711
        %1967 = vmatpush1.bf16.msra.mxu0 %v1710
        %1968 = vmatprep.subr.bf16.mxu0 %v1715
        %1969 = vmatpush1.bf16.msra.mxu0 %v1714
        %1970 = vmatprep.subr.bf16.mxu0 %v1719
        %1971 = vmatpush1.bf16.msra.mxu0 %v1718
        %1972 = vmatprep.subr.bf16.mxu0 %v1723
        %1973 = vmatpush1.bf16.msra.mxu0 %v1722
        %1974 = vmatprep.subr.bf16.mxu0 %v1727
        %1975 = vmatpush1.bf16.msra.mxu0 %v1726
        %1976 = vmatprep.subr.bf16.mxu0 %v1731
        %1977 = vmatpush1.bf16.msra.mxu0 %v1730
        %1978 = vmatprep.subr.bf16.mxu0 %v1735
        %1979 = vmatpush1.bf16.msra.mxu0 %v1734
        %1980 = vmatprep.subr.bf16.mxu0 %v1739
        %1981 = vmatpush1.bf16.msra.mxu0 %v1738
        %1982 = vmatprep.subr.bf16.mxu0 %v1743
        %1983 = vmatpush1.bf16.msra.mxu0 %v1742
        %1984 = vmatprep.subr.bf16.mxu0 %v1747
        %1985 = vmatpush1.bf16.msra.mxu0 %v1746
        %1986 = vmatprep.subr.bf16.mxu0 %v1751
        %1987 = vmatpush1.bf16.msra.mxu0 %v1750
        %1988 = vmatprep.subr.bf16.mxu0 %v1755
        %1989 = vmatpush1.bf16.msra.mxu0 %v1754
        %1990 = vmatprep.subr.bf16.mxu0 %v1759
        %1991 = vmatpush1.bf16.msra.mxu0 %v1758
        %1992 = vmatprep.subr.bf16.mxu0 %v1763
        %1993 = vmatpush1.bf16.msra.mxu0 %v1762
        %1994 = vmatprep.subr.bf16.mxu0 %v1767
        %1995 = vmatpush1.bf16.msra.mxu0 %v1766
        %1996 = vmatprep.subr.bf16.mxu0 %v1771
        %1997 = vmatpush1.bf16.msra.mxu0 %v1770
        %1998 = vmatprep.mubr.bf16.mxu0 %v1113
        %1999 = vmatmul.mubr.bf16.gmra.mrb[0].mxu0 %v1112
        %v2000 = vpop.f32.mrb[0].mxu0
        %v2001 = vadd.f32 %v1309, %v2000
        %v2002 = vpop.f32.mrb[0].mxu0
        %v2003 = vadd.f32 %v1313, %v2002
        %v2004 = vpop.f32.mrb[0].mxu0
        %v2005 = vadd.f32 %v1309, %v2004
        %v2006 = vpop.f32.mrb[0].mxu0
        %v2007 = vadd.f32 %v1313, %v2006
        %2008 = vmatprep.mubr.bf16.mxu0 %v1117
        %2009 = vmatmul.mubr.bf16.gmra.mrb[0].mxu0 %v1116
        %v2010 = vpop.f32.mrb[0].mxu0
        %v2011 = vadd.f32 %v1309, %v2010
        %v2012 = vpop.f32.mrb[0].mxu0
        %v2013 = vadd.f32 %v1313, %v2012
        %v2014 = vpop.f32.mrb[0].mxu0
        %v2015 = vadd.f32 %v1309, %v2014
        %v2016 = vpop.f32.mrb[0].mxu0
        %v2017 = vadd.f32 %v1313, %v2016
        %2018 = vmatprep.mubr.bf16.mxu0 %v1121
        %2019 = vmatmul.mubr.bf16.gmra.mrb[0].mxu0 %v1120
        %v2020 = vpop.f32.mrb[0].mxu0
        %v2021 = vadd.f32 %v1309, %v2020
        %v2022 = vpop.f32.mrb[0].mxu0
        %v2023 = vadd.f32 %v1313, %v2022
        %v2024 = vpop.f32.mrb[0].mxu0
        %v2025 = vadd.f32 %v1309, %v2024
        %v2026 = vpop.f32.mrb[0].mxu0
        %v2027 = vadd.f32 %v1313, %v2026
        %2028 = vmatprep.mubr.bf16.mxu0 %v1125
        %2029 = vmatmul.mubr.bf16.gmra.mrb[0].mxu0 %v1124
        %v2030 = vpop.f32.mrb[0].mxu0
        %v2031 = vadd.f32 %v1309, %v2030
        %v2032 = vpop.f32.mrb[0].mxu0
        %v2033 = vadd.f32 %v1313, %v2032
        %v2034 = vpop.f32.mrb[0].mxu0
        %v2035 = vadd.f32 %v1309, %v2034
        %v2036 = vpop.f32.mrb[0].mxu0
        %v2037 = vadd.f32 %v1313, %v2036
        %2038 = vmatprep.mubr.bf16.mxu0 %v1129
        %2039 = vmatmul.mubr.bf16.gmra.mrb[0].mxu0 %v1128
        %v2040 = vpop.f32.mrb[0].mxu0
        %v2041 = vadd.f32 %v1309, %v2040
        %v2042 = vpop.f32.mrb[0].mxu0
        %v2043 = vadd.f32 %v1313, %v2042
        %v2044 = vpop.f32.mrb[0].mxu0
        %v2045 = vadd.f32 %v1309, %v2044
        %v2046 = vpop.f32.mrb[0].mxu0
        %v2047 = vadd.f32 %v1313, %v2046
        %2048 = vmatprep.mubr.bf16.mxu0 %v1133
        %2049 = vmatmul.mubr.bf16.gmra.mrb[0].mxu0 %v1132
        %v2050 = vpop.f32.mrb[0].mxu0
        %v2051 = vadd.f32 %v1309, %v2050
        %v2052 = vpop.f32.mrb[0].mxu0
        %v2053 = vadd.f32 %v1313, %v2052
        %v2054 = vpop.f32.mrb[0].mxu0
        %v2055 = vadd.f32 %v1309, %v2054
        %v2056 = vpop.f32.mrb[0].mxu0
        %v2057 = vadd.f32 %v1313, %v2056
        %2058 = vmatprep.mubr.bf16.mxu0 %v1137
        %2059 = vmatmul.mubr.bf16.gmra.mrb[0].mxu0 %v1136
        %v2060 = vpop.f32.mrb[0].mxu0
        %v2061 = vadd.f32 %v1309, %v2060
        %v2062 = vpop.f32.mrb[0].mxu0
        %v2063 = vadd.f32 %v1313, %v2062
        %v2064 = vpop.f32.mrb[0].mxu0
        %v2065 = vadd.f32 %v1309, %v2064
        %v2066 = vpop.f32.mrb[0].mxu0
        %v2067 = vadd.f32 %v1313, %v2066
        %2068 = vmatprep.mubr.bf16.mxu0 %v1141
        %2069 = vmatmul.mubr.bf16.gmra.mrb[0].mxu0 %v1140
        %v2070 = vpop.f32.mrb[0].mxu0
        %v2071 = vadd.f32 %v1309, %v2070
        %v2072 = vpop.f32.mrb[0].mxu0
        %v2073 = vadd.f32 %v1313, %v2072
        %v2074 = vpop.f32.mrb[0].mxu0
        %v2075 = vadd.f32 %v1309, %v2074
        %v2076 = vpop.f32.mrb[0].mxu0
        %v2077 = vadd.f32 %v1313, %v2076
        %2078 = vmatprep.mubr.bf16.mxu0 %v1145
        %2079 = vmatmul.mubr.bf16.gmra.mrb[0].mxu0 %v1144
        %v2080 = vpop.f32.mrb[0].mxu0
        %v2081 = vadd.f32 %v1309, %v2080
        %v2082 = vpop.f32.mrb[0].mxu0
        %v2083 = vadd.f32 %v1313, %v2082
        %v2084 = vpop.f32.mrb[0].mxu0
        %v2085 = vadd.f32 %v1309, %v2084
        %v2086 = vpop.f32.mrb[0].mxu0
        %v2087 = vadd.f32 %v1313, %v2086
        %2088 = vmatprep.mubr.bf16.mxu0 %v1149
        %2089 = vmatmul.mubr.bf16.gmra.mrb[0].mxu0 %v1148
        %v2090 = vpop.f32.mrb[0].mxu0
        %v2091 = vadd.f32 %v1309, %v2090
        %v2092 = vpop.f32.mrb[0].mxu0
        %v2093 = vadd.f32 %v1313, %v2092
        %v2094 = vpop.f32.mrb[0].mxu0
        %v2095 = vadd.f32 %v1309, %v2094
        %v2096 = vpop.f32.mrb[0].mxu0
        %v2097 = vadd.f32 %v1313, %v2096
        %2098 = vmatprep.mubr.bf16.mxu0 %v1153
        %2099 = vmatmul.mubr.bf16.gmra.mrb[0].mxu0 %v1152
        %v2100 = vpop.f32.mrb[0].mxu0
        %v2101 = vadd.f32 %v1309, %v2100
        %v2102 = vpop.f32.mrb[0].mxu0
        %v2103 = vadd.f32 %v1313, %v2102
        %v2104 = vpop.f32.mrb[0].mxu0
        %v2105 = vadd.f32 %v1309, %v2104
        %v2106 = vpop.f32.mrb[0].mxu0
        %v2107 = vadd.f32 %v1313, %v2106
        %2108 = vmatprep.mubr.bf16.mxu0 %v1157
        %2109 = vmatmul.mubr.bf16.gmra.mrb[0].mxu0 %v1156
        %v2110 = vpop.f32.mrb[0].mxu0
        %v2111 = vadd.f32 %v1309, %v2110
        %v2112 = vpop.f32.mrb[0].mxu0
        %v2113 = vadd.f32 %v1313, %v2112
        %v2114 = vpop.f32.mrb[0].mxu0
        %v2115 = vadd.f32 %v1309, %v2114
        %v2116 = vpop.f32.mrb[0].mxu0
        %v2117 = vadd.f32 %v1313, %v2116
        %2118 = vmatprep.mubr.bf16.mxu0 %v1161
        %2119 = vmatmul.mubr.bf16.gmra.mrb[0].mxu0 %v1160
        %v2120 = vpop.f32.mrb[0].mxu0
        %v2121 = vadd.f32 %v1309, %v2120
        %v2122 = vpop.f32.mrb[0].mxu0
        %v2123 = vadd.f32 %v1313, %v2122
        %v2124 = vpop.f32.mrb[0].mxu0
        %v2125 = vadd.f32 %v1309, %v2124
        %v2126 = vpop.f32.mrb[0].mxu0
        %v2127 = vadd.f32 %v1313, %v2126
        %2128 = vmatprep.mubr.bf16.mxu0 %v1165
        %2129 = vmatmul.mubr.bf16.gmra.mrb[0].mxu0 %v1164
        %v2130 = vpop.f32.mrb[0].mxu0
        %v2131 = vadd.f32 %v1309, %v2130
        %v2132 = vpop.f32.mrb[0].mxu0
        %v2133 = vadd.f32 %v1313, %v2132
        %v2134 = vpop.f32.mrb[0].mxu0
        %v2135 = vadd.f32 %v1309, %v2134
        %v2136 = vpop.f32.mrb[0].mxu0
        %v2137 = vadd.f32 %v1313, %v2136
        %2138 = vmatprep.mubr.bf16.mxu0 %v1169
        %2139 = vmatmul.mubr.bf16.gmra.mrb[0].mxu0 %v1168
        %v2140 = vpop.f32.mrb[0].mxu0
        %v2141 = vadd.f32 %v1309, %v2140
        %v2142 = vpop.f32.mrb[0].mxu0
        %v2143 = vadd.f32 %v1313, %v2142
        %v2144 = vpop.f32.mrb[0].mxu0
        %v2145 = vadd.f32 %v1309, %v2144
        %v2146 = vpop.f32.mrb[0].mxu0
        %v2147 = vadd.f32 %v1313, %v2146
        %2148 = vmatprep.mubr.bf16.mxu0 %v1173
        %2149 = vmatmul.mubr.bf16.gmra.mrb[0].mxu0 %v1172
        %v2150 = vpop.f32.mrb[0].mxu0
        %v2151 = vadd.f32 %v1309, %v2150
        %v2152 = vpop.f32.mrb[0].mxu0
        %v2153 = vadd.f32 %v1313, %v2152
        %v2154 = vpop.f32.mrb[0].mxu0
        %v2155 = vadd.f32 %v1309, %v2154
        %v2156 = vpop.f32.mrb[0].mxu0
        %v2157 = vadd.f32 %v1313, %v2156
        %2158 = vdwg.mxu0
        %2159 = vmatprep.subr.bf16.mxu0 %v1775
        %2160 = vmatpush1.bf16.msra.mxu0 %v1774
        %2161 = vmatprep.subr.bf16.mxu0 %v1779
        %2162 = vmatpush1.bf16.msra.mxu0 %v1778
        %2163 = vmatprep.subr.bf16.mxu0 %v1783
        %2164 = vmatpush1.bf16.msra.mxu0 %v1782
        %2165 = vmatprep.subr.bf16.mxu0 %v1787
        %2166 = vmatpush1.bf16.msra.mxu0 %v1786
        %2167 = vmatprep.subr.bf16.mxu0 %v1791
        %2168 = vmatpush1.bf16.msra.mxu0 %v1790
        %2169 = vmatprep.subr.bf16.mxu0 %v1795
        %2170 = vmatpush1.bf16.msra.mxu0 %v1794
        %2171 = vmatprep.subr.bf16.mxu0 %v1799
        %2172 = vmatpush1.bf16.msra.mxu0 %v1798
        %2173 = vmatprep.subr.bf16.mxu0 %v1803
        %2174 = vmatpush1.bf16.msra.mxu0 %v1802
        %2175 = vmatprep.subr.bf16.mxu0 %v1807
        %2176 = vmatpush1.bf16.msra.mxu0 %v1806
        %2177 = vmatprep.subr.bf16.mxu0 %v1811
        %2178 = vmatpush1.bf16.msra.mxu0 %v1810
        %2179 = vmatprep.subr.bf16.mxu0 %v1815
        %2180 = vmatpush1.bf16.msra.mxu0 %v1814
        %2181 = vmatprep.subr.bf16.mxu0 %v1819
        %2182 = vmatpush1.bf16.msra.mxu0 %v1818
        %2183 = vmatprep.subr.bf16.mxu0 %v1823
        %2184 = vmatpush1.bf16.msra.mxu0 %v1822
        %2185 = vmatprep.subr.bf16.mxu0 %v1827
        %2186 = vmatpush1.bf16.msra.mxu0 %v1826
        %2187 = vmatprep.subr.bf16.mxu0 %v1831
        %2188 = vmatpush1.bf16.msra.mxu0 %v1830
        %2189 = vmatprep.subr.bf16.mxu0 %v1835
        %2190 = vmatpush1.bf16.msra.mxu0 %v1834
        %2191 = vmatprep.mubr.bf16.mxu0 %v1115
        %2192 = vmatmul.mubr.bf16.gmra.mrb[0].mxu0 %v1114
        %v2193 = vpop.f32.mrb[0].mxu0
        %v2194 = vadd.f32 %v2001, %v2193
        %v2195 = vpop.f32.mrb[0].mxu0
        %v2196 = vadd.f32 %v2003, %v2195
        %v2197 = vpop.f32.mrb[0].mxu0
        %v2198 = vadd.f32 %v2005, %v2197
        %v2199 = vpop.f32.mrb[0].mxu0
        %v2200 = vadd.f32 %v2007, %v2199
        %2201 = vmatprep.mubr.bf16.mxu0 %v1119
        %2202 = vmatmul.mubr.bf16.gmra.mrb[0].mxu0 %v1118
        %v2203 = vpop.f32.mrb[0].mxu0
        %v2204 = vadd.f32 %v2011, %v2203
        %v2205 = vpop.f32.mrb[0].mxu0
        %v2206 = vadd.f32 %v2013, %v2205
        %v2207 = vpop.f32.mrb[0].mxu0
        %v2208 = vadd.f32 %v2015, %v2207
        %v2209 = vpop.f32.mrb[0].mxu0
        %v2210 = vadd.f32 %v2017, %v2209
        %2211 = vmatprep.mubr.bf16.mxu0 %v1123
        %2212 = vmatmul.mubr.bf16.gmra.mrb[0].mxu0 %v1122
        %v2213 = vpop.f32.mrb[0].mxu0
        %v2214 = vadd.f32 %v2021, %v2213
        %v2215 = vpop.f32.mrb[0].mxu0
        %v2216 = vadd.f32 %v2023, %v2215
        %v2217 = vpop.f32.mrb[0].mxu0
        %v2218 = vadd.f32 %v2025, %v2217
        %v2219 = vpop.f32.mrb[0].mxu0
        %v2220 = vadd.f32 %v2027, %v2219
        %2221 = vmatprep.mubr.bf16.mxu0 %v1127
        %2222 = vmatmul.mubr.bf16.gmra.mrb[0].mxu0 %v1126
        %v2223 = vpop.f32.mrb[0].mxu0
        %v2224 = vadd.f32 %v2031, %v2223
        %v2225 = vpop.f32.mrb[0].mxu0
        %v2226 = vadd.f32 %v2033, %v2225
        %v2227 = vpop.f32.mrb[0].mxu0
        %v2228 = vadd.f32 %v2035, %v2227
        %v2229 = vpop.f32.mrb[0].mxu0
        %v2230 = vadd.f32 %v2037, %v2229
        %2231 = vmatprep.mubr.bf16.mxu0 %v1131
        %2232 = vmatmul.mubr.bf16.gmra.mrb[0].mxu0 %v1130
        %v2233 = vpop.f32.mrb[0].mxu0
        %v2234 = vadd.f32 %v2041, %v2233
        %v2235 = vpop.f32.mrb[0].mxu0
        %v2236 = vadd.f32 %v2043, %v2235
        %v2237 = vpop.f32.mrb[0].mxu0
        %v2238 = vadd.f32 %v2045, %v2237
        %v2239 = vpop.f32.mrb[0].mxu0
        %v2240 = vadd.f32 %v2047, %v2239
        %2241 = vmatprep.mubr.bf16.mxu0 %v1135
        %2242 = vmatmul.mubr.bf16.gmra.mrb[0].mxu0 %v1134
        %v2243 = vpop.f32.mrb[0].mxu0
        %v2244 = vadd.f32 %v2051, %v2243
        %v2245 = vpop.f32.mrb[0].mxu0
        %v2246 = vadd.f32 %v2053, %v2245
        %v2247 = vpop.f32.mrb[0].mxu0
        %v2248 = vadd.f32 %v2055, %v2247
        %v2249 = vpop.f32.mrb[0].mxu0
        %v2250 = vadd.f32 %v2057, %v2249
        %2251 = vmatprep.mubr.bf16.mxu0 %v1139
        %2252 = vmatmul.mubr.bf16.gmra.mrb[0].mxu0 %v1138
        %v2253 = vpop.f32.mrb[0].mxu0
        %v2254 = vadd.f32 %v2061, %v2253
        %v2255 = vpop.f32.mrb[0].mxu0
        %v2256 = vadd.f32 %v2063, %v2255
        %v2257 = vpop.f32.mrb[0].mxu0
        %v2258 = vadd.f32 %v2065, %v2257
        %v2259 = vpop.f32.mrb[0].mxu0
        %v2260 = vadd.f32 %v2067, %v2259
        %2261 = vmatprep.mubr.bf16.mxu0 %v1143
        %2262 = vmatmul.mubr.bf16.gmra.mrb[0].mxu0 %v1142
        %v2263 = vpop.f32.mrb[0].mxu0
        %v2264 = vadd.f32 %v2071, %v2263
        %v2265 = vpop.f32.mrb[0].mxu0
        %v2266 = vadd.f32 %v2073, %v2265
        %v2267 = vpop.f32.mrb[0].mxu0
        %v2268 = vadd.f32 %v2075, %v2267
        %v2269 = vpop.f32.mrb[0].mxu0
        %v2270 = vadd.f32 %v2077, %v2269
        %2271 = vmatprep.mubr.bf16.mxu0 %v1147
        %2272 = vmatmul.mubr.bf16.gmra.mrb[0].mxu0 %v1146
        %v2273 = vpop.f32.mrb[0].mxu0
        %v2274 = vadd.f32 %v2081, %v2273
        %v2275 = vpop.f32.mrb[0].mxu0
        %v2276 = vadd.f32 %v2083, %v2275
        %v2277 = vpop.f32.mrb[0].mxu0
        %v2278 = vadd.f32 %v2085, %v2277
        %v2279 = vpop.f32.mrb[0].mxu0
        %v2280 = vadd.f32 %v2087, %v2279
        %2281 = vmatprep.mubr.bf16.mxu0 %v1151
        %2282 = vmatmul.mubr.bf16.gmra.mrb[0].mxu0 %v1150
        %v2283 = vpop.f32.mrb[0].mxu0
        %v2284 = vadd.f32 %v2091, %v2283
        %v2285 = vpop.f32.mrb[0].mxu0
        %v2286 = vadd.f32 %v2093, %v2285
        %v2287 = vpop.f32.mrb[0].mxu0
        %v2288 = vadd.f32 %v2095, %v2287
        %v2289 = vpop.f32.mrb[0].mxu0
        %v2290 = vadd.f32 %v2097, %v2289
        %2291 = vmatprep.mubr.bf16.mxu0 %v1155
        %2292 = vmatmul.mubr.bf16.gmra.mrb[0].mxu0 %v1154
        %v2293 = vpop.f32.mrb[0].mxu0
        %v2294 = vadd.f32 %v2101, %v2293
        %v2295 = vpop.f32.mrb[0].mxu0
        %v2296 = vadd.f32 %v2103, %v2295
        %v2297 = vpop.f32.mrb[0].mxu0
        %v2298 = vadd.f32 %v2105, %v2297
        %v2299 = vpop.f32.mrb[0].mxu0
        %v2300 = vadd.f32 %v2107, %v2299
        %2301 = vmatprep.mubr.bf16.mxu0 %v1159
        %2302 = vmatmul.mubr.bf16.gmra.mrb[0].mxu0 %v1158
        %v2303 = vpop.f32.mrb[0].mxu0
        %v2304 = vadd.f32 %v2111, %v2303
        %v2305 = vpop.f32.mrb[0].mxu0
        %v2306 = vadd.f32 %v2113, %v2305
        %v2307 = vpop.f32.mrb[0].mxu0
        %v2308 = vadd.f32 %v2115, %v2307
        %v2309 = vpop.f32.mrb[0].mxu0
        %v2310 = vadd.f32 %v2117, %v2309
        %2311 = vmatprep.mubr.bf16.mxu0 %v1163
        %2312 = vmatmul.mubr.bf16.gmra.mrb[0].mxu0 %v1162
        %v2313 = vpop.f32.mrb[0].mxu0
        %v2314 = vadd.f32 %v2121, %v2313
        %v2315 = vpop.f32.mrb[0].mxu0
        %v2316 = vadd.f32 %v2123, %v2315
        %v2317 = vpop.f32.mrb[0].mxu0
        %v2318 = vadd.f32 %v2125, %v2317
        %v2319 = vpop.f32.mrb[0].mxu0
        %v2320 = vadd.f32 %v2127, %v2319
        %2321 = vmatprep.mubr.bf16.mxu0 %v1167
        %2322 = vmatmul.mubr.bf16.gmra.mrb[0].mxu0 %v1166
        %v2323 = vpop.f32.mrb[0].mxu0
        %v2324 = vadd.f32 %v2131, %v2323
        %v2325 = vpop.f32.mrb[0].mxu0
        %v2326 = vadd.f32 %v2133, %v2325
        %v2327 = vpop.f32.mrb[0].mxu0
        %v2328 = vadd.f32 %v2135, %v2327
        %v2329 = vpop.f32.mrb[0].mxu0
        %v2330 = vadd.f32 %v2137, %v2329
        %2331 = vmatprep.mubr.bf16.mxu0 %v1171
        %2332 = vmatmul.mubr.bf16.gmra.mrb[0].mxu0 %v1170
        %v2333 = vpop.f32.mrb[0].mxu0
        %v2334 = vadd.f32 %v2141, %v2333
        %v2335 = vpop.f32.mrb[0].mxu0
        %v2336 = vadd.f32 %v2143, %v2335
        %v2337 = vpop.f32.mrb[0].mxu0
        %v2338 = vadd.f32 %v2145, %v2337
        %v2339 = vpop.f32.mrb[0].mxu0
        %v2340 = vadd.f32 %v2147, %v2339
        %2341 = vmatprep.mubr.bf16.mxu0 %v1175
        %2342 = vmatmul.mubr.bf16.gmra.mrb[0].mxu0 %v1174
        %v2343 = vpop.f32.mrb[0].mxu0
        %v2344 = vadd.f32 %v2151, %v2343
        %v2345 = vpop.f32.mrb[0].mxu0
        %v2346 = vadd.f32 %v2153, %v2345
        %v2347 = vpop.f32.mrb[0].mxu0
        %v2348 = vadd.f32 %v2155, %v2347
        %v2349 = vpop.f32.mrb[0].mxu0
        %v2350 = vadd.f32 %v2157, %v2349
        %2351 = vdwg.mxu0
        %2352 = vmatprep.subr.bf16.mxu0 %v1713
        %2353 = vmatpush1.bf16.msra.mxu0 %v1712
        %2354 = vmatprep.subr.bf16.mxu0 %v1717
        %2355 = vmatpush1.bf16.msra.mxu0 %v1716
        %2356 = vmatprep.subr.bf16.mxu0 %v1721
        %2357 = vmatpush1.bf16.msra.mxu0 %v1720
        %2358 = vmatprep.subr.bf16.mxu0 %v1725
        %2359 = vmatpush1.bf16.msra.mxu0 %v1724
        %2360 = vmatprep.subr.bf16.mxu0 %v1729
        %2361 = vmatpush1.bf16.msra.mxu0 %v1728
        %2362 = vmatprep.subr.bf16.mxu0 %v1733
        %2363 = vmatpush1.bf16.msra.mxu0 %v1732
        %2364 = vmatprep.subr.bf16.mxu0 %v1737
        %2365 = vmatpush1.bf16.msra.mxu0 %v1736
        %2366 = vmatprep.subr.bf16.mxu0 %v1741
        %2367 = vmatpush1.bf16.msra.mxu0 %v1740
        %2368 = vmatprep.subr.bf16.mxu0 %v1745
        %2369 = vmatpush1.bf16.msra.mxu0 %v1744
        %2370 = vmatprep.subr.bf16.mxu0 %v1749
        %2371 = vmatpush1.bf16.msra.mxu0 %v1748
        %2372 = vmatprep.subr.bf16.mxu0 %v1753
        %2373 = vmatpush1.bf16.msra.mxu0 %v1752
        %2374 = vmatprep.subr.bf16.mxu0 %v1757
        %2375 = vmatpush1.bf16.msra.mxu0 %v1756
        %2376 = vmatprep.subr.bf16.mxu0 %v1761
        %2377 = vmatpush1.bf16.msra.mxu0 %v1760
        %2378 = vmatprep.subr.bf16.mxu0 %v1765
        %2379 = vmatpush1.bf16.msra.mxu0 %v1764
        %2380 = vmatprep.subr.bf16.mxu0 %v1769
        %2381 = vmatpush1.bf16.msra.mxu0 %v1768
        %2382 = vmatprep.subr.bf16.mxu0 %v1773
        %2383 = vmatpush1.bf16.msra.mxu0 %v1772
        %2384 = vmatprep.mubr.bf16.mxu0 %v1113
        %2385 = vmatmul.mubr.bf16.gmra.mrb[0].mxu0 %v1112
        %v2386 = vpop.f32.mrb[0].mxu0
        %v2387 = vadd.f32 %v1317, %v2386
        %v2388 = vpop.f32.mrb[0].mxu0
        %v2389 = vadd.f32 %v1321, %v2388
        %v2390 = vpop.f32.mrb[0].mxu0
        %v2391 = vadd.f32 %v1317, %v2390
        %v2392 = vpop.f32.mrb[0].mxu0
        %v2393 = vadd.f32 %v1321, %v2392
        %2394 = vmatprep.mubr.bf16.mxu0 %v1117
        %2395 = vmatmul.mubr.bf16.gmra.mrb[0].mxu0 %v1116
        %v2396 = vpop.f32.mrb[0].mxu0
        %v2397 = vadd.f32 %v1317, %v2396
        %v2398 = vpop.f32.mrb[0].mxu0
        %v2399 = vadd.f32 %v1321, %v2398
        %v2400 = vpop.f32.mrb[0].mxu0
        %v2401 = vadd.f32 %v1317, %v2400
        %v2402 = vpop.f32.mrb[0].mxu0
        %v2403 = vadd.f32 %v1321, %v2402
        %2404 = vmatprep.mubr.bf16.mxu0 %v1121
        %2405 = vmatmul.mubr.bf16.gmra.mrb[0].mxu0 %v1120
        %v2406 = vpop.f32.mrb[0].mxu0
        %v2407 = vadd.f32 %v1317, %v2406
        %v2408 = vpop.f32.mrb[0].mxu0
        %v2409 = vadd.f32 %v1321, %v2408
        %v2410 = vpop.f32.mrb[0].mxu0
        %v2411 = vadd.f32 %v1317, %v2410
        %v2412 = vpop.f32.mrb[0].mxu0
        %v2413 = vadd.f32 %v1321, %v2412
        %2414 = vmatprep.mubr.bf16.mxu0 %v1125
        %2415 = vmatmul.mubr.bf16.gmra.mrb[0].mxu0 %v1124
        %v2416 = vpop.f32.mrb[0].mxu0
        %v2417 = vadd.f32 %v1317, %v2416
        %v2418 = vpop.f32.mrb[0].mxu0
        %v2419 = vadd.f32 %v1321, %v2418
        %v2420 = vpop.f32.mrb[0].mxu0
        %v2421 = vadd.f32 %v1317, %v2420
        %v2422 = vpop.f32.mrb[0].mxu0
        %v2423 = vadd.f32 %v1321, %v2422
        %2424 = vmatprep.mubr.bf16.mxu0 %v1129
        %2425 = vmatmul.mubr.bf16.gmra.mrb[0].mxu0 %v1128
        %v2426 = vpop.f32.mrb[0].mxu0
        %v2427 = vadd.f32 %v1317, %v2426
        %v2428 = vpop.f32.mrb[0].mxu0
        %v2429 = vadd.f32 %v1321, %v2428
        %v2430 = vpop.f32.mrb[0].mxu0
        %v2431 = vadd.f32 %v1317, %v2430
        %v2432 = vpop.f32.mrb[0].mxu0
        %v2433 = vadd.f32 %v1321, %v2432
        %2434 = vmatprep.mubr.bf16.mxu0 %v1133
        %2435 = vmatmul.mubr.bf16.gmra.mrb[0].mxu0 %v1132
        %v2436 = vpop.f32.mrb[0].mxu0
        %v2437 = vadd.f32 %v1317, %v2436
        %v2438 = vpop.f32.mrb[0].mxu0
        %v2439 = vadd.f32 %v1321, %v2438
        %v2440 = vpop.f32.mrb[0].mxu0
        %v2441 = vadd.f32 %v1317, %v2440
        %v2442 = vpop.f32.mrb[0].mxu0
        %v2443 = vadd.f32 %v1321, %v2442
        %2444 = vmatprep.mubr.bf16.mxu0 %v1137
        %2445 = vmatmul.mubr.bf16.gmra.mrb[0].mxu0 %v1136
        %v2446 = vpop.f32.mrb[0].mxu0
        %v2447 = vadd.f32 %v1317, %v2446
        %v2448 = vpop.f32.mrb[0].mxu0
        %v2449 = vadd.f32 %v1321, %v2448
        %v2450 = vpop.f32.mrb[0].mxu0
        %v2451 = vadd.f32 %v1317, %v2450
        %v2452 = vpop.f32.mrb[0].mxu0
        %v2453 = vadd.f32 %v1321, %v2452
        %2454 = vmatprep.mubr.bf16.mxu0 %v1141
        %2455 = vmatmul.mubr.bf16.gmra.mrb[0].mxu0 %v1140
        %v2456 = vpop.f32.mrb[0].mxu0
        %v2457 = vadd.f32 %v1317, %v2456
        %v2458 = vpop.f32.mrb[0].mxu0
        %v2459 = vadd.f32 %v1321, %v2458
        %v2460 = vpop.f32.mrb[0].mxu0
        %v2461 = vadd.f32 %v1317, %v2460
        %v2462 = vpop.f32.mrb[0].mxu0
        %v2463 = vadd.f32 %v1321, %v2462
        %2464 = vmatprep.mubr.bf16.mxu0 %v1145
        %2465 = vmatmul.mubr.bf16.gmra.mrb[0].mxu0 %v1144
        %v2466 = vpop.f32.mrb[0].mxu0
        %v2467 = vadd.f32 %v1317, %v2466
        %v2468 = vpop.f32.mrb[0].mxu0
        %v2469 = vadd.f32 %v1321, %v2468
        %v2470 = vpop.f32.mrb[0].mxu0
        %v2471 = vadd.f32 %v1317, %v2470
        %v2472 = vpop.f32.mrb[0].mxu0
        %v2473 = vadd.f32 %v1321, %v2472
        %2474 = vmatprep.mubr.bf16.mxu0 %v1149
        %2475 = vmatmul.mubr.bf16.gmra.mrb[0].mxu0 %v1148
        %v2476 = vpop.f32.mrb[0].mxu0
        %v2477 = vadd.f32 %v1317, %v2476
        %v2478 = vpop.f32.mrb[0].mxu0
        %v2479 = vadd.f32 %v1321, %v2478
        %v2480 = vpop.f32.mrb[0].mxu0
        %v2481 = vadd.f32 %v1317, %v2480
        %v2482 = vpop.f32.mrb[0].mxu0
        %v2483 = vadd.f32 %v1321, %v2482
        %2484 = vmatprep.mubr.bf16.mxu0 %v1153
        %2485 = vmatmul.mubr.bf16.gmra.mrb[0].mxu0 %v1152
        %v2486 = vpop.f32.mrb[0].mxu0
        %v2487 = vadd.f32 %v1317, %v2486
        %v2488 = vpop.f32.mrb[0].mxu0
        %v2489 = vadd.f32 %v1321, %v2488
        %v2490 = vpop.f32.mrb[0].mxu0
        %v2491 = vadd.f32 %v1317, %v2490
        %v2492 = vpop.f32.mrb[0].mxu0
        %v2493 = vadd.f32 %v1321, %v2492
        %2494 = vmatprep.mubr.bf16.mxu0 %v1157
        %2495 = vmatmul.mubr.bf16.gmra.mrb[0].mxu0 %v1156
        %v2496 = vpop.f32.mrb[0].mxu0
        %v2497 = vadd.f32 %v1317, %v2496
        %v2498 = vpop.f32.mrb[0].mxu0
        %v2499 = vadd.f32 %v1321, %v2498
        %v2500 = vpop.f32.mrb[0].mxu0
        %v2501 = vadd.f32 %v1317, %v2500
        %v2502 = vpop.f32.mrb[0].mxu0
        %v2503 = vadd.f32 %v1321, %v2502
        %2504 = vmatprep.mubr.bf16.mxu0 %v1161
        %2505 = vmatmul.mubr.bf16.gmra.mrb[0].mxu0 %v1160
        %v2506 = vpop.f32.mrb[0].mxu0
        %v2507 = vadd.f32 %v1317, %v2506
        %v2508 = vpop.f32.mrb[0].mxu0
        %v2509 = vadd.f32 %v1321, %v2508
        %v2510 = vpop.f32.mrb[0].mxu0
        %v2511 = vadd.f32 %v1317, %v2510
        %v2512 = vpop.f32.mrb[0].mxu0
        %v2513 = vadd.f32 %v1321, %v2512
        %2514 = vmatprep.mubr.bf16.mxu0 %v1165
        %2515 = vmatmul.mubr.bf16.gmra.mrb[0].mxu0 %v1164
        %v2516 = vpop.f32.mrb[0].mxu0
        %v2517 = vadd.f32 %v1317, %v2516
        %v2518 = vpop.f32.mrb[0].mxu0
        %v2519 = vadd.f32 %v1321, %v2518
        %v2520 = vpop.f32.mrb[0].mxu0
        %v2521 = vadd.f32 %v1317, %v2520
        %v2522 = vpop.f32.mrb[0].mxu0
        %v2523 = vadd.f32 %v1321, %v2522
        %2524 = vmatprep.mubr.bf16.mxu0 %v1169
        %2525 = vmatmul.mubr.bf16.gmra.mrb[0].mxu0 %v1168
        %v2526 = vpop.f32.mrb[0].mxu0
        %v2527 = vadd.f32 %v1317, %v2526
        %v2528 = vpop.f32.mrb[0].mxu0
        %v2529 = vadd.f32 %v1321, %v2528
        %v2530 = vpop.f32.mrb[0].mxu0
        %v2531 = vadd.f32 %v1317, %v2530
        %v2532 = vpop.f32.mrb[0].mxu0
        %v2533 = vadd.f32 %v1321, %v2532
        %2534 = vmatprep.mubr.bf16.mxu0 %v1173
        %2535 = vmatmul.mubr.bf16.gmra.mrb[0].mxu0 %v1172
        %v2536 = vpop.f32.mrb[0].mxu0
        %v2537 = vadd.f32 %v1317, %v2536
        %v2538 = vpop.f32.mrb[0].mxu0
        %v2539 = vadd.f32 %v1321, %v2538
        %v2540 = vpop.f32.mrb[0].mxu0
        %v2541 = vadd.f32 %v1317, %v2540
        %v2542 = vpop.f32.mrb[0].mxu0
        %v2543 = vadd.f32 %v1321, %v2542
        %2544 = vdwg.mxu0
        %2545 = vmatprep.subr.bf16.mxu0 %v1777
        %2546 = vmatpush1.bf16.msra.mxu0 %v1776
        %2547 = vmatprep.subr.bf16.mxu0 %v1781
        %2548 = vmatpush1.bf16.msra.mxu0 %v1780
        %2549 = vmatprep.subr.bf16.mxu0 %v1785
        %2550 = vmatpush1.bf16.msra.mxu0 %v1784
        %2551 = vmatprep.subr.bf16.mxu0 %v1789
        %2552 = vmatpush1.bf16.msra.mxu0 %v1788
        %2553 = vmatprep.subr.bf16.mxu0 %v1793
        %2554 = vmatpush1.bf16.msra.mxu0 %v1792
        %2555 = vmatprep.subr.bf16.mxu0 %v1797
        %2556 = vmatpush1.bf16.msra.mxu0 %v1796
        %2557 = vmatprep.subr.bf16.mxu0 %v1801
        %2558 = vmatpush1.bf16.msra.mxu0 %v1800
        %2559 = vmatprep.subr.bf16.mxu0 %v1805
        %2560 = vmatpush1.bf16.msra.mxu0 %v1804
        %2561 = vmatprep.subr.bf16.mxu0 %v1809
        %2562 = vmatpush1.bf16.msra.mxu0 %v1808
        %2563 = vmatprep.subr.bf16.mxu0 %v1813
        %2564 = vmatpush1.bf16.msra.mxu0 %v1812
        %2565 = vmatprep.subr.bf16.mxu0 %v1817
        %2566 = vmatpush1.bf16.msra.mxu0 %v1816
        %2567 = vmatprep.subr.bf16.mxu0 %v1821
        %2568 = vmatpush1.bf16.msra.mxu0 %v1820
        %2569 = vmatprep.subr.bf16.mxu0 %v1825
        %2570 = vmatpush1.bf16.msra.mxu0 %v1824
        %2571 = vmatprep.subr.bf16.mxu0 %v1829
        %2572 = vmatpush1.bf16.msra.mxu0 %v1828
        %2573 = vmatprep.subr.bf16.mxu0 %v1833
        %2574 = vmatpush1.bf16.msra.mxu0 %v1832
        %2575 = vmatprep.subr.bf16.mxu0 %v1837
        %2576 = vmatpush1.bf16.msra.mxu0 %v1836
        %2577 = vmatprep.mubr.bf16.mxu0 %v1115
        %2578 = vmatmul.mubr.bf16.gmra.mrb[0].mxu0 %v1114
        %v2579 = vpop.f32.mrb[0].mxu0
        %v2580 = vadd.f32 %v2387, %v2579
        %v2581 = vpop.f32.mrb[0].mxu0
        %v2582 = vadd.f32 %v2389, %v2581
        %v2583 = vpop.f32.mrb[0].mxu0
        %v2584 = vadd.f32 %v2391, %v2583
        %v2585 = vpop.f32.mrb[0].mxu0
        %v2586 = vadd.f32 %v2393, %v2585
        %2587 = vmatprep.mubr.bf16.mxu0 %v1119
        %2588 = vmatmul.mubr.bf16.gmra.mrb[0].mxu0 %v1118
        %v2589 = vpop.f32.mrb[0].mxu0
        %v2590 = vadd.f32 %v2397, %v2589
        %v2591 = vpop.f32.mrb[0].mxu0
        %v2592 = vadd.f32 %v2399, %v2591
        %v2593 = vpop.f32.mrb[0].mxu0
        %v2594 = vadd.f32 %v2401, %v2593
        %v2595 = vpop.f32.mrb[0].mxu0
        %v2596 = vadd.f32 %v2403, %v2595
        %2597 = vmatprep.mubr.bf16.mxu0 %v1123
        %2598 = vmatmul.mubr.bf16.gmra.mrb[0].mxu0 %v1122
        %v2599 = vpop.f32.mrb[0].mxu0
        %v2600 = vadd.f32 %v2407, %v2599
        %v2601 = vpop.f32.mrb[0].mxu0
        %v2602 = vadd.f32 %v2409, %v2601
        %v2603 = vpop.f32.mrb[0].mxu0
        %v2604 = vadd.f32 %v2411, %v2603
        %v2605 = vpop.f32.mrb[0].mxu0
        %v2606 = vadd.f32 %v2413, %v2605
        %2607 = vmatprep.mubr.bf16.mxu0 %v1127
        %2608 = vmatmul.mubr.bf16.gmra.mrb[0].mxu0 %v1126
        %v2609 = vpop.f32.mrb[0].mxu0
        %v2610 = vadd.f32 %v2417, %v2609
        %v2611 = vpop.f32.mrb[0].mxu0
        %v2612 = vadd.f32 %v2419, %v2611
        %v2613 = vpop.f32.mrb[0].mxu0
        %v2614 = vadd.f32 %v2421, %v2613
        %v2615 = vpop.f32.mrb[0].mxu0
        %v2616 = vadd.f32 %v2423, %v2615
        %2617 = vmatprep.mubr.bf16.mxu0 %v1131
        %2618 = vmatmul.mubr.bf16.gmra.mrb[0].mxu0 %v1130
        %v2619 = vpop.f32.mrb[0].mxu0
        %v2620 = vadd.f32 %v2427, %v2619
        %v2621 = vpop.f32.mrb[0].mxu0
        %v2622 = vadd.f32 %v2429, %v2621
        %v2623 = vpop.f32.mrb[0].mxu0
        %v2624 = vadd.f32 %v2431, %v2623
        %v2625 = vpop.f32.mrb[0].mxu0
        %v2626 = vadd.f32 %v2433, %v2625
        %2627 = vmatprep.mubr.bf16.mxu0 %v1135
        %2628 = vmatmul.mubr.bf16.gmra.mrb[0].mxu0 %v1134
        %v2629 = vpop.f32.mrb[0].mxu0
        %v2630 = vadd.f32 %v2437, %v2629
        %v2631 = vpop.f32.mrb[0].mxu0
        %v2632 = vadd.f32 %v2439, %v2631
        %v2633 = vpop.f32.mrb[0].mxu0
        %v2634 = vadd.f32 %v2441, %v2633
        %v2635 = vpop.f32.mrb[0].mxu0
        %v2636 = vadd.f32 %v2443, %v2635
        %2637 = vmatprep.mubr.bf16.mxu0 %v1139
        %2638 = vmatmul.mubr.bf16.gmra.mrb[0].mxu0 %v1138
        %v2639 = vpop.f32.mrb[0].mxu0
        %v2640 = vadd.f32 %v2447, %v2639
        %v2641 = vpop.f32.mrb[0].mxu0
        %v2642 = vadd.f32 %v2449, %v2641
        %v2643 = vpop.f32.mrb[0].mxu0
        %v2644 = vadd.f32 %v2451, %v2643
        %v2645 = vpop.f32.mrb[0].mxu0
        %v2646 = vadd.f32 %v2453, %v2645
        %2647 = vmatprep.mubr.bf16.mxu0 %v1143
        %2648 = vmatmul.mubr.bf16.gmra.mrb[0].mxu0 %v1142
        %v2649 = vpop.f32.mrb[0].mxu0
        %v2650 = vadd.f32 %v2457, %v2649
        %v2651 = vpop.f32.mrb[0].mxu0
        %v2652 = vadd.f32 %v2459, %v2651
        %v2653 = vpop.f32.mrb[0].mxu0
        %v2654 = vadd.f32 %v2461, %v2653
        %v2655 = vpop.f32.mrb[0].mxu0
        %v2656 = vadd.f32 %v2463, %v2655
        %2657 = vmatprep.mubr.bf16.mxu0 %v1147
        %2658 = vmatmul.mubr.bf16.gmra.mrb[0].mxu0 %v1146
        %v2659 = vpop.f32.mrb[0].mxu0
        %v2660 = vadd.f32 %v2467, %v2659
        %v2661 = vpop.f32.mrb[0].mxu0
        %v2662 = vadd.f32 %v2469, %v2661
        %v2663 = vpop.f32.mrb[0].mxu0
        %v2664 = vadd.f32 %v2471, %v2663
        %v2665 = vpop.f32.mrb[0].mxu0
        %v2666 = vadd.f32 %v2473, %v2665
        %2667 = vmatprep.mubr.bf16.mxu0 %v1151
        %2668 = vmatmul.mubr.bf16.gmra.mrb[0].mxu0 %v1150
        %v2669 = vpop.f32.mrb[0].mxu0
        %v2670 = vadd.f32 %v2477, %v2669
        %v2671 = vpop.f32.mrb[0].mxu0
        %v2672 = vadd.f32 %v2479, %v2671
        %v2673 = vpop.f32.mrb[0].mxu0
        %v2674 = vadd.f32 %v2481, %v2673
        %v2675 = vpop.f32.mrb[0].mxu0
        %v2676 = vadd.f32 %v2483, %v2675
        %2677 = vmatprep.mubr.bf16.mxu0 %v1155
        %2678 = vmatmul.mubr.bf16.gmra.mrb[0].mxu0 %v1154
        %v2679 = vpop.f32.mrb[0].mxu0
        %v2680 = vadd.f32 %v2487, %v2679
        %v2681 = vpop.f32.mrb[0].mxu0
        %v2682 = vadd.f32 %v2489, %v2681
        %v2683 = vpop.f32.mrb[0].mxu0
        %v2684 = vadd.f32 %v2491, %v2683
        %v2685 = vpop.f32.mrb[0].mxu0
        %v2686 = vadd.f32 %v2493, %v2685
        %2687 = vmatprep.mubr.bf16.mxu0 %v1159
        %2688 = vmatmul.mubr.bf16.gmra.mrb[0].mxu0 %v1158
        %v2689 = vpop.f32.mrb[0].mxu0
        %v2690 = vadd.f32 %v2497, %v2689
        %v2691 = vpop.f32.mrb[0].mxu0
        %v2692 = vadd.f32 %v2499, %v2691
        %v2693 = vpop.f32.mrb[0].mxu0
        %v2694 = vadd.f32 %v2501, %v2693
        %v2695 = vpop.f32.mrb[0].mxu0
        %v2696 = vadd.f32 %v2503, %v2695
        %2697 = vmatprep.mubr.bf16.mxu0 %v1163
        %2698 = vmatmul.mubr.bf16.gmra.mrb[0].mxu0 %v1162
        %v2699 = vpop.f32.mrb[0].mxu0
        %v2700 = vadd.f32 %v2507, %v2699
        %v2701 = vpop.f32.mrb[0].mxu0
        %v2702 = vadd.f32 %v2509, %v2701
        %v2703 = vpop.f32.mrb[0].mxu0
        %v2704 = vadd.f32 %v2511, %v2703
        %v2705 = vpop.f32.mrb[0].mxu0
        %v2706 = vadd.f32 %v2513, %v2705
        %2707 = vmatprep.mubr.bf16.mxu0 %v1167
        %2708 = vmatmul.mubr.bf16.gmra.mrb[0].mxu0 %v1166
        %v2709 = vpop.f32.mrb[0].mxu0
        %v2710 = vadd.f32 %v2517, %v2709
        %v2711 = vpop.f32.mrb[0].mxu0
        %v2712 = vadd.f32 %v2519, %v2711
        %v2713 = vpop.f32.mrb[0].mxu0
        %v2714 = vadd.f32 %v2521, %v2713
        %v2715 = vpop.f32.mrb[0].mxu0
        %v2716 = vadd.f32 %v2523, %v2715
        %2717 = vmatprep.mubr.bf16.mxu0 %v1171
        %2718 = vmatmul.mubr.bf16.gmra.mrb[0].mxu0 %v1170
        %v2719 = vpop.f32.mrb[0].mxu0
        %v2720 = vadd.f32 %v2527, %v2719
        %v2721 = vpop.f32.mrb[0].mxu0
        %v2722 = vadd.f32 %v2529, %v2721
        %v2723 = vpop.f32.mrb[0].mxu0
        %v2724 = vadd.f32 %v2531, %v2723
        %v2725 = vpop.f32.mrb[0].mxu0
        %v2726 = vadd.f32 %v2533, %v2725
        %2727 = vmatprep.mubr.bf16.mxu0 %v1175
        %2728 = vmatmul.mubr.bf16.gmra.mrb[0].mxu0 %v1174
        %v2729 = vpop.f32.mrb[0].mxu0
        %v2730 = vadd.f32 %v2537, %v2729
        %v2731 = vpop.f32.mrb[0].mxu0
        %v2732 = vadd.f32 %v2539, %v2731
        %v2733 = vpop.f32.mrb[0].mxu0
        %v2734 = vadd.f32 %v2541, %v2733
        %v2735 = vpop.f32.mrb[0].mxu0
        %v2736 = vadd.f32 %v2543, %v2735
        %2737 = vdwg.mxu0
        %v2738 = vmax.f32 %v2194, 0.0
        %v2739 = vmax.f32 %v2196, 0.0
        %v2740 = vmax.f32 %v2580, 0.0
        %v2741 = vmax.f32 %v2582, 0.0
        %v2742 = vmax.f32 %v2198, 0.0
        %v2743 = vmax.f32 %v2200, 0.0
        %v2744 = vmax.f32 %v2584, 0.0
        %v2745 = vmax.f32 %v2586, 0.0
        %v2746 = vmax.f32 %v2204, 0.0
        %v2747 = vmax.f32 %v2206, 0.0
        %v2748 = vmax.f32 %v2590, 0.0
        %v2749 = vmax.f32 %v2592, 0.0
        %v2750 = vmax.f32 %v2208, 0.0
        %v2751 = vmax.f32 %v2210, 0.0
        %v2752 = vmax.f32 %v2594, 0.0
        %v2753 = vmax.f32 %v2596, 0.0
        %v2754 = vmax.f32 %v2214, 0.0
        %v2755 = vmax.f32 %v2216, 0.0
        %v2756 = vmax.f32 %v2600, 0.0
        %v2757 = vmax.f32 %v2602, 0.0
        %v2758 = vmax.f32 %v2218, 0.0
        %v2759 = vmax.f32 %v2220, 0.0
        %v2760 = vmax.f32 %v2604, 0.0
        %v2761 = vmax.f32 %v2606, 0.0
        %v2762 = vmax.f32 %v2224, 0.0
        %v2763 = vmax.f32 %v2226, 0.0
        %v2764 = vmax.f32 %v2610, 0.0
        %v2765 = vmax.f32 %v2612, 0.0
        %v2766 = vmax.f32 %v2228, 0.0
        %v2767 = vmax.f32 %v2230, 0.0
        %v2768 = vmax.f32 %v2614, 0.0
        %v2769 = vmax.f32 %v2616, 0.0
        %v2770 = vmax.f32 %v2234, 0.0
        %v2771 = vmax.f32 %v2236, 0.0
        %v2772 = vmax.f32 %v2620, 0.0
        %v2773 = vmax.f32 %v2622, 0.0
        %v2774 = vmax.f32 %v2238, 0.0
        %v2775 = vmax.f32 %v2240, 0.0
        %v2776 = vmax.f32 %v2624, 0.0
        %v2777 = vmax.f32 %v2626, 0.0
        %v2778 = vmax.f32 %v2244, 0.0
        %v2779 = vmax.f32 %v2246, 0.0
        %v2780 = vmax.f32 %v2630, 0.0
        %v2781 = vmax.f32 %v2632, 0.0
        %v2782 = vmax.f32 %v2248, 0.0
        %v2783 = vmax.f32 %v2250, 0.0
        %v2784 = vmax.f32 %v2634, 0.0
        %v2785 = vmax.f32 %v2636, 0.0
        %v2786 = vmax.f32 %v2254, 0.0
        %v2787 = vmax.f32 %v2256, 0.0
        %v2788 = vmax.f32 %v2640, 0.0
        %v2789 = vmax.f32 %v2642, 0.0
        %v2790 = vmax.f32 %v2258, 0.0
        %v2791 = vmax.f32 %v2260, 0.0
        %v2792 = vmax.f32 %v2644, 0.0
        %v2793 = vmax.f32 %v2646, 0.0
        %v2794 = vmax.f32 %v2264, 0.0
        %v2795 = vmax.f32 %v2266, 0.0
        %v2796 = vmax.f32 %v2650, 0.0
        %v2797 = vmax.f32 %v2652, 0.0
        %v2798 = vmax.f32 %v2268, 0.0
        %v2799 = vmax.f32 %v2270, 0.0
        %v2800 = vmax.f32 %v2654, 0.0
        %v2801 = vmax.f32 %v2656, 0.0
        %v2802 = vmax.f32 %v2274, 0.0
        %v2803 = vmax.f32 %v2276, 0.0
        %v2804 = vmax.f32 %v2660, 0.0
        %v2805 = vmax.f32 %v2662, 0.0
        %v2806 = vmax.f32 %v2278, 0.0
        %v2807 = vmax.f32 %v2280, 0.0
        %v2808 = vmax.f32 %v2664, 0.0
        %v2809 = vmax.f32 %v2666, 0.0
        %v2810 = vmax.f32 %v2284, 0.0
        %v2811 = vmax.f32 %v2286, 0.0
        %v2812 = vmax.f32 %v2670, 0.0
        %v2813 = vmax.f32 %v2672, 0.0
        %v2814 = vmax.f32 %v2288, 0.0
        %v2815 = vmax.f32 %v2290, 0.0
        %v2816 = vmax.f32 %v2674, 0.0
        %v2817 = vmax.f32 %v2676, 0.0
        %v2818 = vmax.f32 %v2294, 0.0
        %v2819 = vmax.f32 %v2296, 0.0
        %v2820 = vmax.f32 %v2680, 0.0
        %v2821 = vmax.f32 %v2682, 0.0
        %v2822 = vmax.f32 %v2298, 0.0
        %v2823 = vmax.f32 %v2300, 0.0
        %v2824 = vmax.f32 %v2684, 0.0
        %v2825 = vmax.f32 %v2686, 0.0
        %v2826 = vmax.f32 %v2304, 0.0
        %v2827 = vmax.f32 %v2306, 0.0
        %v2828 = vmax.f32 %v2690, 0.0
        %v2829 = vmax.f32 %v2692, 0.0
        %v2830 = vmax.f32 %v2308, 0.0
        %v2831 = vmax.f32 %v2310, 0.0
        %v2832 = vmax.f32 %v2694, 0.0
        %v2833 = vmax.f32 %v2696, 0.0
        %v2834 = vmax.f32 %v2314, 0.0
        %v2835 = vmax.f32 %v2316, 0.0
        %v2836 = vmax.f32 %v2700, 0.0
        %v2837 = vmax.f32 %v2702, 0.0
        %v2838 = vmax.f32 %v2318, 0.0
        %v2839 = vmax.f32 %v2320, 0.0
        %v2840 = vmax.f32 %v2704, 0.0
        %v2841 = vmax.f32 %v2706, 0.0
        %v2842 = vmax.f32 %v2324, 0.0
        %v2843 = vmax.f32 %v2326, 0.0
        %v2844 = vmax.f32 %v2710, 0.0
        %v2845 = vmax.f32 %v2712, 0.0
        %v2846 = vmax.f32 %v2328, 0.0
        %v2847 = vmax.f32 %v2330, 0.0
        %v2848 = vmax.f32 %v2714, 0.0
        %v2849 = vmax.f32 %v2716, 0.0
        %v2850 = vmax.f32 %v2334, 0.0
        %v2851 = vmax.f32 %v2336, 0.0
        %v2852 = vmax.f32 %v2720, 0.0
        %v2853 = vmax.f32 %v2722, 0.0
        %v2854 = vmax.f32 %v2338, 0.0
        %v2855 = vmax.f32 %v2340, 0.0
        %v2856 = vmax.f32 %v2724, 0.0
        %v2857 = vmax.f32 %v2726, 0.0
        %v2858 = vmax.f32 %v2344, 0.0
        %v2859 = vmax.f32 %v2346, 0.0
        %v2860 = vmax.f32 %v2730, 0.0
        %v2861 = vmax.f32 %v2732, 0.0
        %v2862 = vmax.f32 %v2348, 0.0
        %v2863 = vmax.f32 %v2350, 0.0
        %v2864 = vmax.f32 %v2734, 0.0
        %v2865 = vmax.f32 %v2736, 0.0
        %v2866 = vpack.c.bf16 %v2742, %v2738
        %v2867 = vpack.c.bf16 %v2743, %v2739
        %v2868 = vpack.c.bf16 %v2744, %v2740
        %v2869 = vpack.c.bf16 %v2745, %v2741
        %v2870 = vpack.c.bf16 %v2750, %v2746
        %v2871 = vpack.c.bf16 %v2751, %v2747
        %v2872 = vpack.c.bf16 %v2752, %v2748
        %v2873 = vpack.c.bf16 %v2753, %v2749
        %v2874 = vpack.c.bf16 %v2758, %v2754
        %v2875 = vpack.c.bf16 %v2759, %v2755
        %v2876 = vpack.c.bf16 %v2760, %v2756
        %v2877 = vpack.c.bf16 %v2761, %v2757
        %v2878 = vpack.c.bf16 %v2766, %v2762
        %v2879 = vpack.c.bf16 %v2767, %v2763
        %v2880 = vpack.c.bf16 %v2768, %v2764
        %v2881 = vpack.c.bf16 %v2769, %v2765
        %v2882 = vpack.c.bf16 %v2774, %v2770
        %v2883 = vpack.c.bf16 %v2775, %v2771
        %v2884 = vpack.c.bf16 %v2776, %v2772
        %v2885 = vpack.c.bf16 %v2777, %v2773
        %v2886 = vpack.c.bf16 %v2782, %v2778
        %v2887 = vpack.c.bf16 %v2783, %v2779
        %v2888 = vpack.c.bf16 %v2784, %v2780
        %v2889 = vpack.c.bf16 %v2785, %v2781
        %v2890 = vpack.c.bf16 %v2790, %v2786
        %v2891 = vpack.c.bf16 %v2791, %v2787
        %v2892 = vpack.c.bf16 %v2792, %v2788
        %v2893 = vpack.c.bf16 %v2793, %v2789
        %v2894 = vpack.c.bf16 %v2798, %v2794
        %v2895 = vpack.c.bf16 %v2799, %v2795
        %v2896 = vpack.c.bf16 %v2800, %v2796
        %v2897 = vpack.c.bf16 %v2801, %v2797
        %v2898 = vpack.c.bf16 %v2806, %v2802
        %v2899 = vpack.c.bf16 %v2807, %v2803
        %v2900 = vpack.c.bf16 %v2808, %v2804
        %v2901 = vpack.c.bf16 %v2809, %v2805
        %v2902 = vpack.c.bf16 %v2814, %v2810
        %v2903 = vpack.c.bf16 %v2815, %v2811
        %v2904 = vpack.c.bf16 %v2816, %v2812
        %v2905 = vpack.c.bf16 %v2817, %v2813
        %v2906 = vpack.c.bf16 %v2822, %v2818
        %v2907 = vpack.c.bf16 %v2823, %v2819
        %v2908 = vpack.c.bf16 %v2824, %v2820
        %v2909 = vpack.c.bf16 %v2825, %v2821
        %v2910 = vpack.c.bf16 %v2830, %v2826
        %v2911 = vpack.c.bf16 %v2831, %v2827
        %v2912 = vpack.c.bf16 %v2832, %v2828
        %v2913 = vpack.c.bf16 %v2833, %v2829
        %v2914 = vpack.c.bf16 %v2838, %v2834
        %v2915 = vpack.c.bf16 %v2839, %v2835
        %v2916 = vpack.c.bf16 %v2840, %v2836
        %v2917 = vpack.c.bf16 %v2841, %v2837
        %v2918 = vpack.c.bf16 %v2846, %v2842
        %v2919 = vpack.c.bf16 %v2847, %v2843
        %v2920 = vpack.c.bf16 %v2848, %v2844
        %v2921 = vpack.c.bf16 %v2849, %v2845
        %v2922 = vpack.c.bf16 %v2854, %v2850
        %v2923 = vpack.c.bf16 %v2855, %v2851
        %v2924 = vpack.c.bf16 %v2856, %v2852
        %v2925 = vpack.c.bf16 %v2857, %v2853
        %v2926 = vpack.c.bf16 %v2862, %v2858
        %v2927 = vpack.c.bf16 %v2863, %v2859
        %v2928 = vpack.c.bf16 %v2864, %v2860
        %v2929 = vpack.c.bf16 %v2865, %v2861
        %v2930 = vld [vmem:[#allocation6] sm:$0xff]
        %v2931 = vld [vmem:[#allocation6 + $0x8] sm:$0xff]
        %v2932 = vld [vmem:[#allocation6 + $0x10] sm:$0xff]
        %v2933 = vld [vmem:[#allocation6 + $0x18] sm:$0xff]
        %v2934 = vld [vmem:[#allocation6 + $0x20] sm:$0xff]
        %v2935 = vld [vmem:[#allocation6 + $0x28] sm:$0xff]
        %v2936 = vld [vmem:[#allocation6 + $0x30] sm:$0xff]
        %v2937 = vld [vmem:[#allocation6 + $0x38] sm:$0xff]
        %v2938 = vld [vmem:[#allocation6 + $0x40] sm:$0xff]
        %v2939 = vld [vmem:[#allocation6 + $0x48] sm:$0xff]
        %v2940 = vld [vmem:[#allocation6 + $0x50] sm:$0xff]
        %v2941 = vld [vmem:[#allocation6 + $0x58] sm:$0xff]
        %v2942 = vld [vmem:[#allocation6 + $0x60] sm:$0xff]
        %v2943 = vld [vmem:[#allocation6 + $0x68] sm:$0xff]
        %v2944 = vld [vmem:[#allocation6 + $0x70] sm:$0xff]
        %v2945 = vld [vmem:[#allocation6 + $0x78] sm:$0xff]
        %v2946 = vld [vmem:[#allocation6 + $0x80] sm:$0xff]
        %v2947 = vld [vmem:[#allocation6 + $0x88] sm:$0xff]
        %v2948 = vld [vmem:[#allocation6 + $0x90] sm:$0xff]
        %v2949 = vld [vmem:[#allocation6 + $0x98] sm:$0xff]
        %v2950 = vld [vmem:[#allocation6 + $0xa0] sm:$0xff]
        %v2951 = vld [vmem:[#allocation6 + $0xa8] sm:$0xff]
        %v2952 = vld [vmem:[#allocation6 + $0xb0] sm:$0xff]
        %v2953 = vld [vmem:[#allocation6 + $0xb8] sm:$0xff]
        %v2954 = vld [vmem:[#allocation6 + $0xc0] sm:$0xff]
        %v2955 = vld [vmem:[#allocation6 + $0xc8] sm:$0xff]
        %v2956 = vld [vmem:[#allocation6 + $0xd0] sm:$0xff]
        %v2957 = vld [vmem:[#allocation6 + $0xd8] sm:$0xff]
        %v2958 = vld [vmem:[#allocation6 + $0xe0] sm:$0xff]
        %v2959 = vld [vmem:[#allocation6 + $0xe8] sm:$0xff]
        %v2960 = vld [vmem:[#allocation6 + $0xf0] sm:$0xff]
        %v2961 = vld [vmem:[#allocation6 + $0xf8] sm:$0xff]
        %v2962 = vld [vmem:[#allocation6 + $0x100] sm:$0xff]
        %v2963 = vld [vmem:[#allocation6 + $0x108] sm:$0xff]
        %v2964 = vld [vmem:[#allocation6 + $0x110] sm:$0xff]
        %v2965 = vld [vmem:[#allocation6 + $0x118] sm:$0xff]
        %v2966 = vld [vmem:[#allocation6 + $0x120] sm:$0xff]
        %v2967 = vld [vmem:[#allocation6 + $0x128] sm:$0xff]
        %v2968 = vld [vmem:[#allocation6 + $0x130] sm:$0xff]
        %v2969 = vld [vmem:[#allocation6 + $0x138] sm:$0xff]
        %v2970 = vld [vmem:[#allocation6 + $0x140] sm:$0xff]
        %v2971 = vld [vmem:[#allocation6 + $0x148] sm:$0xff]
        %v2972 = vld [vmem:[#allocation6 + $0x150] sm:$0xff]
        %v2973 = vld [vmem:[#allocation6 + $0x158] sm:$0xff]
        %v2974 = vld [vmem:[#allocation6 + $0x160] sm:$0xff]
        %v2975 = vld [vmem:[#allocation6 + $0x168] sm:$0xff]
        %v2976 = vld [vmem:[#allocation6 + $0x170] sm:$0xff]
        %v2977 = vld [vmem:[#allocation6 + $0x178] sm:$0xff]
        %v2978 = vld [vmem:[#allocation6 + $0x180] sm:$0xff]
        %v2979 = vld [vmem:[#allocation6 + $0x188] sm:$0xff]
        %v2980 = vld [vmem:[#allocation6 + $0x190] sm:$0xff]
        %v2981 = vld [vmem:[#allocation6 + $0x198] sm:$0xff]
        %v2982 = vld [vmem:[#allocation6 + $0x1a0] sm:$0xff]
        %v2983 = vld [vmem:[#allocation6 + $0x1a8] sm:$0xff]
        %v2984 = vld [vmem:[#allocation6 + $0x1b0] sm:$0xff]
        %v2985 = vld [vmem:[#allocation6 + $0x1b8] sm:$0xff]
        %v2986 = vld [vmem:[#allocation6 + $0x1c0] sm:$0xff]
        %v2987 = vld [vmem:[#allocation6 + $0x1c8] sm:$0xff]
        %v2988 = vld [vmem:[#allocation6 + $0x1d0] sm:$0xff]
        %v2989 = vld [vmem:[#allocation6 + $0x1d8] sm:$0xff]
        %v2990 = vld [vmem:[#allocation6 + $0x1e0] sm:$0xff]
        %v2991 = vld [vmem:[#allocation6 + $0x1e8] sm:$0xff]
        %v2992 = vld [vmem:[#allocation6 + $0x1f0] sm:$0xff]
        %v2993 = vld [vmem:[#allocation6 + $0x1f8] sm:$0xff]
        %v2994 = vld [vmem:[#allocation6 + $0x200] sm:$0xff]
        %v2995 = vld [vmem:[#allocation6 + $0x208] sm:$0xff]
        %v2996 = vld [vmem:[#allocation6 + $0x210] sm:$0xff]
        %v2997 = vld [vmem:[#allocation6 + $0x218] sm:$0xff]
        %v2998 = vld [vmem:[#allocation6 + $0x220] sm:$0xff]
        %v2999 = vld [vmem:[#allocation6 + $0x228] sm:$0xff]
        %v3000 = vld [vmem:[#allocation6 + $0x230] sm:$0xff]
        %v3001 = vld [vmem:[#allocation6 + $0x238] sm:$0xff]
        %v3002 = vld [vmem:[#allocation6 + $0x240] sm:$0xff]
        %v3003 = vld [vmem:[#allocation6 + $0x248] sm:$0xff]
        %v3004 = vld [vmem:[#allocation6 + $0x250] sm:$0xff]
        %v3005 = vld [vmem:[#allocation6 + $0x258] sm:$0xff]
        %v3006 = vld [vmem:[#allocation6 + $0x260] sm:$0xff]
        %v3007 = vld [vmem:[#allocation6 + $0x268] sm:$0xff]
        %v3008 = vld [vmem:[#allocation6 + $0x270] sm:$0xff]
        %v3009 = vld [vmem:[#allocation6 + $0x278] sm:$0xff]
        %v3010 = vld [vmem:[#allocation6 + $0x280] sm:$0xff]
        %v3011 = vld [vmem:[#allocation6 + $0x288] sm:$0xff]
        %v3012 = vld [vmem:[#allocation6 + $0x290] sm:$0xff]
        %v3013 = vld [vmem:[#allocation6 + $0x298] sm:$0xff]
        %v3014 = vld [vmem:[#allocation6 + $0x2a0] sm:$0xff]
        %v3015 = vld [vmem:[#allocation6 + $0x2a8] sm:$0xff]
        %v3016 = vld [vmem:[#allocation6 + $0x2b0] sm:$0xff]
        %v3017 = vld [vmem:[#allocation6 + $0x2b8] sm:$0xff]
        %v3018 = vld [vmem:[#allocation6 + $0x2c0] sm:$0xff]
        %v3019 = vld [vmem:[#allocation6 + $0x2c8] sm:$0xff]
        %v3020 = vld [vmem:[#allocation6 + $0x2d0] sm:$0xff]
        %v3021 = vld [vmem:[#allocation6 + $0x2d8] sm:$0xff]
        %v3022 = vld [vmem:[#allocation6 + $0x2e0] sm:$0xff]
        %v3023 = vld [vmem:[#allocation6 + $0x2e8] sm:$0xff]
        %v3024 = vld [vmem:[#allocation6 + $0x2f0] sm:$0xff]
        %v3025 = vld [vmem:[#allocation6 + $0x2f8] sm:$0xff]
        %v3026 = vld [vmem:[#allocation6 + $0x300] sm:$0xff]
        %v3027 = vld [vmem:[#allocation6 + $0x308] sm:$0xff]
        %v3028 = vld [vmem:[#allocation6 + $0x310] sm:$0xff]
        %v3029 = vld [vmem:[#allocation6 + $0x318] sm:$0xff]
        %v3030 = vld [vmem:[#allocation6 + $0x320] sm:$0xff]
        %v3031 = vld [vmem:[#allocation6 + $0x328] sm:$0xff]
        %v3032 = vld [vmem:[#allocation6 + $0x330] sm:$0xff]
        %v3033 = vld [vmem:[#allocation6 + $0x338] sm:$0xff]
        %v3034 = vld [vmem:[#allocation6 + $0x340] sm:$0xff]
        %v3035 = vld [vmem:[#allocation6 + $0x348] sm:$0xff]
        %v3036 = vld [vmem:[#allocation6 + $0x350] sm:$0xff]
        %v3037 = vld [vmem:[#allocation6 + $0x358] sm:$0xff]
        %v3038 = vld [vmem:[#allocation6 + $0x360] sm:$0xff]
        %v3039 = vld [vmem:[#allocation6 + $0x368] sm:$0xff]
        %v3040 = vld [vmem:[#allocation6 + $0x370] sm:$0xff]
        %v3041 = vld [vmem:[#allocation6 + $0x378] sm:$0xff]
        %v3042 = vld [vmem:[#allocation6 + $0x380] sm:$0xff]
        %v3043 = vld [vmem:[#allocation6 + $0x388] sm:$0xff]
        %v3044 = vld [vmem:[#allocation6 + $0x390] sm:$0xff]
        %v3045 = vld [vmem:[#allocation6 + $0x398] sm:$0xff]
        %v3046 = vld [vmem:[#allocation6 + $0x3a0] sm:$0xff]
        %v3047 = vld [vmem:[#allocation6 + $0x3a8] sm:$0xff]
        %v3048 = vld [vmem:[#allocation6 + $0x3b0] sm:$0xff]
        %v3049 = vld [vmem:[#allocation6 + $0x3b8] sm:$0xff]
        %v3050 = vld [vmem:[#allocation6 + $0x3c0] sm:$0xff]
        %v3051 = vld [vmem:[#allocation6 + $0x3c8] sm:$0xff]
        %v3052 = vld [vmem:[#allocation6 + $0x3d0] sm:$0xff]
        %v3053 = vld [vmem:[#allocation6 + $0x3d8] sm:$0xff]
        %v3054 = vld [vmem:[#allocation6 + $0x3e0] sm:$0xff]
        %v3055 = vld [vmem:[#allocation6 + $0x3e8] sm:$0xff]
        %v3056 = vld [vmem:[#allocation6 + $0x3f0] sm:$0xff]
        %v3057 = vld [vmem:[#allocation6 + $0x3f8] sm:$0xff]
        %v3058 = vld [vmem:[%s6] sm:$0xf]
        %v3060 = vlaneseq
        %v3061 = vshrl.u32 %v3060, 7
        %v3062 = vsub.s32 0, %v3061
        %v3063 = vrot.slane %v3058, %v3062
        %v3064 = vlaneseq
        %v3065 = vshrl.u32 %v3064, 7
        %v3066 = vsub.s32 1, %v3065
        %v3067 = vrot.slane %v3058, %v3066
        %v3068 = vlaneseq
        %v3069 = vshrl.u32 %v3068, 7
        %v3070 = vsub.s32 2, %v3069
        %v3071 = vrot.slane %v3058, %v3070
        %v3072 = vlaneseq
        %v3073 = vshrl.u32 %v3072, 7
        %v3074 = vsub.s32 3, %v3073
        %v3075 = vrot.slane %v3058, %v3074
        %v3208 = vunpack.c.l.b16 %v2930
        %v3209 = vunpack.c.h.b16 %v2930
        %v3210 = vunpack.c.l.b16 %v2931
        %v3211 = vunpack.c.h.b16 %v2931
        %v3212 = vunpack.c.l.b16 %v2932
        %v3213 = vunpack.c.h.b16 %v2932
        %v3214 = vunpack.c.l.b16 %v2933
        %v3215 = vunpack.c.h.b16 %v2933
        %v3216 = vunpack.c.l.b16 %v2934
        %v3217 = vunpack.c.h.b16 %v2934
        %v3218 = vunpack.c.l.b16 %v2935
        %v3219 = vunpack.c.h.b16 %v2935
        %v3220 = vunpack.c.l.b16 %v2936
        %v3221 = vunpack.c.h.b16 %v2936
        %v3222 = vunpack.c.l.b16 %v2937
        %v3223 = vunpack.c.h.b16 %v2937
        %v3224 = vunpack.c.l.b16 %v2938
        %v3225 = vunpack.c.h.b16 %v2938
        %v3226 = vunpack.c.l.b16 %v2939
        %v3227 = vunpack.c.h.b16 %v2939
        %v3228 = vunpack.c.l.b16 %v2940
        %v3229 = vunpack.c.h.b16 %v2940
        %v3230 = vunpack.c.l.b16 %v2941
        %v3231 = vunpack.c.h.b16 %v2941
        %v3232 = vunpack.c.l.b16 %v2942
        %v3233 = vunpack.c.h.b16 %v2942
        %v3234 = vunpack.c.l.b16 %v2943
        %v3235 = vunpack.c.h.b16 %v2943
        %v3236 = vunpack.c.l.b16 %v2944
        %v3237 = vunpack.c.h.b16 %v2944
        %v3238 = vunpack.c.l.b16 %v2945
        %v3239 = vunpack.c.h.b16 %v2945
        %v3240 = vunpack.c.l.b16 %v2946
        %v3241 = vunpack.c.h.b16 %v2946
        %v3242 = vunpack.c.l.b16 %v2947
        %v3243 = vunpack.c.h.b16 %v2947
        %v3244 = vunpack.c.l.b16 %v2948
        %v3245 = vunpack.c.h.b16 %v2948
        %v3246 = vunpack.c.l.b16 %v2949
        %v3247 = vunpack.c.h.b16 %v2949
        %v3248 = vunpack.c.l.b16 %v2950
        %v3249 = vunpack.c.h.b16 %v2950
        %v3250 = vunpack.c.l.b16 %v2951
        %v3251 = vunpack.c.h.b16 %v2951
        %v3252 = vunpack.c.l.b16 %v2952
        %v3253 = vunpack.c.h.b16 %v2952
        %v3254 = vunpack.c.l.b16 %v2953
        %v3255 = vunpack.c.h.b16 %v2953
        %v3256 = vunpack.c.l.b16 %v2954
        %v3257 = vunpack.c.h.b16 %v2954
        %v3258 = vunpack.c.l.b16 %v2955
        %v3259 = vunpack.c.h.b16 %v2955
        %v3260 = vunpack.c.l.b16 %v2956
        %v3261 = vunpack.c.h.b16 %v2956
        %v3262 = vunpack.c.l.b16 %v2957
        %v3263 = vunpack.c.h.b16 %v2957
        %v3264 = vunpack.c.l.b16 %v2958
        %v3265 = vunpack.c.h.b16 %v2958
        %v3266 = vunpack.c.l.b16 %v2959
        %v3267 = vunpack.c.h.b16 %v2959
        %v3268 = vunpack.c.l.b16 %v2960
        %v3269 = vunpack.c.h.b16 %v2960
        %v3270 = vunpack.c.l.b16 %v2961
        %v3271 = vunpack.c.h.b16 %v2961
        %v3272 = vunpack.c.l.b16 %v2962
        %v3273 = vunpack.c.h.b16 %v2962
        %v3274 = vunpack.c.l.b16 %v2963
        %v3275 = vunpack.c.h.b16 %v2963
        %v3276 = vunpack.c.l.b16 %v2964
        %v3277 = vunpack.c.h.b16 %v2964
        %v3278 = vunpack.c.l.b16 %v2965
        %v3279 = vunpack.c.h.b16 %v2965
        %v3280 = vunpack.c.l.b16 %v2966
        %v3281 = vunpack.c.h.b16 %v2966
        %v3282 = vunpack.c.l.b16 %v2967
        %v3283 = vunpack.c.h.b16 %v2967
        %v3284 = vunpack.c.l.b16 %v2968
        %v3285 = vunpack.c.h.b16 %v2968
        %v3286 = vunpack.c.l.b16 %v2969
        %v3287 = vunpack.c.h.b16 %v2969
        %v3288 = vunpack.c.l.b16 %v2970
        %v3289 = vunpack.c.h.b16 %v2970
        %v3290 = vunpack.c.l.b16 %v2971
        %v3291 = vunpack.c.h.b16 %v2971
        %v3292 = vunpack.c.l.b16 %v2972
        %v3293 = vunpack.c.h.b16 %v2972
        %v3294 = vunpack.c.l.b16 %v2973
        %v3295 = vunpack.c.h.b16 %v2973
        %v3296 = vunpack.c.l.b16 %v2974
        %v3297 = vunpack.c.h.b16 %v2974
        %v3298 = vunpack.c.l.b16 %v2975
        %v3299 = vunpack.c.h.b16 %v2975
        %v3300 = vunpack.c.l.b16 %v2976
        %v3301 = vunpack.c.h.b16 %v2976
        %v3302 = vunpack.c.l.b16 %v2977
        %v3303 = vunpack.c.h.b16 %v2977
        %v3304 = vunpack.c.l.b16 %v2978
        %v3305 = vunpack.c.h.b16 %v2978
        %v3306 = vunpack.c.l.b16 %v2979
        %v3307 = vunpack.c.h.b16 %v2979
        %v3308 = vunpack.c.l.b16 %v2980
        %v3309 = vunpack.c.h.b16 %v2980
        %v3310 = vunpack.c.l.b16 %v2981
        %v3311 = vunpack.c.h.b16 %v2981
        %v3312 = vunpack.c.l.b16 %v2982
        %v3313 = vunpack.c.h.b16 %v2982
        %v3314 = vunpack.c.l.b16 %v2983
        %v3315 = vunpack.c.h.b16 %v2983
        %v3316 = vunpack.c.l.b16 %v2984
        %v3317 = vunpack.c.h.b16 %v2984
        %v3318 = vunpack.c.l.b16 %v2985
        %v3319 = vunpack.c.h.b16 %v2985
        %v3320 = vunpack.c.l.b16 %v2986
        %v3321 = vunpack.c.h.b16 %v2986
        %v3322 = vunpack.c.l.b16 %v2987
        %v3323 = vunpack.c.h.b16 %v2987
        %v3324 = vunpack.c.l.b16 %v2988
        %v3325 = vunpack.c.h.b16 %v2988
        %v3326 = vunpack.c.l.b16 %v2989
        %v3327 = vunpack.c.h.b16 %v2989
        %v3328 = vunpack.c.l.b16 %v2990
        %v3329 = vunpack.c.h.b16 %v2990
        %v3330 = vunpack.c.l.b16 %v2991
        %v3331 = vunpack.c.h.b16 %v2991
        %v3332 = vunpack.c.l.b16 %v2992
        %v3333 = vunpack.c.h.b16 %v2992
        %v3334 = vunpack.c.l.b16 %v2993
        %v3335 = vunpack.c.h.b16 %v2993
        %v3336 = vunpack.c.l.b16 %v2994
        %v3337 = vunpack.c.h.b16 %v2994
        %v3338 = vunpack.c.l.b16 %v2995
        %v3339 = vunpack.c.h.b16 %v2995
        %v3340 = vunpack.c.l.b16 %v2996
        %v3341 = vunpack.c.h.b16 %v2996
        %v3342 = vunpack.c.l.b16 %v2997
        %v3343 = vunpack.c.h.b16 %v2997
        %v3344 = vunpack.c.l.b16 %v2998
        %v3345 = vunpack.c.h.b16 %v2998
        %v3346 = vunpack.c.l.b16 %v2999
        %v3347 = vunpack.c.h.b16 %v2999
        %v3348 = vunpack.c.l.b16 %v3000
        %v3349 = vunpack.c.h.b16 %v3000
        %v3350 = vunpack.c.l.b16 %v3001
        %v3351 = vunpack.c.h.b16 %v3001
        %v3352 = vunpack.c.l.b16 %v3002
        %v3353 = vunpack.c.h.b16 %v3002
        %v3354 = vunpack.c.l.b16 %v3003
        %v3355 = vunpack.c.h.b16 %v3003
        %v3356 = vunpack.c.l.b16 %v3004
        %v3357 = vunpack.c.h.b16 %v3004
        %v3358 = vunpack.c.l.b16 %v3005
        %v3359 = vunpack.c.h.b16 %v3005
        %v3360 = vunpack.c.l.b16 %v3006
        %v3361 = vunpack.c.h.b16 %v3006
        %v3362 = vunpack.c.l.b16 %v3007
        %v3363 = vunpack.c.h.b16 %v3007
        %v3364 = vunpack.c.l.b16 %v3008
        %v3365 = vunpack.c.h.b16 %v3008
        %v3366 = vunpack.c.l.b16 %v3009
        %v3367 = vunpack.c.h.b16 %v3009
        %v3368 = vunpack.c.l.b16 %v3010
        %v3369 = vunpack.c.h.b16 %v3010
        %v3370 = vunpack.c.l.b16 %v3011
        %v3371 = vunpack.c.h.b16 %v3011
        %v3372 = vunpack.c.l.b16 %v3012
        %v3373 = vunpack.c.h.b16 %v3012
        %v3374 = vunpack.c.l.b16 %v3013
        %v3375 = vunpack.c.h.b16 %v3013
        %v3376 = vunpack.c.l.b16 %v3014
        %v3377 = vunpack.c.h.b16 %v3014
        %v3378 = vunpack.c.l.b16 %v3015
        %v3379 = vunpack.c.h.b16 %v3015
        %v3380 = vunpack.c.l.b16 %v3016
        %v3381 = vunpack.c.h.b16 %v3016
        %v3382 = vunpack.c.l.b16 %v3017
        %v3383 = vunpack.c.h.b16 %v3017
        %v3384 = vunpack.c.l.b16 %v3018
        %v3385 = vunpack.c.h.b16 %v3018
        %v3386 = vunpack.c.l.b16 %v3019
        %v3387 = vunpack.c.h.b16 %v3019
        %v3388 = vunpack.c.l.b16 %v3020
        %v3389 = vunpack.c.h.b16 %v3020
        %v3390 = vunpack.c.l.b16 %v3021
        %v3391 = vunpack.c.h.b16 %v3021
        %v3392 = vunpack.c.l.b16 %v3022
        %v3393 = vunpack.c.h.b16 %v3022
        %v3394 = vunpack.c.l.b16 %v3023
        %v3395 = vunpack.c.h.b16 %v3023
        %v3396 = vunpack.c.l.b16 %v3024
        %v3397 = vunpack.c.h.b16 %v3024
        %v3398 = vunpack.c.l.b16 %v3025
        %v3399 = vunpack.c.h.b16 %v3025
        %v3400 = vunpack.c.l.b16 %v3026
        %v3401 = vunpack.c.h.b16 %v3026
        %v3402 = vunpack.c.l.b16 %v3027
        %v3403 = vunpack.c.h.b16 %v3027
        %v3404 = vunpack.c.l.b16 %v3028
        %v3405 = vunpack.c.h.b16 %v3028
        %v3406 = vunpack.c.l.b16 %v3029
        %v3407 = vunpack.c.h.b16 %v3029
        %v3408 = vunpack.c.l.b16 %v3030
        %v3409 = vunpack.c.h.b16 %v3030
        %v3410 = vunpack.c.l.b16 %v3031
        %v3411 = vunpack.c.h.b16 %v3031
        %v3412 = vunpack.c.l.b16 %v3032
        %v3413 = vunpack.c.h.b16 %v3032
        %v3414 = vunpack.c.l.b16 %v3033
        %v3415 = vunpack.c.h.b16 %v3033
        %v3416 = vunpack.c.l.b16 %v3034
        %v3417 = vunpack.c.h.b16 %v3034
        %v3418 = vunpack.c.l.b16 %v3035
        %v3419 = vunpack.c.h.b16 %v3035
        %v3420 = vunpack.c.l.b16 %v3036
        %v3421 = vunpack.c.h.b16 %v3036
        %v3422 = vunpack.c.l.b16 %v3037
        %v3423 = vunpack.c.h.b16 %v3037
        %v3424 = vunpack.c.l.b16 %v3038
        %v3425 = vunpack.c.h.b16 %v3038
        %v3426 = vunpack.c.l.b16 %v3039
        %v3427 = vunpack.c.h.b16 %v3039
        %v3428 = vunpack.c.l.b16 %v3040
        %v3429 = vunpack.c.h.b16 %v3040
        %v3430 = vunpack.c.l.b16 %v3041
        %v3431 = vunpack.c.h.b16 %v3041
        %v3432 = vunpack.c.l.b16 %v3042
        %v3433 = vunpack.c.h.b16 %v3042
        %v3434 = vunpack.c.l.b16 %v3043
        %v3435 = vunpack.c.h.b16 %v3043
        %v3436 = vunpack.c.l.b16 %v3044
        %v3437 = vunpack.c.h.b16 %v3044
        %v3438 = vunpack.c.l.b16 %v3045
        %v3439 = vunpack.c.h.b16 %v3045
        %v3440 = vunpack.c.l.b16 %v3046
        %v3441 = vunpack.c.h.b16 %v3046
        %v3442 = vunpack.c.l.b16 %v3047
        %v3443 = vunpack.c.h.b16 %v3047
        %v3444 = vunpack.c.l.b16 %v3048
        %v3445 = vunpack.c.h.b16 %v3048
        %v3446 = vunpack.c.l.b16 %v3049
        %v3447 = vunpack.c.h.b16 %v3049
        %v3448 = vunpack.c.l.b16 %v3050
        %v3449 = vunpack.c.h.b16 %v3050
        %v3450 = vunpack.c.l.b16 %v3051
        %v3451 = vunpack.c.h.b16 %v3051
        %v3452 = vunpack.c.l.b16 %v3052
        %v3453 = vunpack.c.h.b16 %v3052
        %v3454 = vunpack.c.l.b16 %v3053
        %v3455 = vunpack.c.h.b16 %v3053
        %v3456 = vunpack.c.l.b16 %v3054
        %v3457 = vunpack.c.h.b16 %v3054
        %v3458 = vunpack.c.l.b16 %v3055
        %v3459 = vunpack.c.h.b16 %v3055
        %v3460 = vunpack.c.l.b16 %v3056
        %v3461 = vunpack.c.h.b16 %v3056
        %v3462 = vunpack.c.l.b16 %v3057
        %v3463 = vunpack.c.h.b16 %v3057
        %v3464 = vpack.c.b16 %v3212, %v3208
        %v3465 = vpack.c.b16 %v3213, %v3209
        %v3466 = vpack.c.b16 %v3214, %v3210
        %v3467 = vpack.c.b16 %v3215, %v3211
        %v3468 = vpack.c.b16 %v3220, %v3216
        %v3469 = vpack.c.b16 %v3221, %v3217
        %v3470 = vpack.c.b16 %v3222, %v3218
        %v3471 = vpack.c.b16 %v3223, %v3219
        %v3472 = vpack.c.b16 %v3228, %v3224
        %v3473 = vpack.c.b16 %v3229, %v3225
        %v3474 = vpack.c.b16 %v3230, %v3226
        %v3475 = vpack.c.b16 %v3231, %v3227
        %v3476 = vpack.c.b16 %v3236, %v3232
        %v3477 = vpack.c.b16 %v3237, %v3233
        %v3478 = vpack.c.b16 %v3238, %v3234
        %v3479 = vpack.c.b16 %v3239, %v3235
        %v3480 = vpack.c.b16 %v3244, %v3240
        %v3481 = vpack.c.b16 %v3245, %v3241
        %v3482 = vpack.c.b16 %v3246, %v3242
        %v3483 = vpack.c.b16 %v3247, %v3243
        %v3484 = vpack.c.b16 %v3252, %v3248
        %v3485 = vpack.c.b16 %v3253, %v3249
        %v3486 = vpack.c.b16 %v3254, %v3250
        %v3487 = vpack.c.b16 %v3255, %v3251
        %v3488 = vpack.c.b16 %v3260, %v3256
        %v3489 = vpack.c.b16 %v3261, %v3257
        %v3490 = vpack.c.b16 %v3262, %v3258
        %v3491 = vpack.c.b16 %v3263, %v3259
        %v3492 = vpack.c.b16 %v3268, %v3264
        %v3493 = vpack.c.b16 %v3269, %v3265
        %v3494 = vpack.c.b16 %v3270, %v3266
        %v3495 = vpack.c.b16 %v3271, %v3267
        %v3496 = vpack.c.b16 %v3276, %v3272
        %v3497 = vpack.c.b16 %v3277, %v3273
        %v3498 = vpack.c.b16 %v3278, %v3274
        %v3499 = vpack.c.b16 %v3279, %v3275
        %v3500 = vpack.c.b16 %v3284, %v3280
        %v3501 = vpack.c.b16 %v3285, %v3281
        %v3502 = vpack.c.b16 %v3286, %v3282
        %v3503 = vpack.c.b16 %v3287, %v3283
        %v3504 = vpack.c.b16 %v3292, %v3288
        %v3505 = vpack.c.b16 %v3293, %v3289
        %v3506 = vpack.c.b16 %v3294, %v3290
        %v3507 = vpack.c.b16 %v3295, %v3291
        %v3508 = vpack.c.b16 %v3300, %v3296
        %v3509 = vpack.c.b16 %v3301, %v3297
        %v3510 = vpack.c.b16 %v3302, %v3298
        %v3511 = vpack.c.b16 %v3303, %v3299
        %v3512 = vpack.c.b16 %v3308, %v3304
        %v3513 = vpack.c.b16 %v3309, %v3305
        %v3514 = vpack.c.b16 %v3310, %v3306
        %v3515 = vpack.c.b16 %v3311, %v3307
        %v3516 = vpack.c.b16 %v3316, %v3312
        %v3517 = vpack.c.b16 %v3317, %v3313
        %v3518 = vpack.c.b16 %v3318, %v3314
        %v3519 = vpack.c.b16 %v3319, %v3315
        %v3520 = vpack.c.b16 %v3324, %v3320
        %v3521 = vpack.c.b16 %v3325, %v3321
        %v3522 = vpack.c.b16 %v3326, %v3322
        %v3523 = vpack.c.b16 %v3327, %v3323
        %v3524 = vpack.c.b16 %v3332, %v3328
        %v3525 = vpack.c.b16 %v3333, %v3329
        %v3526 = vpack.c.b16 %v3334, %v3330
        %v3527 = vpack.c.b16 %v3335, %v3331
        %v3528 = vpack.c.b16 %v3340, %v3336
        %v3529 = vpack.c.b16 %v3341, %v3337
        %v3530 = vpack.c.b16 %v3342, %v3338
        %v3531 = vpack.c.b16 %v3343, %v3339
        %v3532 = vpack.c.b16 %v3348, %v3344
        %v3533 = vpack.c.b16 %v3349, %v3345
        %v3534 = vpack.c.b16 %v3350, %v3346
        %v3535 = vpack.c.b16 %v3351, %v3347
        %v3536 = vpack.c.b16 %v3356, %v3352
        %v3537 = vpack.c.b16 %v3357, %v3353
        %v3538 = vpack.c.b16 %v3358, %v3354
        %v3539 = vpack.c.b16 %v3359, %v3355
        %v3540 = vpack.c.b16 %v3364, %v3360
        %v3541 = vpack.c.b16 %v3365, %v3361
        %v3542 = vpack.c.b16 %v3366, %v3362
        %v3543 = vpack.c.b16 %v3367, %v3363
        %v3544 = vpack.c.b16 %v3372, %v3368
        %v3545 = vpack.c.b16 %v3373, %v3369
        %v3546 = vpack.c.b16 %v3374, %v3370
        %v3547 = vpack.c.b16 %v3375, %v3371
        %v3548 = vpack.c.b16 %v3380, %v3376
        %v3549 = vpack.c.b16 %v3381, %v3377
        %v3550 = vpack.c.b16 %v3382, %v3378
        %v3551 = vpack.c.b16 %v3383, %v3379
        %v3552 = vpack.c.b16 %v3388, %v3384
        %v3553 = vpack.c.b16 %v3389, %v3385
        %v3554 = vpack.c.b16 %v3390, %v3386
        %v3555 = vpack.c.b16 %v3391, %v3387
        %v3556 = vpack.c.b16 %v3396, %v3392
        %v3557 = vpack.c.b16 %v3397, %v3393
        %v3558 = vpack.c.b16 %v3398, %v3394
        %v3559 = vpack.c.b16 %v3399, %v3395
        %v3560 = vpack.c.b16 %v3404, %v3400
        %v3561 = vpack.c.b16 %v3405, %v3401
        %v3562 = vpack.c.b16 %v3406, %v3402
        %v3563 = vpack.c.b16 %v3407, %v3403
        %v3564 = vpack.c.b16 %v3412, %v3408
        %v3565 = vpack.c.b16 %v3413, %v3409
        %v3566 = vpack.c.b16 %v3414, %v3410
        %v3567 = vpack.c.b16 %v3415, %v3411
        %v3568 = vpack.c.b16 %v3420, %v3416
        %v3569 = vpack.c.b16 %v3421, %v3417
        %v3570 = vpack.c.b16 %v3422, %v3418
        %v3571 = vpack.c.b16 %v3423, %v3419
        %v3572 = vpack.c.b16 %v3428, %v3424
        %v3573 = vpack.c.b16 %v3429, %v3425
        %v3574 = vpack.c.b16 %v3430, %v3426
        %v3575 = vpack.c.b16 %v3431, %v3427
        %v3576 = vpack.c.b16 %v3436, %v3432
        %v3577 = vpack.c.b16 %v3437, %v3433
        %v3578 = vpack.c.b16 %v3438, %v3434
        %v3579 = vpack.c.b16 %v3439, %v3435
        %v3580 = vpack.c.b16 %v3444, %v3440
        %v3581 = vpack.c.b16 %v3445, %v3441
        %v3582 = vpack.c.b16 %v3446, %v3442
        %v3583 = vpack.c.b16 %v3447, %v3443
        %v3584 = vpack.c.b16 %v3452, %v3448
        %v3585 = vpack.c.b16 %v3453, %v3449
        %v3586 = vpack.c.b16 %v3454, %v3450
        %v3587 = vpack.c.b16 %v3455, %v3451
        %v3588 = vpack.c.b16 %v3460, %v3456
        %v3589 = vpack.c.b16 %v3461, %v3457
        %v3590 = vpack.c.b16 %v3462, %v3458
        %v3591 = vpack.c.b16 %v3463, %v3459
        %3720 = vmatprep.subr.bf16.mxu0 %v3465
        %3721 = vmatpush1.bf16.msra.mxu0 %v3464
        %3722 = vmatprep.subr.bf16.mxu0 %v3469
        %3723 = vmatpush1.bf16.msra.mxu0 %v3468
        %3724 = vmatprep.subr.bf16.mxu0 %v3473
        %3725 = vmatpush1.bf16.msra.mxu0 %v3472
        %3726 = vmatprep.subr.bf16.mxu0 %v3477
        %3727 = vmatpush1.bf16.msra.mxu0 %v3476
        %3728 = vmatprep.subr.bf16.mxu0 %v3481
        %3729 = vmatpush1.bf16.msra.mxu0 %v3480
        %3730 = vmatprep.subr.bf16.mxu0 %v3485
        %3731 = vmatpush1.bf16.msra.mxu0 %v3484
        %3732 = vmatprep.subr.bf16.mxu0 %v3489
        %3733 = vmatpush1.bf16.msra.mxu0 %v3488
        %3734 = vmatprep.subr.bf16.mxu0 %v3493
        %3735 = vmatpush1.bf16.msra.mxu0 %v3492
        %3736 = vmatprep.subr.bf16.mxu0 %v3497
        %3737 = vmatpush1.bf16.msra.mxu0 %v3496
        %3738 = vmatprep.subr.bf16.mxu0 %v3501
        %3739 = vmatpush1.bf16.msra.mxu0 %v3500
        %3740 = vmatprep.subr.bf16.mxu0 %v3505
        %3741 = vmatpush1.bf16.msra.mxu0 %v3504
        %3742 = vmatprep.subr.bf16.mxu0 %v3509
        %3743 = vmatpush1.bf16.msra.mxu0 %v3508
        %3744 = vmatprep.subr.bf16.mxu0 %v3513
        %3745 = vmatpush1.bf16.msra.mxu0 %v3512
        %3746 = vmatprep.subr.bf16.mxu0 %v3517
        %3747 = vmatpush1.bf16.msra.mxu0 %v3516
        %3748 = vmatprep.subr.bf16.mxu0 %v3521
        %3749 = vmatpush1.bf16.msra.mxu0 %v3520
        %3750 = vmatprep.subr.bf16.mxu0 %v3525
        %3751 = vmatpush1.bf16.msra.mxu0 %v3524
        %3752 = vmatprep.mubr.bf16.mxu0 %v2867
        %3753 = vmatmul.mubr.bf16.gmra.mrb[0].mxu0 %v2866
        %v3754 = vpop.f32.mrb[0].mxu0
        %v3755 = vadd.f32 %v3063, %v3754
        %v3756 = vpop.f32.mrb[0].mxu0
        %v3757 = vadd.f32 %v3067, %v3756
        %v3758 = vpop.f32.mrb[0].mxu0
        %v3759 = vadd.f32 %v3063, %v3758
        %v3760 = vpop.f32.mrb[0].mxu0
        %v3761 = vadd.f32 %v3067, %v3760
        %3762 = vmatprep.mubr.bf16.mxu0 %v2871
        %3763 = vmatmul.mubr.bf16.gmra.mrb[0].mxu0 %v2870
        %v3764 = vpop.f32.mrb[0].mxu0
        %v3765 = vadd.f32 %v3063, %v3764
        %v3766 = vpop.f32.mrb[0].mxu0
        %v3767 = vadd.f32 %v3067, %v3766
        %v3768 = vpop.f32.mrb[0].mxu0
        %v3769 = vadd.f32 %v3063, %v3768
        %v3770 = vpop.f32.mrb[0].mxu0
        %v3771 = vadd.f32 %v3067, %v3770
        %3772 = vmatprep.mubr.bf16.mxu0 %v2875
        %3773 = vmatmul.mubr.bf16.gmra.mrb[0].mxu0 %v2874
        %v3774 = vpop.f32.mrb[0].mxu0
        %v3775 = vadd.f32 %v3063, %v3774
        %v3776 = vpop.f32.mrb[0].mxu0
        %v3777 = vadd.f32 %v3067, %v3776
        %v3778 = vpop.f32.mrb[0].mxu0
        %v3779 = vadd.f32 %v3063, %v3778
        %v3780 = vpop.f32.mrb[0].mxu0
        %v3781 = vadd.f32 %v3067, %v3780
        %3782 = vmatprep.mubr.bf16.mxu0 %v2879
        %3783 = vmatmul.mubr.bf16.gmra.mrb[0].mxu0 %v2878
        %v3784 = vpop.f32.mrb[0].mxu0
        %v3785 = vadd.f32 %v3063, %v3784
        %v3786 = vpop.f32.mrb[0].mxu0
        %v3787 = vadd.f32 %v3067, %v3786
        %v3788 = vpop.f32.mrb[0].mxu0
        %v3789 = vadd.f32 %v3063, %v3788
        %v3790 = vpop.f32.mrb[0].mxu0
        %v3791 = vadd.f32 %v3067, %v3790
        %3792 = vmatprep.mubr.bf16.mxu0 %v2883
        %3793 = vmatmul.mubr.bf16.gmra.mrb[0].mxu0 %v2882
        %v3794 = vpop.f32.mrb[0].mxu0
        %v3795 = vadd.f32 %v3063, %v3794
        %v3796 = vpop.f32.mrb[0].mxu0
        %v3797 = vadd.f32 %v3067, %v3796
        %v3798 = vpop.f32.mrb[0].mxu0
        %v3799 = vadd.f32 %v3063, %v3798
        %v3800 = vpop.f32.mrb[0].mxu0
        %v3801 = vadd.f32 %v3067, %v3800
        %3802 = vmatprep.mubr.bf16.mxu0 %v2887
        %3803 = vmatmul.mubr.bf16.gmra.mrb[0].mxu0 %v2886
        %v3804 = vpop.f32.mrb[0].mxu0
        %v3805 = vadd.f32 %v3063, %v3804
        %v3806 = vpop.f32.mrb[0].mxu0
        %v3807 = vadd.f32 %v3067, %v3806
        %v3808 = vpop.f32.mrb[0].mxu0
        %v3809 = vadd.f32 %v3063, %v3808
        %v3810 = vpop.f32.mrb[0].mxu0
        %v3811 = vadd.f32 %v3067, %v3810
        %3812 = vmatprep.mubr.bf16.mxu0 %v2891
        %3813 = vmatmul.mubr.bf16.gmra.mrb[0].mxu0 %v2890
        %v3814 = vpop.f32.mrb[0].mxu0
        %v3815 = vadd.f32 %v3063, %v3814
        %v3816 = vpop.f32.mrb[0].mxu0
        %v3817 = vadd.f32 %v3067, %v3816
        %v3818 = vpop.f32.mrb[0].mxu0
        %v3819 = vadd.f32 %v3063, %v3818
        %v3820 = vpop.f32.mrb[0].mxu0
        %v3821 = vadd.f32 %v3067, %v3820
        %3822 = vmatprep.mubr.bf16.mxu0 %v2895
        %3823 = vmatmul.mubr.bf16.gmra.mrb[0].mxu0 %v2894
        %v3824 = vpop.f32.mrb[0].mxu0
        %v3825 = vadd.f32 %v3063, %v3824
        %v3826 = vpop.f32.mrb[0].mxu0
        %v3827 = vadd.f32 %v3067, %v3826
        %v3828 = vpop.f32.mrb[0].mxu0
        %v3829 = vadd.f32 %v3063, %v3828
        %v3830 = vpop.f32.mrb[0].mxu0
        %v3831 = vadd.f32 %v3067, %v3830
        %3832 = vmatprep.mubr.bf16.mxu0 %v2899
        %3833 = vmatmul.mubr.bf16.gmra.mrb[0].mxu0 %v2898
        %v3834 = vpop.f32.mrb[0].mxu0
        %v3835 = vadd.f32 %v3063, %v3834
        %v3836 = vpop.f32.mrb[0].mxu0
        %v3837 = vadd.f32 %v3067, %v3836
        %v3838 = vpop.f32.mrb[0].mxu0
        %v3839 = vadd.f32 %v3063, %v3838
        %v3840 = vpop.f32.mrb[0].mxu0
        %v3841 = vadd.f32 %v3067, %v3840
        %3842 = vmatprep.mubr.bf16.mxu0 %v2903
        %3843 = vmatmul.mubr.bf16.gmra.mrb[0].mxu0 %v2902
        %v3844 = vpop.f32.mrb[0].mxu0
        %v3845 = vadd.f32 %v3063, %v3844
        %v3846 = vpop.f32.mrb[0].mxu0
        %v3847 = vadd.f32 %v3067, %v3846
        %v3848 = vpop.f32.mrb[0].mxu0
        %v3849 = vadd.f32 %v3063, %v3848
        %v3850 = vpop.f32.mrb[0].mxu0
        %v3851 = vadd.f32 %v3067, %v3850
        %3852 = vmatprep.mubr.bf16.mxu0 %v2907
        %3853 = vmatmul.mubr.bf16.gmra.mrb[0].mxu0 %v2906
        %v3854 = vpop.f32.mrb[0].mxu0
        %v3855 = vadd.f32 %v3063, %v3854
        %v3856 = vpop.f32.mrb[0].mxu0
        %v3857 = vadd.f32 %v3067, %v3856
        %v3858 = vpop.f32.mrb[0].mxu0
        %v3859 = vadd.f32 %v3063, %v3858
        %v3860 = vpop.f32.mrb[0].mxu0
        %v3861 = vadd.f32 %v3067, %v3860
        %3862 = vmatprep.mubr.bf16.mxu0 %v2911
        %3863 = vmatmul.mubr.bf16.gmra.mrb[0].mxu0 %v2910
        %v3864 = vpop.f32.mrb[0].mxu0
        %v3865 = vadd.f32 %v3063, %v3864
        %v3866 = vpop.f32.mrb[0].mxu0
        %v3867 = vadd.f32 %v3067, %v3866
        %v3868 = vpop.f32.mrb[0].mxu0
        %v3869 = vadd.f32 %v3063, %v3868
        %v3870 = vpop.f32.mrb[0].mxu0
        %v3871 = vadd.f32 %v3067, %v3870
        %3872 = vmatprep.mubr.bf16.mxu0 %v2915
        %3873 = vmatmul.mubr.bf16.gmra.mrb[0].mxu0 %v2914
        %v3874 = vpop.f32.mrb[0].mxu0
        %v3875 = vadd.f32 %v3063, %v3874
        %v3876 = vpop.f32.mrb[0].mxu0
        %v3877 = vadd.f32 %v3067, %v3876
        %v3878 = vpop.f32.mrb[0].mxu0
        %v3879 = vadd.f32 %v3063, %v3878
        %v3880 = vpop.f32.mrb[0].mxu0
        %v3881 = vadd.f32 %v3067, %v3880
        %3882 = vmatprep.mubr.bf16.mxu0 %v2919
        %3883 = vmatmul.mubr.bf16.gmra.mrb[0].mxu0 %v2918
        %v3884 = vpop.f32.mrb[0].mxu0
        %v3885 = vadd.f32 %v3063, %v3884
        %v3886 = vpop.f32.mrb[0].mxu0
        %v3887 = vadd.f32 %v3067, %v3886
        %v3888 = vpop.f32.mrb[0].mxu0
        %v3889 = vadd.f32 %v3063, %v3888
        %v3890 = vpop.f32.mrb[0].mxu0
        %v3891 = vadd.f32 %v3067, %v3890
        %3892 = vmatprep.mubr.bf16.mxu0 %v2923
        %3893 = vmatmul.mubr.bf16.gmra.mrb[0].mxu0 %v2922
        %v3894 = vpop.f32.mrb[0].mxu0
        %v3895 = vadd.f32 %v3063, %v3894
        %v3896 = vpop.f32.mrb[0].mxu0
        %v3897 = vadd.f32 %v3067, %v3896
        %v3898 = vpop.f32.mrb[0].mxu0
        %v3899 = vadd.f32 %v3063, %v3898
        %v3900 = vpop.f32.mrb[0].mxu0
        %v3901 = vadd.f32 %v3067, %v3900
        %3902 = vmatprep.mubr.bf16.mxu0 %v2927
        %3903 = vmatmul.mubr.bf16.gmra.mrb[0].mxu0 %v2926
        %v3904 = vpop.f32.mrb[0].mxu0
        %v3905 = vadd.f32 %v3063, %v3904
        %v3906 = vpop.f32.mrb[0].mxu0
        %v3907 = vadd.f32 %v3067, %v3906
        %v3908 = vpop.f32.mrb[0].mxu0
        %v3909 = vadd.f32 %v3063, %v3908
        %v3910 = vpop.f32.mrb[0].mxu0
        %v3911 = vadd.f32 %v3067, %v3910
        %3912 = vdwg.mxu0
        %3913 = vmatprep.subr.bf16.mxu0 %v3529
        %3914 = vmatpush1.bf16.msra.mxu0 %v3528
        %3915 = vmatprep.subr.bf16.mxu0 %v3533
        %3916 = vmatpush1.bf16.msra.mxu0 %v3532
        %3917 = vmatprep.subr.bf16.mxu0 %v3537
        %3918 = vmatpush1.bf16.msra.mxu0 %v3536
        %3919 = vmatprep.subr.bf16.mxu0 %v3541
        %3920 = vmatpush1.bf16.msra.mxu0 %v3540
        %3921 = vmatprep.subr.bf16.mxu0 %v3545
        %3922 = vmatpush1.bf16.msra.mxu0 %v3544
        %3923 = vmatprep.subr.bf16.mxu0 %v3549
        %3924 = vmatpush1.bf16.msra.mxu0 %v3548
        %3925 = vmatprep.subr.bf16.mxu0 %v3553
        %3926 = vmatpush1.bf16.msra.mxu0 %v3552
        %3927 = vmatprep.subr.bf16.mxu0 %v3557
        %3928 = vmatpush1.bf16.msra.mxu0 %v3556
        %3929 = vmatprep.subr.bf16.mxu0 %v3561
        %3930 = vmatpush1.bf16.msra.mxu0 %v3560
        %3931 = vmatprep.subr.bf16.mxu0 %v3565
        %3932 = vmatpush1.bf16.msra.mxu0 %v3564
        %3933 = vmatprep.subr.bf16.mxu0 %v3569
        %3934 = vmatpush1.bf16.msra.mxu0 %v3568
        %3935 = vmatprep.subr.bf16.mxu0 %v3573
        %3936 = vmatpush1.bf16.msra.mxu0 %v3572
        %3937 = vmatprep.subr.bf16.mxu0 %v3577
        %3938 = vmatpush1.bf16.msra.mxu0 %v3576
        %3939 = vmatprep.subr.bf16.mxu0 %v3581
        %3940 = vmatpush1.bf16.msra.mxu0 %v3580
        %3941 = vmatprep.subr.bf16.mxu0 %v3585
        %3942 = vmatpush1.bf16.msra.mxu0 %v3584
        %3943 = vmatprep.subr.bf16.mxu0 %v3589
        %3944 = vmatpush1.bf16.msra.mxu0 %v3588
        %3945 = vmatprep.mubr.bf16.mxu0 %v2869
        %3946 = vmatmul.mubr.bf16.gmra.mrb[0].mxu0 %v2868
        %v3947 = vpop.f32.mrb[0].mxu0
        %v3948 = vadd.f32 %v3755, %v3947
        %v3949 = vpop.f32.mrb[0].mxu0
        %v3950 = vadd.f32 %v3757, %v3949
        %v3951 = vpop.f32.mrb[0].mxu0
        %v3952 = vadd.f32 %v3759, %v3951
        %v3953 = vpop.f32.mrb[0].mxu0
        %v3954 = vadd.f32 %v3761, %v3953
        %3955 = vmatprep.mubr.bf16.mxu0 %v2873
        %3956 = vmatmul.mubr.bf16.gmra.mrb[0].mxu0 %v2872
        %v3957 = vpop.f32.mrb[0].mxu0
        %v3958 = vadd.f32 %v3765, %v3957
        %v3959 = vpop.f32.mrb[0].mxu0
        %v3960 = vadd.f32 %v3767, %v3959
        %v3961 = vpop.f32.mrb[0].mxu0
        %v3962 = vadd.f32 %v3769, %v3961
        %v3963 = vpop.f32.mrb[0].mxu0
        %v3964 = vadd.f32 %v3771, %v3963
        %3965 = vmatprep.mubr.bf16.mxu0 %v2877
        %3966 = vmatmul.mubr.bf16.gmra.mrb[0].mxu0 %v2876
        %v3967 = vpop.f32.mrb[0].mxu0
        %v3968 = vadd.f32 %v3775, %v3967
        %v3969 = vpop.f32.mrb[0].mxu0
        %v3970 = vadd.f32 %v3777, %v3969
        %v3971 = vpop.f32.mrb[0].mxu0
        %v3972 = vadd.f32 %v3779, %v3971
        %v3973 = vpop.f32.mrb[0].mxu0
        %v3974 = vadd.f32 %v3781, %v3973
        %3975 = vmatprep.mubr.bf16.mxu0 %v2881
        %3976 = vmatmul.mubr.bf16.gmra.mrb[0].mxu0 %v2880
        %v3977 = vpop.f32.mrb[0].mxu0
        %v3978 = vadd.f32 %v3785, %v3977
        %v3979 = vpop.f32.mrb[0].mxu0
        %v3980 = vadd.f32 %v3787, %v3979
        %v3981 = vpop.f32.mrb[0].mxu0
        %v3982 = vadd.f32 %v3789, %v3981
        %v3983 = vpop.f32.mrb[0].mxu0
        %v3984 = vadd.f32 %v3791, %v3983
        %3985 = vmatprep.mubr.bf16.mxu0 %v2885
        %3986 = vmatmul.mubr.bf16.gmra.mrb[0].mxu0 %v2884
        %v3987 = vpop.f32.mrb[0].mxu0
        %v3988 = vadd.f32 %v3795, %v3987
        %v3989 = vpop.f32.mrb[0].mxu0
        %v3990 = vadd.f32 %v3797, %v3989
        %v3991 = vpop.f32.mrb[0].mxu0
        %v3992 = vadd.f32 %v3799, %v3991
        %v3993 = vpop.f32.mrb[0].mxu0
        %v3994 = vadd.f32 %v3801, %v3993
        %3995 = vmatprep.mubr.bf16.mxu0 %v2889
        %3996 = vmatmul.mubr.bf16.gmra.mrb[0].mxu0 %v2888
        %v3997 = vpop.f32.mrb[0].mxu0
        %v3998 = vadd.f32 %v3805, %v3997
        %v3999 = vpop.f32.mrb[0].mxu0
        %v4000 = vadd.f32 %v3807, %v3999
        %v4001 = vpop.f32.mrb[0].mxu0
        %v4002 = vadd.f32 %v3809, %v4001
        %v4003 = vpop.f32.mrb[0].mxu0
        %v4004 = vadd.f32 %v3811, %v4003
        %4005 = vmatprep.mubr.bf16.mxu0 %v2893
        %4006 = vmatmul.mubr.bf16.gmra.mrb[0].mxu0 %v2892
        %v4007 = vpop.f32.mrb[0].mxu0
        %v4008 = vadd.f32 %v3815, %v4007
        %v4009 = vpop.f32.mrb[0].mxu0
        %v4010 = vadd.f32 %v3817, %v4009
        %v4011 = vpop.f32.mrb[0].mxu0
        %v4012 = vadd.f32 %v3819, %v4011
        %v4013 = vpop.f32.mrb[0].mxu0
        %v4014 = vadd.f32 %v3821, %v4013
        %4015 = vmatprep.mubr.bf16.mxu0 %v2897
        %4016 = vmatmul.mubr.bf16.gmra.mrb[0].mxu0 %v2896
        %v4017 = vpop.f32.mrb[0].mxu0
        %v4018 = vadd.f32 %v3825, %v4017
        %v4019 = vpop.f32.mrb[0].mxu0
        %v4020 = vadd.f32 %v3827, %v4019
        %v4021 = vpop.f32.mrb[0].mxu0
        %v4022 = vadd.f32 %v3829, %v4021
        %v4023 = vpop.f32.mrb[0].mxu0
        %v4024 = vadd.f32 %v3831, %v4023
        %4025 = vmatprep.mubr.bf16.mxu0 %v2901
        %4026 = vmatmul.mubr.bf16.gmra.mrb[0].mxu0 %v2900
        %v4027 = vpop.f32.mrb[0].mxu0
        %v4028 = vadd.f32 %v3835, %v4027
        %v4029 = vpop.f32.mrb[0].mxu0
        %v4030 = vadd.f32 %v3837, %v4029
        %v4031 = vpop.f32.mrb[0].mxu0
        %v4032 = vadd.f32 %v3839, %v4031
        %v4033 = vpop.f32.mrb[0].mxu0
        %v4034 = vadd.f32 %v3841, %v4033
        %4035 = vmatprep.mubr.bf16.mxu0 %v2905
        %4036 = vmatmul.mubr.bf16.gmra.mrb[0].mxu0 %v2904
        %v4037 = vpop.f32.mrb[0].mxu0
        %v4038 = vadd.f32 %v3845, %v4037
        %v4039 = vpop.f32.mrb[0].mxu0
        %v4040 = vadd.f32 %v3847, %v4039
        %v4041 = vpop.f32.mrb[0].mxu0
        %v4042 = vadd.f32 %v3849, %v4041
        %v4043 = vpop.f32.mrb[0].mxu0
        %v4044 = vadd.f32 %v3851, %v4043
        %4045 = vmatprep.mubr.bf16.mxu0 %v2909
        %4046 = vmatmul.mubr.bf16.gmra.mrb[0].mxu0 %v2908
        %v4047 = vpop.f32.mrb[0].mxu0
        %v4048 = vadd.f32 %v3855, %v4047
        %v4049 = vpop.f32.mrb[0].mxu0
        %v4050 = vadd.f32 %v3857, %v4049
        %v4051 = vpop.f32.mrb[0].mxu0
        %v4052 = vadd.f32 %v3859, %v4051
        %v4053 = vpop.f32.mrb[0].mxu0
        %v4054 = vadd.f32 %v3861, %v4053
        %4055 = vmatprep.mubr.bf16.mxu0 %v2913
        %4056 = vmatmul.mubr.bf16.gmra.mrb[0].mxu0 %v2912
        %v4057 = vpop.f32.mrb[0].mxu0
        %v4058 = vadd.f32 %v3865, %v4057
        %v4059 = vpop.f32.mrb[0].mxu0
        %v4060 = vadd.f32 %v3867, %v4059
        %v4061 = vpop.f32.mrb[0].mxu0
        %v4062 = vadd.f32 %v3869, %v4061
        %v4063 = vpop.f32.mrb[0].mxu0
        %v4064 = vadd.f32 %v3871, %v4063
        %4065 = vmatprep.mubr.bf16.mxu0 %v2917
        %4066 = vmatmul.mubr.bf16.gmra.mrb[0].mxu0 %v2916
        %v4067 = vpop.f32.mrb[0].mxu0
        %v4068 = vadd.f32 %v3875, %v4067
        %v4069 = vpop.f32.mrb[0].mxu0
        %v4070 = vadd.f32 %v3877, %v4069
        %v4071 = vpop.f32.mrb[0].mxu0
        %v4072 = vadd.f32 %v3879, %v4071
        %v4073 = vpop.f32.mrb[0].mxu0
        %v4074 = vadd.f32 %v3881, %v4073
        %4075 = vmatprep.mubr.bf16.mxu0 %v2921
        %4076 = vmatmul.mubr.bf16.gmra.mrb[0].mxu0 %v2920
        %v4077 = vpop.f32.mrb[0].mxu0
        %v4078 = vadd.f32 %v3885, %v4077
        %v4079 = vpop.f32.mrb[0].mxu0
        %v4080 = vadd.f32 %v3887, %v4079
        %v4081 = vpop.f32.mrb[0].mxu0
        %v4082 = vadd.f32 %v3889, %v4081
        %v4083 = vpop.f32.mrb[0].mxu0
        %v4084 = vadd.f32 %v3891, %v4083
        %4085 = vmatprep.mubr.bf16.mxu0 %v2925
        %4086 = vmatmul.mubr.bf16.gmra.mrb[0].mxu0 %v2924
        %v4087 = vpop.f32.mrb[0].mxu0
        %v4088 = vadd.f32 %v3895, %v4087
        %v4089 = vpop.f32.mrb[0].mxu0
        %v4090 = vadd.f32 %v3897, %v4089
        %v4091 = vpop.f32.mrb[0].mxu0
        %v4092 = vadd.f32 %v3899, %v4091
        %v4093 = vpop.f32.mrb[0].mxu0
        %v4094 = vadd.f32 %v3901, %v4093
        %4095 = vmatprep.mubr.bf16.mxu0 %v2929
        %4096 = vmatmul.mubr.bf16.gmra.mrb[0].mxu0 %v2928
        %v4097 = vpop.f32.mrb[0].mxu0
        %v4098 = vadd.f32 %v3905, %v4097
        %v4099 = vpop.f32.mrb[0].mxu0
        %v4100 = vadd.f32 %v3907, %v4099
        %v4101 = vpop.f32.mrb[0].mxu0
        %v4102 = vadd.f32 %v3909, %v4101
        %v4103 = vpop.f32.mrb[0].mxu0
        %v4104 = vadd.f32 %v3911, %v4103
        %4105 = vdwg.mxu0
        %4106 = vmatprep.subr.bf16.mxu0 %v3467
        %4107 = vmatpush1.bf16.msra.mxu0 %v3466
        %4108 = vmatprep.subr.bf16.mxu0 %v3471
        %4109 = vmatpush1.bf16.msra.mxu0 %v3470
        %4110 = vmatprep.subr.bf16.mxu0 %v3475
        %4111 = vmatpush1.bf16.msra.mxu0 %v3474
        %4112 = vmatprep.subr.bf16.mxu0 %v3479
        %4113 = vmatpush1.bf16.msra.mxu0 %v3478
        %4114 = vmatprep.subr.bf16.mxu0 %v3483
        %4115 = vmatpush1.bf16.msra.mxu0 %v3482
        %4116 = vmatprep.subr.bf16.mxu0 %v3487
        %4117 = vmatpush1.bf16.msra.mxu0 %v3486
        %4118 = vmatprep.subr.bf16.mxu0 %v3491
        %4119 = vmatpush1.bf16.msra.mxu0 %v3490
        %4120 = vmatprep.subr.bf16.mxu0 %v3495
        %4121 = vmatpush1.bf16.msra.mxu0 %v3494
        %4122 = vmatprep.subr.bf16.mxu0 %v3499
        %4123 = vmatpush1.bf16.msra.mxu0 %v3498
        %4124 = vmatprep.subr.bf16.mxu0 %v3503
        %4125 = vmatpush1.bf16.msra.mxu0 %v3502
        %4126 = vmatprep.subr.bf16.mxu0 %v3507
        %4127 = vmatpush1.bf16.msra.mxu0 %v3506
        %4128 = vmatprep.subr.bf16.mxu0 %v3511
        %4129 = vmatpush1.bf16.msra.mxu0 %v3510
        %4130 = vmatprep.subr.bf16.mxu0 %v3515
        %4131 = vmatpush1.bf16.msra.mxu0 %v3514
        %4132 = vmatprep.subr.bf16.mxu0 %v3519
        %4133 = vmatpush1.bf16.msra.mxu0 %v3518
        %4134 = vmatprep.subr.bf16.mxu0 %v3523
        %4135 = vmatpush1.bf16.msra.mxu0 %v3522
        %4136 = vmatprep.subr.bf16.mxu0 %v3527
        %4137 = vmatpush1.bf16.msra.mxu0 %v3526
        %4138 = vmatprep.mubr.bf16.mxu0 %v2867
        %4139 = vmatmul.mubr.bf16.gmra.mrb[0].mxu0 %v2866
        %v4140 = vpop.f32.mrb[0].mxu0
        %v4141 = vadd.f32 %v3071, %v4140
        %v4142 = vpop.f32.mrb[0].mxu0
        %v4143 = vadd.f32 %v3075, %v4142
        %v4144 = vpop.f32.mrb[0].mxu0
        %v4145 = vadd.f32 %v3071, %v4144
        %v4146 = vpop.f32.mrb[0].mxu0
        %v4147 = vadd.f32 %v3075, %v4146
        %4148 = vmatprep.mubr.bf16.mxu0 %v2871
        %4149 = vmatmul.mubr.bf16.gmra.mrb[0].mxu0 %v2870
        %v4150 = vpop.f32.mrb[0].mxu0
        %v4151 = vadd.f32 %v3071, %v4150
        %v4152 = vpop.f32.mrb[0].mxu0
        %v4153 = vadd.f32 %v3075, %v4152
        %v4154 = vpop.f32.mrb[0].mxu0
        %v4155 = vadd.f32 %v3071, %v4154
        %v4156 = vpop.f32.mrb[0].mxu0
        %v4157 = vadd.f32 %v3075, %v4156
        %4158 = vmatprep.mubr.bf16.mxu0 %v2875
        %4159 = vmatmul.mubr.bf16.gmra.mrb[0].mxu0 %v2874
        %v4160 = vpop.f32.mrb[0].mxu0
        %v4161 = vadd.f32 %v3071, %v4160
        %v4162 = vpop.f32.mrb[0].mxu0
        %v4163 = vadd.f32 %v3075, %v4162
        %v4164 = vpop.f32.mrb[0].mxu0
        %v4165 = vadd.f32 %v3071, %v4164
        %v4166 = vpop.f32.mrb[0].mxu0
        %v4167 = vadd.f32 %v3075, %v4166
        %4168 = vmatprep.mubr.bf16.mxu0 %v2879
        %4169 = vmatmul.mubr.bf16.gmra.mrb[0].mxu0 %v2878
        %v4170 = vpop.f32.mrb[0].mxu0
        %v4171 = vadd.f32 %v3071, %v4170
        %v4172 = vpop.f32.mrb[0].mxu0
        %v4173 = vadd.f32 %v3075, %v4172
        %v4174 = vpop.f32.mrb[0].mxu0
        %v4175 = vadd.f32 %v3071, %v4174
        %v4176 = vpop.f32.mrb[0].mxu0
        %v4177 = vadd.f32 %v3075, %v4176
        %4178 = vmatprep.mubr.bf16.mxu0 %v2883
        %4179 = vmatmul.mubr.bf16.gmra.mrb[0].mxu0 %v2882
        %v4180 = vpop.f32.mrb[0].mxu0
        %v4181 = vadd.f32 %v3071, %v4180
        %v4182 = vpop.f32.mrb[0].mxu0
        %v4183 = vadd.f32 %v3075, %v4182
        %v4184 = vpop.f32.mrb[0].mxu0
        %v4185 = vadd.f32 %v3071, %v4184
        %v4186 = vpop.f32.mrb[0].mxu0
        %v4187 = vadd.f32 %v3075, %v4186
        %4188 = vmatprep.mubr.bf16.mxu0 %v2887
        %4189 = vmatmul.mubr.bf16.gmra.mrb[0].mxu0 %v2886
        %v4190 = vpop.f32.mrb[0].mxu0
        %v4191 = vadd.f32 %v3071, %v4190
        %v4192 = vpop.f32.mrb[0].mxu0
        %v4193 = vadd.f32 %v3075, %v4192
        %v4194 = vpop.f32.mrb[0].mxu0
        %v4195 = vadd.f32 %v3071, %v4194
        %v4196 = vpop.f32.mrb[0].mxu0
        %v4197 = vadd.f32 %v3075, %v4196
        %4198 = vmatprep.mubr.bf16.mxu0 %v2891
        %4199 = vmatmul.mubr.bf16.gmra.mrb[0].mxu0 %v2890
        %v4200 = vpop.f32.mrb[0].mxu0
        %v4201 = vadd.f32 %v3071, %v4200
        %v4202 = vpop.f32.mrb[0].mxu0
        %v4203 = vadd.f32 %v3075, %v4202
        %v4204 = vpop.f32.mrb[0].mxu0
        %v4205 = vadd.f32 %v3071, %v4204
        %v4206 = vpop.f32.mrb[0].mxu0
        %v4207 = vadd.f32 %v3075, %v4206
        %4208 = vmatprep.mubr.bf16.mxu0 %v2895
        %4209 = vmatmul.mubr.bf16.gmra.mrb[0].mxu0 %v2894
        %v4210 = vpop.f32.mrb[0].mxu0
        %v4211 = vadd.f32 %v3071, %v4210
        %v4212 = vpop.f32.mrb[0].mxu0
        %v4213 = vadd.f32 %v3075, %v4212
        %v4214 = vpop.f32.mrb[0].mxu0
        %v4215 = vadd.f32 %v3071, %v4214
        %v4216 = vpop.f32.mrb[0].mxu0
        %v4217 = vadd.f32 %v3075, %v4216
        %4218 = vmatprep.mubr.bf16.mxu0 %v2899
        %4219 = vmatmul.mubr.bf16.gmra.mrb[0].mxu0 %v2898
        %v4220 = vpop.f32.mrb[0].mxu0
        %v4221 = vadd.f32 %v3071, %v4220
        %v4222 = vpop.f32.mrb[0].mxu0
        %v4223 = vadd.f32 %v3075, %v4222
        %v4224 = vpop.f32.mrb[0].mxu0
        %v4225 = vadd.f32 %v3071, %v4224
        %v4226 = vpop.f32.mrb[0].mxu0
        %v4227 = vadd.f32 %v3075, %v4226
        %4228 = vmatprep.mubr.bf16.mxu0 %v2903
        %4229 = vmatmul.mubr.bf16.gmra.mrb[0].mxu0 %v2902
        %v4230 = vpop.f32.mrb[0].mxu0
        %v4231 = vadd.f32 %v3071, %v4230
        %v4232 = vpop.f32.mrb[0].mxu0
        %v4233 = vadd.f32 %v3075, %v4232
        %v4234 = vpop.f32.mrb[0].mxu0
        %v4235 = vadd.f32 %v3071, %v4234
        %v4236 = vpop.f32.mrb[0].mxu0
        %v4237 = vadd.f32 %v3075, %v4236
        %4238 = vmatprep.mubr.bf16.mxu0 %v2907
        %4239 = vmatmul.mubr.bf16.gmra.mrb[0].mxu0 %v2906
        %v4240 = vpop.f32.mrb[0].mxu0
        %v4241 = vadd.f32 %v3071, %v4240
        %v4242 = vpop.f32.mrb[0].mxu0
        %v4243 = vadd.f32 %v3075, %v4242
        %v4244 = vpop.f32.mrb[0].mxu0
        %v4245 = vadd.f32 %v3071, %v4244
        %v4246 = vpop.f32.mrb[0].mxu0
        %v4247 = vadd.f32 %v3075, %v4246
        %4248 = vmatprep.mubr.bf16.mxu0 %v2911
        %4249 = vmatmul.mubr.bf16.gmra.mrb[0].mxu0 %v2910
        %v4250 = vpop.f32.mrb[0].mxu0
        %v4251 = vadd.f32 %v3071, %v4250
        %v4252 = vpop.f32.mrb[0].mxu0
        %v4253 = vadd.f32 %v3075, %v4252
        %v4254 = vpop.f32.mrb[0].mxu0
        %v4255 = vadd.f32 %v3071, %v4254
        %v4256 = vpop.f32.mrb[0].mxu0
        %v4257 = vadd.f32 %v3075, %v4256
        %4258 = vmatprep.mubr.bf16.mxu0 %v2915
        %4259 = vmatmul.mubr.bf16.gmra.mrb[0].mxu0 %v2914
        %v4260 = vpop.f32.mrb[0].mxu0
        %v4261 = vadd.f32 %v3071, %v4260
        %v4262 = vpop.f32.mrb[0].mxu0
        %v4263 = vadd.f32 %v3075, %v4262
        %v4264 = vpop.f32.mrb[0].mxu0
        %v4265 = vadd.f32 %v3071, %v4264
        %v4266 = vpop.f32.mrb[0].mxu0
        %v4267 = vadd.f32 %v3075, %v4266
        %4268 = vmatprep.mubr.bf16.mxu0 %v2919
        %4269 = vmatmul.mubr.bf16.gmra.mrb[0].mxu0 %v2918
        %v4270 = vpop.f32.mrb[0].mxu0
        %v4271 = vadd.f32 %v3071, %v4270
        %v4272 = vpop.f32.mrb[0].mxu0
        %v4273 = vadd.f32 %v3075, %v4272
        %v4274 = vpop.f32.mrb[0].mxu0
        %v4275 = vadd.f32 %v3071, %v4274
        %v4276 = vpop.f32.mrb[0].mxu0
        %v4277 = vadd.f32 %v3075, %v4276
        %4278 = vmatprep.mubr.bf16.mxu0 %v2923
        %4279 = vmatmul.mubr.bf16.gmra.mrb[0].mxu0 %v2922
        %v4280 = vpop.f32.mrb[0].mxu0
        %v4281 = vadd.f32 %v3071, %v4280
        %v4282 = vpop.f32.mrb[0].mxu0
        %v4283 = vadd.f32 %v3075, %v4282
        %v4284 = vpop.f32.mrb[0].mxu0
        %v4285 = vadd.f32 %v3071, %v4284
        %v4286 = vpop.f32.mrb[0].mxu0
        %v4287 = vadd.f32 %v3075, %v4286
        %4288 = vmatprep.mubr.bf16.mxu0 %v2927
        %4289 = vmatmul.mubr.bf16.gmra.mrb[0].mxu0 %v2926
        %v4290 = vpop.f32.mrb[0].mxu0
        %v4291 = vadd.f32 %v3071, %v4290
        %v4292 = vpop.f32.mrb[0].mxu0
        %v4293 = vadd.f32 %v3075, %v4292
        %v4294 = vpop.f32.mrb[0].mxu0
        %v4295 = vadd.f32 %v3071, %v4294
        %v4296 = vpop.f32.mrb[0].mxu0
        %v4297 = vadd.f32 %v3075, %v4296
        %4298 = vdwg.mxu0
        %4299 = vmatprep.subr.bf16.mxu0 %v3531
        %4300 = vmatpush1.bf16.msra.mxu0 %v3530
        %4301 = vmatprep.subr.bf16.mxu0 %v3535
        %4302 = vmatpush1.bf16.msra.mxu0 %v3534
        %4303 = vmatprep.subr.bf16.mxu0 %v3539
        %4304 = vmatpush1.bf16.msra.mxu0 %v3538
        %4305 = vmatprep.subr.bf16.mxu0 %v3543
        %4306 = vmatpush1.bf16.msra.mxu0 %v3542
        %4307 = vmatprep.subr.bf16.mxu0 %v3547
        %4308 = vmatpush1.bf16.msra.mxu0 %v3546
        %4309 = vmatprep.subr.bf16.mxu0 %v3551
        %4310 = vmatpush1.bf16.msra.mxu0 %v3550
        %4311 = vmatprep.subr.bf16.mxu0 %v3555
        %4312 = vmatpush1.bf16.msra.mxu0 %v3554
        %4313 = vmatprep.subr.bf16.mxu0 %v3559
        %4314 = vmatpush1.bf16.msra.mxu0 %v3558
        %4315 = vmatprep.subr.bf16.mxu0 %v3563
        %4316 = vmatpush1.bf16.msra.mxu0 %v3562
        %4317 = vmatprep.subr.bf16.mxu0 %v3567
        %4318 = vmatpush1.bf16.msra.mxu0 %v3566
        %4319 = vmatprep.subr.bf16.mxu0 %v3571
        %4320 = vmatpush1.bf16.msra.mxu0 %v3570
        %4321 = vmatprep.subr.bf16.mxu0 %v3575
        %4322 = vmatpush1.bf16.msra.mxu0 %v3574
        %4323 = vmatprep.subr.bf16.mxu0 %v3579
        %4324 = vmatpush1.bf16.msra.mxu0 %v3578
        %4325 = vmatprep.subr.bf16.mxu0 %v3583
        %4326 = vmatpush1.bf16.msra.mxu0 %v3582
        %4327 = vmatprep.subr.bf16.mxu0 %v3587
        %4328 = vmatpush1.bf16.msra.mxu0 %v3586
        %4329 = vmatprep.subr.bf16.mxu0 %v3591
        %4330 = vmatpush1.bf16.msra.mxu0 %v3590
        %4331 = vmatprep.mubr.bf16.mxu0 %v2869
        %4332 = vmatmul.mubr.bf16.gmra.mrb[0].mxu0 %v2868
        %v4333 = vpop.f32.mrb[0].mxu0
        %v4334 = vadd.f32 %v4141, %v4333
        %v4335 = vpop.f32.mrb[0].mxu0
        %v4336 = vadd.f32 %v4143, %v4335
        %v4337 = vpop.f32.mrb[0].mxu0
        %v4338 = vadd.f32 %v4145, %v4337
        %v4339 = vpop.f32.mrb[0].mxu0
        %v4340 = vadd.f32 %v4147, %v4339
        %4341 = vmatprep.mubr.bf16.mxu0 %v2873
        %4342 = vmatmul.mubr.bf16.gmra.mrb[0].mxu0 %v2872
        %v4343 = vpop.f32.mrb[0].mxu0
        %v4344 = vadd.f32 %v4151, %v4343
        %v4345 = vpop.f32.mrb[0].mxu0
        %v4346 = vadd.f32 %v4153, %v4345
        %v4347 = vpop.f32.mrb[0].mxu0
        %v4348 = vadd.f32 %v4155, %v4347
        %v4349 = vpop.f32.mrb[0].mxu0
        %v4350 = vadd.f32 %v4157, %v4349
        %4351 = vmatprep.mubr.bf16.mxu0 %v2877
        %4352 = vmatmul.mubr.bf16.gmra.mrb[0].mxu0 %v2876
        %v4353 = vpop.f32.mrb[0].mxu0
        %v4354 = vadd.f32 %v4161, %v4353
        %v4355 = vpop.f32.mrb[0].mxu0
        %v4356 = vadd.f32 %v4163, %v4355
        %v4357 = vpop.f32.mrb[0].mxu0
        %v4358 = vadd.f32 %v4165, %v4357
        %v4359 = vpop.f32.mrb[0].mxu0
        %v4360 = vadd.f32 %v4167, %v4359
        %4361 = vmatprep.mubr.bf16.mxu0 %v2881
        %4362 = vmatmul.mubr.bf16.gmra.mrb[0].mxu0 %v2880
        %v4363 = vpop.f32.mrb[0].mxu0
        %v4364 = vadd.f32 %v4171, %v4363
        %v4365 = vpop.f32.mrb[0].mxu0
        %v4366 = vadd.f32 %v4173, %v4365
        %v4367 = vpop.f32.mrb[0].mxu0
        %v4368 = vadd.f32 %v4175, %v4367
        %v4369 = vpop.f32.mrb[0].mxu0
        %v4370 = vadd.f32 %v4177, %v4369
        %4371 = vmatprep.mubr.bf16.mxu0 %v2885
        %4372 = vmatmul.mubr.bf16.gmra.mrb[0].mxu0 %v2884
        %v4373 = vpop.f32.mrb[0].mxu0
        %v4374 = vadd.f32 %v4181, %v4373
        %v4375 = vpop.f32.mrb[0].mxu0
        %v4376 = vadd.f32 %v4183, %v4375
        %v4377 = vpop.f32.mrb[0].mxu0
        %v4378 = vadd.f32 %v4185, %v4377
        %v4379 = vpop.f32.mrb[0].mxu0
        %v4380 = vadd.f32 %v4187, %v4379
        %4381 = vmatprep.mubr.bf16.mxu0 %v2889
        %4382 = vmatmul.mubr.bf16.gmra.mrb[0].mxu0 %v2888
        %v4383 = vpop.f32.mrb[0].mxu0
        %v4384 = vadd.f32 %v4191, %v4383
        %v4385 = vpop.f32.mrb[0].mxu0
        %v4386 = vadd.f32 %v4193, %v4385
        %v4387 = vpop.f32.mrb[0].mxu0
        %v4388 = vadd.f32 %v4195, %v4387
        %v4389 = vpop.f32.mrb[0].mxu0
        %v4390 = vadd.f32 %v4197, %v4389
        %4391 = vmatprep.mubr.bf16.mxu0 %v2893
        %4392 = vmatmul.mubr.bf16.gmra.mrb[0].mxu0 %v2892
        %v4393 = vpop.f32.mrb[0].mxu0
        %v4394 = vadd.f32 %v4201, %v4393
        %v4395 = vpop.f32.mrb[0].mxu0
        %v4396 = vadd.f32 %v4203, %v4395
        %v4397 = vpop.f32.mrb[0].mxu0
        %v4398 = vadd.f32 %v4205, %v4397
        %v4399 = vpop.f32.mrb[0].mxu0
        %v4400 = vadd.f32 %v4207, %v4399
        %4401 = vmatprep.mubr.bf16.mxu0 %v2897
        %4402 = vmatmul.mubr.bf16.gmra.mrb[0].mxu0 %v2896
        %v4403 = vpop.f32.mrb[0].mxu0
        %v4404 = vadd.f32 %v4211, %v4403
        %v4405 = vpop.f32.mrb[0].mxu0
        %v4406 = vadd.f32 %v4213, %v4405
        %v4407 = vpop.f32.mrb[0].mxu0
        %v4408 = vadd.f32 %v4215, %v4407
        %v4409 = vpop.f32.mrb[0].mxu0
        %v4410 = vadd.f32 %v4217, %v4409
        %4411 = vmatprep.mubr.bf16.mxu0 %v2901
        %4412 = vmatmul.mubr.bf16.gmra.mrb[0].mxu0 %v2900
        %v4413 = vpop.f32.mrb[0].mxu0
        %v4414 = vadd.f32 %v4221, %v4413
        %v4415 = vpop.f32.mrb[0].mxu0
        %v4416 = vadd.f32 %v4223, %v4415
        %v4417 = vpop.f32.mrb[0].mxu0
        %v4418 = vadd.f32 %v4225, %v4417
        %v4419 = vpop.f32.mrb[0].mxu0
        %v4420 = vadd.f32 %v4227, %v4419
        %4421 = vmatprep.mubr.bf16.mxu0 %v2905
        %4422 = vmatmul.mubr.bf16.gmra.mrb[0].mxu0 %v2904
        %v4423 = vpop.f32.mrb[0].mxu0
        %v4424 = vadd.f32 %v4231, %v4423
        %v4425 = vpop.f32.mrb[0].mxu0
        %v4426 = vadd.f32 %v4233, %v4425
        %v4427 = vpop.f32.mrb[0].mxu0
        %v4428 = vadd.f32 %v4235, %v4427
        %v4429 = vpop.f32.mrb[0].mxu0
        %v4430 = vadd.f32 %v4237, %v4429
        %4431 = vmatprep.mubr.bf16.mxu0 %v2909
        %4432 = vmatmul.mubr.bf16.gmra.mrb[0].mxu0 %v2908
        %v4433 = vpop.f32.mrb[0].mxu0
        %v4434 = vadd.f32 %v4241, %v4433
        %v4435 = vpop.f32.mrb[0].mxu0
        %v4436 = vadd.f32 %v4243, %v4435
        %v4437 = vpop.f32.mrb[0].mxu0
        %v4438 = vadd.f32 %v4245, %v4437
        %v4439 = vpop.f32.mrb[0].mxu0
        %v4440 = vadd.f32 %v4247, %v4439
        %4441 = vmatprep.mubr.bf16.mxu0 %v2913
        %4442 = vmatmul.mubr.bf16.gmra.mrb[0].mxu0 %v2912
        %v4443 = vpop.f32.mrb[0].mxu0
        %v4444 = vadd.f32 %v4251, %v4443
        %v4445 = vpop.f32.mrb[0].mxu0
        %v4446 = vadd.f32 %v4253, %v4445
        %v4447 = vpop.f32.mrb[0].mxu0
        %v4448 = vadd.f32 %v4255, %v4447
        %v4449 = vpop.f32.mrb[0].mxu0
        %v4450 = vadd.f32 %v4257, %v4449
        %4451 = vmatprep.mubr.bf16.mxu0 %v2917
        %4452 = vmatmul.mubr.bf16.gmra.mrb[0].mxu0 %v2916
        %v4453 = vpop.f32.mrb[0].mxu0
        %v4454 = vadd.f32 %v4261, %v4453
        %v4455 = vpop.f32.mrb[0].mxu0
        %v4456 = vadd.f32 %v4263, %v4455
        %v4457 = vpop.f32.mrb[0].mxu0
        %v4458 = vadd.f32 %v4265, %v4457
        %v4459 = vpop.f32.mrb[0].mxu0
        %v4460 = vadd.f32 %v4267, %v4459
        %4461 = vmatprep.mubr.bf16.mxu0 %v2921
        %4462 = vmatmul.mubr.bf16.gmra.mrb[0].mxu0 %v2920
        %v4463 = vpop.f32.mrb[0].mxu0
        %v4464 = vadd.f32 %v4271, %v4463
        %v4465 = vpop.f32.mrb[0].mxu0
        %v4466 = vadd.f32 %v4273, %v4465
        %v4467 = vpop.f32.mrb[0].mxu0
        %v4468 = vadd.f32 %v4275, %v4467
        %v4469 = vpop.f32.mrb[0].mxu0
        %v4470 = vadd.f32 %v4277, %v4469
        %4471 = vmatprep.mubr.bf16.mxu0 %v2925
        %4472 = vmatmul.mubr.bf16.gmra.mrb[0].mxu0 %v2924
        %v4473 = vpop.f32.mrb[0].mxu0
        %v4474 = vadd.f32 %v4281, %v4473
        %v4475 = vpop.f32.mrb[0].mxu0
        %v4476 = vadd.f32 %v4283, %v4475
        %v4477 = vpop.f32.mrb[0].mxu0
        %v4478 = vadd.f32 %v4285, %v4477
        %v4479 = vpop.f32.mrb[0].mxu0
        %v4480 = vadd.f32 %v4287, %v4479
        %4481 = vmatprep.mubr.bf16.mxu0 %v2929
        %4482 = vmatmul.mubr.bf16.gmra.mrb[0].mxu0 %v2928
        %v4483 = vpop.f32.mrb[0].mxu0
        %v4484 = vadd.f32 %v4291, %v4483
        %v4485 = vpop.f32.mrb[0].mxu0
        %v4486 = vadd.f32 %v4293, %v4485
        %v4487 = vpop.f32.mrb[0].mxu0
        %v4488 = vadd.f32 %v4295, %v4487
        %v4489 = vpop.f32.mrb[0].mxu0
        %v4490 = vadd.f32 %v4297, %v4489
        %4491 = vdwg.mxu0
        %v4492 = vmax.f32 %v3948, 0.0
        %v4493 = vmax.f32 %v3950, 0.0
        %v4494 = vmax.f32 %v4334, 0.0
        %v4495 = vmax.f32 %v4336, 0.0
        %v4496 = vmax.f32 %v3952, 0.0
        %v4497 = vmax.f32 %v3954, 0.0
        %v4498 = vmax.f32 %v4338, 0.0
        %v4499 = vmax.f32 %v4340, 0.0
        %v4500 = vmax.f32 %v3958, 0.0
        %v4501 = vmax.f32 %v3960, 0.0
        %v4502 = vmax.f32 %v4344, 0.0
        %v4503 = vmax.f32 %v4346, 0.0
        %v4504 = vmax.f32 %v3962, 0.0
        %v4505 = vmax.f32 %v3964, 0.0
        %v4506 = vmax.f32 %v4348, 0.0
        %v4507 = vmax.f32 %v4350, 0.0
        %v4508 = vmax.f32 %v3968, 0.0
        %v4509 = vmax.f32 %v3970, 0.0
        %v4510 = vmax.f32 %v4354, 0.0
        %v4511 = vmax.f32 %v4356, 0.0
        %v4512 = vmax.f32 %v3972, 0.0
        %v4513 = vmax.f32 %v3974, 0.0
        %v4514 = vmax.f32 %v4358, 0.0
        %v4515 = vmax.f32 %v4360, 0.0
        %v4516 = vmax.f32 %v3978, 0.0
        %v4517 = vmax.f32 %v3980, 0.0
        %v4518 = vmax.f32 %v4364, 0.0
        %v4519 = vmax.f32 %v4366, 0.0
        %v4520 = vmax.f32 %v3982, 0.0
        %v4521 = vmax.f32 %v3984, 0.0
        %v4522 = vmax.f32 %v4368, 0.0
        %v4523 = vmax.f32 %v4370, 0.0
        %v4524 = vmax.f32 %v3988, 0.0
        %v4525 = vmax.f32 %v3990, 0.0
        %v4526 = vmax.f32 %v4374, 0.0
        %v4527 = vmax.f32 %v4376, 0.0
        %v4528 = vmax.f32 %v3992, 0.0
        %v4529 = vmax.f32 %v3994, 0.0
        %v4530 = vmax.f32 %v4378, 0.0
        %v4531 = vmax.f32 %v4380, 0.0
        %v4532 = vmax.f32 %v3998, 0.0
        %v4533 = vmax.f32 %v4000, 0.0
        %v4534 = vmax.f32 %v4384, 0.0
        %v4535 = vmax.f32 %v4386, 0.0
        %v4536 = vmax.f32 %v4002, 0.0
        %v4537 = vmax.f32 %v4004, 0.0
        %v4538 = vmax.f32 %v4388, 0.0
        %v4539 = vmax.f32 %v4390, 0.0
        %v4540 = vmax.f32 %v4008, 0.0
        %v4541 = vmax.f32 %v4010, 0.0
        %v4542 = vmax.f32 %v4394, 0.0
        %v4543 = vmax.f32 %v4396, 0.0
        %v4544 = vmax.f32 %v4012, 0.0
        %v4545 = vmax.f32 %v4014, 0.0
        %v4546 = vmax.f32 %v4398, 0.0
        %v4547 = vmax.f32 %v4400, 0.0
        %v4548 = vmax.f32 %v4018, 0.0
        %v4549 = vmax.f32 %v4020, 0.0
        %v4550 = vmax.f32 %v4404, 0.0
        %v4551 = vmax.f32 %v4406, 0.0
        %v4552 = vmax.f32 %v4022, 0.0
        %v4553 = vmax.f32 %v4024, 0.0
        %v4554 = vmax.f32 %v4408, 0.0
        %v4555 = vmax.f32 %v4410, 0.0
        %v4556 = vmax.f32 %v4028, 0.0
        %v4557 = vmax.f32 %v4030, 0.0
        %v4558 = vmax.f32 %v4414, 0.0
        %v4559 = vmax.f32 %v4416, 0.0
        %v4560 = vmax.f32 %v4032, 0.0
        %v4561 = vmax.f32 %v4034, 0.0
        %v4562 = vmax.f32 %v4418, 0.0
        %v4563 = vmax.f32 %v4420, 0.0
        %v4564 = vmax.f32 %v4038, 0.0
        %v4565 = vmax.f32 %v4040, 0.0
        %v4566 = vmax.f32 %v4424, 0.0
        %v4567 = vmax.f32 %v4426, 0.0
        %v4568 = vmax.f32 %v4042, 0.0
        %v4569 = vmax.f32 %v4044, 0.0
        %v4570 = vmax.f32 %v4428, 0.0
        %v4571 = vmax.f32 %v4430, 0.0
        %v4572 = vmax.f32 %v4048, 0.0
        %v4573 = vmax.f32 %v4050, 0.0
        %v4574 = vmax.f32 %v4434, 0.0
        %v4575 = vmax.f32 %v4436, 0.0
        %v4576 = vmax.f32 %v4052, 0.0
        %v4577 = vmax.f32 %v4054, 0.0
        %v4578 = vmax.f32 %v4438, 0.0
        %v4579 = vmax.f32 %v4440, 0.0
        %v4580 = vmax.f32 %v4058, 0.0
        %v4581 = vmax.f32 %v4060, 0.0
        %v4582 = vmax.f32 %v4444, 0.0
        %v4583 = vmax.f32 %v4446, 0.0
        %v4584 = vmax.f32 %v4062, 0.0
        %v4585 = vmax.f32 %v4064, 0.0
        %v4586 = vmax.f32 %v4448, 0.0
        %v4587 = vmax.f32 %v4450, 0.0
        %v4588 = vmax.f32 %v4068, 0.0
        %v4589 = vmax.f32 %v4070, 0.0
        %v4590 = vmax.f32 %v4454, 0.0
        %v4591 = vmax.f32 %v4456, 0.0
        %v4592 = vmax.f32 %v4072, 0.0
        %v4593 = vmax.f32 %v4074, 0.0
        %v4594 = vmax.f32 %v4458, 0.0
        %v4595 = vmax.f32 %v4460, 0.0
        %v4596 = vmax.f32 %v4078, 0.0
        %v4597 = vmax.f32 %v4080, 0.0
        %v4598 = vmax.f32 %v4464, 0.0
        %v4599 = vmax.f32 %v4466, 0.0
        %v4600 = vmax.f32 %v4082, 0.0
        %v4601 = vmax.f32 %v4084, 0.0
        %v4602 = vmax.f32 %v4468, 0.0
        %v4603 = vmax.f32 %v4470, 0.0
        %v4604 = vmax.f32 %v4088, 0.0
        %v4605 = vmax.f32 %v4090, 0.0
        %v4606 = vmax.f32 %v4474, 0.0
        %v4607 = vmax.f32 %v4476, 0.0
        %v4608 = vmax.f32 %v4092, 0.0
        %v4609 = vmax.f32 %v4094, 0.0
        %v4610 = vmax.f32 %v4478, 0.0
        %v4611 = vmax.f32 %v4480, 0.0
        %v4612 = vmax.f32 %v4098, 0.0
        %v4613 = vmax.f32 %v4100, 0.0
        %v4614 = vmax.f32 %v4484, 0.0
        %v4615 = vmax.f32 %v4486, 0.0
        %v4616 = vmax.f32 %v4102, 0.0
        %v4617 = vmax.f32 %v4104, 0.0
        %v4618 = vmax.f32 %v4488, 0.0
        %v4619 = vmax.f32 %v4490, 0.0
        %v4620 = vld [vmem:[%s7] sm:$0xf]
        %v4621 = vunpack.c.l.bf16 %v4620
        %v4623 = vlaneseq
        %v4624 = vshrl.u32 %v4623, 7
        %v4625 = vsub.s32 0, %v4624
        %v4626 = vrot.slane %v4621, %v4625
        %v4627 = vlaneseq
        %v4628 = vshrl.u32 %v4627, 7
        %v4629 = vsub.s32 2, %v4628
        %v4630 = vrot.slane %v4621, %v4629
        %v4631 = vlaneseq
        %v4632 = vshrl.u32 %v4631, 7
        %v4633 = vsub.s32 4, %v4632
        %v4634 = vrot.slane %v4621, %v4633
        %v4635 = vlaneseq
        %v4636 = vshrl.u32 %v4635, 7
        %v4637 = vsub.s32 6, %v4636
        %v4638 = vrot.slane %v4621, %v4637
        %v4643 = vlaneseq
        %v4644 = vshrl.u32 %v4643, 7
        %v4645 = vsub.s32 0, %v4644
        %v4646 = vrot.slane %v4626, %v4645
        %v4647 = vlaneseq
        %v4648 = vshrl.u32 %v4647, 7
        %v4649 = vsub.s32 0, %v4648
        %v4650 = vrot.slane %v4630, %v4649
        %v4651 = vlaneseq
        %v4652 = vshrl.u32 %v4651, 7
        %v4653 = vsub.s32 0, %v4652
        %v4654 = vrot.slane %v4634, %v4653
        %v4655 = vlaneseq
        %v4656 = vshrl.u32 %v4655, 7
        %v4657 = vsub.s32 0, %v4656
        %v4658 = vrot.slane %v4638, %v4657
        %v4659 = vmul.f32 %v4492, %v4646
        %v4660 = vmul.f32 %v4493, %v4650
        %v4661 = vmul.f32 %v4494, %v4654
        %v4662 = vmul.f32 %v4495, %v4658
        %v4663 = vmul.f32 %v4496, %v4646
        %v4664 = vmul.f32 %v4497, %v4650
        %v4665 = vmul.f32 %v4498, %v4654
        %v4666 = vmul.f32 %v4499, %v4658
        %v4667 = vmul.f32 %v4500, %v4646
        %v4668 = vmul.f32 %v4501, %v4650
        %v4669 = vmul.f32 %v4502, %v4654
        %v4670 = vmul.f32 %v4503, %v4658
        %v4671 = vmul.f32 %v4504, %v4646
        %v4672 = vmul.f32 %v4505, %v4650
        %v4673 = vmul.f32 %v4506, %v4654
        %v4674 = vmul.f32 %v4507, %v4658
        %v4675 = vmul.f32 %v4508, %v4646
        %v4676 = vmul.f32 %v4509, %v4650
        %v4677 = vmul.f32 %v4510, %v4654
        %v4678 = vmul.f32 %v4511, %v4658
        %v4679 = vmul.f32 %v4512, %v4646
        %v4680 = vmul.f32 %v4513, %v4650
        %v4681 = vmul.f32 %v4514, %v4654
        %v4682 = vmul.f32 %v4515, %v4658
        %v4683 = vmul.f32 %v4516, %v4646
        %v4684 = vmul.f32 %v4517, %v4650
        %v4685 = vmul.f32 %v4518, %v4654
        %v4686 = vmul.f32 %v4519, %v4658
        %v4687 = vmul.f32 %v4520, %v4646
        %v4688 = vmul.f32 %v4521, %v4650
        %v4689 = vmul.f32 %v4522, %v4654
        %v4690 = vmul.f32 %v4523, %v4658
        %v4691 = vmul.f32 %v4524, %v4646
        %v4692 = vmul.f32 %v4525, %v4650
        %v4693 = vmul.f32 %v4526, %v4654
        %v4694 = vmul.f32 %v4527, %v4658
        %v4695 = vmul.f32 %v4528, %v4646
        %v4696 = vmul.f32 %v4529, %v4650
        %v4697 = vmul.f32 %v4530, %v4654
        %v4698 = vmul.f32 %v4531, %v4658
        %v4699 = vmul.f32 %v4532, %v4646
        %v4700 = vmul.f32 %v4533, %v4650
        %v4701 = vmul.f32 %v4534, %v4654
        %v4702 = vmul.f32 %v4535, %v4658
        %v4703 = vmul.f32 %v4536, %v4646
        %v4704 = vmul.f32 %v4537, %v4650
        %v4705 = vmul.f32 %v4538, %v4654
        %v4706 = vmul.f32 %v4539, %v4658
        %v4707 = vmul.f32 %v4540, %v4646
        %v4708 = vmul.f32 %v4541, %v4650
        %v4709 = vmul.f32 %v4542, %v4654
        %v4710 = vmul.f32 %v4543, %v4658
        %v4711 = vmul.f32 %v4544, %v4646
        %v4712 = vmul.f32 %v4545, %v4650
        %v4713 = vmul.f32 %v4546, %v4654
        %v4714 = vmul.f32 %v4547, %v4658
        %v4715 = vmul.f32 %v4548, %v4646
        %v4716 = vmul.f32 %v4549, %v4650
        %v4717 = vmul.f32 %v4550, %v4654
        %v4718 = vmul.f32 %v4551, %v4658
        %v4719 = vmul.f32 %v4552, %v4646
        %v4720 = vmul.f32 %v4553, %v4650
        %v4721 = vmul.f32 %v4554, %v4654
        %v4722 = vmul.f32 %v4555, %v4658
        %v4723 = vmul.f32 %v4556, %v4646
        %v4724 = vmul.f32 %v4557, %v4650
        %v4725 = vmul.f32 %v4558, %v4654
        %v4726 = vmul.f32 %v4559, %v4658
        %v4727 = vmul.f32 %v4560, %v4646
        %v4728 = vmul.f32 %v4561, %v4650
        %v4729 = vmul.f32 %v4562, %v4654
        %v4730 = vmul.f32 %v4563, %v4658
        %v4731 = vmul.f32 %v4564, %v4646
        %v4732 = vmul.f32 %v4565, %v4650
        %v4733 = vmul.f32 %v4566, %v4654
        %v4734 = vmul.f32 %v4567, %v4658
        %v4735 = vmul.f32 %v4568, %v4646
        %v4736 = vmul.f32 %v4569, %v4650
        %v4737 = vmul.f32 %v4570, %v4654
        %v4738 = vmul.f32 %v4571, %v4658
        %v4739 = vmul.f32 %v4572, %v4646
        %v4740 = vmul.f32 %v4573, %v4650
        %v4741 = vmul.f32 %v4574, %v4654
        %v4742 = vmul.f32 %v4575, %v4658
        %v4743 = vmul.f32 %v4576, %v4646
        %v4744 = vmul.f32 %v4577, %v4650
        %v4745 = vmul.f32 %v4578, %v4654
        %v4746 = vmul.f32 %v4579, %v4658
        %v4747 = vmul.f32 %v4580, %v4646
        %v4748 = vmul.f32 %v4581, %v4650
        %v4749 = vmul.f32 %v4582, %v4654
        %v4750 = vmul.f32 %v4583, %v4658
        %v4751 = vmul.f32 %v4584, %v4646
        %v4752 = vmul.f32 %v4585, %v4650
        %v4753 = vmul.f32 %v4586, %v4654
        %v4754 = vmul.f32 %v4587, %v4658
        %v4755 = vmul.f32 %v4588, %v4646
        %v4756 = vmul.f32 %v4589, %v4650
        %v4757 = vmul.f32 %v4590, %v4654
        %v4758 = vmul.f32 %v4591, %v4658
        %v4759 = vmul.f32 %v4592, %v4646
        %v4760 = vmul.f32 %v4593, %v4650
        %v4761 = vmul.f32 %v4594, %v4654
        %v4762 = vmul.f32 %v4595, %v4658
        %v4763 = vmul.f32 %v4596, %v4646
        %v4764 = vmul.f32 %v4597, %v4650
        %v4765 = vmul.f32 %v4598, %v4654
        %v4766 = vmul.f32 %v4599, %v4658
        %v4767 = vmul.f32 %v4600, %v4646
        %v4768 = vmul.f32 %v4601, %v4650
        %v4769 = vmul.f32 %v4602, %v4654
        %v4770 = vmul.f32 %v4603, %v4658
        %v4771 = vmul.f32 %v4604, %v4646
        %v4772 = vmul.f32 %v4605, %v4650
        %v4773 = vmul.f32 %v4606, %v4654
        %v4774 = vmul.f32 %v4607, %v4658
        %v4775 = vmul.f32 %v4608, %v4646
        %v4776 = vmul.f32 %v4609, %v4650
        %v4777 = vmul.f32 %v4610, %v4654
        %v4778 = vmul.f32 %v4611, %v4658
        %v4779 = vmul.f32 %v4612, %v4646
        %v4780 = vmul.f32 %v4613, %v4650
        %v4781 = vmul.f32 %v4614, %v4654
        %v4782 = vmul.f32 %v4615, %v4658
        %v4783 = vmul.f32 %v4616, %v4646
        %v4784 = vmul.f32 %v4617, %v4650
        %v4785 = vmul.f32 %v4618, %v4654
        %v4786 = vmul.f32 %v4619, %v4658
        %v4787 = vadd.f32 %v4659, %v4660
        %v4788 = vadd.f32 %v4787, %v4661
        %v4789 = vadd.f32 %v4788, %v4662
        %4790 = vadd.xlane.f32.xlu0 %v4789
        %v4791 = vpop.xlane.xlu0 %4790
        %v4792 = vadd.f32 %v4663, %v4664
        %v4793 = vadd.f32 %v4792, %v4665
        %v4794 = vadd.f32 %v4793, %v4666
        %4795 = vadd.xlane.f32.xlu0 %v4794
        %v4796 = vpop.xlane.xlu0 %4795
        %v4797 = vadd.f32 %v4667, %v4668
        %v4798 = vadd.f32 %v4797, %v4669
        %v4799 = vadd.f32 %v4798, %v4670
        %4800 = vadd.xlane.f32.xlu0 %v4799
        %v4801 = vpop.xlane.xlu0 %4800
        %v4802 = vadd.f32 %v4671, %v4672
        %v4803 = vadd.f32 %v4802, %v4673
        %v4804 = vadd.f32 %v4803, %v4674
        %4805 = vadd.xlane.f32.xlu0 %v4804
        %v4806 = vpop.xlane.xlu0 %4805
        %v4807 = vadd.f32 %v4675, %v4676
        %v4808 = vadd.f32 %v4807, %v4677
        %v4809 = vadd.f32 %v4808, %v4678
        %4810 = vadd.xlane.f32.xlu0 %v4809
        %v4811 = vpop.xlane.xlu0 %4810
        %v4812 = vadd.f32 %v4679, %v4680
        %v4813 = vadd.f32 %v4812, %v4681
        %v4814 = vadd.f32 %v4813, %v4682
        %4815 = vadd.xlane.f32.xlu0 %v4814
        %v4816 = vpop.xlane.xlu0 %4815
        %v4817 = vadd.f32 %v4683, %v4684
        %v4818 = vadd.f32 %v4817, %v4685
        %v4819 = vadd.f32 %v4818, %v4686
        %4820 = vadd.xlane.f32.xlu0 %v4819
        %v4821 = vpop.xlane.xlu0 %4820
        %v4822 = vadd.f32 %v4687, %v4688
        %v4823 = vadd.f32 %v4822, %v4689
        %v4824 = vadd.f32 %v4823, %v4690
        %4825 = vadd.xlane.f32.xlu0 %v4824
        %v4826 = vpop.xlane.xlu0 %4825
        %v4827 = vadd.f32 %v4691, %v4692
        %v4828 = vadd.f32 %v4827, %v4693
        %v4829 = vadd.f32 %v4828, %v4694
        %4830 = vadd.xlane.f32.xlu0 %v4829
        %v4831 = vpop.xlane.xlu0 %4830
        %v4832 = vadd.f32 %v4695, %v4696
        %v4833 = vadd.f32 %v4832, %v4697
        %v4834 = vadd.f32 %v4833, %v4698
        %4835 = vadd.xlane.f32.xlu0 %v4834
        %v4836 = vpop.xlane.xlu0 %4835
        %v4837 = vadd.f32 %v4699, %v4700
        %v4838 = vadd.f32 %v4837, %v4701
        %v4839 = vadd.f32 %v4838, %v4702
        %4840 = vadd.xlane.f32.xlu0 %v4839
        %v4841 = vpop.xlane.xlu0 %4840
        %v4842 = vadd.f32 %v4703, %v4704
        %v4843 = vadd.f32 %v4842, %v4705
        %v4844 = vadd.f32 %v4843, %v4706
        %4845 = vadd.xlane.f32.xlu0 %v4844
        %v4846 = vpop.xlane.xlu0 %4845
        %v4847 = vadd.f32 %v4707, %v4708
        %v4848 = vadd.f32 %v4847, %v4709
        %v4849 = vadd.f32 %v4848, %v4710
        %4850 = vadd.xlane.f32.xlu0 %v4849
        %v4851 = vpop.xlane.xlu0 %4850
        %v4852 = vadd.f32 %v4711, %v4712
        %v4853 = vadd.f32 %v4852, %v4713
        %v4854 = vadd.f32 %v4853, %v4714
        %4855 = vadd.xlane.f32.xlu0 %v4854
        %v4856 = vpop.xlane.xlu0 %4855
        %v4857 = vadd.f32 %v4715, %v4716
        %v4858 = vadd.f32 %v4857, %v4717
        %v4859 = vadd.f32 %v4858, %v4718
        %4860 = vadd.xlane.f32.xlu0 %v4859
        %v4861 = vpop.xlane.xlu0 %4860
        %v4862 = vadd.f32 %v4719, %v4720
        %v4863 = vadd.f32 %v4862, %v4721
        %v4864 = vadd.f32 %v4863, %v4722
        %4865 = vadd.xlane.f32.xlu0 %v4864
        %v4866 = vpop.xlane.xlu0 %4865
        %v4867 = vadd.f32 %v4723, %v4724
        %v4868 = vadd.f32 %v4867, %v4725
        %v4869 = vadd.f32 %v4868, %v4726
        %4870 = vadd.xlane.f32.xlu0 %v4869
        %v4871 = vpop.xlane.xlu0 %4870
        %v4872 = vadd.f32 %v4727, %v4728
        %v4873 = vadd.f32 %v4872, %v4729
        %v4874 = vadd.f32 %v4873, %v4730
        %4875 = vadd.xlane.f32.xlu0 %v4874
        %v4876 = vpop.xlane.xlu0 %4875
        %v4877 = vadd.f32 %v4731, %v4732
        %v4878 = vadd.f32 %v4877, %v4733
        %v4879 = vadd.f32 %v4878, %v4734
        %4880 = vadd.xlane.f32.xlu0 %v4879
        %v4881 = vpop.xlane.xlu0 %4880
        %v4882 = vadd.f32 %v4735, %v4736
        %v4883 = vadd.f32 %v4882, %v4737
        %v4884 = vadd.f32 %v4883, %v4738
        %4885 = vadd.xlane.f32.xlu0 %v4884
        %v4886 = vpop.xlane.xlu0 %4885
        %v4887 = vadd.f32 %v4739, %v4740
        %v4888 = vadd.f32 %v4887, %v4741
        %v4889 = vadd.f32 %v4888, %v4742
        %4890 = vadd.xlane.f32.xlu0 %v4889
        %v4891 = vpop.xlane.xlu0 %4890
        %v4892 = vadd.f32 %v4743, %v4744
        %v4893 = vadd.f32 %v4892, %v4745
        %v4894 = vadd.f32 %v4893, %v4746
        %4895 = vadd.xlane.f32.xlu0 %v4894
        %v4896 = vpop.xlane.xlu0 %4895
        %v4897 = vadd.f32 %v4747, %v4748
        %v4898 = vadd.f32 %v4897, %v4749
        %v4899 = vadd.f32 %v4898, %v4750
        %4900 = vadd.xlane.f32.xlu0 %v4899
        %v4901 = vpop.xlane.xlu0 %4900
        %v4902 = vadd.f32 %v4751, %v4752
        %v4903 = vadd.f32 %v4902, %v4753
        %v4904 = vadd.f32 %v4903, %v4754
        %4905 = vadd.xlane.f32.xlu0 %v4904
        %v4906 = vpop.xlane.xlu0 %4905
        %v4907 = vadd.f32 %v4755, %v4756
        %v4908 = vadd.f32 %v4907, %v4757
        %v4909 = vadd.f32 %v4908, %v4758
        %4910 = vadd.xlane.f32.xlu0 %v4909
        %v4911 = vpop.xlane.xlu0 %4910
        %v4912 = vadd.f32 %v4759, %v4760
        %v4913 = vadd.f32 %v4912, %v4761
        %v4914 = vadd.f32 %v4913, %v4762
        %4915 = vadd.xlane.f32.xlu0 %v4914
        %v4916 = vpop.xlane.xlu0 %4915
        %v4917 = vadd.f32 %v4763, %v4764
        %v4918 = vadd.f32 %v4917, %v4765
        %v4919 = vadd.f32 %v4918, %v4766
        %4920 = vadd.xlane.f32.xlu0 %v4919
        %v4921 = vpop.xlane.xlu0 %4920
        %v4922 = vadd.f32 %v4767, %v4768
        %v4923 = vadd.f32 %v4922, %v4769
        %v4924 = vadd.f32 %v4923, %v4770
        %4925 = vadd.xlane.f32.xlu0 %v4924
        %v4926 = vpop.xlane.xlu0 %4925
        %v4927 = vadd.f32 %v4771, %v4772
        %v4928 = vadd.f32 %v4927, %v4773
        %v4929 = vadd.f32 %v4928, %v4774
        %4930 = vadd.xlane.f32.xlu0 %v4929
        %v4931 = vpop.xlane.xlu0 %4930
        %v4932 = vadd.f32 %v4775, %v4776
        %v4933 = vadd.f32 %v4932, %v4777
        %v4934 = vadd.f32 %v4933, %v4778
        %4935 = vadd.xlane.f32.xlu0 %v4934
        %v4936 = vpop.xlane.xlu0 %4935
        %v4937 = vadd.f32 %v4779, %v4780
        %v4938 = vadd.f32 %v4937, %v4781
        %v4939 = vadd.f32 %v4938, %v4782
        %4940 = vadd.xlane.f32.xlu0 %v4939
        %v4941 = vpop.xlane.xlu0 %4940
        %v4942 = vadd.f32 %v4783, %v4784
        %v4943 = vadd.f32 %v4942, %v4785
        %v4944 = vadd.f32 %v4943, %v4786
        %4945 = vadd.xlane.f32.xlu0 %v4944
        %v4946 = vpop.xlane.xlu0 %4945
        %v4947 = vld [vmem:[#allocation2] sm:$0x1]
        %4949 = vset.pattern.permute.xlu0 0
        %4950 = vperm.xlu0 %4949, %v4947
        %v4951 = vpop.permute.xlu0 %4950
        %v4953 = vlaneseq
        %v4954 = vshrl.u32 %v4953, 7
        %v4955 = vsub.s32 0, %v4954
        %v4956 = vrot.slane %v4951, %v4955
        %v4957 = vadd.f32 %v4791, %v4956
        %v4958 = vadd.f32 %v4796, %v4956
        %v4959 = vadd.f32 %v4801, %v4956
        %v4960 = vadd.f32 %v4806, %v4956
        %v4961 = vadd.f32 %v4811, %v4956
        %v4962 = vadd.f32 %v4816, %v4956
        %v4963 = vadd.f32 %v4821, %v4956
        %v4964 = vadd.f32 %v4826, %v4956
        %v4965 = vadd.f32 %v4831, %v4956
        %v4966 = vadd.f32 %v4836, %v4956
        %v4967 = vadd.f32 %v4841, %v4956
        %v4968 = vadd.f32 %v4846, %v4956
        %v4969 = vadd.f32 %v4851, %v4956
        %v4970 = vadd.f32 %v4856, %v4956
        %v4971 = vadd.f32 %v4861, %v4956
        %v4972 = vadd.f32 %v4866, %v4956
        %v4973 = vadd.f32 %v4871, %v4956
        %v4974 = vadd.f32 %v4876, %v4956
        %v4975 = vadd.f32 %v4881, %v4956
        %v4976 = vadd.f32 %v4886, %v4956
        %v4977 = vadd.f32 %v4891, %v4956
        %v4978 = vadd.f32 %v4896, %v4956
        %v4979 = vadd.f32 %v4901, %v4956
        %v4980 = vadd.f32 %v4906, %v4956
        %v4981 = vadd.f32 %v4911, %v4956
        %v4982 = vadd.f32 %v4916, %v4956
        %v4983 = vadd.f32 %v4921, %v4956
        %v4984 = vadd.f32 %v4926, %v4956
        %v4985 = vadd.f32 %v4931, %v4956
        %v4986 = vadd.f32 %v4936, %v4956
        %v4987 = vadd.f32 %v4941, %v4956
        %v4988 = vadd.f32 %v4946, %v4956
        %v5021 = vlaneseq
        %v5022 = vshrl.u32 %v5021, 7
        %v5023 = vsub.s32 0, %v5022
        %v5024 = vrot.slane %v4957, %v5023
        %v5025 = vlaneseq
        %v5026 = vshrl.u32 %v5025, 7
        %v5027 = vsub.s32 1, %v5026
        %v5028 = vrot.slane %v4957, %v5027
        %v5029 = vlaneseq
        %v5030 = vshrl.u32 %v5029, 7
        %v5031 = vsub.s32 2, %v5030
        %v5032 = vrot.slane %v4957, %v5031
        %v5033 = vlaneseq
        %v5034 = vshrl.u32 %v5033, 7
        %v5035 = vsub.s32 3, %v5034
        %v5036 = vrot.slane %v4957, %v5035
        %v5037 = vlaneseq
        %v5038 = vshrl.u32 %v5037, 7
        %v5039 = vsub.s32 4, %v5038
        %v5040 = vrot.slane %v4957, %v5039
        %v5041 = vlaneseq
        %v5042 = vshrl.u32 %v5041, 7
        %v5043 = vsub.s32 5, %v5042
        %v5044 = vrot.slane %v4957, %v5043
        %v5045 = vlaneseq
        %v5046 = vshrl.u32 %v5045, 7
        %v5047 = vsub.s32 6, %v5046
        %v5048 = vrot.slane %v4957, %v5047
        %v5049 = vlaneseq
        %v5050 = vshrl.u32 %v5049, 7
        %v5051 = vsub.s32 7, %v5050
        %v5052 = vrot.slane %v4957, %v5051
        %v5053 = vlaneseq
        %v5054 = vshrl.u32 %v5053, 7
        %v5055 = vsub.s32 0, %v5054
        %v5056 = vrot.slane %v4958, %v5055
        %v5057 = vlaneseq
        %v5058 = vshrl.u32 %v5057, 7
        %v5059 = vsub.s32 1, %v5058
        %v5060 = vrot.slane %v4958, %v5059
        %v5061 = vlaneseq
        %v5062 = vshrl.u32 %v5061, 7
        %v5063 = vsub.s32 2, %v5062
        %v5064 = vrot.slane %v4958, %v5063
        %v5065 = vlaneseq
        %v5066 = vshrl.u32 %v5065, 7
        %v5067 = vsub.s32 3, %v5066
        %v5068 = vrot.slane %v4958, %v5067
        %v5069 = vlaneseq
        %v5070 = vshrl.u32 %v5069, 7
        %v5071 = vsub.s32 4, %v5070
        %v5072 = vrot.slane %v4958, %v5071
        %v5073 = vlaneseq
        %v5074 = vshrl.u32 %v5073, 7
        %v5075 = vsub.s32 5, %v5074
        %v5076 = vrot.slane %v4958, %v5075
        %v5077 = vlaneseq
        %v5078 = vshrl.u32 %v5077, 7
        %v5079 = vsub.s32 6, %v5078
        %v5080 = vrot.slane %v4958, %v5079
        %v5081 = vlaneseq
        %v5082 = vshrl.u32 %v5081, 7
        %v5083 = vsub.s32 7, %v5082
        %v5084 = vrot.slane %v4958, %v5083
        %v5085 = vlaneseq
        %v5086 = vshrl.u32 %v5085, 7
        %v5087 = vsub.s32 0, %v5086
        %v5088 = vrot.slane %v4959, %v5087
        %v5089 = vlaneseq
        %v5090 = vshrl.u32 %v5089, 7
        %v5091 = vsub.s32 1, %v5090
        %v5092 = vrot.slane %v4959, %v5091
        %v5093 = vlaneseq
        %v5094 = vshrl.u32 %v5093, 7
        %v5095 = vsub.s32 2, %v5094
        %v5096 = vrot.slane %v4959, %v5095
        %v5097 = vlaneseq
        %v5098 = vshrl.u32 %v5097, 7
        %v5099 = vsub.s32 3, %v5098
        %v5100 = vrot.slane %v4959, %v5099
        %v5101 = vlaneseq
        %v5102 = vshrl.u32 %v5101, 7
        %v5103 = vsub.s32 4, %v5102
        %v5104 = vrot.slane %v4959, %v5103
        %v5105 = vlaneseq
        %v5106 = vshrl.u32 %v5105, 7
        %v5107 = vsub.s32 5, %v5106
        %v5108 = vrot.slane %v4959, %v5107
        %v5109 = vlaneseq
        %v5110 = vshrl.u32 %v5109, 7
        %v5111 = vsub.s32 6, %v5110
        %v5112 = vrot.slane %v4959, %v5111
        %v5113 = vlaneseq
        %v5114 = vshrl.u32 %v5113, 7
        %v5115 = vsub.s32 7, %v5114
        %v5116 = vrot.slane %v4959, %v5115
        %v5117 = vlaneseq
        %v5118 = vshrl.u32 %v5117, 7
        %v5119 = vsub.s32 0, %v5118
        %v5120 = vrot.slane %v4960, %v5119
        %v5121 = vlaneseq
        %v5122 = vshrl.u32 %v5121, 7
        %v5123 = vsub.s32 1, %v5122
        %v5124 = vrot.slane %v4960, %v5123
        %v5125 = vlaneseq
        %v5126 = vshrl.u32 %v5125, 7
        %v5127 = vsub.s32 2, %v5126
        %v5128 = vrot.slane %v4960, %v5127
        %v5129 = vlaneseq
        %v5130 = vshrl.u32 %v5129, 7
        %v5131 = vsub.s32 3, %v5130
        %v5132 = vrot.slane %v4960, %v5131
        %v5133 = vlaneseq
        %v5134 = vshrl.u32 %v5133, 7
        %v5135 = vsub.s32 4, %v5134
        %v5136 = vrot.slane %v4960, %v5135
        %v5137 = vlaneseq
        %v5138 = vshrl.u32 %v5137, 7
        %v5139 = vsub.s32 5, %v5138
        %v5140 = vrot.slane %v4960, %v5139
        %v5141 = vlaneseq
        %v5142 = vshrl.u32 %v5141, 7
        %v5143 = vsub.s32 6, %v5142
        %v5144 = vrot.slane %v4960, %v5143
        %v5145 = vlaneseq
        %v5146 = vshrl.u32 %v5145, 7
        %v5147 = vsub.s32 7, %v5146
        %v5148 = vrot.slane %v4960, %v5147
        %v5149 = vlaneseq
        %v5150 = vshrl.u32 %v5149, 7
        %v5151 = vsub.s32 0, %v5150
        %v5152 = vrot.slane %v4961, %v5151
        %v5153 = vlaneseq
        %v5154 = vshrl.u32 %v5153, 7
        %v5155 = vsub.s32 1, %v5154
        %v5156 = vrot.slane %v4961, %v5155
        %v5157 = vlaneseq
        %v5158 = vshrl.u32 %v5157, 7
        %v5159 = vsub.s32 2, %v5158
        %v5160 = vrot.slane %v4961, %v5159
        %v5161 = vlaneseq
        %v5162 = vshrl.u32 %v5161, 7
        %v5163 = vsub.s32 3, %v5162
        %v5164 = vrot.slane %v4961, %v5163
        %v5165 = vlaneseq
        %v5166 = vshrl.u32 %v5165, 7
        %v5167 = vsub.s32 4, %v5166
        %v5168 = vrot.slane %v4961, %v5167
        %v5169 = vlaneseq
        %v5170 = vshrl.u32 %v5169, 7
        %v5171 = vsub.s32 5, %v5170
        %v5172 = vrot.slane %v4961, %v5171
        %v5173 = vlaneseq
        %v5174 = vshrl.u32 %v5173, 7
        %v5175 = vsub.s32 6, %v5174
        %v5176 = vrot.slane %v4961, %v5175
        %v5177 = vlaneseq
        %v5178 = vshrl.u32 %v5177, 7
        %v5179 = vsub.s32 7, %v5178
        %v5180 = vrot.slane %v4961, %v5179
        %v5181 = vlaneseq
        %v5182 = vshrl.u32 %v5181, 7
        %v5183 = vsub.s32 0, %v5182
        %v5184 = vrot.slane %v4962, %v5183
        %v5185 = vlaneseq
        %v5186 = vshrl.u32 %v5185, 7
        %v5187 = vsub.s32 1, %v5186
        %v5188 = vrot.slane %v4962, %v5187
        %v5189 = vlaneseq
        %v5190 = vshrl.u32 %v5189, 7
        %v5191 = vsub.s32 2, %v5190
        %v5192 = vrot.slane %v4962, %v5191
        %v5193 = vlaneseq
        %v5194 = vshrl.u32 %v5193, 7
        %v5195 = vsub.s32 3, %v5194
        %v5196 = vrot.slane %v4962, %v5195
        %v5197 = vlaneseq
        %v5198 = vshrl.u32 %v5197, 7
        %v5199 = vsub.s32 4, %v5198
        %v5200 = vrot.slane %v4962, %v5199
        %v5201 = vlaneseq
        %v5202 = vshrl.u32 %v5201, 7
        %v5203 = vsub.s32 5, %v5202
        %v5204 = vrot.slane %v4962, %v5203
        %v5205 = vlaneseq
        %v5206 = vshrl.u32 %v5205, 7
        %v5207 = vsub.s32 6, %v5206
        %v5208 = vrot.slane %v4962, %v5207
        %v5209 = vlaneseq
        %v5210 = vshrl.u32 %v5209, 7
        %v5211 = vsub.s32 7, %v5210
        %v5212 = vrot.slane %v4962, %v5211
        %v5213 = vlaneseq
        %v5214 = vshrl.u32 %v5213, 7
        %v5215 = vsub.s32 0, %v5214
        %v5216 = vrot.slane %v4963, %v5215
        %v5217 = vlaneseq
        %v5218 = vshrl.u32 %v5217, 7
        %v5219 = vsub.s32 1, %v5218
        %v5220 = vrot.slane %v4963, %v5219
        %v5221 = vlaneseq
        %v5222 = vshrl.u32 %v5221, 7
        %v5223 = vsub.s32 2, %v5222
        %v5224 = vrot.slane %v4963, %v5223
        %v5225 = vlaneseq
        %v5226 = vshrl.u32 %v5225, 7
        %v5227 = vsub.s32 3, %v5226
        %v5228 = vrot.slane %v4963, %v5227
        %v5229 = vlaneseq
        %v5230 = vshrl.u32 %v5229, 7
        %v5231 = vsub.s32 4, %v5230
        %v5232 = vrot.slane %v4963, %v5231
        %v5233 = vlaneseq
        %v5234 = vshrl.u32 %v5233, 7
        %v5235 = vsub.s32 5, %v5234
        %v5236 = vrot.slane %v4963, %v5235
        %v5237 = vlaneseq
        %v5238 = vshrl.u32 %v5237, 7
        %v5239 = vsub.s32 6, %v5238
        %v5240 = vrot.slane %v4963, %v5239
        %v5241 = vlaneseq
        %v5242 = vshrl.u32 %v5241, 7
        %v5243 = vsub.s32 7, %v5242
        %v5244 = vrot.slane %v4963, %v5243
        %v5245 = vlaneseq
        %v5246 = vshrl.u32 %v5245, 7
        %v5247 = vsub.s32 0, %v5246
        %v5248 = vrot.slane %v4964, %v5247
        %v5249 = vlaneseq
        %v5250 = vshrl.u32 %v5249, 7
        %v5251 = vsub.s32 1, %v5250
        %v5252 = vrot.slane %v4964, %v5251
        %v5253 = vlaneseq
        %v5254 = vshrl.u32 %v5253, 7
        %v5255 = vsub.s32 2, %v5254
        %v5256 = vrot.slane %v4964, %v5255
        %v5257 = vlaneseq
        %v5258 = vshrl.u32 %v5257, 7
        %v5259 = vsub.s32 3, %v5258
        %v5260 = vrot.slane %v4964, %v5259
        %v5261 = vlaneseq
        %v5262 = vshrl.u32 %v5261, 7
        %v5263 = vsub.s32 4, %v5262
        %v5264 = vrot.slane %v4964, %v5263
        %v5265 = vlaneseq
        %v5266 = vshrl.u32 %v5265, 7
        %v5267 = vsub.s32 5, %v5266
        %v5268 = vrot.slane %v4964, %v5267
        %v5269 = vlaneseq
        %v5270 = vshrl.u32 %v5269, 7
        %v5271 = vsub.s32 6, %v5270
        %v5272 = vrot.slane %v4964, %v5271
        %v5273 = vlaneseq
        %v5274 = vshrl.u32 %v5273, 7
        %v5275 = vsub.s32 7, %v5274
        %v5276 = vrot.slane %v4964, %v5275
        %v5277 = vlaneseq
        %v5278 = vshrl.u32 %v5277, 7
        %v5279 = vsub.s32 0, %v5278
        %v5280 = vrot.slane %v4965, %v5279
        %v5281 = vlaneseq
        %v5282 = vshrl.u32 %v5281, 7
        %v5283 = vsub.s32 1, %v5282
        %v5284 = vrot.slane %v4965, %v5283
        %v5285 = vlaneseq
        %v5286 = vshrl.u32 %v5285, 7
        %v5287 = vsub.s32 2, %v5286
        %v5288 = vrot.slane %v4965, %v5287
        %v5289 = vlaneseq
        %v5290 = vshrl.u32 %v5289, 7
        %v5291 = vsub.s32 3, %v5290
        %v5292 = vrot.slane %v4965, %v5291
        %v5293 = vlaneseq
        %v5294 = vshrl.u32 %v5293, 7
        %v5295 = vsub.s32 4, %v5294
        %v5296 = vrot.slane %v4965, %v5295
        %v5297 = vlaneseq
        %v5298 = vshrl.u32 %v5297, 7
        %v5299 = vsub.s32 5, %v5298
        %v5300 = vrot.slane %v4965, %v5299
        %v5301 = vlaneseq
        %v5302 = vshrl.u32 %v5301, 7
        %v5303 = vsub.s32 6, %v5302
        %v5304 = vrot.slane %v4965, %v5303
        %v5305 = vlaneseq
        %v5306 = vshrl.u32 %v5305, 7
        %v5307 = vsub.s32 7, %v5306
        %v5308 = vrot.slane %v4965, %v5307
        %v5309 = vlaneseq
        %v5310 = vshrl.u32 %v5309, 7
        %v5311 = vsub.s32 0, %v5310
        %v5312 = vrot.slane %v4966, %v5311
        %v5313 = vlaneseq
        %v5314 = vshrl.u32 %v5313, 7
        %v5315 = vsub.s32 1, %v5314
        %v5316 = vrot.slane %v4966, %v5315
        %v5317 = vlaneseq
        %v5318 = vshrl.u32 %v5317, 7
        %v5319 = vsub.s32 2, %v5318
        %v5320 = vrot.slane %v4966, %v5319
        %v5321 = vlaneseq
        %v5322 = vshrl.u32 %v5321, 7
        %v5323 = vsub.s32 3, %v5322
        %v5324 = vrot.slane %v4966, %v5323
        %v5325 = vlaneseq
        %v5326 = vshrl.u32 %v5325, 7
        %v5327 = vsub.s32 4, %v5326
        %v5328 = vrot.slane %v4966, %v5327
        %v5329 = vlaneseq
        %v5330 = vshrl.u32 %v5329, 7
        %v5331 = vsub.s32 5, %v5330
        %v5332 = vrot.slane %v4966, %v5331
        %v5333 = vlaneseq
        %v5334 = vshrl.u32 %v5333, 7
        %v5335 = vsub.s32 6, %v5334
        %v5336 = vrot.slane %v4966, %v5335
        %v5337 = vlaneseq
        %v5338 = vshrl.u32 %v5337, 7
        %v5339 = vsub.s32 7, %v5338
        %v5340 = vrot.slane %v4966, %v5339
        %v5341 = vlaneseq
        %v5342 = vshrl.u32 %v5341, 7
        %v5343 = vsub.s32 0, %v5342
        %v5344 = vrot.slane %v4967, %v5343
        %v5345 = vlaneseq
        %v5346 = vshrl.u32 %v5345, 7
        %v5347 = vsub.s32 1, %v5346
        %v5348 = vrot.slane %v4967, %v5347
        %v5349 = vlaneseq
        %v5350 = vshrl.u32 %v5349, 7
        %v5351 = vsub.s32 2, %v5350
        %v5352 = vrot.slane %v4967, %v5351
        %v5353 = vlaneseq
        %v5354 = vshrl.u32 %v5353, 7
        %v5355 = vsub.s32 3, %v5354
        %v5356 = vrot.slane %v4967, %v5355
        %v5357 = vlaneseq
        %v5358 = vshrl.u32 %v5357, 7
        %v5359 = vsub.s32 4, %v5358
        %v5360 = vrot.slane %v4967, %v5359
        %v5361 = vlaneseq
        %v5362 = vshrl.u32 %v5361, 7
        %v5363 = vsub.s32 5, %v5362
        %v5364 = vrot.slane %v4967, %v5363
        %v5365 = vlaneseq
        %v5366 = vshrl.u32 %v5365, 7
        %v5367 = vsub.s32 6, %v5366
        %v5368 = vrot.slane %v4967, %v5367
        %v5369 = vlaneseq
        %v5370 = vshrl.u32 %v5369, 7
        %v5371 = vsub.s32 7, %v5370
        %v5372 = vrot.slane %v4967, %v5371
        %v5373 = vlaneseq
        %v5374 = vshrl.u32 %v5373, 7
        %v5375 = vsub.s32 0, %v5374
        %v5376 = vrot.slane %v4968, %v5375
        %v5377 = vlaneseq
        %v5378 = vshrl.u32 %v5377, 7
        %v5379 = vsub.s32 1, %v5378
        %v5380 = vrot.slane %v4968, %v5379
        %v5381 = vlaneseq
        %v5382 = vshrl.u32 %v5381, 7
        %v5383 = vsub.s32 2, %v5382
        %v5384 = vrot.slane %v4968, %v5383
        %v5385 = vlaneseq
        %v5386 = vshrl.u32 %v5385, 7
        %v5387 = vsub.s32 3, %v5386
        %v5388 = vrot.slane %v4968, %v5387
        %v5389 = vlaneseq
        %v5390 = vshrl.u32 %v5389, 7
        %v5391 = vsub.s32 4, %v5390
        %v5392 = vrot.slane %v4968, %v5391
        %v5393 = vlaneseq
        %v5394 = vshrl.u32 %v5393, 7
        %v5395 = vsub.s32 5, %v5394
        %v5396 = vrot.slane %v4968, %v5395
        %v5397 = vlaneseq
        %v5398 = vshrl.u32 %v5397, 7
        %v5399 = vsub.s32 6, %v5398
        %v5400 = vrot.slane %v4968, %v5399
        %v5401 = vlaneseq
        %v5402 = vshrl.u32 %v5401, 7
        %v5403 = vsub.s32 7, %v5402
        %v5404 = vrot.slane %v4968, %v5403
        %v5405 = vlaneseq
        %v5406 = vshrl.u32 %v5405, 7
        %v5407 = vsub.s32 0, %v5406
        %v5408 = vrot.slane %v4969, %v5407
        %v5409 = vlaneseq
        %v5410 = vshrl.u32 %v5409, 7
        %v5411 = vsub.s32 1, %v5410
        %v5412 = vrot.slane %v4969, %v5411
        %v5413 = vlaneseq
        %v5414 = vshrl.u32 %v5413, 7
        %v5415 = vsub.s32 2, %v5414
        %v5416 = vrot.slane %v4969, %v5415
        %v5417 = vlaneseq
        %v5418 = vshrl.u32 %v5417, 7
        %v5419 = vsub.s32 3, %v5418
        %v5420 = vrot.slane %v4969, %v5419
        %v5421 = vlaneseq
        %v5422 = vshrl.u32 %v5421, 7
        %v5423 = vsub.s32 4, %v5422
        %v5424 = vrot.slane %v4969, %v5423
        %v5425 = vlaneseq
        %v5426 = vshrl.u32 %v5425, 7
        %v5427 = vsub.s32 5, %v5426
        %v5428 = vrot.slane %v4969, %v5427
        %v5429 = vlaneseq
        %v5430 = vshrl.u32 %v5429, 7
        %v5431 = vsub.s32 6, %v5430
        %v5432 = vrot.slane %v4969, %v5431
        %v5433 = vlaneseq
        %v5434 = vshrl.u32 %v5433, 7
        %v5435 = vsub.s32 7, %v5434
        %v5436 = vrot.slane %v4969, %v5435
        %v5437 = vlaneseq
        %v5438 = vshrl.u32 %v5437, 7
        %v5439 = vsub.s32 0, %v5438
        %v5440 = vrot.slane %v4970, %v5439
        %v5441 = vlaneseq
        %v5442 = vshrl.u32 %v5441, 7
        %v5443 = vsub.s32 1, %v5442
        %v5444 = vrot.slane %v4970, %v5443
        %v5445 = vlaneseq
        %v5446 = vshrl.u32 %v5445, 7
        %v5447 = vsub.s32 2, %v5446
        %v5448 = vrot.slane %v4970, %v5447
        %v5449 = vlaneseq
        %v5450 = vshrl.u32 %v5449, 7
        %v5451 = vsub.s32 3, %v5450
        %v5452 = vrot.slane %v4970, %v5451
        %v5453 = vlaneseq
        %v5454 = vshrl.u32 %v5453, 7
        %v5455 = vsub.s32 4, %v5454
        %v5456 = vrot.slane %v4970, %v5455
        %v5457 = vlaneseq
        %v5458 = vshrl.u32 %v5457, 7
        %v5459 = vsub.s32 5, %v5458
        %v5460 = vrot.slane %v4970, %v5459
        %v5461 = vlaneseq
        %v5462 = vshrl.u32 %v5461, 7
        %v5463 = vsub.s32 6, %v5462
        %v5464 = vrot.slane %v4970, %v5463
        %v5465 = vlaneseq
        %v5466 = vshrl.u32 %v5465, 7
        %v5467 = vsub.s32 7, %v5466
        %v5468 = vrot.slane %v4970, %v5467
        %v5469 = vlaneseq
        %v5470 = vshrl.u32 %v5469, 7
        %v5471 = vsub.s32 0, %v5470
        %v5472 = vrot.slane %v4971, %v5471
        %v5473 = vlaneseq
        %v5474 = vshrl.u32 %v5473, 7
        %v5475 = vsub.s32 1, %v5474
        %v5476 = vrot.slane %v4971, %v5475
        %v5477 = vlaneseq
        %v5478 = vshrl.u32 %v5477, 7
        %v5479 = vsub.s32 2, %v5478
        %v5480 = vrot.slane %v4971, %v5479
        %v5481 = vlaneseq
        %v5482 = vshrl.u32 %v5481, 7
        %v5483 = vsub.s32 3, %v5482
        %v5484 = vrot.slane %v4971, %v5483
        %v5485 = vlaneseq
        %v5486 = vshrl.u32 %v5485, 7
        %v5487 = vsub.s32 4, %v5486
        %v5488 = vrot.slane %v4971, %v5487
        %v5489 = vlaneseq
        %v5490 = vshrl.u32 %v5489, 7
        %v5491 = vsub.s32 5, %v5490
        %v5492 = vrot.slane %v4971, %v5491
        %v5493 = vlaneseq
        %v5494 = vshrl.u32 %v5493, 7
        %v5495 = vsub.s32 6, %v5494
        %v5496 = vrot.slane %v4971, %v5495
        %v5497 = vlaneseq
        %v5498 = vshrl.u32 %v5497, 7
        %v5499 = vsub.s32 7, %v5498
        %v5500 = vrot.slane %v4971, %v5499
        %v5501 = vlaneseq
        %v5502 = vshrl.u32 %v5501, 7
        %v5503 = vsub.s32 0, %v5502
        %v5504 = vrot.slane %v4972, %v5503
        %v5505 = vlaneseq
        %v5506 = vshrl.u32 %v5505, 7
        %v5507 = vsub.s32 1, %v5506
        %v5508 = vrot.slane %v4972, %v5507
        %v5509 = vlaneseq
        %v5510 = vshrl.u32 %v5509, 7
        %v5511 = vsub.s32 2, %v5510
        %v5512 = vrot.slane %v4972, %v5511
        %v5513 = vlaneseq
        %v5514 = vshrl.u32 %v5513, 7
        %v5515 = vsub.s32 3, %v5514
        %v5516 = vrot.slane %v4972, %v5515
        %v5517 = vlaneseq
        %v5518 = vshrl.u32 %v5517, 7
        %v5519 = vsub.s32 4, %v5518
        %v5520 = vrot.slane %v4972, %v5519
        %v5521 = vlaneseq
        %v5522 = vshrl.u32 %v5521, 7
        %v5523 = vsub.s32 5, %v5522
        %v5524 = vrot.slane %v4972, %v5523
        %v5525 = vlaneseq
        %v5526 = vshrl.u32 %v5525, 7
        %v5527 = vsub.s32 6, %v5526
        %v5528 = vrot.slane %v4972, %v5527
        %v5529 = vlaneseq
        %v5530 = vshrl.u32 %v5529, 7
        %v5531 = vsub.s32 7, %v5530
        %v5532 = vrot.slane %v4972, %v5531
        %v5533 = vlaneseq
        %v5534 = vshrl.u32 %v5533, 7
        %v5535 = vsub.s32 0, %v5534
        %v5536 = vrot.slane %v4973, %v5535
        %v5537 = vlaneseq
        %v5538 = vshrl.u32 %v5537, 7
        %v5539 = vsub.s32 1, %v5538
        %v5540 = vrot.slane %v4973, %v5539
        %v5541 = vlaneseq
        %v5542 = vshrl.u32 %v5541, 7
        %v5543 = vsub.s32 2, %v5542
        %v5544 = vrot.slane %v4973, %v5543
        %v5545 = vlaneseq
        %v5546 = vshrl.u32 %v5545, 7
        %v5547 = vsub.s32 3, %v5546
        %v5548 = vrot.slane %v4973, %v5547
        %v5549 = vlaneseq
        %v5550 = vshrl.u32 %v5549, 7
        %v5551 = vsub.s32 4, %v5550
        %v5552 = vrot.slane %v4973, %v5551
        %v5553 = vlaneseq
        %v5554 = vshrl.u32 %v5553, 7
        %v5555 = vsub.s32 5, %v5554
        %v5556 = vrot.slane %v4973, %v5555
        %v5557 = vlaneseq
        %v5558 = vshrl.u32 %v5557, 7
        %v5559 = vsub.s32 6, %v5558
        %v5560 = vrot.slane %v4973, %v5559
        %v5561 = vlaneseq
        %v5562 = vshrl.u32 %v5561, 7
        %v5563 = vsub.s32 7, %v5562
        %v5564 = vrot.slane %v4973, %v5563
        %v5565 = vlaneseq
        %v5566 = vshrl.u32 %v5565, 7
        %v5567 = vsub.s32 0, %v5566
        %v5568 = vrot.slane %v4974, %v5567
        %v5569 = vlaneseq
        %v5570 = vshrl.u32 %v5569, 7
        %v5571 = vsub.s32 1, %v5570
        %v5572 = vrot.slane %v4974, %v5571
        %v5573 = vlaneseq
        %v5574 = vshrl.u32 %v5573, 7
        %v5575 = vsub.s32 2, %v5574
        %v5576 = vrot.slane %v4974, %v5575
        %v5577 = vlaneseq
        %v5578 = vshrl.u32 %v5577, 7
        %v5579 = vsub.s32 3, %v5578
        %v5580 = vrot.slane %v4974, %v5579
        %v5581 = vlaneseq
        %v5582 = vshrl.u32 %v5581, 7
        %v5583 = vsub.s32 4, %v5582
        %v5584 = vrot.slane %v4974, %v5583
        %v5585 = vlaneseq
        %v5586 = vshrl.u32 %v5585, 7
        %v5587 = vsub.s32 5, %v5586
        %v5588 = vrot.slane %v4974, %v5587
        %v5589 = vlaneseq
        %v5590 = vshrl.u32 %v5589, 7
        %v5591 = vsub.s32 6, %v5590
        %v5592 = vrot.slane %v4974, %v5591
        %v5593 = vlaneseq
        %v5594 = vshrl.u32 %v5593, 7
        %v5595 = vsub.s32 7, %v5594
        %v5596 = vrot.slane %v4974, %v5595
        %v5597 = vlaneseq
        %v5598 = vshrl.u32 %v5597, 7
        %v5599 = vsub.s32 0, %v5598
        %v5600 = vrot.slane %v4975, %v5599
        %v5601 = vlaneseq
        %v5602 = vshrl.u32 %v5601, 7
        %v5603 = vsub.s32 1, %v5602
        %v5604 = vrot.slane %v4975, %v5603
        %v5605 = vlaneseq
        %v5606 = vshrl.u32 %v5605, 7
        %v5607 = vsub.s32 2, %v5606
        %v5608 = vrot.slane %v4975, %v5607
        %v5609 = vlaneseq
        %v5610 = vshrl.u32 %v5609, 7
        %v5611 = vsub.s32 3, %v5610
        %v5612 = vrot.slane %v4975, %v5611
        %v5613 = vlaneseq
        %v5614 = vshrl.u32 %v5613, 7
        %v5615 = vsub.s32 4, %v5614
        %v5616 = vrot.slane %v4975, %v5615
        %v5617 = vlaneseq
        %v5618 = vshrl.u32 %v5617, 7
        %v5619 = vsub.s32 5, %v5618
        %v5620 = vrot.slane %v4975, %v5619
        %v5621 = vlaneseq
        %v5622 = vshrl.u32 %v5621, 7
        %v5623 = vsub.s32 6, %v5622
        %v5624 = vrot.slane %v4975, %v5623
        %v5625 = vlaneseq
        %v5626 = vshrl.u32 %v5625, 7
        %v5627 = vsub.s32 7, %v5626
        %v5628 = vrot.slane %v4975, %v5627
        %v5629 = vlaneseq
        %v5630 = vshrl.u32 %v5629, 7
        %v5631 = vsub.s32 0, %v5630
        %v5632 = vrot.slane %v4976, %v5631
        %v5633 = vlaneseq
        %v5634 = vshrl.u32 %v5633, 7
        %v5635 = vsub.s32 1, %v5634
        %v5636 = vrot.slane %v4976, %v5635
        %v5637 = vlaneseq
        %v5638 = vshrl.u32 %v5637, 7
        %v5639 = vsub.s32 2, %v5638
        %v5640 = vrot.slane %v4976, %v5639
        %v5641 = vlaneseq
        %v5642 = vshrl.u32 %v5641, 7
        %v5643 = vsub.s32 3, %v5642
        %v5644 = vrot.slane %v4976, %v5643
        %v5645 = vlaneseq
        %v5646 = vshrl.u32 %v5645, 7
        %v5647 = vsub.s32 4, %v5646
        %v5648 = vrot.slane %v4976, %v5647
        %v5649 = vlaneseq
        %v5650 = vshrl.u32 %v5649, 7
        %v5651 = vsub.s32 5, %v5650
        %v5652 = vrot.slane %v4976, %v5651
        %v5653 = vlaneseq
        %v5654 = vshrl.u32 %v5653, 7
        %v5655 = vsub.s32 6, %v5654
        %v5656 = vrot.slane %v4976, %v5655
        %v5657 = vlaneseq
        %v5658 = vshrl.u32 %v5657, 7
        %v5659 = vsub.s32 7, %v5658
        %v5660 = vrot.slane %v4976, %v5659
        %v5661 = vlaneseq
        %v5662 = vshrl.u32 %v5661, 7
        %v5663 = vsub.s32 0, %v5662
        %v5664 = vrot.slane %v4977, %v5663
        %v5665 = vlaneseq
        %v5666 = vshrl.u32 %v5665, 7
        %v5667 = vsub.s32 1, %v5666
        %v5668 = vrot.slane %v4977, %v5667
        %v5669 = vlaneseq
        %v5670 = vshrl.u32 %v5669, 7
        %v5671 = vsub.s32 2, %v5670
        %v5672 = vrot.slane %v4977, %v5671
        %v5673 = vlaneseq
        %v5674 = vshrl.u32 %v5673, 7
        %v5675 = vsub.s32 3, %v5674
        %v5676 = vrot.slane %v4977, %v5675
        %v5677 = vlaneseq
        %v5678 = vshrl.u32 %v5677, 7
        %v5679 = vsub.s32 4, %v5678
        %v5680 = vrot.slane %v4977, %v5679
        %v5681 = vlaneseq
        %v5682 = vshrl.u32 %v5681, 7
        %v5683 = vsub.s32 5, %v5682
        %v5684 = vrot.slane %v4977, %v5683
        %v5685 = vlaneseq
        %v5686 = vshrl.u32 %v5685, 7
        %v5687 = vsub.s32 6, %v5686
        %v5688 = vrot.slane %v4977, %v5687
        %v5689 = vlaneseq
        %v5690 = vshrl.u32 %v5689, 7
        %v5691 = vsub.s32 7, %v5690
        %v5692 = vrot.slane %v4977, %v5691
        %v5693 = vlaneseq
        %v5694 = vshrl.u32 %v5693, 7
        %v5695 = vsub.s32 0, %v5694
        %v5696 = vrot.slane %v4978, %v5695
        %v5697 = vlaneseq
        %v5698 = vshrl.u32 %v5697, 7
        %v5699 = vsub.s32 1, %v5698
        %v5700 = vrot.slane %v4978, %v5699
        %v5701 = vlaneseq
        %v5702 = vshrl.u32 %v5701, 7
        %v5703 = vsub.s32 2, %v5702
        %v5704 = vrot.slane %v4978, %v5703
        %v5705 = vlaneseq
        %v5706 = vshrl.u32 %v5705, 7
        %v5707 = vsub.s32 3, %v5706
        %v5708 = vrot.slane %v4978, %v5707
        %v5709 = vlaneseq
        %v5710 = vshrl.u32 %v5709, 7
        %v5711 = vsub.s32 4, %v5710
        %v5712 = vrot.slane %v4978, %v5711
        %v5713 = vlaneseq
        %v5714 = vshrl.u32 %v5713, 7
        %v5715 = vsub.s32 5, %v5714
        %v5716 = vrot.slane %v4978, %v5715
        %v5717 = vlaneseq
        %v5718 = vshrl.u32 %v5717, 7
        %v5719 = vsub.s32 6, %v5718
        %v5720 = vrot.slane %v4978, %v5719
        %v5721 = vlaneseq
        %v5722 = vshrl.u32 %v5721, 7
        %v5723 = vsub.s32 7, %v5722
        %v5724 = vrot.slane %v4978, %v5723
        %v5725 = vlaneseq
        %v5726 = vshrl.u32 %v5725, 7
        %v5727 = vsub.s32 0, %v5726
        %v5728 = vrot.slane %v4979, %v5727
        %v5729 = vlaneseq
        %v5730 = vshrl.u32 %v5729, 7
        %v5731 = vsub.s32 1, %v5730
        %v5732 = vrot.slane %v4979, %v5731
        %v5733 = vlaneseq
        %v5734 = vshrl.u32 %v5733, 7
        %v5735 = vsub.s32 2, %v5734
        %v5736 = vrot.slane %v4979, %v5735
        %v5737 = vlaneseq
        %v5738 = vshrl.u32 %v5737, 7
        %v5739 = vsub.s32 3, %v5738
        %v5740 = vrot.slane %v4979, %v5739
        %v5741 = vlaneseq
        %v5742 = vshrl.u32 %v5741, 7
        %v5743 = vsub.s32 4, %v5742
        %v5744 = vrot.slane %v4979, %v5743
        %v5745 = vlaneseq
        %v5746 = vshrl.u32 %v5745, 7
        %v5747 = vsub.s32 5, %v5746
        %v5748 = vrot.slane %v4979, %v5747
        %v5749 = vlaneseq
        %v5750 = vshrl.u32 %v5749, 7
        %v5751 = vsub.s32 6, %v5750
        %v5752 = vrot.slane %v4979, %v5751
        %v5753 = vlaneseq
        %v5754 = vshrl.u32 %v5753, 7
        %v5755 = vsub.s32 7, %v5754
        %v5756 = vrot.slane %v4979, %v5755
        %v5757 = vlaneseq
        %v5758 = vshrl.u32 %v5757, 7
        %v5759 = vsub.s32 0, %v5758
        %v5760 = vrot.slane %v4980, %v5759
        %v5761 = vlaneseq
        %v5762 = vshrl.u32 %v5761, 7
        %v5763 = vsub.s32 1, %v5762
        %v5764 = vrot.slane %v4980, %v5763
        %v5765 = vlaneseq
        %v5766 = vshrl.u32 %v5765, 7
        %v5767 = vsub.s32 2, %v5766
        %v5768 = vrot.slane %v4980, %v5767
        %v5769 = vlaneseq
        %v5770 = vshrl.u32 %v5769, 7
        %v5771 = vsub.s32 3, %v5770
        %v5772 = vrot.slane %v4980, %v5771
        %v5773 = vlaneseq
        %v5774 = vshrl.u32 %v5773, 7
        %v5775 = vsub.s32 4, %v5774
        %v5776 = vrot.slane %v4980, %v5775
        %v5777 = vlaneseq
        %v5778 = vshrl.u32 %v5777, 7
        %v5779 = vsub.s32 5, %v5778
        %v5780 = vrot.slane %v4980, %v5779
        %v5781 = vlaneseq
        %v5782 = vshrl.u32 %v5781, 7
        %v5783 = vsub.s32 6, %v5782
        %v5784 = vrot.slane %v4980, %v5783
        %v5785 = vlaneseq
        %v5786 = vshrl.u32 %v5785, 7
        %v5787 = vsub.s32 7, %v5786
        %v5788 = vrot.slane %v4980, %v5787
        %v5789 = vlaneseq
        %v5790 = vshrl.u32 %v5789, 7
        %v5791 = vsub.s32 0, %v5790
        %v5792 = vrot.slane %v4981, %v5791
        %v5793 = vlaneseq
        %v5794 = vshrl.u32 %v5793, 7
        %v5795 = vsub.s32 1, %v5794
        %v5796 = vrot.slane %v4981, %v5795
        %v5797 = vlaneseq
        %v5798 = vshrl.u32 %v5797, 7
        %v5799 = vsub.s32 2, %v5798
        %v5800 = vrot.slane %v4981, %v5799
        %v5801 = vlaneseq
        %v5802 = vshrl.u32 %v5801, 7
        %v5803 = vsub.s32 3, %v5802
        %v5804 = vrot.slane %v4981, %v5803
        %v5805 = vlaneseq
        %v5806 = vshrl.u32 %v5805, 7
        %v5807 = vsub.s32 4, %v5806
        %v5808 = vrot.slane %v4981, %v5807
        %v5809 = vlaneseq
        %v5810 = vshrl.u32 %v5809, 7
        %v5811 = vsub.s32 5, %v5810
        %v5812 = vrot.slane %v4981, %v5811
        %v5813 = vlaneseq
        %v5814 = vshrl.u32 %v5813, 7
        %v5815 = vsub.s32 6, %v5814
        %v5816 = vrot.slane %v4981, %v5815
        %v5817 = vlaneseq
        %v5818 = vshrl.u32 %v5817, 7
        %v5819 = vsub.s32 7, %v5818
        %v5820 = vrot.slane %v4981, %v5819
        %v5821 = vlaneseq
        %v5822 = vshrl.u32 %v5821, 7
        %v5823 = vsub.s32 0, %v5822
        %v5824 = vrot.slane %v4982, %v5823
        %v5825 = vlaneseq
        %v5826 = vshrl.u32 %v5825, 7
        %v5827 = vsub.s32 1, %v5826
        %v5828 = vrot.slane %v4982, %v5827
        %v5829 = vlaneseq
        %v5830 = vshrl.u32 %v5829, 7
        %v5831 = vsub.s32 2, %v5830
        %v5832 = vrot.slane %v4982, %v5831
        %v5833 = vlaneseq
        %v5834 = vshrl.u32 %v5833, 7
        %v5835 = vsub.s32 3, %v5834
        %v5836 = vrot.slane %v4982, %v5835
        %v5837 = vlaneseq
        %v5838 = vshrl.u32 %v5837, 7
        %v5839 = vsub.s32 4, %v5838
        %v5840 = vrot.slane %v4982, %v5839
        %v5841 = vlaneseq
        %v5842 = vshrl.u32 %v5841, 7
        %v5843 = vsub.s32 5, %v5842
        %v5844 = vrot.slane %v4982, %v5843
        %v5845 = vlaneseq
        %v5846 = vshrl.u32 %v5845, 7
        %v5847 = vsub.s32 6, %v5846
        %v5848 = vrot.slane %v4982, %v5847
        %v5849 = vlaneseq
        %v5850 = vshrl.u32 %v5849, 7
        %v5851 = vsub.s32 7, %v5850
        %v5852 = vrot.slane %v4982, %v5851
        %v5853 = vlaneseq
        %v5854 = vshrl.u32 %v5853, 7
        %v5855 = vsub.s32 0, %v5854
        %v5856 = vrot.slane %v4983, %v5855
        %v5857 = vlaneseq
        %v5858 = vshrl.u32 %v5857, 7
        %v5859 = vsub.s32 1, %v5858
        %v5860 = vrot.slane %v4983, %v5859
        %v5861 = vlaneseq
        %v5862 = vshrl.u32 %v5861, 7
        %v5863 = vsub.s32 2, %v5862
        %v5864 = vrot.slane %v4983, %v5863
        %v5865 = vlaneseq
        %v5866 = vshrl.u32 %v5865, 7
        %v5867 = vsub.s32 3, %v5866
        %v5868 = vrot.slane %v4983, %v5867
        %v5869 = vlaneseq
        %v5870 = vshrl.u32 %v5869, 7
        %v5871 = vsub.s32 4, %v5870
        %v5872 = vrot.slane %v4983, %v5871
        %v5873 = vlaneseq
        %v5874 = vshrl.u32 %v5873, 7
        %v5875 = vsub.s32 5, %v5874
        %v5876 = vrot.slane %v4983, %v5875
        %v5877 = vlaneseq
        %v5878 = vshrl.u32 %v5877, 7
        %v5879 = vsub.s32 6, %v5878
        %v5880 = vrot.slane %v4983, %v5879
        %v5881 = vlaneseq
        %v5882 = vshrl.u32 %v5881, 7
        %v5883 = vsub.s32 7, %v5882
        %v5884 = vrot.slane %v4983, %v5883
        %v5885 = vlaneseq
        %v5886 = vshrl.u32 %v5885, 7
        %v5887 = vsub.s32 0, %v5886
        %v5888 = vrot.slane %v4984, %v5887
        %v5889 = vlaneseq
        %v5890 = vshrl.u32 %v5889, 7
        %v5891 = vsub.s32 1, %v5890
        %v5892 = vrot.slane %v4984, %v5891
        %v5893 = vlaneseq
        %v5894 = vshrl.u32 %v5893, 7
        %v5895 = vsub.s32 2, %v5894
        %v5896 = vrot.slane %v4984, %v5895
        %v5897 = vlaneseq
        %v5898 = vshrl.u32 %v5897, 7
        %v5899 = vsub.s32 3, %v5898
        %v5900 = vrot.slane %v4984, %v5899
        %v5901 = vlaneseq
        %v5902 = vshrl.u32 %v5901, 7
        %v5903 = vsub.s32 4, %v5902
        %v5904 = vrot.slane %v4984, %v5903
        %v5905 = vlaneseq
        %v5906 = vshrl.u32 %v5905, 7
        %v5907 = vsub.s32 5, %v5906
        %v5908 = vrot.slane %v4984, %v5907
        %v5909 = vlaneseq
        %v5910 = vshrl.u32 %v5909, 7
        %v5911 = vsub.s32 6, %v5910
        %v5912 = vrot.slane %v4984, %v5911
        %v5913 = vlaneseq
        %v5914 = vshrl.u32 %v5913, 7
        %v5915 = vsub.s32 7, %v5914
        %v5916 = vrot.slane %v4984, %v5915
        %v5917 = vlaneseq
        %v5918 = vshrl.u32 %v5917, 7
        %v5919 = vsub.s32 0, %v5918
        %v5920 = vrot.slane %v4985, %v5919
        %v5921 = vlaneseq
        %v5922 = vshrl.u32 %v5921, 7
        %v5923 = vsub.s32 1, %v5922
        %v5924 = vrot.slane %v4985, %v5923
        %v5925 = vlaneseq
        %v5926 = vshrl.u32 %v5925, 7
        %v5927 = vsub.s32 2, %v5926
        %v5928 = vrot.slane %v4985, %v5927
        %v5929 = vlaneseq
        %v5930 = vshrl.u32 %v5929, 7
        %v5931 = vsub.s32 3, %v5930
        %v5932 = vrot.slane %v4985, %v5931
        %v5933 = vlaneseq
        %v5934 = vshrl.u32 %v5933, 7
        %v5935 = vsub.s32 4, %v5934
        %v5936 = vrot.slane %v4985, %v5935
        %v5937 = vlaneseq
        %v5938 = vshrl.u32 %v5937, 7
        %v5939 = vsub.s32 5, %v5938
        %v5940 = vrot.slane %v4985, %v5939
        %v5941 = vlaneseq
        %v5942 = vshrl.u32 %v5941, 7
        %v5943 = vsub.s32 6, %v5942
        %v5944 = vrot.slane %v4985, %v5943
        %v5945 = vlaneseq
        %v5946 = vshrl.u32 %v5945, 7
        %v5947 = vsub.s32 7, %v5946
        %v5948 = vrot.slane %v4985, %v5947
        %v5949 = vlaneseq
        %v5950 = vshrl.u32 %v5949, 7
        %v5951 = vsub.s32 0, %v5950
        %v5952 = vrot.slane %v4986, %v5951
        %v5953 = vlaneseq
        %v5954 = vshrl.u32 %v5953, 7
        %v5955 = vsub.s32 1, %v5954
        %v5956 = vrot.slane %v4986, %v5955
        %v5957 = vlaneseq
        %v5958 = vshrl.u32 %v5957, 7
        %v5959 = vsub.s32 2, %v5958
        %v5960 = vrot.slane %v4986, %v5959
        %v5961 = vlaneseq
        %v5962 = vshrl.u32 %v5961, 7
        %v5963 = vsub.s32 3, %v5962
        %v5964 = vrot.slane %v4986, %v5963
        %v5965 = vlaneseq
        %v5966 = vshrl.u32 %v5965, 7
        %v5967 = vsub.s32 4, %v5966
        %v5968 = vrot.slane %v4986, %v5967
        %v5969 = vlaneseq
        %v5970 = vshrl.u32 %v5969, 7
        %v5971 = vsub.s32 5, %v5970
        %v5972 = vrot.slane %v4986, %v5971
        %v5973 = vlaneseq
        %v5974 = vshrl.u32 %v5973, 7
        %v5975 = vsub.s32 6, %v5974
        %v5976 = vrot.slane %v4986, %v5975
        %v5977 = vlaneseq
        %v5978 = vshrl.u32 %v5977, 7
        %v5979 = vsub.s32 7, %v5978
        %v5980 = vrot.slane %v4986, %v5979
        %v5981 = vlaneseq
        %v5982 = vshrl.u32 %v5981, 7
        %v5983 = vsub.s32 0, %v5982
        %v5984 = vrot.slane %v4987, %v5983
        %v5985 = vlaneseq
        %v5986 = vshrl.u32 %v5985, 7
        %v5987 = vsub.s32 1, %v5986
        %v5988 = vrot.slane %v4987, %v5987
        %v5989 = vlaneseq
        %v5990 = vshrl.u32 %v5989, 7
        %v5991 = vsub.s32 2, %v5990
        %v5992 = vrot.slane %v4987, %v5991
        %v5993 = vlaneseq
        %v5994 = vshrl.u32 %v5993, 7
        %v5995 = vsub.s32 3, %v5994
        %v5996 = vrot.slane %v4987, %v5995
        %v5997 = vlaneseq
        %v5998 = vshrl.u32 %v5997, 7
        %v5999 = vsub.s32 4, %v5998
        %v6000 = vrot.slane %v4987, %v5999
        %v6001 = vlaneseq
        %v6002 = vshrl.u32 %v6001, 7
        %v6003 = vsub.s32 5, %v6002
        %v6004 = vrot.slane %v4987, %v6003
        %v6005 = vlaneseq
        %v6006 = vshrl.u32 %v6005, 7
        %v6007 = vsub.s32 6, %v6006
        %v6008 = vrot.slane %v4987, %v6007
        %v6009 = vlaneseq
        %v6010 = vshrl.u32 %v6009, 7
        %v6011 = vsub.s32 7, %v6010
        %v6012 = vrot.slane %v4987, %v6011
        %v6013 = vlaneseq
        %v6014 = vshrl.u32 %v6013, 7
        %v6015 = vsub.s32 0, %v6014
        %v6016 = vrot.slane %v4988, %v6015
        %v6017 = vlaneseq
        %v6018 = vshrl.u32 %v6017, 7
        %v6019 = vsub.s32 1, %v6018
        %v6020 = vrot.slane %v4988, %v6019
        %v6021 = vlaneseq
        %v6022 = vshrl.u32 %v6021, 7
        %v6023 = vsub.s32 2, %v6022
        %v6024 = vrot.slane %v4988, %v6023
        %v6025 = vlaneseq
        %v6026 = vshrl.u32 %v6025, 7
        %v6027 = vsub.s32 3, %v6026
        %v6028 = vrot.slane %v4988, %v6027
        %v6029 = vlaneseq
        %v6030 = vshrl.u32 %v6029, 7
        %v6031 = vsub.s32 4, %v6030
        %v6032 = vrot.slane %v4988, %v6031
        %v6033 = vlaneseq
        %v6034 = vshrl.u32 %v6033, 7
        %v6035 = vsub.s32 5, %v6034
        %v6036 = vrot.slane %v4988, %v6035
        %v6037 = vlaneseq
        %v6038 = vshrl.u32 %v6037, 7
        %v6039 = vsub.s32 6, %v6038
        %v6040 = vrot.slane %v4988, %v6039
        %v6041 = vlaneseq
        %v6042 = vshrl.u32 %v6041, 7
        %v6043 = vsub.s32 7, %v6042
        %v6044 = vrot.slane %v4988, %v6043
        %v6045 = vcombine.low %v5024, %v5028
        %v6046 = vcombine.low %v5032, %v5036
        %v6047 = vcombine.low %v5040, %v5044
        %v6048 = vcombine.low %v5048, %v5052
        %v6050 = vunpack.c.l.s4 1966171168
        %v6051 = vunpack.c.0.s8 %v6050
        %v6052 = vlaneseq
        %v6053 = vshrl.u32 %v6052, 7
        %v6054 = vsub.s32 %v6051, %v6053
        %v6055 = vrot.slane %v6045, %v6054
        %v6057 = vunpack.c.l.s4 1966171168
        %v6058 = vunpack.c.0.s8 %v6057
        %v6059 = vlaneseq
        %v6060 = vshrl.u32 %v6059, 7
        %v6061 = vsub.s32 %v6058, %v6060
        %v6062 = vrot.slane %v6046, %v6061
        %v6064 = vunpack.c.l.s4 1966171168
        %v6065 = vunpack.c.0.s8 %v6064
        %v6066 = vlaneseq
        %v6067 = vshrl.u32 %v6066, 7
        %v6068 = vsub.s32 %v6065, %v6067
        %v6069 = vrot.slane %v6047, %v6068
        %v6071 = vunpack.c.l.s4 1966171168
        %v6072 = vunpack.c.0.s8 %v6071
        %v6073 = vlaneseq
        %v6074 = vshrl.u32 %v6073, 7
        %v6075 = vsub.s32 %v6072, %v6074
        %v6076 = vrot.slane %v6048, %v6075
        %v6077 = vcombine.low %v6055, %v6062
        %v6078 = vcombine.low %v6069, %v6076
        %v6080 = vunpack.c.l.s4 1966171168
        %v6081 = vunpack.c.0.s8 %v6080
        %v6082 = vlaneseq
        %v6083 = vshrl.u32 %v6082, 7
        %v6084 = vsub.s32 %v6081, %v6083
        %v6085 = vrot.slane %v6077, %v6084
        %v6087 = vunpack.c.l.s4 1966171168
        %v6088 = vunpack.c.0.s8 %v6087
        %v6089 = vlaneseq
        %v6090 = vshrl.u32 %v6089, 7
        %v6091 = vsub.s32 %v6088, %v6090
        %v6092 = vrot.slane %v6078, %v6091
        %v6093 = vcombine.low %v6085, %v6092
        %v6094 = vcombine.low %v5056, %v5060
        %v6095 = vcombine.low %v5064, %v5068
        %v6096 = vcombine.low %v5072, %v5076
        %v6097 = vcombine.low %v5080, %v5084
        %v6099 = vunpack.c.l.s4 1966171168
        %v6100 = vunpack.c.0.s8 %v6099
        %v6101 = vlaneseq
        %v6102 = vshrl.u32 %v6101, 7
        %v6103 = vsub.s32 %v6100, %v6102
        %v6104 = vrot.slane %v6094, %v6103
        %v6106 = vunpack.c.l.s4 1966171168
        %v6107 = vunpack.c.0.s8 %v6106
        %v6108 = vlaneseq
        %v6109 = vshrl.u32 %v6108, 7
        %v6110 = vsub.s32 %v6107, %v6109
        %v6111 = vrot.slane %v6095, %v6110
        %v6113 = vunpack.c.l.s4 1966171168
        %v6114 = vunpack.c.0.s8 %v6113
        %v6115 = vlaneseq
        %v6116 = vshrl.u32 %v6115, 7
        %v6117 = vsub.s32 %v6114, %v6116
        %v6118 = vrot.slane %v6096, %v6117
        %v6120 = vunpack.c.l.s4 1966171168
        %v6121 = vunpack.c.0.s8 %v6120
        %v6122 = vlaneseq
        %v6123 = vshrl.u32 %v6122, 7
        %v6124 = vsub.s32 %v6121, %v6123
        %v6125 = vrot.slane %v6097, %v6124
        %v6126 = vcombine.low %v6104, %v6111
        %v6127 = vcombine.low %v6118, %v6125
        %v6129 = vunpack.c.l.s4 1966171168
        %v6130 = vunpack.c.0.s8 %v6129
        %v6131 = vlaneseq
        %v6132 = vshrl.u32 %v6131, 7
        %v6133 = vsub.s32 %v6130, %v6132
        %v6134 = vrot.slane %v6126, %v6133
        %v6136 = vunpack.c.l.s4 1966171168
        %v6137 = vunpack.c.0.s8 %v6136
        %v6138 = vlaneseq
        %v6139 = vshrl.u32 %v6138, 7
        %v6140 = vsub.s32 %v6137, %v6139
        %v6141 = vrot.slane %v6127, %v6140
        %v6142 = vcombine.low %v6134, %v6141
        %v6143 = vcombine.low %v5088, %v5092
        %v6144 = vcombine.low %v5096, %v5100
        %v6145 = vcombine.low %v5104, %v5108
        %v6146 = vcombine.low %v5112, %v5116
        %v6148 = vunpack.c.l.s4 1966171168
        %v6149 = vunpack.c.0.s8 %v6148
        %v6150 = vlaneseq
        %v6151 = vshrl.u32 %v6150, 7
        %v6152 = vsub.s32 %v6149, %v6151
        %v6153 = vrot.slane %v6143, %v6152
        %v6155 = vunpack.c.l.s4 1966171168
        %v6156 = vunpack.c.0.s8 %v6155
        %v6157 = vlaneseq
        %v6158 = vshrl.u32 %v6157, 7
        %v6159 = vsub.s32 %v6156, %v6158
        %v6160 = vrot.slane %v6144, %v6159
        %v6162 = vunpack.c.l.s4 1966171168
        %v6163 = vunpack.c.0.s8 %v6162
        %v6164 = vlaneseq
        %v6165 = vshrl.u32 %v6164, 7
        %v6166 = vsub.s32 %v6163, %v6165
        %v6167 = vrot.slane %v6145, %v6166
        %v6169 = vunpack.c.l.s4 1966171168
        %v6170 = vunpack.c.0.s8 %v6169
        %v6171 = vlaneseq
        %v6172 = vshrl.u32 %v6171, 7
        %v6173 = vsub.s32 %v6170, %v6172
        %v6174 = vrot.slane %v6146, %v6173
        %v6175 = vcombine.low %v6153, %v6160
        %v6176 = vcombine.low %v6167, %v6174
        %v6178 = vunpack.c.l.s4 1966171168
        %v6179 = vunpack.c.0.s8 %v6178
        %v6180 = vlaneseq
        %v6181 = vshrl.u32 %v6180, 7
        %v6182 = vsub.s32 %v6179, %v6181
        %v6183 = vrot.slane %v6175, %v6182
        %v6185 = vunpack.c.l.s4 1966171168
        %v6186 = vunpack.c.0.s8 %v6185
        %v6187 = vlaneseq
        %v6188 = vshrl.u32 %v6187, 7
        %v6189 = vsub.s32 %v6186, %v6188
        %v6190 = vrot.slane %v6176, %v6189
        %v6191 = vcombine.low %v6183, %v6190
        %v6192 = vcombine.low %v5120, %v5124
        %v6193 = vcombine.low %v5128, %v5132
        %v6194 = vcombine.low %v5136, %v5140
        %v6195 = vcombine.low %v5144, %v5148
        %v6197 = vunpack.c.l.s4 1966171168
        %v6198 = vunpack.c.0.s8 %v6197
        %v6199 = vlaneseq
        %v6200 = vshrl.u32 %v6199, 7
        %v6201 = vsub.s32 %v6198, %v6200
        %v6202 = vrot.slane %v6192, %v6201
        %v6204 = vunpack.c.l.s4 1966171168
        %v6205 = vunpack.c.0.s8 %v6204
        %v6206 = vlaneseq
        %v6207 = vshrl.u32 %v6206, 7
        %v6208 = vsub.s32 %v6205, %v6207
        %v6209 = vrot.slane %v6193, %v6208
        %v6211 = vunpack.c.l.s4 1966171168
        %v6212 = vunpack.c.0.s8 %v6211
        %v6213 = vlaneseq
        %v6214 = vshrl.u32 %v6213, 7
        %v6215 = vsub.s32 %v6212, %v6214
        %v6216 = vrot.slane %v6194, %v6215
        %v6218 = vunpack.c.l.s4 1966171168
        %v6219 = vunpack.c.0.s8 %v6218
        %v6220 = vlaneseq
        %v6221 = vshrl.u32 %v6220, 7
        %v6222 = vsub.s32 %v6219, %v6221
        %v6223 = vrot.slane %v6195, %v6222
        %v6224 = vcombine.low %v6202, %v6209
        %v6225 = vcombine.low %v6216, %v6223
        %v6227 = vunpack.c.l.s4 1966171168
        %v6228 = vunpack.c.0.s8 %v6227
        %v6229 = vlaneseq
        %v6230 = vshrl.u32 %v6229, 7
        %v6231 = vsub.s32 %v6228, %v6230
        %v6232 = vrot.slane %v6224, %v6231
        %v6234 = vunpack.c.l.s4 1966171168
        %v6235 = vunpack.c.0.s8 %v6234
        %v6236 = vlaneseq
        %v6237 = vshrl.u32 %v6236, 7
        %v6238 = vsub.s32 %v6235, %v6237
        %v6239 = vrot.slane %v6225, %v6238
        %v6240 = vcombine.low %v6232, %v6239
        %v6241 = vcombine.low %v5152, %v5156
        %v6242 = vcombine.low %v5160, %v5164
        %v6243 = vcombine.low %v5168, %v5172
        %v6244 = vcombine.low %v5176, %v5180
        %v6246 = vunpack.c.l.s4 1966171168
        %v6247 = vunpack.c.0.s8 %v6246
        %v6248 = vlaneseq
        %v6249 = vshrl.u32 %v6248, 7
        %v6250 = vsub.s32 %v6247, %v6249
        %v6251 = vrot.slane %v6241, %v6250
        %v6253 = vunpack.c.l.s4 1966171168
        %v6254 = vunpack.c.0.s8 %v6253
        %v6255 = vlaneseq
        %v6256 = vshrl.u32 %v6255, 7
        %v6257 = vsub.s32 %v6254, %v6256
        %v6258 = vrot.slane %v6242, %v6257
        %v6260 = vunpack.c.l.s4 1966171168
        %v6261 = vunpack.c.0.s8 %v6260
        %v6262 = vlaneseq
        %v6263 = vshrl.u32 %v6262, 7
        %v6264 = vsub.s32 %v6261, %v6263
        %v6265 = vrot.slane %v6243, %v6264
        %v6267 = vunpack.c.l.s4 1966171168
        %v6268 = vunpack.c.0.s8 %v6267
        %v6269 = vlaneseq
        %v6270 = vshrl.u32 %v6269, 7
        %v6271 = vsub.s32 %v6268, %v6270
        %v6272 = vrot.slane %v6244, %v6271
        %v6273 = vcombine.low %v6251, %v6258
        %v6274 = vcombine.low %v6265, %v6272
        %v6276 = vunpack.c.l.s4 1966171168
        %v6277 = vunpack.c.0.s8 %v6276
        %v6278 = vlaneseq
        %v6279 = vshrl.u32 %v6278, 7
        %v6280 = vsub.s32 %v6277, %v6279
        %v6281 = vrot.slane %v6273, %v6280
        %v6283 = vunpack.c.l.s4 1966171168
        %v6284 = vunpack.c.0.s8 %v6283
        %v6285 = vlaneseq
        %v6286 = vshrl.u32 %v6285, 7
        %v6287 = vsub.s32 %v6284, %v6286
        %v6288 = vrot.slane %v6274, %v6287
        %v6289 = vcombine.low %v6281, %v6288
        %v6290 = vcombine.low %v5184, %v5188
        %v6291 = vcombine.low %v5192, %v5196
        %v6292 = vcombine.low %v5200, %v5204
        %v6293 = vcombine.low %v5208, %v5212
        %v6295 = vunpack.c.l.s4 1966171168
        %v6296 = vunpack.c.0.s8 %v6295
        %v6297 = vlaneseq
        %v6298 = vshrl.u32 %v6297, 7
        %v6299 = vsub.s32 %v6296, %v6298
        %v6300 = vrot.slane %v6290, %v6299
        %v6302 = vunpack.c.l.s4 1966171168
        %v6303 = vunpack.c.0.s8 %v6302
        %v6304 = vlaneseq
        %v6305 = vshrl.u32 %v6304, 7
        %v6306 = vsub.s32 %v6303, %v6305
        %v6307 = vrot.slane %v6291, %v6306
        %v6309 = vunpack.c.l.s4 1966171168
        %v6310 = vunpack.c.0.s8 %v6309
        %v6311 = vlaneseq
        %v6312 = vshrl.u32 %v6311, 7
        %v6313 = vsub.s32 %v6310, %v6312
        %v6314 = vrot.slane %v6292, %v6313
        %v6316 = vunpack.c.l.s4 1966171168
        %v6317 = vunpack.c.0.s8 %v6316
        %v6318 = vlaneseq
        %v6319 = vshrl.u32 %v6318, 7
        %v6320 = vsub.s32 %v6317, %v6319
        %v6321 = vrot.slane %v6293, %v6320
        %v6322 = vcombine.low %v6300, %v6307
        %v6323 = vcombine.low %v6314, %v6321
        %v6325 = vunpack.c.l.s4 1966171168
        %v6326 = vunpack.c.0.s8 %v6325
        %v6327 = vlaneseq
        %v6328 = vshrl.u32 %v6327, 7
        %v6329 = vsub.s32 %v6326, %v6328
        %v6330 = vrot.slane %v6322, %v6329
        %v6332 = vunpack.c.l.s4 1966171168
        %v6333 = vunpack.c.0.s8 %v6332
        %v6334 = vlaneseq
        %v6335 = vshrl.u32 %v6334, 7
        %v6336 = vsub.s32 %v6333, %v6335
        %v6337 = vrot.slane %v6323, %v6336
        %v6338 = vcombine.low %v6330, %v6337
        %v6339 = vcombine.low %v5216, %v5220
        %v6340 = vcombine.low %v5224, %v5228
        %v6341 = vcombine.low %v5232, %v5236
        %v6342 = vcombine.low %v5240, %v5244
        %v6344 = vunpack.c.l.s4 1966171168
        %v6345 = vunpack.c.0.s8 %v6344
        %v6346 = vlaneseq
        %v6347 = vshrl.u32 %v6346, 7
        %v6348 = vsub.s32 %v6345, %v6347
        %v6349 = vrot.slane %v6339, %v6348
        %v6351 = vunpack.c.l.s4 1966171168
        %v6352 = vunpack.c.0.s8 %v6351
        %v6353 = vlaneseq
        %v6354 = vshrl.u32 %v6353, 7
        %v6355 = vsub.s32 %v6352, %v6354
        %v6356 = vrot.slane %v6340, %v6355
        %v6358 = vunpack.c.l.s4 1966171168
        %v6359 = vunpack.c.0.s8 %v6358
        %v6360 = vlaneseq
        %v6361 = vshrl.u32 %v6360, 7
        %v6362 = vsub.s32 %v6359, %v6361
        %v6363 = vrot.slane %v6341, %v6362
        %v6365 = vunpack.c.l.s4 1966171168
        %v6366 = vunpack.c.0.s8 %v6365
        %v6367 = vlaneseq
        %v6368 = vshrl.u32 %v6367, 7
        %v6369 = vsub.s32 %v6366, %v6368
        %v6370 = vrot.slane %v6342, %v6369
        %v6371 = vcombine.low %v6349, %v6356
        %v6372 = vcombine.low %v6363, %v6370
        %v6374 = vunpack.c.l.s4 1966171168
        %v6375 = vunpack.c.0.s8 %v6374
        %v6376 = vlaneseq
        %v6377 = vshrl.u32 %v6376, 7
        %v6378 = vsub.s32 %v6375, %v6377
        %v6379 = vrot.slane %v6371, %v6378
        %v6381 = vunpack.c.l.s4 1966171168
        %v6382 = vunpack.c.0.s8 %v6381
        %v6383 = vlaneseq
        %v6384 = vshrl.u32 %v6383, 7
        %v6385 = vsub.s32 %v6382, %v6384
        %v6386 = vrot.slane %v6372, %v6385
        %v6387 = vcombine.low %v6379, %v6386
        %v6388 = vcombine.low %v5248, %v5252
        %v6389 = vcombine.low %v5256, %v5260
        %v6390 = vcombine.low %v5264, %v5268
        %v6391 = vcombine.low %v5272, %v5276
        %v6393 = vunpack.c.l.s4 1966171168
        %v6394 = vunpack.c.0.s8 %v6393
        %v6395 = vlaneseq
        %v6396 = vshrl.u32 %v6395, 7
        %v6397 = vsub.s32 %v6394, %v6396
        %v6398 = vrot.slane %v6388, %v6397
        %v6400 = vunpack.c.l.s4 1966171168
        %v6401 = vunpack.c.0.s8 %v6400
        %v6402 = vlaneseq
        %v6403 = vshrl.u32 %v6402, 7
        %v6404 = vsub.s32 %v6401, %v6403
        %v6405 = vrot.slane %v6389, %v6404
        %v6407 = vunpack.c.l.s4 1966171168
        %v6408 = vunpack.c.0.s8 %v6407
        %v6409 = vlaneseq
        %v6410 = vshrl.u32 %v6409, 7
        %v6411 = vsub.s32 %v6408, %v6410
        %v6412 = vrot.slane %v6390, %v6411
        %v6414 = vunpack.c.l.s4 1966171168
        %v6415 = vunpack.c.0.s8 %v6414
        %v6416 = vlaneseq
        %v6417 = vshrl.u32 %v6416, 7
        %v6418 = vsub.s32 %v6415, %v6417
        %v6419 = vrot.slane %v6391, %v6418
        %v6420 = vcombine.low %v6398, %v6405
        %v6421 = vcombine.low %v6412, %v6419
        %v6423 = vunpack.c.l.s4 1966171168
        %v6424 = vunpack.c.0.s8 %v6423
        %v6425 = vlaneseq
        %v6426 = vshrl.u32 %v6425, 7
        %v6427 = vsub.s32 %v6424, %v6426
        %v6428 = vrot.slane %v6420, %v6427
        %v6430 = vunpack.c.l.s4 1966171168
        %v6431 = vunpack.c.0.s8 %v6430
        %v6432 = vlaneseq
        %v6433 = vshrl.u32 %v6432, 7
        %v6434 = vsub.s32 %v6431, %v6433
        %v6435 = vrot.slane %v6421, %v6434
        %v6436 = vcombine.low %v6428, %v6435
        %v6437 = vcombine.low %v5280, %v5284
        %v6438 = vcombine.low %v5288, %v5292
        %v6439 = vcombine.low %v5296, %v5300
        %v6440 = vcombine.low %v5304, %v5308
        %v6442 = vunpack.c.l.s4 1966171168
        %v6443 = vunpack.c.0.s8 %v6442
        %v6444 = vlaneseq
        %v6445 = vshrl.u32 %v6444, 7
        %v6446 = vsub.s32 %v6443, %v6445
        %v6447 = vrot.slane %v6437, %v6446
        %v6449 = vunpack.c.l.s4 1966171168
        %v6450 = vunpack.c.0.s8 %v6449
        %v6451 = vlaneseq
        %v6452 = vshrl.u32 %v6451, 7
        %v6453 = vsub.s32 %v6450, %v6452
        %v6454 = vrot.slane %v6438, %v6453
        %v6456 = vunpack.c.l.s4 1966171168
        %v6457 = vunpack.c.0.s8 %v6456
        %v6458 = vlaneseq
        %v6459 = vshrl.u32 %v6458, 7
        %v6460 = vsub.s32 %v6457, %v6459
        %v6461 = vrot.slane %v6439, %v6460
        %v6463 = vunpack.c.l.s4 1966171168
        %v6464 = vunpack.c.0.s8 %v6463
        %v6465 = vlaneseq
        %v6466 = vshrl.u32 %v6465, 7
        %v6467 = vsub.s32 %v6464, %v6466
        %v6468 = vrot.slane %v6440, %v6467
        %v6469 = vcombine.low %v6447, %v6454
        %v6470 = vcombine.low %v6461, %v6468
        %v6472 = vunpack.c.l.s4 1966171168
        %v6473 = vunpack.c.0.s8 %v6472
        %v6474 = vlaneseq
        %v6475 = vshrl.u32 %v6474, 7
        %v6476 = vsub.s32 %v6473, %v6475
        %v6477 = vrot.slane %v6469, %v6476
        %v6479 = vunpack.c.l.s4 1966171168
        %v6480 = vunpack.c.0.s8 %v6479
        %v6481 = vlaneseq
        %v6482 = vshrl.u32 %v6481, 7
        %v6483 = vsub.s32 %v6480, %v6482
        %v6484 = vrot.slane %v6470, %v6483
        %v6485 = vcombine.low %v6477, %v6484
        %v6486 = vcombine.low %v5312, %v5316
        %v6487 = vcombine.low %v5320, %v5324
        %v6488 = vcombine.low %v5328, %v5332
        %v6489 = vcombine.low %v5336, %v5340
        %v6491 = vunpack.c.l.s4 1966171168
        %v6492 = vunpack.c.0.s8 %v6491
        %v6493 = vlaneseq
        %v6494 = vshrl.u32 %v6493, 7
        %v6495 = vsub.s32 %v6492, %v6494
        %v6496 = vrot.slane %v6486, %v6495
        %v6498 = vunpack.c.l.s4 1966171168
        %v6499 = vunpack.c.0.s8 %v6498
        %v6500 = vlaneseq
        %v6501 = vshrl.u32 %v6500, 7
        %v6502 = vsub.s32 %v6499, %v6501
        %v6503 = vrot.slane %v6487, %v6502
        %v6505 = vunpack.c.l.s4 1966171168
        %v6506 = vunpack.c.0.s8 %v6505
        %v6507 = vlaneseq
        %v6508 = vshrl.u32 %v6507, 7
        %v6509 = vsub.s32 %v6506, %v6508
        %v6510 = vrot.slane %v6488, %v6509
        %v6512 = vunpack.c.l.s4 1966171168
        %v6513 = vunpack.c.0.s8 %v6512
        %v6514 = vlaneseq
        %v6515 = vshrl.u32 %v6514, 7
        %v6516 = vsub.s32 %v6513, %v6515
        %v6517 = vrot.slane %v6489, %v6516
        %v6518 = vcombine.low %v6496, %v6503
        %v6519 = vcombine.low %v6510, %v6517
        %v6521 = vunpack.c.l.s4 1966171168
        %v6522 = vunpack.c.0.s8 %v6521
        %v6523 = vlaneseq
        %v6524 = vshrl.u32 %v6523, 7
        %v6525 = vsub.s32 %v6522, %v6524
        %v6526 = vrot.slane %v6518, %v6525
        %v6528 = vunpack.c.l.s4 1966171168
        %v6529 = vunpack.c.0.s8 %v6528
        %v6530 = vlaneseq
        %v6531 = vshrl.u32 %v6530, 7
        %v6532 = vsub.s32 %v6529, %v6531
        %v6533 = vrot.slane %v6519, %v6532
        %v6534 = vcombine.low %v6526, %v6533
        %v6535 = vcombine.low %v5344, %v5348
        %v6536 = vcombine.low %v5352, %v5356
        %v6537 = vcombine.low %v5360, %v5364
        %v6538 = vcombine.low %v5368, %v5372
        %v6540 = vunpack.c.l.s4 1966171168
        %v6541 = vunpack.c.0.s8 %v6540
        %v6542 = vlaneseq
        %v6543 = vshrl.u32 %v6542, 7
        %v6544 = vsub.s32 %v6541, %v6543
        %v6545 = vrot.slane %v6535, %v6544
        %v6547 = vunpack.c.l.s4 1966171168
        %v6548 = vunpack.c.0.s8 %v6547
        %v6549 = vlaneseq
        %v6550 = vshrl.u32 %v6549, 7
        %v6551 = vsub.s32 %v6548, %v6550
        %v6552 = vrot.slane %v6536, %v6551
        %v6554 = vunpack.c.l.s4 1966171168
        %v6555 = vunpack.c.0.s8 %v6554
        %v6556 = vlaneseq
        %v6557 = vshrl.u32 %v6556, 7
        %v6558 = vsub.s32 %v6555, %v6557
        %v6559 = vrot.slane %v6537, %v6558
        %v6561 = vunpack.c.l.s4 1966171168
        %v6562 = vunpack.c.0.s8 %v6561
        %v6563 = vlaneseq
        %v6564 = vshrl.u32 %v6563, 7
        %v6565 = vsub.s32 %v6562, %v6564
        %v6566 = vrot.slane %v6538, %v6565
        %v6567 = vcombine.low %v6545, %v6552
        %v6568 = vcombine.low %v6559, %v6566
        %v6570 = vunpack.c.l.s4 1966171168
        %v6571 = vunpack.c.0.s8 %v6570
        %v6572 = vlaneseq
        %v6573 = vshrl.u32 %v6572, 7
        %v6574 = vsub.s32 %v6571, %v6573
        %v6575 = vrot.slane %v6567, %v6574
        %v6577 = vunpack.c.l.s4 1966171168
        %v6578 = vunpack.c.0.s8 %v6577
        %v6579 = vlaneseq
        %v6580 = vshrl.u32 %v6579, 7
        %v6581 = vsub.s32 %v6578, %v6580
        %v6582 = vrot.slane %v6568, %v6581
        %v6583 = vcombine.low %v6575, %v6582
        %v6584 = vcombine.low %v5376, %v5380
        %v6585 = vcombine.low %v5384, %v5388
        %v6586 = vcombine.low %v5392, %v5396
        %v6587 = vcombine.low %v5400, %v5404
        %v6589 = vunpack.c.l.s4 1966171168
        %v6590 = vunpack.c.0.s8 %v6589
        %v6591 = vlaneseq
        %v6592 = vshrl.u32 %v6591, 7
        %v6593 = vsub.s32 %v6590, %v6592
        %v6594 = vrot.slane %v6584, %v6593
        %v6596 = vunpack.c.l.s4 1966171168
        %v6597 = vunpack.c.0.s8 %v6596
        %v6598 = vlaneseq
        %v6599 = vshrl.u32 %v6598, 7
        %v6600 = vsub.s32 %v6597, %v6599
        %v6601 = vrot.slane %v6585, %v6600
        %v6603 = vunpack.c.l.s4 1966171168
        %v6604 = vunpack.c.0.s8 %v6603
        %v6605 = vlaneseq
        %v6606 = vshrl.u32 %v6605, 7
        %v6607 = vsub.s32 %v6604, %v6606
        %v6608 = vrot.slane %v6586, %v6607
        %v6610 = vunpack.c.l.s4 1966171168
        %v6611 = vunpack.c.0.s8 %v6610
        %v6612 = vlaneseq
        %v6613 = vshrl.u32 %v6612, 7
        %v6614 = vsub.s32 %v6611, %v6613
        %v6615 = vrot.slane %v6587, %v6614
        %v6616 = vcombine.low %v6594, %v6601
        %v6617 = vcombine.low %v6608, %v6615
        %v6619 = vunpack.c.l.s4 1966171168
        %v6620 = vunpack.c.0.s8 %v6619
        %v6621 = vlaneseq
        %v6622 = vshrl.u32 %v6621, 7
        %v6623 = vsub.s32 %v6620, %v6622
        %v6624 = vrot.slane %v6616, %v6623
        %v6626 = vunpack.c.l.s4 1966171168
        %v6627 = vunpack.c.0.s8 %v6626
        %v6628 = vlaneseq
        %v6629 = vshrl.u32 %v6628, 7
        %v6630 = vsub.s32 %v6627, %v6629
        %v6631 = vrot.slane %v6617, %v6630
        %v6632 = vcombine.low %v6624, %v6631
        %v6633 = vcombine.low %v5408, %v5412
        %v6634 = vcombine.low %v5416, %v5420
        %v6635 = vcombine.low %v5424, %v5428
        %v6636 = vcombine.low %v5432, %v5436
        %v6638 = vunpack.c.l.s4 1966171168
        %v6639 = vunpack.c.0.s8 %v6638
        %v6640 = vlaneseq
        %v6641 = vshrl.u32 %v6640, 7
        %v6642 = vsub.s32 %v6639, %v6641
        %v6643 = vrot.slane %v6633, %v6642
        %v6645 = vunpack.c.l.s4 1966171168
        %v6646 = vunpack.c.0.s8 %v6645
        %v6647 = vlaneseq
        %v6648 = vshrl.u32 %v6647, 7
        %v6649 = vsub.s32 %v6646, %v6648
        %v6650 = vrot.slane %v6634, %v6649
        %v6652 = vunpack.c.l.s4 1966171168
        %v6653 = vunpack.c.0.s8 %v6652
        %v6654 = vlaneseq
        %v6655 = vshrl.u32 %v6654, 7
        %v6656 = vsub.s32 %v6653, %v6655
        %v6657 = vrot.slane %v6635, %v6656
        %v6659 = vunpack.c.l.s4 1966171168
        %v6660 = vunpack.c.0.s8 %v6659
        %v6661 = vlaneseq
        %v6662 = vshrl.u32 %v6661, 7
        %v6663 = vsub.s32 %v6660, %v6662
        %v6664 = vrot.slane %v6636, %v6663
        %v6665 = vcombine.low %v6643, %v6650
        %v6666 = vcombine.low %v6657, %v6664
        %v6668 = vunpack.c.l.s4 1966171168
        %v6669 = vunpack.c.0.s8 %v6668
        %v6670 = vlaneseq
        %v6671 = vshrl.u32 %v6670, 7
        %v6672 = vsub.s32 %v6669, %v6671
        %v6673 = vrot.slane %v6665, %v6672
        %v6675 = vunpack.c.l.s4 1966171168
        %v6676 = vunpack.c.0.s8 %v6675
        %v6677 = vlaneseq
        %v6678 = vshrl.u32 %v6677, 7
        %v6679 = vsub.s32 %v6676, %v6678
        %v6680 = vrot.slane %v6666, %v6679
        %v6681 = vcombine.low %v6673, %v6680
        %v6682 = vcombine.low %v5440, %v5444
        %v6683 = vcombine.low %v5448, %v5452
        %v6684 = vcombine.low %v5456, %v5460
        %v6685 = vcombine.low %v5464, %v5468
        %v6687 = vunpack.c.l.s4 1966171168
        %v6688 = vunpack.c.0.s8 %v6687
        %v6689 = vlaneseq
        %v6690 = vshrl.u32 %v6689, 7
        %v6691 = vsub.s32 %v6688, %v6690
        %v6692 = vrot.slane %v6682, %v6691
        %v6694 = vunpack.c.l.s4 1966171168
        %v6695 = vunpack.c.0.s8 %v6694
        %v6696 = vlaneseq
        %v6697 = vshrl.u32 %v6696, 7
        %v6698 = vsub.s32 %v6695, %v6697
        %v6699 = vrot.slane %v6683, %v6698
        %v6701 = vunpack.c.l.s4 1966171168
        %v6702 = vunpack.c.0.s8 %v6701
        %v6703 = vlaneseq
        %v6704 = vshrl.u32 %v6703, 7
        %v6705 = vsub.s32 %v6702, %v6704
        %v6706 = vrot.slane %v6684, %v6705
        %v6708 = vunpack.c.l.s4 1966171168
        %v6709 = vunpack.c.0.s8 %v6708
        %v6710 = vlaneseq
        %v6711 = vshrl.u32 %v6710, 7
        %v6712 = vsub.s32 %v6709, %v6711
        %v6713 = vrot.slane %v6685, %v6712
        %v6714 = vcombine.low %v6692, %v6699
        %v6715 = vcombine.low %v6706, %v6713
        %v6717 = vunpack.c.l.s4 1966171168
        %v6718 = vunpack.c.0.s8 %v6717
        %v6719 = vlaneseq
        %v6720 = vshrl.u32 %v6719, 7
        %v6721 = vsub.s32 %v6718, %v6720
        %v6722 = vrot.slane %v6714, %v6721
        %v6724 = vunpack.c.l.s4 1966171168
        %v6725 = vunpack.c.0.s8 %v6724
        %v6726 = vlaneseq
        %v6727 = vshrl.u32 %v6726, 7
        %v6728 = vsub.s32 %v6725, %v6727
        %v6729 = vrot.slane %v6715, %v6728
        %v6730 = vcombine.low %v6722, %v6729
        %v6731 = vcombine.low %v5472, %v5476
        %v6732 = vcombine.low %v5480, %v5484
        %v6733 = vcombine.low %v5488, %v5492
        %v6734 = vcombine.low %v5496, %v5500
        %v6736 = vunpack.c.l.s4 1966171168
        %v6737 = vunpack.c.0.s8 %v6736
        %v6738 = vlaneseq
        %v6739 = vshrl.u32 %v6738, 7
        %v6740 = vsub.s32 %v6737, %v6739
        %v6741 = vrot.slane %v6731, %v6740
        %v6743 = vunpack.c.l.s4 1966171168
        %v6744 = vunpack.c.0.s8 %v6743
        %v6745 = vlaneseq
        %v6746 = vshrl.u32 %v6745, 7
        %v6747 = vsub.s32 %v6744, %v6746
        %v6748 = vrot.slane %v6732, %v6747
        %v6750 = vunpack.c.l.s4 1966171168
        %v6751 = vunpack.c.0.s8 %v6750
        %v6752 = vlaneseq
        %v6753 = vshrl.u32 %v6752, 7
        %v6754 = vsub.s32 %v6751, %v6753
        %v6755 = vrot.slane %v6733, %v6754
        %v6757 = vunpack.c.l.s4 1966171168
        %v6758 = vunpack.c.0.s8 %v6757
        %v6759 = vlaneseq
        %v6760 = vshrl.u32 %v6759, 7
        %v6761 = vsub.s32 %v6758, %v6760
        %v6762 = vrot.slane %v6734, %v6761
        %v6763 = vcombine.low %v6741, %v6748
        %v6764 = vcombine.low %v6755, %v6762
        %v6766 = vunpack.c.l.s4 1966171168
        %v6767 = vunpack.c.0.s8 %v6766
        %v6768 = vlaneseq
        %v6769 = vshrl.u32 %v6768, 7
        %v6770 = vsub.s32 %v6767, %v6769
        %v6771 = vrot.slane %v6763, %v6770
        %v6773 = vunpack.c.l.s4 1966171168
        %v6774 = vunpack.c.0.s8 %v6773
        %v6775 = vlaneseq
        %v6776 = vshrl.u32 %v6775, 7
        %v6777 = vsub.s32 %v6774, %v6776
        %v6778 = vrot.slane %v6764, %v6777
        %v6779 = vcombine.low %v6771, %v6778
        %v6780 = vcombine.low %v5504, %v5508
        %v6781 = vcombine.low %v5512, %v5516
        %v6782 = vcombine.low %v5520, %v5524
        %v6783 = vcombine.low %v5528, %v5532
        %v6785 = vunpack.c.l.s4 1966171168
        %v6786 = vunpack.c.0.s8 %v6785
        %v6787 = vlaneseq
        %v6788 = vshrl.u32 %v6787, 7
        %v6789 = vsub.s32 %v6786, %v6788
        %v6790 = vrot.slane %v6780, %v6789
        %v6792 = vunpack.c.l.s4 1966171168
        %v6793 = vunpack.c.0.s8 %v6792
        %v6794 = vlaneseq
        %v6795 = vshrl.u32 %v6794, 7
        %v6796 = vsub.s32 %v6793, %v6795
        %v6797 = vrot.slane %v6781, %v6796
        %v6799 = vunpack.c.l.s4 1966171168
        %v6800 = vunpack.c.0.s8 %v6799
        %v6801 = vlaneseq
        %v6802 = vshrl.u32 %v6801, 7
        %v6803 = vsub.s32 %v6800, %v6802
        %v6804 = vrot.slane %v6782, %v6803
        %v6806 = vunpack.c.l.s4 1966171168
        %v6807 = vunpack.c.0.s8 %v6806
        %v6808 = vlaneseq
        %v6809 = vshrl.u32 %v6808, 7
        %v6810 = vsub.s32 %v6807, %v6809
        %v6811 = vrot.slane %v6783, %v6810
        %v6812 = vcombine.low %v6790, %v6797
        %v6813 = vcombine.low %v6804, %v6811
        %v6815 = vunpack.c.l.s4 1966171168
        %v6816 = vunpack.c.0.s8 %v6815
        %v6817 = vlaneseq
        %v6818 = vshrl.u32 %v6817, 7
        %v6819 = vsub.s32 %v6816, %v6818
        %v6820 = vrot.slane %v6812, %v6819
        %v6822 = vunpack.c.l.s4 1966171168
        %v6823 = vunpack.c.0.s8 %v6822
        %v6824 = vlaneseq
        %v6825 = vshrl.u32 %v6824, 7
        %v6826 = vsub.s32 %v6823, %v6825
        %v6827 = vrot.slane %v6813, %v6826
        %v6828 = vcombine.low %v6820, %v6827
        %v6829 = vcombine.low %v5536, %v5540
        %v6830 = vcombine.low %v5544, %v5548
        %v6831 = vcombine.low %v5552, %v5556
        %v6832 = vcombine.low %v5560, %v5564
        %v6834 = vunpack.c.l.s4 1966171168
        %v6835 = vunpack.c.0.s8 %v6834
        %v6836 = vlaneseq
        %v6837 = vshrl.u32 %v6836, 7
        %v6838 = vsub.s32 %v6835, %v6837
        %v6839 = vrot.slane %v6829, %v6838
        %v6841 = vunpack.c.l.s4 1966171168
        %v6842 = vunpack.c.0.s8 %v6841
        %v6843 = vlaneseq
        %v6844 = vshrl.u32 %v6843, 7
        %v6845 = vsub.s32 %v6842, %v6844
        %v6846 = vrot.slane %v6830, %v6845
        %v6848 = vunpack.c.l.s4 1966171168
        %v6849 = vunpack.c.0.s8 %v6848
        %v6850 = vlaneseq
        %v6851 = vshrl.u32 %v6850, 7
        %v6852 = vsub.s32 %v6849, %v6851
        %v6853 = vrot.slane %v6831, %v6852
        %v6855 = vunpack.c.l.s4 1966171168
        %v6856 = vunpack.c.0.s8 %v6855
        %v6857 = vlaneseq
        %v6858 = vshrl.u32 %v6857, 7
        %v6859 = vsub.s32 %v6856, %v6858
        %v6860 = vrot.slane %v6832, %v6859
        %v6861 = vcombine.low %v6839, %v6846
        %v6862 = vcombine.low %v6853, %v6860
        %v6864 = vunpack.c.l.s4 1966171168
        %v6865 = vunpack.c.0.s8 %v6864
        %v6866 = vlaneseq
        %v6867 = vshrl.u32 %v6866, 7
        %v6868 = vsub.s32 %v6865, %v6867
        %v6869 = vrot.slane %v6861, %v6868
        %v6871 = vunpack.c.l.s4 1966171168
        %v6872 = vunpack.c.0.s8 %v6871
        %v6873 = vlaneseq
        %v6874 = vshrl.u32 %v6873, 7
        %v6875 = vsub.s32 %v6872, %v6874
        %v6876 = vrot.slane %v6862, %v6875
        %v6877 = vcombine.low %v6869, %v6876
        %v6878 = vcombine.low %v5568, %v5572
        %v6879 = vcombine.low %v5576, %v5580
        %v6880 = vcombine.low %v5584, %v5588
        %v6881 = vcombine.low %v5592, %v5596
        %v6883 = vunpack.c.l.s4 1966171168
        %v6884 = vunpack.c.0.s8 %v6883
        %v6885 = vlaneseq
        %v6886 = vshrl.u32 %v6885, 7
        %v6887 = vsub.s32 %v6884, %v6886
        %v6888 = vrot.slane %v6878, %v6887
        %v6890 = vunpack.c.l.s4 1966171168
        %v6891 = vunpack.c.0.s8 %v6890
        %v6892 = vlaneseq
        %v6893 = vshrl.u32 %v6892, 7
        %v6894 = vsub.s32 %v6891, %v6893
        %v6895 = vrot.slane %v6879, %v6894
        %v6897 = vunpack.c.l.s4 1966171168
        %v6898 = vunpack.c.0.s8 %v6897
        %v6899 = vlaneseq
        %v6900 = vshrl.u32 %v6899, 7
        %v6901 = vsub.s32 %v6898, %v6900
        %v6902 = vrot.slane %v6880, %v6901
        %v6904 = vunpack.c.l.s4 1966171168
        %v6905 = vunpack.c.0.s8 %v6904
        %v6906 = vlaneseq
        %v6907 = vshrl.u32 %v6906, 7
        %v6908 = vsub.s32 %v6905, %v6907
        %v6909 = vrot.slane %v6881, %v6908
        %v6910 = vcombine.low %v6888, %v6895
        %v6911 = vcombine.low %v6902, %v6909
        %v6913 = vunpack.c.l.s4 1966171168
        %v6914 = vunpack.c.0.s8 %v6913
        %v6915 = vlaneseq
        %v6916 = vshrl.u32 %v6915, 7
        %v6917 = vsub.s32 %v6914, %v6916
        %v6918 = vrot.slane %v6910, %v6917
        %v6920 = vunpack.c.l.s4 1966171168
        %v6921 = vunpack.c.0.s8 %v6920
        %v6922 = vlaneseq
        %v6923 = vshrl.u32 %v6922, 7
        %v6924 = vsub.s32 %v6921, %v6923
        %v6925 = vrot.slane %v6911, %v6924
        %v6926 = vcombine.low %v6918, %v6925
        %v6927 = vcombine.low %v5600, %v5604
        %v6928 = vcombine.low %v5608, %v5612
        %v6929 = vcombine.low %v5616, %v5620
        %v6930 = vcombine.low %v5624, %v5628
        %v6932 = vunpack.c.l.s4 1966171168
        %v6933 = vunpack.c.0.s8 %v6932
        %v6934 = vlaneseq
        %v6935 = vshrl.u32 %v6934, 7
        %v6936 = vsub.s32 %v6933, %v6935
        %v6937 = vrot.slane %v6927, %v6936
        %v6939 = vunpack.c.l.s4 1966171168
        %v6940 = vunpack.c.0.s8 %v6939
        %v6941 = vlaneseq
        %v6942 = vshrl.u32 %v6941, 7
        %v6943 = vsub.s32 %v6940, %v6942
        %v6944 = vrot.slane %v6928, %v6943
        %v6946 = vunpack.c.l.s4 1966171168
        %v6947 = vunpack.c.0.s8 %v6946
        %v6948 = vlaneseq
        %v6949 = vshrl.u32 %v6948, 7
        %v6950 = vsub.s32 %v6947, %v6949
        %v6951 = vrot.slane %v6929, %v6950
        %v6953 = vunpack.c.l.s4 1966171168
        %v6954 = vunpack.c.0.s8 %v6953
        %v6955 = vlaneseq
        %v6956 = vshrl.u32 %v6955, 7
        %v6957 = vsub.s32 %v6954, %v6956
        %v6958 = vrot.slane %v6930, %v6957
        %v6959 = vcombine.low %v6937, %v6944
        %v6960 = vcombine.low %v6951, %v6958
        %v6962 = vunpack.c.l.s4 1966171168
        %v6963 = vunpack.c.0.s8 %v6962
        %v6964 = vlaneseq
        %v6965 = vshrl.u32 %v6964, 7
        %v6966 = vsub.s32 %v6963, %v6965
        %v6967 = vrot.slane %v6959, %v6966
        %v6969 = vunpack.c.l.s4 1966171168
        %v6970 = vunpack.c.0.s8 %v6969
        %v6971 = vlaneseq
        %v6972 = vshrl.u32 %v6971, 7
        %v6973 = vsub.s32 %v6970, %v6972
        %v6974 = vrot.slane %v6960, %v6973
        %v6975 = vcombine.low %v6967, %v6974
        %v6976 = vcombine.low %v5632, %v5636
        %v6977 = vcombine.low %v5640, %v5644
        %v6978 = vcombine.low %v5648, %v5652
        %v6979 = vcombine.low %v5656, %v5660
        %v6981 = vunpack.c.l.s4 1966171168
        %v6982 = vunpack.c.0.s8 %v6981
        %v6983 = vlaneseq
        %v6984 = vshrl.u32 %v6983, 7
        %v6985 = vsub.s32 %v6982, %v6984
        %v6986 = vrot.slane %v6976, %v6985
        %v6988 = vunpack.c.l.s4 1966171168
        %v6989 = vunpack.c.0.s8 %v6988
        %v6990 = vlaneseq
        %v6991 = vshrl.u32 %v6990, 7
        %v6992 = vsub.s32 %v6989, %v6991
        %v6993 = vrot.slane %v6977, %v6992
        %v6995 = vunpack.c.l.s4 1966171168
        %v6996 = vunpack.c.0.s8 %v6995
        %v6997 = vlaneseq
        %v6998 = vshrl.u32 %v6997, 7
        %v6999 = vsub.s32 %v6996, %v6998
        %v7000 = vrot.slane %v6978, %v6999
        %v7002 = vunpack.c.l.s4 1966171168
        %v7003 = vunpack.c.0.s8 %v7002
        %v7004 = vlaneseq
        %v7005 = vshrl.u32 %v7004, 7
        %v7006 = vsub.s32 %v7003, %v7005
        %v7007 = vrot.slane %v6979, %v7006
        %v7008 = vcombine.low %v6986, %v6993
        %v7009 = vcombine.low %v7000, %v7007
        %v7011 = vunpack.c.l.s4 1966171168
        %v7012 = vunpack.c.0.s8 %v7011
        %v7013 = vlaneseq
        %v7014 = vshrl.u32 %v7013, 7
        %v7015 = vsub.s32 %v7012, %v7014
        %v7016 = vrot.slane %v7008, %v7015
        %v7018 = vunpack.c.l.s4 1966171168
        %v7019 = vunpack.c.0.s8 %v7018
        %v7020 = vlaneseq
        %v7021 = vshrl.u32 %v7020, 7
        %v7022 = vsub.s32 %v7019, %v7021
        %v7023 = vrot.slane %v7009, %v7022
        %v7024 = vcombine.low %v7016, %v7023
        %v7025 = vcombine.low %v5664, %v5668
        %v7026 = vcombine.low %v5672, %v5676
        %v7027 = vcombine.low %v5680, %v5684
        %v7028 = vcombine.low %v5688, %v5692
        %v7030 = vunpack.c.l.s4 1966171168
        %v7031 = vunpack.c.0.s8 %v7030
        %v7032 = vlaneseq
        %v7033 = vshrl.u32 %v7032, 7
        %v7034 = vsub.s32 %v7031, %v7033
        %v7035 = vrot.slane %v7025, %v7034
        %v7037 = vunpack.c.l.s4 1966171168
        %v7038 = vunpack.c.0.s8 %v7037
        %v7039 = vlaneseq
        %v7040 = vshrl.u32 %v7039, 7
        %v7041 = vsub.s32 %v7038, %v7040
        %v7042 = vrot.slane %v7026, %v7041
        %v7044 = vunpack.c.l.s4 1966171168
        %v7045 = vunpack.c.0.s8 %v7044
        %v7046 = vlaneseq
        %v7047 = vshrl.u32 %v7046, 7
        %v7048 = vsub.s32 %v7045, %v7047
        %v7049 = vrot.slane %v7027, %v7048
        %v7051 = vunpack.c.l.s4 1966171168
        %v7052 = vunpack.c.0.s8 %v7051
        %v7053 = vlaneseq
        %v7054 = vshrl.u32 %v7053, 7
        %v7055 = vsub.s32 %v7052, %v7054
        %v7056 = vrot.slane %v7028, %v7055
        %v7057 = vcombine.low %v7035, %v7042
        %v7058 = vcombine.low %v7049, %v7056
        %v7060 = vunpack.c.l.s4 1966171168
        %v7061 = vunpack.c.0.s8 %v7060
        %v7062 = vlaneseq
        %v7063 = vshrl.u32 %v7062, 7
        %v7064 = vsub.s32 %v7061, %v7063
        %v7065 = vrot.slane %v7057, %v7064
        %v7067 = vunpack.c.l.s4 1966171168
        %v7068 = vunpack.c.0.s8 %v7067
        %v7069 = vlaneseq
        %v7070 = vshrl.u32 %v7069, 7
        %v7071 = vsub.s32 %v7068, %v7070
        %v7072 = vrot.slane %v7058, %v7071
        %v7073 = vcombine.low %v7065, %v7072
        %v7074 = vcombine.low %v5696, %v5700
        %v7075 = vcombine.low %v5704, %v5708
        %v7076 = vcombine.low %v5712, %v5716
        %v7077 = vcombine.low %v5720, %v5724
        %v7079 = vunpack.c.l.s4 1966171168
        %v7080 = vunpack.c.0.s8 %v7079
        %v7081 = vlaneseq
        %v7082 = vshrl.u32 %v7081, 7
        %v7083 = vsub.s32 %v7080, %v7082
        %v7084 = vrot.slane %v7074, %v7083
        %v7086 = vunpack.c.l.s4 1966171168
        %v7087 = vunpack.c.0.s8 %v7086
        %v7088 = vlaneseq
        %v7089 = vshrl.u32 %v7088, 7
        %v7090 = vsub.s32 %v7087, %v7089
        %v7091 = vrot.slane %v7075, %v7090
        %v7093 = vunpack.c.l.s4 1966171168
        %v7094 = vunpack.c.0.s8 %v7093
        %v7095 = vlaneseq
        %v7096 = vshrl.u32 %v7095, 7
        %v7097 = vsub.s32 %v7094, %v7096
        %v7098 = vrot.slane %v7076, %v7097
        %v7100 = vunpack.c.l.s4 1966171168
        %v7101 = vunpack.c.0.s8 %v7100
        %v7102 = vlaneseq
        %v7103 = vshrl.u32 %v7102, 7
        %v7104 = vsub.s32 %v7101, %v7103
        %v7105 = vrot.slane %v7077, %v7104
        %v7106 = vcombine.low %v7084, %v7091
        %v7107 = vcombine.low %v7098, %v7105
        %v7109 = vunpack.c.l.s4 1966171168
        %v7110 = vunpack.c.0.s8 %v7109
        %v7111 = vlaneseq
        %v7112 = vshrl.u32 %v7111, 7
        %v7113 = vsub.s32 %v7110, %v7112
        %v7114 = vrot.slane %v7106, %v7113
        %v7116 = vunpack.c.l.s4 1966171168
        %v7117 = vunpack.c.0.s8 %v7116
        %v7118 = vlaneseq
        %v7119 = vshrl.u32 %v7118, 7
        %v7120 = vsub.s32 %v7117, %v7119
        %v7121 = vrot.slane %v7107, %v7120
        %v7122 = vcombine.low %v7114, %v7121
        %v7123 = vcombine.low %v5728, %v5732
        %v7124 = vcombine.low %v5736, %v5740
        %v7125 = vcombine.low %v5744, %v5748
        %v7126 = vcombine.low %v5752, %v5756
        %v7128 = vunpack.c.l.s4 1966171168
        %v7129 = vunpack.c.0.s8 %v7128
        %v7130 = vlaneseq
        %v7131 = vshrl.u32 %v7130, 7
        %v7132 = vsub.s32 %v7129, %v7131
        %v7133 = vrot.slane %v7123, %v7132
        %v7135 = vunpack.c.l.s4 1966171168
        %v7136 = vunpack.c.0.s8 %v7135
        %v7137 = vlaneseq
        %v7138 = vshrl.u32 %v7137, 7
        %v7139 = vsub.s32 %v7136, %v7138
        %v7140 = vrot.slane %v7124, %v7139
        %v7142 = vunpack.c.l.s4 1966171168
        %v7143 = vunpack.c.0.s8 %v7142
        %v7144 = vlaneseq
        %v7145 = vshrl.u32 %v7144, 7
        %v7146 = vsub.s32 %v7143, %v7145
        %v7147 = vrot.slane %v7125, %v7146
        %v7149 = vunpack.c.l.s4 1966171168
        %v7150 = vunpack.c.0.s8 %v7149
        %v7151 = vlaneseq
        %v7152 = vshrl.u32 %v7151, 7
        %v7153 = vsub.s32 %v7150, %v7152
        %v7154 = vrot.slane %v7126, %v7153
        %v7155 = vcombine.low %v7133, %v7140
        %v7156 = vcombine.low %v7147, %v7154
        %v7158 = vunpack.c.l.s4 1966171168
        %v7159 = vunpack.c.0.s8 %v7158
        %v7160 = vlaneseq
        %v7161 = vshrl.u32 %v7160, 7
        %v7162 = vsub.s32 %v7159, %v7161
        %v7163 = vrot.slane %v7155, %v7162
        %v7165 = vunpack.c.l.s4 1966171168
        %v7166 = vunpack.c.0.s8 %v7165
        %v7167 = vlaneseq
        %v7168 = vshrl.u32 %v7167, 7
        %v7169 = vsub.s32 %v7166, %v7168
        %v7170 = vrot.slane %v7156, %v7169
        %v7171 = vcombine.low %v7163, %v7170
        %v7172 = vcombine.low %v5760, %v5764
        %v7173 = vcombine.low %v5768, %v5772
        %v7174 = vcombine.low %v5776, %v5780
        %v7175 = vcombine.low %v5784, %v5788
        %v7177 = vunpack.c.l.s4 1966171168
        %v7178 = vunpack.c.0.s8 %v7177
        %v7179 = vlaneseq
        %v7180 = vshrl.u32 %v7179, 7
        %v7181 = vsub.s32 %v7178, %v7180
        %v7182 = vrot.slane %v7172, %v7181
        %v7184 = vunpack.c.l.s4 1966171168
        %v7185 = vunpack.c.0.s8 %v7184
        %v7186 = vlaneseq
        %v7187 = vshrl.u32 %v7186, 7
        %v7188 = vsub.s32 %v7185, %v7187
        %v7189 = vrot.slane %v7173, %v7188
        %v7191 = vunpack.c.l.s4 1966171168
        %v7192 = vunpack.c.0.s8 %v7191
        %v7193 = vlaneseq
        %v7194 = vshrl.u32 %v7193, 7
        %v7195 = vsub.s32 %v7192, %v7194
        %v7196 = vrot.slane %v7174, %v7195
        %v7198 = vunpack.c.l.s4 1966171168
        %v7199 = vunpack.c.0.s8 %v7198
        %v7200 = vlaneseq
        %v7201 = vshrl.u32 %v7200, 7
        %v7202 = vsub.s32 %v7199, %v7201
        %v7203 = vrot.slane %v7175, %v7202
        %v7204 = vcombine.low %v7182, %v7189
        %v7205 = vcombine.low %v7196, %v7203
        %v7207 = vunpack.c.l.s4 1966171168
        %v7208 = vunpack.c.0.s8 %v7207
        %v7209 = vlaneseq
        %v7210 = vshrl.u32 %v7209, 7
        %v7211 = vsub.s32 %v7208, %v7210
        %v7212 = vrot.slane %v7204, %v7211
        %v7214 = vunpack.c.l.s4 1966171168
        %v7215 = vunpack.c.0.s8 %v7214
        %v7216 = vlaneseq
        %v7217 = vshrl.u32 %v7216, 7
        %v7218 = vsub.s32 %v7215, %v7217
        %v7219 = vrot.slane %v7205, %v7218
        %v7220 = vcombine.low %v7212, %v7219
        %v7221 = vcombine.low %v5792, %v5796
        %v7222 = vcombine.low %v5800, %v5804
        %v7223 = vcombine.low %v5808, %v5812
        %v7224 = vcombine.low %v5816, %v5820
        %v7226 = vunpack.c.l.s4 1966171168
        %v7227 = vunpack.c.0.s8 %v7226
        %v7228 = vlaneseq
        %v7229 = vshrl.u32 %v7228, 7
        %v7230 = vsub.s32 %v7227, %v7229
        %v7231 = vrot.slane %v7221, %v7230
        %v7233 = vunpack.c.l.s4 1966171168
        %v7234 = vunpack.c.0.s8 %v7233
        %v7235 = vlaneseq
        %v7236 = vshrl.u32 %v7235, 7
        %v7237 = vsub.s32 %v7234, %v7236
        %v7238 = vrot.slane %v7222, %v7237
        %v7240 = vunpack.c.l.s4 1966171168
        %v7241 = vunpack.c.0.s8 %v7240
        %v7242 = vlaneseq
        %v7243 = vshrl.u32 %v7242, 7
        %v7244 = vsub.s32 %v7241, %v7243
        %v7245 = vrot.slane %v7223, %v7244
        %v7247 = vunpack.c.l.s4 1966171168
        %v7248 = vunpack.c.0.s8 %v7247
        %v7249 = vlaneseq
        %v7250 = vshrl.u32 %v7249, 7
        %v7251 = vsub.s32 %v7248, %v7250
        %v7252 = vrot.slane %v7224, %v7251
        %v7253 = vcombine.low %v7231, %v7238
        %v7254 = vcombine.low %v7245, %v7252
        %v7256 = vunpack.c.l.s4 1966171168
        %v7257 = vunpack.c.0.s8 %v7256
        %v7258 = vlaneseq
        %v7259 = vshrl.u32 %v7258, 7
        %v7260 = vsub.s32 %v7257, %v7259
        %v7261 = vrot.slane %v7253, %v7260
        %v7263 = vunpack.c.l.s4 1966171168
        %v7264 = vunpack.c.0.s8 %v7263
        %v7265 = vlaneseq
        %v7266 = vshrl.u32 %v7265, 7
        %v7267 = vsub.s32 %v7264, %v7266
        %v7268 = vrot.slane %v7254, %v7267
        %v7269 = vcombine.low %v7261, %v7268
        %v7270 = vcombine.low %v5824, %v5828
        %v7271 = vcombine.low %v5832, %v5836
        %v7272 = vcombine.low %v5840, %v5844
        %v7273 = vcombine.low %v5848, %v5852
        %v7275 = vunpack.c.l.s4 1966171168
        %v7276 = vunpack.c.0.s8 %v7275
        %v7277 = vlaneseq
        %v7278 = vshrl.u32 %v7277, 7
        %v7279 = vsub.s32 %v7276, %v7278
        %v7280 = vrot.slane %v7270, %v7279
        %v7282 = vunpack.c.l.s4 1966171168
        %v7283 = vunpack.c.0.s8 %v7282
        %v7284 = vlaneseq
        %v7285 = vshrl.u32 %v7284, 7
        %v7286 = vsub.s32 %v7283, %v7285
        %v7287 = vrot.slane %v7271, %v7286
        %v7289 = vunpack.c.l.s4 1966171168
        %v7290 = vunpack.c.0.s8 %v7289
        %v7291 = vlaneseq
        %v7292 = vshrl.u32 %v7291, 7
        %v7293 = vsub.s32 %v7290, %v7292
        %v7294 = vrot.slane %v7272, %v7293
        %v7296 = vunpack.c.l.s4 1966171168
        %v7297 = vunpack.c.0.s8 %v7296
        %v7298 = vlaneseq
        %v7299 = vshrl.u32 %v7298, 7
        %v7300 = vsub.s32 %v7297, %v7299
        %v7301 = vrot.slane %v7273, %v7300
        %v7302 = vcombine.low %v7280, %v7287
        %v7303 = vcombine.low %v7294, %v7301
        %v7305 = vunpack.c.l.s4 1966171168
        %v7306 = vunpack.c.0.s8 %v7305
        %v7307 = vlaneseq
        %v7308 = vshrl.u32 %v7307, 7
        %v7309 = vsub.s32 %v7306, %v7308
        %v7310 = vrot.slane %v7302, %v7309
        %v7312 = vunpack.c.l.s4 1966171168
        %v7313 = vunpack.c.0.s8 %v7312
        %v7314 = vlaneseq
        %v7315 = vshrl.u32 %v7314, 7
        %v7316 = vsub.s32 %v7313, %v7315
        %v7317 = vrot.slane %v7303, %v7316
        %v7318 = vcombine.low %v7310, %v7317
        %v7319 = vcombine.low %v5856, %v5860
        %v7320 = vcombine.low %v5864, %v5868
        %v7321 = vcombine.low %v5872, %v5876
        %v7322 = vcombine.low %v5880, %v5884
        %v7324 = vunpack.c.l.s4 1966171168
        %v7325 = vunpack.c.0.s8 %v7324
        %v7326 = vlaneseq
        %v7327 = vshrl.u32 %v7326, 7
        %v7328 = vsub.s32 %v7325, %v7327
        %v7329 = vrot.slane %v7319, %v7328
        %v7331 = vunpack.c.l.s4 1966171168
        %v7332 = vunpack.c.0.s8 %v7331
        %v7333 = vlaneseq
        %v7334 = vshrl.u32 %v7333, 7
        %v7335 = vsub.s32 %v7332, %v7334
        %v7336 = vrot.slane %v7320, %v7335
        %v7338 = vunpack.c.l.s4 1966171168
        %v7339 = vunpack.c.0.s8 %v7338
        %v7340 = vlaneseq
        %v7341 = vshrl.u32 %v7340, 7
        %v7342 = vsub.s32 %v7339, %v7341
        %v7343 = vrot.slane %v7321, %v7342
        %v7345 = vunpack.c.l.s4 1966171168
        %v7346 = vunpack.c.0.s8 %v7345
        %v7347 = vlaneseq
        %v7348 = vshrl.u32 %v7347, 7
        %v7349 = vsub.s32 %v7346, %v7348
        %v7350 = vrot.slane %v7322, %v7349
        %v7351 = vcombine.low %v7329, %v7336
        %v7352 = vcombine.low %v7343, %v7350
        %v7354 = vunpack.c.l.s4 1966171168
        %v7355 = vunpack.c.0.s8 %v7354
        %v7356 = vlaneseq
        %v7357 = vshrl.u32 %v7356, 7
        %v7358 = vsub.s32 %v7355, %v7357
        %v7359 = vrot.slane %v7351, %v7358
        %v7361 = vunpack.c.l.s4 1966171168
        %v7362 = vunpack.c.0.s8 %v7361
        %v7363 = vlaneseq
        %v7364 = vshrl.u32 %v7363, 7
        %v7365 = vsub.s32 %v7362, %v7364
        %v7366 = vrot.slane %v7352, %v7365
        %v7367 = vcombine.low %v7359, %v7366
        %v7368 = vcombine.low %v5888, %v5892
        %v7369 = vcombine.low %v5896, %v5900
        %v7370 = vcombine.low %v5904, %v5908
        %v7371 = vcombine.low %v5912, %v5916
        %v7373 = vunpack.c.l.s4 1966171168
        %v7374 = vunpack.c.0.s8 %v7373
        %v7375 = vlaneseq
        %v7376 = vshrl.u32 %v7375, 7
        %v7377 = vsub.s32 %v7374, %v7376
        %v7378 = vrot.slane %v7368, %v7377
        %v7380 = vunpack.c.l.s4 1966171168
        %v7381 = vunpack.c.0.s8 %v7380
        %v7382 = vlaneseq
        %v7383 = vshrl.u32 %v7382, 7
        %v7384 = vsub.s32 %v7381, %v7383
        %v7385 = vrot.slane %v7369, %v7384
        %v7387 = vunpack.c.l.s4 1966171168
        %v7388 = vunpack.c.0.s8 %v7387
        %v7389 = vlaneseq
        %v7390 = vshrl.u32 %v7389, 7
        %v7391 = vsub.s32 %v7388, %v7390
        %v7392 = vrot.slane %v7370, %v7391
        %v7394 = vunpack.c.l.s4 1966171168
        %v7395 = vunpack.c.0.s8 %v7394
        %v7396 = vlaneseq
        %v7397 = vshrl.u32 %v7396, 7
        %v7398 = vsub.s32 %v7395, %v7397
        %v7399 = vrot.slane %v7371, %v7398
        %v7400 = vcombine.low %v7378, %v7385
        %v7401 = vcombine.low %v7392, %v7399
        %v7403 = vunpack.c.l.s4 1966171168
        %v7404 = vunpack.c.0.s8 %v7403
        %v7405 = vlaneseq
        %v7406 = vshrl.u32 %v7405, 7
        %v7407 = vsub.s32 %v7404, %v7406
        %v7408 = vrot.slane %v7400, %v7407
        %v7410 = vunpack.c.l.s4 1966171168
        %v7411 = vunpack.c.0.s8 %v7410
        %v7412 = vlaneseq
        %v7413 = vshrl.u32 %v7412, 7
        %v7414 = vsub.s32 %v7411, %v7413
        %v7415 = vrot.slane %v7401, %v7414
        %v7416 = vcombine.low %v7408, %v7415
        %v7417 = vcombine.low %v5920, %v5924
        %v7418 = vcombine.low %v5928, %v5932
        %v7419 = vcombine.low %v5936, %v5940
        %v7420 = vcombine.low %v5944, %v5948
        %v7422 = vunpack.c.l.s4 1966171168
        %v7423 = vunpack.c.0.s8 %v7422
        %v7424 = vlaneseq
        %v7425 = vshrl.u32 %v7424, 7
        %v7426 = vsub.s32 %v7423, %v7425
        %v7427 = vrot.slane %v7417, %v7426
        %v7429 = vunpack.c.l.s4 1966171168
        %v7430 = vunpack.c.0.s8 %v7429
        %v7431 = vlaneseq
        %v7432 = vshrl.u32 %v7431, 7
        %v7433 = vsub.s32 %v7430, %v7432
        %v7434 = vrot.slane %v7418, %v7433
        %v7436 = vunpack.c.l.s4 1966171168
        %v7437 = vunpack.c.0.s8 %v7436
        %v7438 = vlaneseq
        %v7439 = vshrl.u32 %v7438, 7
        %v7440 = vsub.s32 %v7437, %v7439
        %v7441 = vrot.slane %v7419, %v7440
        %v7443 = vunpack.c.l.s4 1966171168
        %v7444 = vunpack.c.0.s8 %v7443
        %v7445 = vlaneseq
        %v7446 = vshrl.u32 %v7445, 7
        %v7447 = vsub.s32 %v7444, %v7446
        %v7448 = vrot.slane %v7420, %v7447
        %v7449 = vcombine.low %v7427, %v7434
        %v7450 = vcombine.low %v7441, %v7448
        %v7452 = vunpack.c.l.s4 1966171168
        %v7453 = vunpack.c.0.s8 %v7452
        %v7454 = vlaneseq
        %v7455 = vshrl.u32 %v7454, 7
        %v7456 = vsub.s32 %v7453, %v7455
        %v7457 = vrot.slane %v7449, %v7456
        %v7459 = vunpack.c.l.s4 1966171168
        %v7460 = vunpack.c.0.s8 %v7459
        %v7461 = vlaneseq
        %v7462 = vshrl.u32 %v7461, 7
        %v7463 = vsub.s32 %v7460, %v7462
        %v7464 = vrot.slane %v7450, %v7463
        %v7465 = vcombine.low %v7457, %v7464
        %v7466 = vcombine.low %v5952, %v5956
        %v7467 = vcombine.low %v5960, %v5964
        %v7468 = vcombine.low %v5968, %v5972
        %v7469 = vcombine.low %v5976, %v5980
        %v7471 = vunpack.c.l.s4 1966171168
        %v7472 = vunpack.c.0.s8 %v7471
        %v7473 = vlaneseq
        %v7474 = vshrl.u32 %v7473, 7
        %v7475 = vsub.s32 %v7472, %v7474
        %v7476 = vrot.slane %v7466, %v7475
        %v7478 = vunpack.c.l.s4 1966171168
        %v7479 = vunpack.c.0.s8 %v7478
        %v7480 = vlaneseq
        %v7481 = vshrl.u32 %v7480, 7
        %v7482 = vsub.s32 %v7479, %v7481
        %v7483 = vrot.slane %v7467, %v7482
        %v7485 = vunpack.c.l.s4 1966171168
        %v7486 = vunpack.c.0.s8 %v7485
        %v7487 = vlaneseq
        %v7488 = vshrl.u32 %v7487, 7
        %v7489 = vsub.s32 %v7486, %v7488
        %v7490 = vrot.slane %v7468, %v7489
        %v7492 = vunpack.c.l.s4 1966171168
        %v7493 = vunpack.c.0.s8 %v7492
        %v7494 = vlaneseq
        %v7495 = vshrl.u32 %v7494, 7
        %v7496 = vsub.s32 %v7493, %v7495
        %v7497 = vrot.slane %v7469, %v7496
        %v7498 = vcombine.low %v7476, %v7483
        %v7499 = vcombine.low %v7490, %v7497
        %v7501 = vunpack.c.l.s4 1966171168
        %v7502 = vunpack.c.0.s8 %v7501
        %v7503 = vlaneseq
        %v7504 = vshrl.u32 %v7503, 7
        %v7505 = vsub.s32 %v7502, %v7504
        %v7506 = vrot.slane %v7498, %v7505
        %v7508 = vunpack.c.l.s4 1966171168
        %v7509 = vunpack.c.0.s8 %v7508
        %v7510 = vlaneseq
        %v7511 = vshrl.u32 %v7510, 7
        %v7512 = vsub.s32 %v7509, %v7511
        %v7513 = vrot.slane %v7499, %v7512
        %v7514 = vcombine.low %v7506, %v7513
        %v7515 = vcombine.low %v5984, %v5988
        %v7516 = vcombine.low %v5992, %v5996
        %v7517 = vcombine.low %v6000, %v6004
        %v7518 = vcombine.low %v6008, %v6012
        %v7520 = vunpack.c.l.s4 1966171168
        %v7521 = vunpack.c.0.s8 %v7520
        %v7522 = vlaneseq
        %v7523 = vshrl.u32 %v7522, 7
        %v7524 = vsub.s32 %v7521, %v7523
        %v7525 = vrot.slane %v7515, %v7524
        %v7527 = vunpack.c.l.s4 1966171168
        %v7528 = vunpack.c.0.s8 %v7527
        %v7529 = vlaneseq
        %v7530 = vshrl.u32 %v7529, 7
        %v7531 = vsub.s32 %v7528, %v7530
        %v7532 = vrot.slane %v7516, %v7531
        %v7534 = vunpack.c.l.s4 1966171168
        %v7535 = vunpack.c.0.s8 %v7534
        %v7536 = vlaneseq
        %v7537 = vshrl.u32 %v7536, 7
        %v7538 = vsub.s32 %v7535, %v7537
        %v7539 = vrot.slane %v7517, %v7538
        %v7541 = vunpack.c.l.s4 1966171168
        %v7542 = vunpack.c.0.s8 %v7541
        %v7543 = vlaneseq
        %v7544 = vshrl.u32 %v7543, 7
        %v7545 = vsub.s32 %v7542, %v7544
        %v7546 = vrot.slane %v7518, %v7545
        %v7547 = vcombine.low %v7525, %v7532
        %v7548 = vcombine.low %v7539, %v7546
        %v7550 = vunpack.c.l.s4 1966171168
        %v7551 = vunpack.c.0.s8 %v7550
        %v7552 = vlaneseq
        %v7553 = vshrl.u32 %v7552, 7
        %v7554 = vsub.s32 %v7551, %v7553
        %v7555 = vrot.slane %v7547, %v7554
        %v7557 = vunpack.c.l.s4 1966171168
        %v7558 = vunpack.c.0.s8 %v7557
        %v7559 = vlaneseq
        %v7560 = vshrl.u32 %v7559, 7
        %v7561 = vsub.s32 %v7558, %v7560
        %v7562 = vrot.slane %v7548, %v7561
        %v7563 = vcombine.low %v7555, %v7562
        %v7564 = vcombine.low %v6016, %v6020
        %v7565 = vcombine.low %v6024, %v6028
        %v7566 = vcombine.low %v6032, %v6036
        %v7567 = vcombine.low %v6040, %v6044
        %v7569 = vunpack.c.l.s4 1966171168
        %v7570 = vunpack.c.0.s8 %v7569
        %v7571 = vlaneseq
        %v7572 = vshrl.u32 %v7571, 7
        %v7573 = vsub.s32 %v7570, %v7572
        %v7574 = vrot.slane %v7564, %v7573
        %v7576 = vunpack.c.l.s4 1966171168
        %v7577 = vunpack.c.0.s8 %v7576
        %v7578 = vlaneseq
        %v7579 = vshrl.u32 %v7578, 7
        %v7580 = vsub.s32 %v7577, %v7579
        %v7581 = vrot.slane %v7565, %v7580
        %v7583 = vunpack.c.l.s4 1966171168
        %v7584 = vunpack.c.0.s8 %v7583
        %v7585 = vlaneseq
        %v7586 = vshrl.u32 %v7585, 7
        %v7587 = vsub.s32 %v7584, %v7586
        %v7588 = vrot.slane %v7566, %v7587
        %v7590 = vunpack.c.l.s4 1966171168
        %v7591 = vunpack.c.0.s8 %v7590
        %v7592 = vlaneseq
        %v7593 = vshrl.u32 %v7592, 7
        %v7594 = vsub.s32 %v7591, %v7593
        %v7595 = vrot.slane %v7567, %v7594
        %v7596 = vcombine.low %v7574, %v7581
        %v7597 = vcombine.low %v7588, %v7595
        %v7599 = vunpack.c.l.s4 1966171168
        %v7600 = vunpack.c.0.s8 %v7599
        %v7601 = vlaneseq
        %v7602 = vshrl.u32 %v7601, 7
        %v7603 = vsub.s32 %v7600, %v7602
        %v7604 = vrot.slane %v7596, %v7603
        %v7606 = vunpack.c.l.s4 1966171168
        %v7607 = vunpack.c.0.s8 %v7606
        %v7608 = vlaneseq
        %v7609 = vshrl.u32 %v7608, 7
        %v7610 = vsub.s32 %v7607, %v7609
        %v7611 = vrot.slane %v7597, %v7610
        %v7612 = vcombine.low %v7604, %v7611
        %7613 = vset.pattern.permute.xlu0 0
        %7614 = vperm.xlu0 %7613, %v6093
        %v7615 = vpop.permute.xlu0 %7614
        %7616 = vset.pattern.permute.xlu0 0
        %7617 = vperm.xlu0 %7616, %v6142
        %v7618 = vpop.permute.xlu0 %7617
        %7619 = vset.pattern.permute.xlu0 0
        %7620 = vperm.xlu0 %7619, %v6191
        %v7621 = vpop.permute.xlu0 %7620
        %7622 = vset.pattern.permute.xlu0 0
        %7623 = vperm.xlu0 %7622, %v6240
        %v7624 = vpop.permute.xlu0 %7623
        %7625 = vset.pattern.permute.xlu0 0
        %7626 = vperm.xlu0 %7625, %v6289
        %v7627 = vpop.permute.xlu0 %7626
        %7628 = vset.pattern.permute.xlu0 0
        %7629 = vperm.xlu0 %7628, %v6338
        %v7630 = vpop.permute.xlu0 %7629
        %7631 = vset.pattern.permute.xlu0 0
        %7632 = vperm.xlu0 %7631, %v6387
        %v7633 = vpop.permute.xlu0 %7632
        %7634 = vset.pattern.permute.xlu0 0
        %7635 = vperm.xlu0 %7634, %v6436
        %v7636 = vpop.permute.xlu0 %7635
        %7637 = vset.pattern.permute.xlu0 0
        %7638 = vperm.xlu0 %7637, %v6485
        %v7639 = vpop.permute.xlu0 %7638
        %7640 = vset.pattern.permute.xlu0 0
        %7641 = vperm.xlu0 %7640, %v6534
        %v7642 = vpop.permute.xlu0 %7641
        %7643 = vset.pattern.permute.xlu0 0
        %7644 = vperm.xlu0 %7643, %v6583
        %v7645 = vpop.permute.xlu0 %7644
        %7646 = vset.pattern.permute.xlu0 0
        %7647 = vperm.xlu0 %7646, %v6632
        %v7648 = vpop.permute.xlu0 %7647
        %7649 = vset.pattern.permute.xlu0 0
        %7650 = vperm.xlu0 %7649, %v6681
        %v7651 = vpop.permute.xlu0 %7650
        %7652 = vset.pattern.permute.xlu0 0
        %7653 = vperm.xlu0 %7652, %v6730
        %v7654 = vpop.permute.xlu0 %7653
        %7655 = vset.pattern.permute.xlu0 0
        %7656 = vperm.xlu0 %7655, %v6779
        %v7657 = vpop.permute.xlu0 %7656
        %7658 = vset.pattern.permute.xlu0 0
        %7659 = vperm.xlu0 %7658, %v6828
        %v7660 = vpop.permute.xlu0 %7659
        %7661 = vset.pattern.permute.xlu0 0
        %7662 = vperm.xlu0 %7661, %v6877
        %v7663 = vpop.permute.xlu0 %7662
        %7664 = vset.pattern.permute.xlu0 0
        %7665 = vperm.xlu0 %7664, %v6926
        %v7666 = vpop.permute.xlu0 %7665
        %7667 = vset.pattern.permute.xlu0 0
        %7668 = vperm.xlu0 %7667, %v6975
        %v7669 = vpop.permute.xlu0 %7668
        %7670 = vset.pattern.permute.xlu0 0
        %7671 = vperm.xlu0 %7670, %v7024
        %v7672 = vpop.permute.xlu0 %7671
        %7673 = vset.pattern.permute.xlu0 0
        %7674 = vperm.xlu0 %7673, %v7073
        %v7675 = vpop.permute.xlu0 %7674
        %7676 = vset.pattern.permute.xlu0 0
        %7677 = vperm.xlu0 %7676, %v7122
        %v7678 = vpop.permute.xlu0 %7677
        %7679 = vset.pattern.permute.xlu0 0
        %7680 = vperm.xlu0 %7679, %v7171
        %v7681 = vpop.permute.xlu0 %7680
        %7682 = vset.pattern.permute.xlu0 0
        %7683 = vperm.xlu0 %7682, %v7220
        %v7684 = vpop.permute.xlu0 %7683
        %7685 = vset.pattern.permute.xlu0 0
        %7686 = vperm.xlu0 %7685, %v7269
        %v7687 = vpop.permute.xlu0 %7686
        %7688 = vset.pattern.permute.xlu0 0
        %7689 = vperm.xlu0 %7688, %v7318
        %v7690 = vpop.permute.xlu0 %7689
        %7691 = vset.pattern.permute.xlu0 0
        %7692 = vperm.xlu0 %7691, %v7367
        %v7693 = vpop.permute.xlu0 %7692
        %7694 = vset.pattern.permute.xlu0 0
        %7695 = vperm.xlu0 %7694, %v7416
        %v7696 = vpop.permute.xlu0 %7695
        %7697 = vset.pattern.permute.xlu0 0
        %7698 = vperm.xlu0 %7697, %v7465
        %v7699 = vpop.permute.xlu0 %7698
        %7700 = vset.pattern.permute.xlu0 0
        %7701 = vperm.xlu0 %7700, %v7514
        %v7702 = vpop.permute.xlu0 %7701
        %7703 = vset.pattern.permute.xlu0 0
        %7704 = vperm.xlu0 %7703, %v7563
        %v7705 = vpop.permute.xlu0 %7704
        %7706 = vset.pattern.permute.xlu0 0
        %7707 = vperm.xlu0 %7706, %v7612
        %v7708 = vpop.permute.xlu0 %7707
        %v7709 = vlaneseq
        %v7710 = vand.u32 %v7709, 127
        %v7711 = vlaneseq
        %v7712 = vshrl.u32 %v7711, 7
        %v7713 = vsub.s32 %v7710, %v7712
        %v7714 = vrot.slane %v7615, %v7713
        %v7715 = vadd.s32 %v7710, 4294967288
        %v7716 = vlaneseq
        %v7717 = vshrl.u32 %v7716, 7
        %v7718 = vsub.s32 %v7715, %v7717
        %v7719 = vrot.slane %v7618, %v7718
        %vm7720 = vcmask 130112
        %v7721 = vsel %vm7720, %v7719, %v7714
        %v7722 = vadd.s32 %v7710, 4294967280
        %v7723 = vlaneseq
        %v7724 = vshrl.u32 %v7723, 7
        %v7725 = vsub.s32 %v7722, %v7724
        %v7726 = vrot.slane %v7621, %v7725
        %vm7727 = vcmask 195712
        %v7728 = vsel %vm7727, %v7726, %v7721
        %v7729 = vadd.s32 %v7710, 4294967272
        %v7730 = vlaneseq
        %v7731 = vshrl.u32 %v7730, 7
        %v7732 = vsub.s32 %v7729, %v7731
        %v7733 = vrot.slane %v7624, %v7732
        %vm7734 = vcmask 261312
        %v7735 = vsel %vm7734, %v7733, %v7728
        %v7736 = vadd.s32 %v7710, 4294967264
        %v7737 = vlaneseq
        %v7738 = vshrl.u32 %v7737, 7
        %v7739 = vsub.s32 %v7736, %v7738
        %v7740 = vrot.slane %v7627, %v7739
        %vm7741 = vcmask 326912
        %v7742 = vsel %vm7741, %v7740, %v7735
        %v7743 = vadd.s32 %v7710, 4294967256
        %v7744 = vlaneseq
        %v7745 = vshrl.u32 %v7744, 7
        %v7746 = vsub.s32 %v7743, %v7745
        %v7747 = vrot.slane %v7630, %v7746
        %vm7748 = vcmask 392512
        %v7749 = vsel %vm7748, %v7747, %v7742
        %v7750 = vadd.s32 %v7710, 4294967248
        %v7751 = vlaneseq
        %v7752 = vshrl.u32 %v7751, 7
        %v7753 = vsub.s32 %v7750, %v7752
        %v7754 = vrot.slane %v7633, %v7753
        %vm7755 = vcmask 458112
        %v7756 = vsel %vm7755, %v7754, %v7749
        %v7757 = vadd.s32 %v7710, 4294967240
        %v7758 = vlaneseq
        %v7759 = vshrl.u32 %v7758, 7
        %v7760 = vsub.s32 %v7757, %v7759
        %v7761 = vrot.slane %v7636, %v7760
        %vm7762 = vcmask 523712
        %v7763 = vsel %vm7762, %v7761, %v7756
        %v7764 = vadd.s32 %v7710, 4294967232
        %v7765 = vlaneseq
        %v7766 = vshrl.u32 %v7765, 7
        %v7767 = vsub.s32 %v7764, %v7766
        %v7768 = vrot.slane %v7639, %v7767
        %vm7769 = vcmask 589312
        %v7770 = vsel %vm7769, %v7768, %v7763
        %v7771 = vadd.s32 %v7710, 4294967224
        %v7772 = vlaneseq
        %v7773 = vshrl.u32 %v7772, 7
        %v7774 = vsub.s32 %v7771, %v7773
        %v7775 = vrot.slane %v7642, %v7774
        %vm7776 = vcmask 654912
        %v7777 = vsel %vm7776, %v7775, %v7770
        %v7778 = vadd.s32 %v7710, 4294967216
        %v7779 = vlaneseq
        %v7780 = vshrl.u32 %v7779, 7
        %v7781 = vsub.s32 %v7778, %v7780
        %v7782 = vrot.slane %v7645, %v7781
        %vm7783 = vcmask 720512
        %v7784 = vsel %vm7783, %v7782, %v7777
        %v7785 = vadd.s32 %v7710, 4294967208
        %v7786 = vlaneseq
        %v7787 = vshrl.u32 %v7786, 7
        %v7788 = vsub.s32 %v7785, %v7787
        %v7789 = vrot.slane %v7648, %v7788
        %vm7790 = vcmask 786112
        %v7791 = vsel %vm7790, %v7789, %v7784
        %v7792 = vadd.s32 %v7710, 4294967200
        %v7793 = vlaneseq
        %v7794 = vshrl.u32 %v7793, 7
        %v7795 = vsub.s32 %v7792, %v7794
        %v7796 = vrot.slane %v7651, %v7795
        %vm7797 = vcmask 851712
        %v7798 = vsel %vm7797, %v7796, %v7791
        %v7799 = vadd.s32 %v7710, 4294967192
        %v7800 = vlaneseq
        %v7801 = vshrl.u32 %v7800, 7
        %v7802 = vsub.s32 %v7799, %v7801
        %v7803 = vrot.slane %v7654, %v7802
        %vm7804 = vcmask 917312
        %v7805 = vsel %vm7804, %v7803, %v7798
        %v7806 = vadd.s32 %v7710, 4294967184
        %v7807 = vlaneseq
        %v7808 = vshrl.u32 %v7807, 7
        %v7809 = vsub.s32 %v7806, %v7808
        %v7810 = vrot.slane %v7657, %v7809
        %vm7811 = vcmask 982912
        %v7812 = vsel %vm7811, %v7810, %v7805
        %v7813 = vadd.s32 %v7710, 4294967176
        %v7814 = vlaneseq
        %v7815 = vshrl.u32 %v7814, 7
        %v7816 = vsub.s32 %v7813, %v7815
        %v7817 = vrot.slane %v7660, %v7816
        %vm7818 = vcmask 1048512
        %v7819 = vsel %vm7818, %v7817, %v7812
        %v7820 = vlaneseq
        %v7821 = vshrl.u32 %v7820, 7
        %v7822 = vsub.s32 %v7710, %v7821
        %v7823 = vrot.slane %v7663, %v7822
        %v7824 = vlaneseq
        %v7825 = vshrl.u32 %v7824, 7
        %v7826 = vsub.s32 %v7715, %v7825
        %v7827 = vrot.slane %v7666, %v7826
        %v7828 = vsel %vm7720, %v7827, %v7823
        %v7829 = vlaneseq
        %v7830 = vshrl.u32 %v7829, 7
        %v7831 = vsub.s32 %v7722, %v7830
        %v7832 = vrot.slane %v7669, %v7831
        %v7833 = vsel %vm7727, %v7832, %v7828
        %v7834 = vlaneseq
        %v7835 = vshrl.u32 %v7834, 7
        %v7836 = vsub.s32 %v7729, %v7835
        %v7837 = vrot.slane %v7672, %v7836
        %v7838 = vsel %vm7734, %v7837, %v7833
        %v7839 = vlaneseq
        %v7840 = vshrl.u32 %v7839, 7
        %v7841 = vsub.s32 %v7736, %v7840
        %v7842 = vrot.slane %v7675, %v7841
        %v7843 = vsel %vm7741, %v7842, %v7838
        %v7844 = vlaneseq
        %v7845 = vshrl.u32 %v7844, 7
        %v7846 = vsub.s32 %v7743, %v7845
        %v7847 = vrot.slane %v7678, %v7846
        %v7848 = vsel %vm7748, %v7847, %v7843
        %v7849 = vlaneseq
        %v7850 = vshrl.u32 %v7849, 7
        %v7851 = vsub.s32 %v7750, %v7850
        %v7852 = vrot.slane %v7681, %v7851
        %v7853 = vsel %vm7755, %v7852, %v7848
        %v7854 = vlaneseq
        %v7855 = vshrl.u32 %v7854, 7
        %v7856 = vsub.s32 %v7757, %v7855
        %v7857 = vrot.slane %v7684, %v7856
        %v7858 = vsel %vm7762, %v7857, %v7853
        %v7859 = vlaneseq
        %v7860 = vshrl.u32 %v7859, 7
        %v7861 = vsub.s32 %v7764, %v7860
        %v7862 = vrot.slane %v7687, %v7861
        %v7863 = vsel %vm7769, %v7862, %v7858
        %v7864 = vlaneseq
        %v7865 = vshrl.u32 %v7864, 7
        %v7866 = vsub.s32 %v7771, %v7865
        %v7867 = vrot.slane %v7690, %v7866
        %v7868 = vsel %vm7776, %v7867, %v7863
        %v7869 = vlaneseq
        %v7870 = vshrl.u32 %v7869, 7
        %v7871 = vsub.s32 %v7778, %v7870
        %v7872 = vrot.slane %v7693, %v7871
        %v7873 = vsel %vm7783, %v7872, %v7868
        %v7874 = vlaneseq
        %v7875 = vshrl.u32 %v7874, 7
        %v7876 = vsub.s32 %v7785, %v7875
        %v7877 = vrot.slane %v7696, %v7876
        %v7878 = vsel %vm7790, %v7877, %v7873
        %v7879 = vlaneseq
        %v7880 = vshrl.u32 %v7879, 7
        %v7881 = vsub.s32 %v7792, %v7880
        %v7882 = vrot.slane %v7699, %v7881
        %v7883 = vsel %vm7797, %v7882, %v7878
        %v7884 = vlaneseq
        %v7885 = vshrl.u32 %v7884, 7
        %v7886 = vsub.s32 %v7799, %v7885
        %v7887 = vrot.slane %v7702, %v7886
        %v7888 = vsel %vm7804, %v7887, %v7883
        %v7889 = vlaneseq
        %v7890 = vshrl.u32 %v7889, 7
        %v7891 = vsub.s32 %v7806, %v7890
        %v7892 = vrot.slane %v7705, %v7891
        %v7893 = vsel %vm7811, %v7892, %v7888
        %v7894 = vlaneseq
        %v7895 = vshrl.u32 %v7894, 7
        %v7896 = vsub.s32 %v7813, %v7895
        %v7897 = vrot.slane %v7708, %v7896
        %v7898 = vsel %vm7818, %v7897, %v7893
        %v7899 = vcombine.low %v7819, %v7898
        %v7901 = vunpack.c.l.s4 1966171168
        %v7902 = vunpack.c.0.s8 %v7901
        %v7903 = vlaneseq
        %v7904 = vshrl.u32 %v7903, 7
        %v7905 = vsub.s32 %v7902, %v7904
        %v7906 = vrot.slane %v7899, %v7905
        %v7908 = vunpack.c.l.s4 1966171168
        %v7909 = vunpack.c.0.s8 %v7908
        %v7910 = vlaneseq
        %v7911 = vshrl.u32 %v7910, 7
        %v7912 = vsub.s32 %v7909, %v7911
        %v7913 = vrot.slane %v7906, %v7912
        %v7915 = vlaneseq
        %vm7916 = vcmp.ge.s32.totalorder %v7915, 0
        %vm7917 = vcmp.lt.s32.totalorder %v7915, 256
        %vm7918 = vmand %vm7916, %vm7917
        %7919 = vst.msk [vmem:[%s358] sm:$0x3] %vm7918, %v7913
        %s7920 = sand.u32 %s229, 1
        %s7921 = scalar_lea.sflag [#allocation5], %s7920
        %s7922 = sand.u32 %s229, 1
        %s7923 = smul.addr %s7922, 2
        %s7924 = scalar_lea.vmem [#allocation8], %s7923
        // Predicated region
        $region65: #{tpu_custom_call.1} parent=55 // pred_check
          %p7925 = pneg %p239
        $region66: #{tpu_custom_call.1} parent=55 // pred_check_branch
          %7927 = sbr.rel (%p7925) target = $region68
        $region67: #{tpu_custom_call.1} parent=55 // pred_region
          %s7928 = smul.u32 2, %s27
          %s7930 = ssub.s32 32, 32
          %7931 = vsyncadd %s7921, %s7930
          %s7932 = smul.addr %s7928, 16
          %s7933 = scalar_lea.hbm %s9, %s7932
          %s7935 = sshll.u32 %s7924, 4
          %s7936 = int_to_ptr.vmem [resolvable:$true] %s7935
          %7938 = dma.vmem_to_hbm [thread:$0]  %s7936, 32, %s7933, %s7921
        $region68: #{tpu_custom_call.1} parent=55 // pred_fallthru
          _
      $region56: #{tpu_custom_call.1} parent=5 // pred_fallthru
        _
      %p7939 = scmp.le.s32.totalorder 2, %s22
      // Predicated region
      $region69: #{tpu_custom_call.1} parent=5 // pred_check
        %p7940 = pneg %p7939
      $region70: #{tpu_custom_call.1} parent=5 // pred_check_branch
        %7942 = sbr.rel (%p7940) target = $region72
      $region71: #{tpu_custom_call.1} parent=5 // pred_region
        %s7943 = ssub.s32 %s22, 2
        // Predicated region
        $region73: #{tpu_custom_call.1} parent=71 // pred_check
          %p7944 = pneg %p245
        $region74: #{tpu_custom_call.1} parent=71 // pred_check_branch
          %7946 = sbr.rel (%p7944) target = $region76
        $region75: #{tpu_custom_call.1} parent=71 // pred_region
          %s7947 = sand.u32 %s230, 1
          %s7948 = scalar_lea.sflag [#allocation5], %s7947
          %s7949 = sand.u32 %s230, 1
          %s7950 = smul.addr %s7949, 2
          %s7951 = scalar_lea.vmem [#allocation8], %s7950
          %7952 = dma.done %s7948, 32
        $region76: #{tpu_custom_call.1} parent=71 // pred_fallthru
          _
      $region72: #{tpu_custom_call.1} parent=5 // pred_fallthru
        _
    $region6: #{tpu_custom_call.1} parent=1 // loop_footer
      %s26 = sadd.s32 1, %s22
    $region7: #{tpu_custom_call.1} parent=1 // loop_footer_branch
      %21 = sbr.rel target = $region3
    $region8: #{tpu_custom_call.1} parent=1 // loop_exit
      _
    %7953 = vsyncpa [#allocation4], 1
    %s7954 = scalar_lea.sflag [#allocation4], 1
    %7955 = vsyncpa %s7954, 1
    %7956 = vsyncpa [#allocation7], 1
    %7957 = vsyncpa [#allocation5], 1
    %s7958 = scalar_lea.sflag [#allocation5], 1
    %7959 = vsyncpa %s7958, 1

</llo_original>
